<compile_context>
chip_gen: v6e
topology: v6e:2x2x1
jax: 0.10.0
libtpu: 0.0.40
codegen_flags: <defaults>
</compile_context>

<pallas_src>
import jax
import jax.numpy as jnp
from jax.experimental import pallas as pl
from jax.experimental.pallas import tpu as pltpu


_VMEM_LIMIT = 48 * 1024 * 1024   # explicit cap: headroom under v7x's 64 MiB VMEM


# ----------------------------------------------------------------------------
# In-kernel helper
# ----------------------------------------------------------------------------
def _tap_conv(xp, w_ref, H, W):
    """Tap-stacked KxK conv: one (H*W, KW*Cin) x (KW*Cin, Cout) matmul per kh.

    xp    : (H+KH-1, W+KW-1, Cin) zero-padded input (value, already loaded)
    w_ref : (KH, KW*Cin, Cout) tap-stacked weights
    returns f32 accumulator of shape (H*W, Cout)
    """
    KH, KWC, Cout = w_ref.shape
    Cin = xp.shape[-1]
    KW = KWC // Cin
    acc = jnp.zeros((H * W, Cout), jnp.float32)
    for kh in range(KH):
        # KW shifted windows concatenated on the channel axis -> K = KW*Cin
        patch = jnp.concatenate(
            [xp[kh:kh + H, kw:kw + W, :] for kw in range(KW)], axis=-1,
        ).reshape(H * W, KW * Cin)
        acc = acc + jnp.dot(patch, w_ref[kh],
                            preferred_element_type=jnp.float32)
    return acc


# ----------------------------------------------------------------------------
# Fused InceptionA kernel (one image per grid step)
# ----------------------------------------------------------------------------
def _inception_a_kernel(x_ref, w1_ref, sc1_ref, bi1_ref, scp_ref, bip_ref,
                        w52_ref, sc52_ref, bi52_ref,
                        w32_ref, sc32_ref, bi32_ref,
                        w33_ref, sc33_ref, bi33_ref,
                        o_ref,
                        pp_ref, t5p_ref, t3p_ref, t3bp_ref):
    """Whole InceptionA block for one NHWC image.

    x_ref   : (H, W, Cin)        input image (no host-side padding needed)
    w1_ref  : (Cin, 176 + P)     fused 1x1 weights [b1x1|b5x5_1|b3x3dbl_1|pool]
    sc1/bi1 : (1, 176)           folded BN for the first three 1x1 branches
    scp/bip : (1, P)             folded BN for the pool branch (1/9 folded in)
    w52_ref : (5, 5*48, 64)      branch5x5_2 tap-stacked weights
    w32_ref : (3, 3*64, 96)      branch3x3dbl_2
    w33_ref : (3, 3*96, 96)      branch3x3dbl_3
    o_ref   : (H, W, 64+64+96+P) concatenated output (lane-dense single store)
    pp_ref  : (H+2, W+2, P)      scratch: pool-branch conv output, zero halo 1
    t5p_ref : (H+4, W+4, 48)     scratch: branch5x5_1 output, zero halo 2
    t3p_ref : (H+2, W+2, 64)     scratch: branch3x3dbl_1 output, zero halo 1
    t3bp_ref: (H+2, W+2, 96)     scratch: branch3x3dbl_2 output, zero halo 1
    """
    H, W, Ctot = o_ref.shape
    Cin = x_ref.shape[-1]
    P = pp_ref.shape[-1]
    C5 = t5p_ref.shape[-1]          # 48
    C3 = t3p_ref.shape[-1]          # 64
    C176 = sc1_ref.shape[-1]        # 176
    C1 = C176 - C5 - C3             # 64

    # ---- all four 1x1 branches as ONE MXU call (Cout = 64+48+64+P) ---------
    xin = x_ref[...].reshape(H * W, Cin)
    y = jnp.dot(xin, w1_ref[...], preferred_element_type=jnp.float32)

    y176 = jnp.maximum(y[:, :C176] * sc1_ref[...] + bi1_ref[...], 0.0)
    b1 = y176[:, :C1]                                   # final branch1x1
    t5 = y176[:, C1:C1 + C5].reshape(H, W, C5)          # branch5x5_1
    t3 = y176[:, C1 + C5:].reshape(H, W, C3)            # branch3x3dbl_1

    # ---- branch_pool: pool AFTER the (commuting) 1x1 conv ------------------
    # avg_pool(3x3, pad=1, count_include_pad) o conv1x1 == conv1x1 o avg_pool;
    # the raw (pre-BN) conv output is zero-padded and sum-pooled, 1/9 is
    # folded into scp.
    pp_ref[...] = jnp.zeros_like(pp_ref)
    pp_ref[1:H + 1, 1:W + 1, :] = y[:, C176:].reshape(H, W, P)
    pp = pp_ref[...]
    ps = jnp.zeros((H, W, P), jnp.float32)
    for kh in range(3):
        for kw in range(3):
            ps = ps + pp[kh:kh + H, kw:kw + W, :]
    bp = jnp.maximum(ps.reshape(H * W, P) * scp_ref[...] + bip_ref[...], 0.0)

    # ---- branch5x5: 5x5 conv on zero-halo-padded branch5x5_1 ---------------
    t5p_ref[...] = jnp.zeros_like(t5p_ref)
    t5p_ref[2:H + 2, 2:W + 2, :] = t5
    acc5 = _tap_conv(t5p_ref[...], w52_ref, H, W)
    b5 = jnp.maximum(acc5 * sc52_ref[...] + bi52_ref[...], 0.0)

    # ---- branch3x3dbl: two chained 3x3 convs --------------------------------
    t3p_ref[...] = jnp.zeros_like(t3p_ref)
    t3p_ref[1:H + 1, 1:W + 1, :] = t3
    acc32 = _tap_conv(t3p_ref[...], w32_ref, H, W)
    y32 = jnp.maximum(acc32 * sc32_ref[...] + bi32_ref[...], 0.0)

    t3bp_ref[...] = jnp.zeros_like(t3bp_ref)
    t3bp_ref[1:H + 1, 1:W + 1, :] = y32.reshape(H, W, -1)
    acc33 = _tap_conv(t3bp_ref[...], w33_ref, H, W)
    b3 = jnp.maximum(acc33 * sc33_ref[...] + bi33_ref[...], 0.0)

    # ---- concat + single lane-dense store -----------------------------------
    out = jnp.concatenate([b1, b5, b3, bp], axis=-1)     # (H*W, 232)
    o_ref[...] = out.reshape(H, W, Ctot)


# ----------------------------------------------------------------------------
# Forward wrapper (single pallas_call)
# ----------------------------------------------------------------------------
def inception_a(x_nchw, packed):
    N, Cin, H, W = x_nchw.shape
    x = jnp.transpose(x_nchw, (0, 2, 3, 1))              # NCHW -> NHWC

    P = packed["scp"].shape[-1]
    C176 = packed["sc1"].shape[-1]
    Ctot = 64 + 64 + 96 + P

    out_nhwc = pl.pallas_call(
        _inception_a_kernel,
        out_shape=jax.ShapeDtypeStruct((N, H, W, Ctot), jnp.float32),
        grid=(N,),
        in_specs=[
            pl.BlockSpec((None, H, W, Cin), lambda n: (n, 0, 0, 0)),
            pl.BlockSpec((Cin, C176 + P), lambda n: (0, 0)),
            pl.BlockSpec((1, C176), lambda n: (0, 0)),
            pl.BlockSpec((1, C176), lambda n: (0, 0)),
            pl.BlockSpec((1, P), lambda n: (0, 0)),
            pl.BlockSpec((1, P), lambda n: (0, 0)),
            pl.BlockSpec((5, 5 * 48, 64), lambda n: (0, 0, 0)),
            pl.BlockSpec((1, 64), lambda n: (0, 0)),
            pl.BlockSpec((1, 64), lambda n: (0, 0)),
            pl.BlockSpec((3, 3 * 64, 96), lambda n: (0, 0, 0)),
            pl.BlockSpec((1, 96), lambda n: (0, 0)),
            pl.BlockSpec((1, 96), lambda n: (0, 0)),
            pl.BlockSpec((3, 3 * 96, 96), lambda n: (0, 0, 0)),
            pl.BlockSpec((1, 96), lambda n: (0, 0)),
            pl.BlockSpec((1, 96), lambda n: (0, 0)),
        ],
        out_specs=pl.BlockSpec((None, H, W, Ctot), lambda n: (n, 0, 0, 0)),
        scratch_shapes=[
            pltpu.VMEM((H + 2, W + 2, P), jnp.float32),
            pltpu.VMEM((H + 4, W + 4, 48), jnp.float32),
            pltpu.VMEM((H + 2, W + 2, 64), jnp.float32),
            pltpu.VMEM((H + 2, W + 2, 96), jnp.float32),
        ],
        compiler_params=pltpu.CompilerParams(
            dimension_semantics=("parallel",),
            vmem_limit_bytes=_VMEM_LIMIT),
    )(x, packed["w1"], packed["sc1"], packed["bi1"],
      packed["scp"], packed["bip"],
      packed["w52"], packed["sc52"], packed["bi52"],
      packed["w32"], packed["sc32"], packed["bi32"],
      packed["w33"], packed["sc33"], packed["bi33"])

    # NHWC -> NCHW to match torch.cat(outputs, dim=1) semantics
    return jnp.transpose(out_nhwc, (0, 3, 1, 2))


# ----------------------------------------------------------------------------
# Parameter init (deterministic synthetic, mirrors BasicConv2d) + packing
# ----------------------------------------------------------------------------
def _make_basic_conv(key, cin, cout, kh, kw, eps=1e-3):
    k1, k2, k3, k4, k5 = jax.random.split(key, 5)
    fan_in = float(cin * kh * kw)
    w = jax.random.normal(k1, (kh, kw, cin, cout), jnp.float32) * (fan_in ** -0.5)
    gamma = 1.0 + 0.1 * jax.random.normal(k2, (cout,), jnp.float32)
    beta = 0.1 * jax.random.normal(k3, (cout,), jnp.float32)
    running_mean = 0.1 * jax.random.normal(k4, (cout,), jnp.float32)
    running_var = jax.random.uniform(k5, (cout,), jnp.float32, 0.5, 1.5)
    scale = gamma / jnp.sqrt(running_var + eps)      # folded BN (inference)
    bias = beta - running_mean * scale
    # NOTE: weights are HWIO; real PyTorch OIHW weights need a (2,3,1,0) transpose.
    return dict(w=w, scale=scale, bias=bias)


def init_inception_a(key, in_channels, pool_features):
    keys = jax.random.split(key, 7)
    return {
        "branch1x1":      _make_basic_conv(keys[0], in_channels, 64, 1, 1),
        "branch5x5_1":    _make_basic_conv(keys[1], in_channels, 48, 1, 1),
        "branch5x5_2":    _make_basic_conv(keys[2], 48, 64, 5, 5),
        "branch3x3dbl_1": _make_basic_conv(keys[3], in_channels, 64, 1, 1),
        "branch3x3dbl_2": _make_basic_conv(keys[4], 64, 96, 3, 3),
        "branch3x3dbl_3": _make_basic_conv(keys[5], 96, 96, 3, 3),
        "branch_pool":    _make_basic_conv(keys[6], in_channels,
                                           pool_features, 1, 1),
    }


def pack_inception_a(raw):
    """Pack raw per-branch params into the fused / tap-stacked kernel layout."""
    def w1x1(p):                       # (1,1,Cin,Cout) -> (Cin, Cout)
        return p["w"].reshape(p["w"].shape[2], p["w"].shape[3])

    def wtaps(p):                      # (KH,KW,Cin,Cout) -> (KH, KW*Cin, Cout)
        kh, kw, cin, cout = p["w"].shape
        return p["w"].reshape(kh, kw * cin, cout)

    b1, b51, b31 = raw["branch1x1"], raw["branch5x5_1"], raw["branch3x3dbl_1"]
    bp = raw["branch_pool"]
    b52, b32, b33 = raw["branch5x5_2"], raw["branch3x3dbl_2"], raw["branch3x3dbl_3"]

    return {
        # fused 1x1 convs on x: [branch1x1 | branch5x5_1 | branch3x3dbl_1 | pool]
        "w1":  jnp.concatenate([w1x1(b1), w1x1(b51), w1x1(b31), w1x1(bp)], axis=1),
        "sc1": jnp.concatenate([b1["scale"], b51["scale"], b31["scale"]])[None, :],
        "bi1": jnp.concatenate([b1["bias"], b51["bias"], b31["bias"]])[None, :],
        # pool branch BN — avg-pool's 1/9 folded into the scale
        "scp": (bp["scale"] * (1.0 / 9.0))[None, :],
        "bip": bp["bias"][None, :],
        # branch5x5_2
        "w52": wtaps(b52), "sc52": b52["scale"][None, :], "bi52": b52["bias"][None, :],
        # branch3x3dbl_2
        "w32": wtaps(b32), "sc32": b32["scale"][None, :], "bi32": b32["bias"][None, :],
        # branch3x3dbl_3
        "w33": wtaps(b33), "sc33": b33["scale"][None, :], "bi33": b33["bias"][None, :],
    }


# ----------------------------------------------------------------------------
# Pure-JAX reference (for correctness check)
# ----------------------------------------------------------------------------
def _conv_bn_relu_ref(x, p, pad):
    y = jax.lax.conv_general_dilated(
        x, p["w"], window_strides=(1, 1),
        padding=((pad, pad), (pad, pad)),
        dimension_numbers=("NHWC", "HWIO", "NHWC"))
    return jnp.maximum(y * p["scale"] + p["bias"], 0.0)


def inception_a_ref(x_nchw, raw):
    x = jnp.transpose(x_nchw, (0, 2, 3, 1))
    b1 = _conv_bn_relu_ref(x, raw["branch1x1"], 0)
    b5 = _conv_bn_relu_ref(x, raw["branch5x5_1"], 0)
    b5 = _conv_bn_relu_ref(b5, raw["branch5x5_2"], 2)
    b3 = _conv_bn_relu_ref(x, raw["branch3x3dbl_1"], 0)
    b3 = _conv_bn_relu_ref(b3, raw["branch3x3dbl_2"], 1)
    b3 = _conv_bn_relu_ref(b3, raw["branch3x3dbl_3"], 1)
    pooled = jax.lax.reduce_window(
        x, 0.0, jax.lax.add, (1, 3, 3, 1), (1, 1, 1, 1),
        padding=((0, 0), (1, 1), (1, 1), (0, 0))) * (1.0 / 9.0)
    bpool = _conv_bn_relu_ref(pooled, raw["branch_pool"], 0)
    out = jnp.concatenate([b1, b5, b3, bpool], axis=-1)
    return jnp.transpose(out, (0, 3, 1, 2))


# ----------------------------------------------------------------------------
if __name__ == "__main__":
    key = jax.random.PRNGKey(0)
    k_x, k_p = jax.random.split(key)

    N, C_in, H, W = 2, 4, 16, 16
    pool_features = 8

    x = jax.random.normal(k_x, (N, C_in, H, W), jnp.float32)
    raw = init_inception_a(k_p, C_in, pool_features)
    packed = pack_inception_a(raw)

    out = jax.jit(inception_a)(x, packed)
    out = jax.block_until_ready(out)

    expected_channels = 64 + 64 + 96 + pool_features
    assert out.shape == (N, expected_channels, H, W), out.shape
    assert bool(jnp.all(jnp.isfinite(out)))
    assert bool(jnp.all(out >= 0.0))  # ReLU output

    ref = inception_a_ref(x, raw)
    assert bool(jnp.allclose(out, ref, rtol=3e-2, atol=3e-2)), (
        "max abs diff vs reference: %f" % float(jnp.max(jnp.abs(out - ref))))

    print("KERNEL_OK")
</pallas_src>

<mosaic_0001>
module attributes {stable_mosaic.version = 11 : i64} {
  func.func @_inception_a_kernel(%arg0: i32, %arg1: memref<1x16x16x4xf32, #tpu.memory_space<vmem>>, %arg2: memref<4x184xf32, #tpu.memory_space<vmem>>, %arg3: memref<1x176xf32, #tpu.memory_space<vmem>>, %arg4: memref<1x176xf32, #tpu.memory_space<vmem>>, %arg5: memref<1x8xf32, #tpu.memory_space<vmem>>, %arg6: memref<1x8xf32, #tpu.memory_space<vmem>>, %arg7: memref<5x240x64xf32, #tpu.memory_space<vmem>>, %arg8: memref<1x64xf32, #tpu.memory_space<vmem>>, %arg9: memref<1x64xf32, #tpu.memory_space<vmem>>, %arg10: memref<3x192x96xf32, #tpu.memory_space<vmem>>, %arg11: memref<1x96xf32, #tpu.memory_space<vmem>>, %arg12: memref<1x96xf32, #tpu.memory_space<vmem>>, %arg13: memref<3x288x96xf32, #tpu.memory_space<vmem>>, %arg14: memref<1x96xf32, #tpu.memory_space<vmem>>, %arg15: memref<1x96xf32, #tpu.memory_space<vmem>>, %arg16: memref<1x16x16x232xf32, #tpu.memory_space<vmem>>, %arg17: memref<18x18x8xf32, #tpu.memory_space<vmem>>, %arg18: memref<20x20x48xf32, #tpu.memory_space<vmem>>, %arg19: memref<18x18x64xf32, #tpu.memory_space<vmem>>, %arg20: memref<18x18x96xf32, #tpu.memory_space<vmem>>) attributes {dimension_semantics = [#tpu.dimension_semantics<parallel>], iteration_bounds = array<i64: 2>, scalar_prefetch = 0 : i64, scratch_operands = 4 : i64, tpu.core_type = #tpu.core_type<tc>, window_params = [{transform_indices = @transform_0, window_bounds = array<i64: 1, 16, 16, 4>}, {pipeline_mode = #tpu.pipeline_mode<synchronous>, transform_indices = @transform_1, window_bounds = array<i64: 4, 184>}, {pipeline_mode = #tpu.pipeline_mode<synchronous>, transform_indices = @transform_2, window_bounds = array<i64: 1, 176>}, {pipeline_mode = #tpu.pipeline_mode<synchronous>, transform_indices = @transform_3, window_bounds = array<i64: 1, 176>}, {pipeline_mode = #tpu.pipeline_mode<synchronous>, transform_indices = @transform_4, window_bounds = array<i64: 1, 8>}, {pipeline_mode = #tpu.pipeline_mode<synchronous>, transform_indices = @transform_5, window_bounds = array<i64: 1, 8>}, {pipeline_mode = #tpu.pipeline_mode<synchronous>, transform_indices = @transform_6, window_bounds = array<i64: 5, 240, 64>}, {pipeline_mode = #tpu.pipeline_mode<synchronous>, transform_indices = @transform_7, window_bounds = array<i64: 1, 64>}, {pipeline_mode = #tpu.pipeline_mode<synchronous>, transform_indices = @transform_8, window_bounds = array<i64: 1, 64>}, {pipeline_mode = #tpu.pipeline_mode<synchronous>, transform_indices = @transform_9, window_bounds = array<i64: 3, 192, 96>}, {pipeline_mode = #tpu.pipeline_mode<synchronous>, transform_indices = @transform_10, window_bounds = array<i64: 1, 96>}, {pipeline_mode = #tpu.pipeline_mode<synchronous>, transform_indices = @transform_11, window_bounds = array<i64: 1, 96>}, {pipeline_mode = #tpu.pipeline_mode<synchronous>, transform_indices = @transform_12, window_bounds = array<i64: 3, 288, 96>}, {pipeline_mode = #tpu.pipeline_mode<synchronous>, transform_indices = @transform_13, window_bounds = array<i64: 1, 96>}, {pipeline_mode = #tpu.pipeline_mode<synchronous>, transform_indices = @transform_14, window_bounds = array<i64: 1, 96>}, {transform_indices = @transform_15, window_bounds = array<i64: 1, 16, 16, 232>}]} {
    %c0 = arith.constant 0 : index
    %c0_0 = arith.constant 0 : index
    %c0_1 = arith.constant 0 : index
    %c0_2 = arith.constant 0 : index
    %0 = vector.load %arg1[%c0, %c0_0, %c0_1, %c0_2] : memref<1x16x16x4xf32, #tpu.memory_space<vmem>>, vector<1x16x16x4xf32>
    %1 = vector.shape_cast %0 : vector<1x16x16x4xf32> to vector<16x16x4xf32>
    %2 = vector.shape_cast %1 : vector<16x16x4xf32> to vector<256x4xf32>
    %c0_3 = arith.constant 0 : index
    %c0_4 = arith.constant 0 : index
    %3 = vector.load %arg2[%c0_3, %c0_4] : memref<4x184xf32, #tpu.memory_space<vmem>>, vector<4x184xf32>
    %cst = arith.constant dense<0.000000e+00> : vector<256x184xf32>
    %4 = tpu.matmul %2, %3, %cst {dimension_numbers = #tpu.dot_dimension_numbers<[1], [0], [0], [1], [0, 0, 1, 1], [], []>} : vector<256x4xf32>, vector<4x184xf32>, vector<256x184xf32> -> vector<256x184xf32>
    %5 = vector.extract_strided_slice %4 {offsets = [0, 0], sizes = [256, 176], strides = [1, 1]} : vector<256x184xf32> to vector<256x176xf32>
    %c0_5 = arith.constant 0 : index
    %c0_6 = arith.constant 0 : index
    %6 = vector.load %arg3[%c0_5, %c0_6] : memref<1x176xf32, #tpu.memory_space<vmem>>, vector<1x176xf32>
    %7 = vector.broadcast %6 : vector<1x176xf32> to vector<256x176xf32>
    %8 = arith.mulf %5, %7 : vector<256x176xf32>
    %c0_7 = arith.constant 0 : index
    %c0_8 = arith.constant 0 : index
    %9 = vector.load %arg4[%c0_7, %c0_8] : memref<1x176xf32, #tpu.memory_space<vmem>>, vector<1x176xf32>
    %10 = vector.broadcast %9 : vector<1x176xf32> to vector<256x176xf32>
    %11 = arith.addf %8, %10 : vector<256x176xf32>
    %cst_9 = arith.constant 0.000000e+00 : f32
    %12 = vector.broadcast %cst_9 : f32 to vector<256x176xf32>
    %13 = arith.maximumf %11, %12 : vector<256x176xf32>
    %14 = vector.extract_strided_slice %13 {offsets = [0, 0], sizes = [256, 64], strides = [1, 1]} : vector<256x176xf32> to vector<256x64xf32>
    %15 = vector.extract_strided_slice %13 {offsets = [0, 64], sizes = [256, 48], strides = [1, 1]} : vector<256x176xf32> to vector<256x48xf32>
    %16 = vector.shape_cast %15 : vector<256x48xf32> to vector<16x16x48xf32>
    %17 = vector.extract_strided_slice %13 {offsets = [0, 112], sizes = [256, 64], strides = [1, 1]} : vector<256x176xf32> to vector<256x64xf32>
    %18 = vector.shape_cast %17 : vector<256x64xf32> to vector<16x16x64xf32>
    %cst_10 = arith.constant 0.000000e+00 : f32
    %19 = vector.broadcast %cst_10 : f32 to vector<18x18x8xf32>
    %c0_11 = arith.constant 0 : index
    %c0_12 = arith.constant 0 : index
    %c0_13 = arith.constant 0 : index
    %20 = vector.load %arg17[%c0_11, %c0_12, %c0_13] : memref<18x18x8xf32, #tpu.memory_space<vmem>>, vector<18x18x8xf32>
    tpu.vector_store %arg17[%c0_11, %c0_12, %c0_13], %19 {strides = array<i32>} : memref<18x18x8xf32, #tpu.memory_space<vmem>>, vector<18x18x8xf32>,
    %21 = vector.extract_strided_slice %4 {offsets = [0, 176], sizes = [256, 8], strides = [1, 1]} : vector<256x184xf32> to vector<256x8xf32>
    %22 = vector.shape_cast %21 : vector<256x8xf32> to vector<16x16x8xf32>
    %c1 = arith.constant 1 : index
    %c1_14 = arith.constant 1 : index
    %c0_15 = arith.constant 0 : index
    %23 = vector.load %arg17[%c1, %c1_14, %c0_15] : memref<18x18x8xf32, #tpu.memory_space<vmem>>, vector<16x16x8xf32>
    tpu.vector_store %arg17[%c1, %c1_14, %c0_15], %22 {strides = array<i32>} : memref<18x18x8xf32, #tpu.memory_space<vmem>>, vector<16x16x8xf32>,
    %c0_16 = arith.constant 0 : index
    %c0_17 = arith.constant 0 : index
    %c0_18 = arith.constant 0 : index
    %24 = vector.load %arg17[%c0_16, %c0_17, %c0_18] : memref<18x18x8xf32, #tpu.memory_space<vmem>>, vector<18x18x8xf32>
    %cst_19 = arith.constant 0.000000e+00 : f32
    %25 = vector.broadcast %cst_19 : f32 to vector<16x16x8xf32>
    %26 = vector.extract_strided_slice %24 {offsets = [0, 0, 0], sizes = [16, 16, 8], strides = [1, 1, 1]} : vector<18x18x8xf32> to vector<16x16x8xf32>
    %27 = arith.addf %25, %26 : vector<16x16x8xf32>
    %28 = vector.extract_strided_slice %24 {offsets = [0, 1, 0], sizes = [16, 16, 8], strides = [1, 1, 1]} : vector<18x18x8xf32> to vector<16x16x8xf32>
    %29 = arith.addf %27, %28 : vector<16x16x8xf32>
    %30 = vector.extract_strided_slice %24 {offsets = [0, 2, 0], sizes = [16, 16, 8], strides = [1, 1, 1]} : vector<18x18x8xf32> to vector<16x16x8xf32>
    %31 = arith.addf %29, %30 : vector<16x16x8xf32>
    %32 = vector.extract_strided_slice %24 {offsets = [1, 0, 0], sizes = [16, 16, 8], strides = [1, 1, 1]} : vector<18x18x8xf32> to vector<16x16x8xf32>
    %33 = arith.addf %31, %32 : vector<16x16x8xf32>
    %34 = vector.extract_strided_slice %24 {offsets = [1, 1, 0], sizes = [16, 16, 8], strides = [1, 1, 1]} : vector<18x18x8xf32> to vector<16x16x8xf32>
    %35 = arith.addf %33, %34 : vector<16x16x8xf32>
    %36 = vector.extract_strided_slice %24 {offsets = [1, 2, 0], sizes = [16, 16, 8], strides = [1, 1, 1]} : vector<18x18x8xf32> to vector<16x16x8xf32>
    %37 = arith.addf %35, %36 : vector<16x16x8xf32>
    %38 = vector.extract_strided_slice %24 {offsets = [2, 0, 0], sizes = [16, 16, 8], strides = [1, 1, 1]} : vector<18x18x8xf32> to vector<16x16x8xf32>
    %39 = arith.addf %37, %38 : vector<16x16x8xf32>
    %40 = vector.extract_strided_slice %24 {offsets = [2, 1, 0], sizes = [16, 16, 8], strides = [1, 1, 1]} : vector<18x18x8xf32> to vector<16x16x8xf32>
    %41 = arith.addf %39, %40 : vector<16x16x8xf32>
    %42 = vector.extract_strided_slice %24 {offsets = [2, 2, 0], sizes = [16, 16, 8], strides = [1, 1, 1]} : vector<18x18x8xf32> to vector<16x16x8xf32>
    %43 = arith.addf %41, %42 : vector<16x16x8xf32>
    %44 = vector.shape_cast %43 : vector<16x16x8xf32> to vector<256x8xf32>
    %c0_20 = arith.constant 0 : index
    %c0_21 = arith.constant 0 : index
    %45 = vector.load %arg5[%c0_20, %c0_21] : memref<1x8xf32, #tpu.memory_space<vmem>>, vector<1x8xf32>
    %46 = vector.broadcast %45 : vector<1x8xf32> to vector<256x8xf32>
    %47 = arith.mulf %44, %46 : vector<256x8xf32>
    %c0_22 = arith.constant 0 : index
    %c0_23 = arith.constant 0 : index
    %48 = vector.load %arg6[%c0_22, %c0_23] : memref<1x8xf32, #tpu.memory_space<vmem>>, vector<1x8xf32>
    %49 = vector.broadcast %48 : vector<1x8xf32> to vector<256x8xf32>
    %50 = arith.addf %47, %49 : vector<256x8xf32>
    %cst_24 = arith.constant 0.000000e+00 : f32
    %51 = vector.broadcast %cst_24 : f32 to vector<256x8xf32>
    %52 = arith.maximumf %50, %51 : vector<256x8xf32>
    %cst_25 = arith.constant 0.000000e+00 : f32
    %53 = vector.broadcast %cst_25 : f32 to vector<20x20x48xf32>
    %c0_26 = arith.constant 0 : index
    %c0_27 = arith.constant 0 : index
    %c0_28 = arith.constant 0 : index
    %54 = vector.load %arg18[%c0_26, %c0_27, %c0_28] : memref<20x20x48xf32, #tpu.memory_space<vmem>>, vector<20x20x48xf32>
    tpu.vector_store %arg18[%c0_26, %c0_27, %c0_28], %53 {strides = array<i32>} : memref<20x20x48xf32, #tpu.memory_space<vmem>>, vector<20x20x48xf32>,
    %c2 = arith.constant 2 : index
    %c2_29 = arith.constant 2 : index
    %c0_30 = arith.constant 0 : index
    %55 = vector.load %arg18[%c2, %c2_29, %c0_30] : memref<20x20x48xf32, #tpu.memory_space<vmem>>, vector<16x16x48xf32>
    tpu.vector_store %arg18[%c2, %c2_29, %c0_30], %16 {strides = array<i32>} : memref<20x20x48xf32, #tpu.memory_space<vmem>>, vector<16x16x48xf32>,
    %c0_31 = arith.constant 0 : index
    %c0_32 = arith.constant 0 : index
    %c0_33 = arith.constant 0 : index
    %56 = vector.load %arg18[%c0_31, %c0_32, %c0_33] : memref<20x20x48xf32, #tpu.memory_space<vmem>>, vector<20x20x48xf32>
    %cst_34 = arith.constant 0.000000e+00 : f32
    %57 = vector.broadcast %cst_34 : f32 to vector<256x64xf32>
    %58 = vector.extract_strided_slice %56 {offsets = [0, 0, 0], sizes = [16, 16, 48], strides = [1, 1, 1]} : vector<20x20x48xf32> to vector<16x16x48xf32>
    %59 = vector.extract_strided_slice %56 {offsets = [0, 1, 0], sizes = [16, 16, 48], strides = [1, 1, 1]} : vector<20x20x48xf32> to vector<16x16x48xf32>
    %60 = vector.extract_strided_slice %56 {offsets = [0, 2, 0], sizes = [16, 16, 48], strides = [1, 1, 1]} : vector<20x20x48xf32> to vector<16x16x48xf32>
    %61 = vector.extract_strided_slice %56 {offsets = [0, 3, 0], sizes = [16, 16, 48], strides = [1, 1, 1]} : vector<20x20x48xf32> to vector<16x16x48xf32>
    %62 = vector.extract_strided_slice %56 {offsets = [0, 4, 0], sizes = [16, 16, 48], strides = [1, 1, 1]} : vector<20x20x48xf32> to vector<16x16x48xf32>
    %63 = tpu.concatenate %58, %59, %60, %61, %62 in 2 : vector<16x16x48xf32>, vector<16x16x48xf32>, vector<16x16x48xf32>, vector<16x16x48xf32>, vector<16x16x48xf32> -> vector<16x16x240xf32>
    %64 = vector.shape_cast %63 : vector<16x16x240xf32> to vector<256x240xf32>
    %c0_35 = arith.constant 0 : index
    %c0_36 = arith.constant 0 : index
    %c0_37 = arith.constant 0 : index
    %65 = vector.load %arg7[%c0_35, %c0_36, %c0_37] : memref<5x240x64xf32, #tpu.memory_space<vmem>>, vector<1x240x64xf32>
    %66 = vector.shape_cast %65 : vector<1x240x64xf32> to vector<240x64xf32>
    %cst_38 = arith.constant dense<0.000000e+00> : vector<256x64xf32>
    %67 = tpu.matmul %64, %66, %cst_38 {dimension_numbers = #tpu.dot_dimension_numbers<[1], [0], [0], [1], [0, 0, 1, 1], [], []>} : vector<256x240xf32>, vector<240x64xf32>, vector<256x64xf32> -> vector<256x64xf32>
    %68 = arith.addf %57, %67 : vector<256x64xf32>
    %69 = vector.extract_strided_slice %56 {offsets = [1, 0, 0], sizes = [16, 16, 48], strides = [1, 1, 1]} : vector<20x20x48xf32> to vector<16x16x48xf32>
    %70 = vector.extract_strided_slice %56 {offsets = [1, 1, 0], sizes = [16, 16, 48], strides = [1, 1, 1]} : vector<20x20x48xf32> to vector<16x16x48xf32>
    %71 = vector.extract_strided_slice %56 {offsets = [1, 2, 0], sizes = [16, 16, 48], strides = [1, 1, 1]} : vector<20x20x48xf32> to vector<16x16x48xf32>
    %72 = vector.extract_strided_slice %56 {offsets = [1, 3, 0], sizes = [16, 16, 48], strides = [1, 1, 1]} : vector<20x20x48xf32> to vector<16x16x48xf32>
    %73 = vector.extract_strided_slice %56 {offsets = [1, 4, 0], sizes = [16, 16, 48], strides = [1, 1, 1]} : vector<20x20x48xf32> to vector<16x16x48xf32>
    %74 = tpu.concatenate %69, %70, %71, %72, %73 in 2 : vector<16x16x48xf32>, vector<16x16x48xf32>, vector<16x16x48xf32>, vector<16x16x48xf32>, vector<16x16x48xf32> -> vector<16x16x240xf32>
    %75 = vector.shape_cast %74 : vector<16x16x240xf32> to vector<256x240xf32>
    %c1_39 = arith.constant 1 : index
    %c0_40 = arith.constant 0 : index
    %c0_41 = arith.constant 0 : index
    %76 = vector.load %arg7[%c1_39, %c0_40, %c0_41] : memref<5x240x64xf32, #tpu.memory_space<vmem>>, vector<1x240x64xf32>
    %77 = vector.shape_cast %76 : vector<1x240x64xf32> to vector<240x64xf32>
    %cst_42 = arith.constant dense<0.000000e+00> : vector<256x64xf32>
    %78 = tpu.matmul %75, %77, %cst_42 {dimension_numbers = #tpu.dot_dimension_numbers<[1], [0], [0], [1], [0, 0, 1, 1], [], []>} : vector<256x240xf32>, vector<240x64xf32>, vector<256x64xf32> -> vector<256x64xf32>
    %79 = arith.addf %68, %78 : vector<256x64xf32>
    %80 = vector.extract_strided_slice %56 {offsets = [2, 0, 0], sizes = [16, 16, 48], strides = [1, 1, 1]} : vector<20x20x48xf32> to vector<16x16x48xf32>
    %81 = vector.extract_strided_slice %56 {offsets = [2, 1, 0], sizes = [16, 16, 48], strides = [1, 1, 1]} : vector<20x20x48xf32> to vector<16x16x48xf32>
    %82 = vector.extract_strided_slice %56 {offsets = [2, 2, 0], sizes = [16, 16, 48], strides = [1, 1, 1]} : vector<20x20x48xf32> to vector<16x16x48xf32>
    %83 = vector.extract_strided_slice %56 {offsets = [2, 3, 0], sizes = [16, 16, 48], strides = [1, 1, 1]} : vector<20x20x48xf32> to vector<16x16x48xf32>
    %84 = vector.extract_strided_slice %56 {offsets = [2, 4, 0], sizes = [16, 16, 48], strides = [1, 1, 1]} : vector<20x20x48xf32> to vector<16x16x48xf32>
    %85 = tpu.concatenate %80, %81, %82, %83, %84 in 2 : vector<16x16x48xf32>, vector<16x16x48xf32>, vector<16x16x48xf32>, vector<16x16x48xf32>, vector<16x16x48xf32> -> vector<16x16x240xf32>
    %86 = vector.shape_cast %85 : vector<16x16x240xf32> to vector<256x240xf32>
    %c2_43 = arith.constant 2 : index
    %c0_44 = arith.constant 0 : index
    %c0_45 = arith.constant 0 : index
    %87 = vector.load %arg7[%c2_43, %c0_44, %c0_45] : memref<5x240x64xf32, #tpu.memory_space<vmem>>, vector<1x240x64xf32>
    %88 = vector.shape_cast %87 : vector<1x240x64xf32> to vector<240x64xf32>
    %cst_46 = arith.constant dense<0.000000e+00> : vector<256x64xf32>
    %89 = tpu.matmul %86, %88, %cst_46 {dimension_numbers = #tpu.dot_dimension_numbers<[1], [0], [0], [1], [0, 0, 1, 1], [], []>} : vector<256x240xf32>, vector<240x64xf32>, vector<256x64xf32> -> vector<256x64xf32>
    %90 = arith.addf %79, %89 : vector<256x64xf32>
    %91 = vector.extract_strided_slice %56 {offsets = [3, 0, 0], sizes = [16, 16, 48], strides = [1, 1, 1]} : vector<20x20x48xf32> to vector<16x16x48xf32>
    %92 = vector.extract_strided_slice %56 {offsets = [3, 1, 0], sizes = [16, 16, 48], strides = [1, 1, 1]} : vector<20x20x48xf32> to vector<16x16x48xf32>
    %93 = vector.extract_strided_slice %56 {offsets = [3, 2, 0], sizes = [16, 16, 48], strides = [1, 1, 1]} : vector<20x20x48xf32> to vector<16x16x48xf32>
    %94 = vector.extract_strided_slice %56 {offsets = [3, 3, 0], sizes = [16, 16, 48], strides = [1, 1, 1]} : vector<20x20x48xf32> to vector<16x16x48xf32>
    %95 = vector.extract_strided_slice %56 {offsets = [3, 4, 0], sizes = [16, 16, 48], strides = [1, 1, 1]} : vector<20x20x48xf32> to vector<16x16x48xf32>
    %96 = tpu.concatenate %91, %92, %93, %94, %95 in 2 : vector<16x16x48xf32>, vector<16x16x48xf32>, vector<16x16x48xf32>, vector<16x16x48xf32>, vector<16x16x48xf32> -> vector<16x16x240xf32>
    %97 = vector.shape_cast %96 : vector<16x16x240xf32> to vector<256x240xf32>
    %c3 = arith.constant 3 : index
    %c0_47 = arith.constant 0 : index
    %c0_48 = arith.constant 0 : index
    %98 = vector.load %arg7[%c3, %c0_47, %c0_48] : memref<5x240x64xf32, #tpu.memory_space<vmem>>, vector<1x240x64xf32>
    %99 = vector.shape_cast %98 : vector<1x240x64xf32> to vector<240x64xf32>
    %cst_49 = arith.constant dense<0.000000e+00> : vector<256x64xf32>
    %100 = tpu.matmul %97, %99, %cst_49 {dimension_numbers = #tpu.dot_dimension_numbers<[1], [0], [0], [1], [0, 0, 1, 1], [], []>} : vector<256x240xf32>, vector<240x64xf32>, vector<256x64xf32> -> vector<256x64xf32>
    %101 = arith.addf %90, %100 : vector<256x64xf32>
    %102 = vector.extract_strided_slice %56 {offsets = [4, 0, 0], sizes = [16, 16, 48], strides = [1, 1, 1]} : vector<20x20x48xf32> to vector<16x16x48xf32>
    %103 = vector.extract_strided_slice %56 {offsets = [4, 1, 0], sizes = [16, 16, 48], strides = [1, 1, 1]} : vector<20x20x48xf32> to vector<16x16x48xf32>
    %104 = vector.extract_strided_slice %56 {offsets = [4, 2, 0], sizes = [16, 16, 48], strides = [1, 1, 1]} : vector<20x20x48xf32> to vector<16x16x48xf32>
    %105 = vector.extract_strided_slice %56 {offsets = [4, 3, 0], sizes = [16, 16, 48], strides = [1, 1, 1]} : vector<20x20x48xf32> to vector<16x16x48xf32>
    %106 = vector.extract_strided_slice %56 {offsets = [4, 4, 0], sizes = [16, 16, 48], strides = [1, 1, 1]} : vector<20x20x48xf32> to vector<16x16x48xf32>
    %107 = tpu.concatenate %102, %103, %104, %105, %106 in 2 : vector<16x16x48xf32>, vector<16x16x48xf32>, vector<16x16x48xf32>, vector<16x16x48xf32>, vector<16x16x48xf32> -> vector<16x16x240xf32>
    %108 = vector.shape_cast %107 : vector<16x16x240xf32> to vector<256x240xf32>
    %c4 = arith.constant 4 : index
    %c0_50 = arith.constant 0 : index
    %c0_51 = arith.constant 0 : index
    %109 = vector.load %arg7[%c4, %c0_50, %c0_51] : memref<5x240x64xf32, #tpu.memory_space<vmem>>, vector<1x240x64xf32>
    %110 = vector.shape_cast %109 : vector<1x240x64xf32> to vector<240x64xf32>
    %cst_52 = arith.constant dense<0.000000e+00> : vector<256x64xf32>
    %111 = tpu.matmul %108, %110, %cst_52 {dimension_numbers = #tpu.dot_dimension_numbers<[1], [0], [0], [1], [0, 0, 1, 1], [], []>} : vector<256x240xf32>, vector<240x64xf32>, vector<256x64xf32> -> vector<256x64xf32>
    %112 = arith.addf %101, %111 : vector<256x64xf32>
    %c0_53 = arith.constant 0 : index
    %c0_54 = arith.constant 0 : index
    %113 = vector.load %arg8[%c0_53, %c0_54] : memref<1x64xf32, #tpu.memory_space<vmem>>, vector<1x64xf32>
    %114 = vector.broadcast %113 : vector<1x64xf32> to vector<256x64xf32>
    %115 = arith.mulf %112, %114 : vector<256x64xf32>
    %c0_55 = arith.constant 0 : index
    %c0_56 = arith.constant 0 : index
    %116 = vector.load %arg9[%c0_55, %c0_56] : memref<1x64xf32, #tpu.memory_space<vmem>>, vector<1x64xf32>
    %117 = vector.broadcast %116 : vector<1x64xf32> to vector<256x64xf32>
    %118 = arith.addf %115, %117 : vector<256x64xf32>
    %cst_57 = arith.constant 0.000000e+00 : f32
    %119 = vector.broadcast %cst_57 : f32 to vector<256x64xf32>
    %120 = arith.maximumf %118, %119 : vector<256x64xf32>
    %cst_58 = arith.constant 0.000000e+00 : f32
    %121 = vector.broadcast %cst_58 : f32 to vector<18x18x64xf32>
    %c0_59 = arith.constant 0 : index
    %c0_60 = arith.constant 0 : index
    %c0_61 = arith.constant 0 : index
    %122 = vector.load %arg19[%c0_59, %c0_60, %c0_61] : memref<18x18x64xf32, #tpu.memory_space<vmem>>, vector<18x18x64xf32>
    tpu.vector_store %arg19[%c0_59, %c0_60, %c0_61], %121 {strides = array<i32>} : memref<18x18x64xf32, #tpu.memory_space<vmem>>, vector<18x18x64xf32>,
    %c1_62 = arith.constant 1 : index
    %c1_63 = arith.constant 1 : index
    %c0_64 = arith.constant 0 : index
    %123 = vector.load %arg19[%c1_62, %c1_63, %c0_64] : memref<18x18x64xf32, #tpu.memory_space<vmem>>, vector<16x16x64xf32>
    tpu.vector_store %arg19[%c1_62, %c1_63, %c0_64], %18 {strides = array<i32>} : memref<18x18x64xf32, #tpu.memory_space<vmem>>, vector<16x16x64xf32>,
    %c0_65 = arith.constant 0 : index
    %c0_66 = arith.constant 0 : index
    %c0_67 = arith.constant 0 : index
    %124 = vector.load %arg19[%c0_65, %c0_66, %c0_67] : memref<18x18x64xf32, #tpu.memory_space<vmem>>, vector<18x18x64xf32>
    %cst_68 = arith.constant 0.000000e+00 : f32
    %125 = vector.broadcast %cst_68 : f32 to vector<256x96xf32>
    %126 = vector.extract_strided_slice %124 {offsets = [0, 0, 0], sizes = [16, 16, 64], strides = [1, 1, 1]} : vector<18x18x64xf32> to vector<16x16x64xf32>
    %127 = vector.extract_strided_slice %124 {offsets = [0, 1, 0], sizes = [16, 16, 64], strides = [1, 1, 1]} : vector<18x18x64xf32> to vector<16x16x64xf32>
    %128 = vector.extract_strided_slice %124 {offsets = [0, 2, 0], sizes = [16, 16, 64], strides = [1, 1, 1]} : vector<18x18x64xf32> to vector<16x16x64xf32>
    %129 = tpu.concatenate %126, %127, %128 in 2 : vector<16x16x64xf32>, vector<16x16x64xf32>, vector<16x16x64xf32> -> vector<16x16x192xf32>
    %130 = vector.shape_cast %129 : vector<16x16x192xf32> to vector<256x192xf32>
    %c0_69 = arith.constant 0 : index
    %c0_70 = arith.constant 0 : index
    %c0_71 = arith.constant 0 : index
    %131 = vector.load %arg10[%c0_69, %c0_70, %c0_71] : memref<3x192x96xf32, #tpu.memory_space<vmem>>, vector<1x192x96xf32>
    %132 = vector.shape_cast %131 : vector<1x192x96xf32> to vector<192x96xf32>
    %cst_72 = arith.constant dense<0.000000e+00> : vector<256x96xf32>
    %133 = tpu.matmul %130, %132, %cst_72 {dimension_numbers = #tpu.dot_dimension_numbers<[1], [0], [0], [1], [0, 0, 1, 1], [], []>} : vector<256x192xf32>, vector<192x96xf32>, vector<256x96xf32> -> vector<256x96xf32>
    %134 = arith.addf %125, %133 : vector<256x96xf32>
    %135 = vector.extract_strided_slice %124 {offsets = [1, 0, 0], sizes = [16, 16, 64], strides = [1, 1, 1]} : vector<18x18x64xf32> to vector<16x16x64xf32>
    %136 = vector.extract_strided_slice %124 {offsets = [1, 1, 0], sizes = [16, 16, 64], strides = [1, 1, 1]} : vector<18x18x64xf32> to vector<16x16x64xf32>
    %137 = vector.extract_strided_slice %124 {offsets = [1, 2, 0], sizes = [16, 16, 64], strides = [1, 1, 1]} : vector<18x18x64xf32> to vector<16x16x64xf32>
    %138 = tpu.concatenate %135, %136, %137 in 2 : vector<16x16x64xf32>, vector<16x16x64xf32>, vector<16x16x64xf32> -> vector<16x16x192xf32>
    %139 = vector.shape_cast %138 : vector<16x16x192xf32> to vector<256x192xf32>
    %c1_73 = arith.constant 1 : index
    %c0_74 = arith.constant 0 : index
    %c0_75 = arith.constant 0 : index
    %140 = vector.load %arg10[%c1_73, %c0_74, %c0_75] : memref<3x192x96xf32, #tpu.memory_space<vmem>>, vector<1x192x96xf32>
    %141 = vector.shape_cast %140 : vector<1x192x96xf32> to vector<192x96xf32>
    %cst_76 = arith.constant dense<0.000000e+00> : vector<256x96xf32>
    %142 = tpu.matmul %139, %141, %cst_76 {dimension_numbers = #tpu.dot_dimension_numbers<[1], [0], [0], [1], [0, 0, 1, 1], [], []>} : vector<256x192xf32>, vector<192x96xf32>, vector<256x96xf32> -> vector<256x96xf32>
    %143 = arith.addf %134, %142 : vector<256x96xf32>
    %144 = vector.extract_strided_slice %124 {offsets = [2, 0, 0], sizes = [16, 16, 64], strides = [1, 1, 1]} : vector<18x18x64xf32> to vector<16x16x64xf32>
    %145 = vector.extract_strided_slice %124 {offsets = [2, 1, 0], sizes = [16, 16, 64], strides = [1, 1, 1]} : vector<18x18x64xf32> to vector<16x16x64xf32>
    %146 = vector.extract_strided_slice %124 {offsets = [2, 2, 0], sizes = [16, 16, 64], strides = [1, 1, 1]} : vector<18x18x64xf32> to vector<16x16x64xf32>
    %147 = tpu.concatenate %144, %145, %146 in 2 : vector<16x16x64xf32>, vector<16x16x64xf32>, vector<16x16x64xf32> -> vector<16x16x192xf32>
    %148 = vector.shape_cast %147 : vector<16x16x192xf32> to vector<256x192xf32>
    %c2_77 = arith.constant 2 : index
    %c0_78 = arith.constant 0 : index
    %c0_79 = arith.constant 0 : index
    %149 = vector.load %arg10[%c2_77, %c0_78, %c0_79] : memref<3x192x96xf32, #tpu.memory_space<vmem>>, vector<1x192x96xf32>
    %150 = vector.shape_cast %149 : vector<1x192x96xf32> to vector<192x96xf32>
    %cst_80 = arith.constant dense<0.000000e+00> : vector<256x96xf32>
    %151 = tpu.matmul %148, %150, %cst_80 {dimension_numbers = #tpu.dot_dimension_numbers<[1], [0], [0], [1], [0, 0, 1, 1], [], []>} : vector<256x192xf32>, vector<192x96xf32>, vector<256x96xf32> -> vector<256x96xf32>
    %152 = arith.addf %143, %151 : vector<256x96xf32>
    %c0_81 = arith.constant 0 : index
    %c0_82 = arith.constant 0 : index
    %153 = vector.load %arg11[%c0_81, %c0_82] : memref<1x96xf32, #tpu.memory_space<vmem>>, vector<1x96xf32>
    %154 = vector.broadcast %153 : vector<1x96xf32> to vector<256x96xf32>
    %155 = arith.mulf %152, %154 : vector<256x96xf32>
    %c0_83 = arith.constant 0 : index
    %c0_84 = arith.constant 0 : index
    %156 = vector.load %arg12[%c0_83, %c0_84] : memref<1x96xf32, #tpu.memory_space<vmem>>, vector<1x96xf32>
    %157 = vector.broadcast %156 : vector<1x96xf32> to vector<256x96xf32>
    %158 = arith.addf %155, %157 : vector<256x96xf32>
    %cst_85 = arith.constant 0.000000e+00 : f32
    %159 = vector.broadcast %cst_85 : f32 to vector<256x96xf32>
    %160 = arith.maximumf %158, %159 : vector<256x96xf32>
    %cst_86 = arith.constant 0.000000e+00 : f32
    %161 = vector.broadcast %cst_86 : f32 to vector<18x18x96xf32>
    %c0_87 = arith.constant 0 : index
    %c0_88 = arith.constant 0 : index
    %c0_89 = arith.constant 0 : index
    %162 = vector.load %arg20[%c0_87, %c0_88, %c0_89] : memref<18x18x96xf32, #tpu.memory_space<vmem>>, vector<18x18x96xf32>
    tpu.vector_store %arg20[%c0_87, %c0_88, %c0_89], %161 {strides = array<i32>} : memref<18x18x96xf32, #tpu.memory_space<vmem>>, vector<18x18x96xf32>,
    %163 = vector.shape_cast %160 : vector<256x96xf32> to vector<16x16x96xf32>
    %c1_90 = arith.constant 1 : index
    %c1_91 = arith.constant 1 : index
    %c0_92 = arith.constant 0 : index
    %164 = vector.load %arg20[%c1_90, %c1_91, %c0_92] : memref<18x18x96xf32, #tpu.memory_space<vmem>>, vector<16x16x96xf32>
    tpu.vector_store %arg20[%c1_90, %c1_91, %c0_92], %163 {strides = array<i32>} : memref<18x18x96xf32, #tpu.memory_space<vmem>>, vector<16x16x96xf32>,
    %c0_93 = arith.constant 0 : index
    %c0_94 = arith.constant 0 : index
    %c0_95 = arith.constant 0 : index
    %165 = vector.load %arg20[%c0_93, %c0_94, %c0_95] : memref<18x18x96xf32, #tpu.memory_space<vmem>>, vector<18x18x96xf32>
    %cst_96 = arith.constant 0.000000e+00 : f32
    %166 = vector.broadcast %cst_96 : f32 to vector<256x96xf32>
    %167 = vector.extract_strided_slice %165 {offsets = [0, 0, 0], sizes = [16, 16, 96], strides = [1, 1, 1]} : vector<18x18x96xf32> to vector<16x16x96xf32>
    %168 = vector.extract_strided_slice %165 {offsets = [0, 1, 0], sizes = [16, 16, 96], strides = [1, 1, 1]} : vector<18x18x96xf32> to vector<16x16x96xf32>
    %169 = vector.extract_strided_slice %165 {offsets = [0, 2, 0], sizes = [16, 16, 96], strides = [1, 1, 1]} : vector<18x18x96xf32> to vector<16x16x96xf32>
    %170 = tpu.concatenate %167, %168, %169 in 2 : vector<16x16x96xf32>, vector<16x16x96xf32>, vector<16x16x96xf32> -> vector<16x16x288xf32>
    %171 = vector.shape_cast %170 : vector<16x16x288xf32> to vector<256x288xf32>
    %c0_97 = arith.constant 0 : index
    %c0_98 = arith.constant 0 : index
    %c0_99 = arith.constant 0 : index
    %172 = vector.load %arg13[%c0_97, %c0_98, %c0_99] : memref<3x288x96xf32, #tpu.memory_space<vmem>>, vector<1x288x96xf32>
    %173 = vector.shape_cast %172 : vector<1x288x96xf32> to vector<288x96xf32>
    %cst_100 = arith.constant dense<0.000000e+00> : vector<256x96xf32>
    %174 = tpu.matmul %171, %173, %cst_100 {dimension_numbers = #tpu.dot_dimension_numbers<[1], [0], [0], [1], [0, 0, 1, 1], [], []>} : vector<256x288xf32>, vector<288x96xf32>, vector<256x96xf32> -> vector<256x96xf32>
    %175 = arith.addf %166, %174 : vector<256x96xf32>
    %176 = vector.extract_strided_slice %165 {offsets = [1, 0, 0], sizes = [16, 16, 96], strides = [1, 1, 1]} : vector<18x18x96xf32> to vector<16x16x96xf32>
    %177 = vector.extract_strided_slice %165 {offsets = [1, 1, 0], sizes = [16, 16, 96], strides = [1, 1, 1]} : vector<18x18x96xf32> to vector<16x16x96xf32>
    %178 = vector.extract_strided_slice %165 {offsets = [1, 2, 0], sizes = [16, 16, 96], strides = [1, 1, 1]} : vector<18x18x96xf32> to vector<16x16x96xf32>
    %179 = tpu.concatenate %176, %177, %178 in 2 : vector<16x16x96xf32>, vector<16x16x96xf32>, vector<16x16x96xf32> -> vector<16x16x288xf32>
    %180 = vector.shape_cast %179 : vector<16x16x288xf32> to vector<256x288xf32>
    %c1_101 = arith.constant 1 : index
    %c0_102 = arith.constant 0 : index
    %c0_103 = arith.constant 0 : index
    %181 = vector.load %arg13[%c1_101, %c0_102, %c0_103] : memref<3x288x96xf32, #tpu.memory_space<vmem>>, vector<1x288x96xf32>
    %182 = vector.shape_cast %181 : vector<1x288x96xf32> to vector<288x96xf32>
    %cst_104 = arith.constant dense<0.000000e+00> : vector<256x96xf32>
    %183 = tpu.matmul %180, %182, %cst_104 {dimension_numbers = #tpu.dot_dimension_numbers<[1], [0], [0], [1], [0, 0, 1, 1], [], []>} : vector<256x288xf32>, vector<288x96xf32>, vector<256x96xf32> -> vector<256x96xf32>
    %184 = arith.addf %175, %183 : vector<256x96xf32>
    %185 = vector.extract_strided_slice %165 {offsets = [2, 0, 0], sizes = [16, 16, 96], strides = [1, 1, 1]} : vector<18x18x96xf32> to vector<16x16x96xf32>
    %186 = vector.extract_strided_slice %165 {offsets = [2, 1, 0], sizes = [16, 16, 96], strides = [1, 1, 1]} : vector<18x18x96xf32> to vector<16x16x96xf32>
    %187 = vector.extract_strided_slice %165 {offsets = [2, 2, 0], sizes = [16, 16, 96], strides = [1, 1, 1]} : vector<18x18x96xf32> to vector<16x16x96xf32>
    %188 = tpu.concatenate %185, %186, %187 in 2 : vector<16x16x96xf32>, vector<16x16x96xf32>, vector<16x16x96xf32> -> vector<16x16x288xf32>
    %189 = vector.shape_cast %188 : vector<16x16x288xf32> to vector<256x288xf32>
    %c2_105 = arith.constant 2 : index
    %c0_106 = arith.constant 0 : index
    %c0_107 = arith.constant 0 : index
    %190 = vector.load %arg13[%c2_105, %c0_106, %c0_107] : memref<3x288x96xf32, #tpu.memory_space<vmem>>, vector<1x288x96xf32>
    %191 = vector.shape_cast %190 : vector<1x288x96xf32> to vector<288x96xf32>
    %cst_108 = arith.constant dense<0.000000e+00> : vector<256x96xf32>
    %192 = tpu.matmul %189, %191, %cst_108 {dimension_numbers = #tpu.dot_dimension_numbers<[1], [0], [0], [1], [0, 0, 1, 1], [], []>} : vector<256x288xf32>, vector<288x96xf32>, vector<256x96xf32> -> vector<256x96xf32>
    %193 = arith.addf %184, %192 : vector<256x96xf32>
    %c0_109 = arith.constant 0 : index
    %c0_110 = arith.constant 0 : index
    %194 = vector.load %arg14[%c0_109, %c0_110] : memref<1x96xf32, #tpu.memory_space<vmem>>, vector<1x96xf32>
    %195 = vector.broadcast %194 : vector<1x96xf32> to vector<256x96xf32>
    %196 = arith.mulf %193, %195 : vector<256x96xf32>
    %c0_111 = arith.constant 0 : index
    %c0_112 = arith.constant 0 : index
    %197 = vector.load %arg15[%c0_111, %c0_112] : memref<1x96xf32, #tpu.memory_space<vmem>>, vector<1x96xf32>
    %198 = vector.broadcast %197 : vector<1x96xf32> to vector<256x96xf32>
    %199 = arith.addf %196, %198 : vector<256x96xf32>
    %cst_113 = arith.constant 0.000000e+00 : f32
    %200 = vector.broadcast %cst_113 : f32 to vector<256x96xf32>
    %201 = arith.maximumf %199, %200 : vector<256x96xf32>
    %202 = tpu.concatenate %14, %120, %201, %52 in 1 : vector<256x64xf32>, vector<256x64xf32>, vector<256x96xf32>, vector<256x8xf32> -> vector<256x232xf32>
    %203 = vector.shape_cast %202 : vector<256x232xf32> to vector<16x16x232xf32>
    %c0_114 = arith.constant 0 : index
    %c0_115 = arith.constant 0 : index
    %c0_116 = arith.constant 0 : index
    %c0_117 = arith.constant 0 : index
    %204 = vector.load %arg16[%c0_114, %c0_115, %c0_116, %c0_117] : memref<1x16x16x232xf32, #tpu.memory_space<vmem>>, vector<1x16x16x232xf32>
    %205 = vector.shape_cast %204 : vector<1x16x16x232xf32> to vector<16x16x232xf32>
    %206 = vector.shape_cast %203 : vector<16x16x232xf32> to vector<1x16x16x232xf32>
    tpu.vector_store %arg16[%c0_114, %c0_115, %c0_116, %c0_117], %206 {strides = array<i32>} : memref<1x16x16x232xf32, #tpu.memory_space<vmem>>, vector<1x16x16x232xf32>,
    return
  }
  func.func @transform_0(%arg0: i32) -> (i32, i32, i32, i32) {
    %c0_i32 = arith.constant 0 : i32
    %c0_i32_0 = arith.constant 0 : i32
    %c0_i32_1 = arith.constant 0 : i32
    %c0_i32_2 = arith.constant 0 : i32
    return %arg0, %c0_i32, %c0_i32_0, %c0_i32_1 : i32, i32, i32, i32
  }
  func.func @transform_1(%arg0: i32) -> (i32, i32) {
    %c0_i32 = arith.constant 0 : i32
    %c0_i32_0 = arith.constant 0 : i32
    %c0_i32_1 = arith.constant 0 : i32
    return %c0_i32, %c0_i32_0 : i32, i32
  }
  func.func @transform_2(%arg0: i32) -> (i32, i32) {
    %c0_i32 = arith.constant 0 : i32
    %c0_i32_0 = arith.constant 0 : i32
    %c0_i32_1 = arith.constant 0 : i32
    return %c0_i32, %c0_i32_0 : i32, i32
  }
  func.func @transform_3(%arg0: i32) -> (i32, i32) {
    %c0_i32 = arith.constant 0 : i32
    %c0_i32_0 = arith.constant 0 : i32
    %c0_i32_1 = arith.constant 0 : i32
    return %c0_i32, %c0_i32_0 : i32, i32
  }
  func.func @transform_4(%arg0: i32) -> (i32, i32) {
    %c0_i32 = arith.constant 0 : i32
    %c0_i32_0 = arith.constant 0 : i32
    %c0_i32_1 = arith.constant 0 : i32
    return %c0_i32, %c0_i32_0 : i32, i32
  }
  func.func @transform_5(%arg0: i32) -> (i32, i32) {
    %c0_i32 = arith.constant 0 : i32
    %c0_i32_0 = arith.constant 0 : i32
    %c0_i32_1 = arith.constant 0 : i32
    return %c0_i32, %c0_i32_0 : i32, i32
  }
  func.func @transform_6(%arg0: i32) -> (i32, i32, i32) {
    %c0_i32 = arith.constant 0 : i32
    %c0_i32_0 = arith.constant 0 : i32
    %c0_i32_1 = arith.constant 0 : i32
    %c0_i32_2 = arith.constant 0 : i32
    return %c0_i32, %c0_i32_0, %c0_i32_1 : i32, i32, i32
  }
  func.func @transform_7(%arg0: i32) -> (i32, i32) {
    %c0_i32 = arith.constant 0 : i32
    %c0_i32_0 = arith.constant 0 : i32
    %c0_i32_1 = arith.constant 0 : i32
    return %c0_i32, %c0_i32_0 : i32, i32
  }
  func.func @transform_8(%arg0: i32) -> (i32, i32) {
    %c0_i32 = arith.constant 0 : i32
    %c0_i32_0 = arith.constant 0 : i32
    %c0_i32_1 = arith.constant 0 : i32
    return %c0_i32, %c0_i32_0 : i32, i32
  }
  func.func @transform_9(%arg0: i32) -> (i32, i32, i32) {
    %c0_i32 = arith.constant 0 : i32
    %c0_i32_0 = arith.constant 0 : i32
    %c0_i32_1 = arith.constant 0 : i32
    %c0_i32_2 = arith.constant 0 : i32
    return %c0_i32, %c0_i32_0, %c0_i32_1 : i32, i32, i32
  }
  func.func @transform_10(%arg0: i32) -> (i32, i32) {
    %c0_i32 = arith.constant 0 : i32
    %c0_i32_0 = arith.constant 0 : i32
    %c0_i32_1 = arith.constant 0 : i32
    return %c0_i32, %c0_i32_0 : i32, i32
  }
  func.func @transform_11(%arg0: i32) -> (i32, i32) {
    %c0_i32 = arith.constant 0 : i32
    %c0_i32_0 = arith.constant 0 : i32
    %c0_i32_1 = arith.constant 0 : i32
    return %c0_i32, %c0_i32_0 : i32, i32
  }
  func.func @transform_12(%arg0: i32) -> (i32, i32, i32) {
    %c0_i32 = arith.constant 0 : i32
    %c0_i32_0 = arith.constant 0 : i32
    %c0_i32_1 = arith.constant 0 : i32
    %c0_i32_2 = arith.constant 0 : i32
    return %c0_i32, %c0_i32_0, %c0_i32_1 : i32, i32, i32
  }
  func.func @transform_13(%arg0: i32) -> (i32, i32) {
    %c0_i32 = arith.constant 0 : i32
    %c0_i32_0 = arith.constant 0 : i32
    %c0_i32_1 = arith.constant 0 : i32
    return %c0_i32, %c0_i32_0 : i32, i32
  }
  func.func @transform_14(%arg0: i32) -> (i32, i32) {
    %c0_i32 = arith.constant 0 : i32
    %c0_i32_0 = arith.constant 0 : i32
    %c0_i32_1 = arith.constant 0 : i32
    return %c0_i32, %c0_i32_0 : i32, i32
  }
  func.func @transform_15(%arg0: i32) -> (i32, i32, i32, i32) {
    %c0_i32 = arith.constant 0 : i32
    %c0_i32_0 = arith.constant 0 : i32
    %c0_i32_1 = arith.constant 0 : i32
    %c0_i32_2 = arith.constant 0 : i32
    return %arg0, %c0_i32, %c0_i32_0, %c0_i32_1 : i32, i32, i32, i32
  }
}

</mosaic_0001>

<llo_original>
// kernel: inception_a.1
$region0: #{inception_a.1}
  #allocation0 [shape = 'u32[]', space=smem, size = 0x4, offset = 0x4, fixed_abs, tag = 'smem constant byte address 0x4 - core index']
  #allocation1 [shape = 'u32[144,128]{1,0:T(1,128)}', space=vmem, size = 0x12000, scoped, tag = 'internal scratch']
  #allocation2 [shape = 'f32[18,18,8]{2,1,0:T(8,128)}', space=vmem, size = 0x36000, scoped, tag = 'scratch operand']
  #allocation3 [shape = 'f32[20,20,48]{2,1,0:T(8,128)}', space=vmem, size = 0x3c000, scoped, tag = 'scratch operand']
  #allocation4 [shape = 'f32[18,18,64]{2,1,0:T(8,128)}', space=vmem, size = 0x36000, scoped, tag = 'scratch operand']
  #allocation5 [shape = 'f32[18,18,96]{2,1,0:T(8,128)}', space=vmem, size = 0x36000, scoped, tag = 'scratch operand']
  %s0 = inlined_call_operand.vmem [shape: f32[2,16,16,4], index: 0, kind: input, shape index: {}]
  %s1 = inlined_call_operand.vmem [shape: f32[4,184], index: 1, kind: input, shape index: {}]
  %s2 = inlined_call_operand.vmem [shape: f32[1,176], index: 2, kind: input, shape index: {}]
  %s3 = inlined_call_operand.vmem [shape: f32[1,176], index: 3, kind: input, shape index: {}]
  %s4 = inlined_call_operand.vmem [shape: f32[1,8], index: 4, kind: input, shape index: {}]
  %s5 = inlined_call_operand.vmem [shape: f32[1,8], index: 5, kind: input, shape index: {}]
  %s6 = inlined_call_operand.vmem [shape: f32[5,240,64], index: 6, kind: input, shape index: {}]
  %s7 = inlined_call_operand.vmem [shape: f32[1,64], index: 7, kind: input, shape index: {}]
  %s8 = inlined_call_operand.vmem [shape: f32[1,64], index: 8, kind: input, shape index: {}]
  %s9 = inlined_call_operand.vmem [shape: f32[3,192,96], index: 9, kind: input, shape index: {}]
  %s10 = inlined_call_operand.vmem [shape: f32[1,96], index: 10, kind: input, shape index: {}]
  %s11 = inlined_call_operand.vmem [shape: f32[1,96], index: 11, kind: input, shape index: {}]
  %s12 = inlined_call_operand.vmem [shape: f32[3,288,96], index: 12, kind: input, shape index: {}]
  %s13 = inlined_call_operand.vmem [shape: f32[1,96], index: 13, kind: input, shape index: {}]
  %s14 = inlined_call_operand.vmem [shape: f32[1,96], index: 14, kind: input, shape index: {}]
  %s15 = inlined_call_operand.hbm [shape: f32[2,16,16,232], index: 15, kind: output, shape index: {}]
  %s16 = sld [smem:[#allocation0]]
  $region93: #{inception_a.1} parent=0
    _
  %s18 = ssub.s32 1, %s16
  %s19 = scalar_select 0, %s18, %s16
  $region1: #{inception_a.1} parent=0
    #allocation6 [shape = 'u8[524288]{0}', space=vmem, size = 0x80000, scoped, tag = 'output window, operand 0']
    #allocation7 [shape = 's32[2]{0}', space=sflag, size = 0x8, scoped, tag = 'scoped memory for inception_a.1']
    %20 = vsyncpa [#allocation7], 0
    %s21 = scalar_lea.sflag [#allocation7], 1
    %22 = vsyncpa %s21, 0
    loop: start=0, step=1, limit=4
    $region2: #{inception_a.1} parent=1 // loop_pre_header
      _
    $region3: #{inception_a.1} parent=1 // loop_header
      %s24 = sphi 0, %s28
      %p25 = scmp.ge.s32.totalorder %s24, 4
      %s34 = sphi 0, %s36
      %s37 = sphi 0, %s34
      %s38 = sphi 0, %s37
      %s54 = sphi 0, %s38
      %s58 = sphi 0, %s58
      %s60 = sphi 0, %s58
      %s61 = sphi 0, %s60
      %s75 = sphi 0, %s61
      %s79 = sphi 0, %s79
      %s81 = sphi 0, %s79
      %s82 = sphi 0, %s81
      %s96 = sphi 0, %s82
      %s100 = sphi 0, %s100
      %s102 = sphi 0, %s100
      %s103 = sphi 0, %s102
      %s117 = sphi 0, %s103
      %s121 = sphi 0, %s121
      %s123 = sphi 0, %s121
      %s124 = sphi 0, %s123
      %s138 = sphi 0, %s124
      %s142 = sphi 0, %s142
      %s144 = sphi 0, %s142
      %s145 = sphi 0, %s144
      %s159 = sphi 0, %s145
      %s163 = sphi 0, %s163
      %s165 = sphi 0, %s163
      %s166 = sphi 0, %s165
      %s180 = sphi 0, %s166
      %s184 = sphi 0, %s184
      %s186 = sphi 0, %s184
      %s187 = sphi 0, %s186
      %s201 = sphi 0, %s187
      %s205 = sphi 0, %s205
      %s207 = sphi 0, %s205
      %s208 = sphi 0, %s207
      %s222 = sphi 0, %s208
      %s226 = sphi 0, %s226
      %s228 = sphi 0, %s226
      %s229 = sphi 0, %s228
      %s243 = sphi 0, %s229
      %s247 = sphi 0, %s247
      %s249 = sphi 0, %s247
      %s250 = sphi 0, %s249
      %s264 = sphi 0, %s250
      %s268 = sphi 0, %s268
      %s270 = sphi 0, %s268
      %s271 = sphi 0, %s270
      %s285 = sphi 0, %s271
      %s289 = sphi 0, %s289
      %s291 = sphi 0, %s289
      %s292 = sphi 0, %s291
      %s306 = sphi 0, %s292
      %s310 = sphi 0, %s310
      %s312 = sphi 0, %s310
      %s313 = sphi 0, %s312
      %s327 = sphi 0, %s313
      %s331 = sphi 0, %s331
      %s333 = sphi 0, %s331
      %s334 = sphi 0, %s333
      %s348 = sphi 0, %s334
      %s354 = sphi 0, %s356
      %s357 = sphi 0, %s354
      %s358 = sphi 0, %s357
      %s374 = sphi 0, %s358
    $region4: #{inception_a.1} parent=1 // loop_header_branch
      %27 = sbr.rel (%p25) target = $region8
    $region5: #{inception_a.1} parent=1 // loop_body
      %s29 = ssub.s32 %s24, 1
      %s30 = ssub.s32 %s24, 2
      %s31 = sadd.s32 %s24, 1
      %s32 = ssub.s32 %s24, %s31
      %p33 = scmp.eq.s32.totalorder %s32, 0
      %s35 = sadd.s32 %s34, 1
      %s36 = scalar_select %p33, %s34, %s35
      %p39 = pneg %p33
      %p40 = scmp.eq.s32.totalorder %s24, 1
      %p41 = por %p39, %p40
      %p42 = scmp.ne.s32.totalorder %s34, %s37
      %p43 = scmp.eq.s32.totalorder %s24, 0
      %p44 = por %p42, %p43
      %p45 = scmp.ne.s32.totalorder %s34, %s37
      %p46 = scmp.eq.s32.totalorder %s29, 1
      %p47 = por %p45, %p46
      %p48 = scmp.ne.s32.totalorder %s37, %s38
      %p49 = scmp.eq.s32.totalorder %s29, 0
      %p50 = por %p48, %p49
      %p51 = scmp.ne.s32.totalorder %s37, %s38
      %p52 = scmp.eq.s32.totalorder %s30, 1
      %p53 = por %p51, %p52
      %p55 = scmp.ne.s32.totalorder %s38, %s54
      %p56 = scmp.eq.s32.totalorder %s30, 0
      %p57 = por %p55, %p56
      %s59 = sadd.s32 %s58, 1
      %p62 = scmp.eq.s32.totalorder %s24, 1
      %p63 = scmp.ne.s32.totalorder %s58, %s60
      %p64 = scmp.eq.s32.totalorder %s24, 0
      %p65 = por %p63, %p64
      %p66 = scmp.ne.s32.totalorder %s58, %s60
      %p67 = scmp.eq.s32.totalorder %s29, 1
      %p68 = por %p66, %p67
      %p69 = scmp.ne.s32.totalorder %s60, %s61
      %p70 = scmp.eq.s32.totalorder %s29, 0
      %p71 = por %p69, %p70
      %p72 = scmp.ne.s32.totalorder %s60, %s61
      %p73 = scmp.eq.s32.totalorder %s30, 1
      %p74 = por %p72, %p73
      %p76 = scmp.ne.s32.totalorder %s61, %s75
      %p77 = scmp.eq.s32.totalorder %s30, 0
      %p78 = por %p76, %p77
      %s80 = sadd.s32 %s79, 1
      %p83 = scmp.eq.s32.totalorder %s24, 1
      %p84 = scmp.ne.s32.totalorder %s79, %s81
      %p85 = scmp.eq.s32.totalorder %s24, 0
      %p86 = por %p84, %p85
      %p87 = scmp.ne.s32.totalorder %s79, %s81
      %p88 = scmp.eq.s32.totalorder %s29, 1
      %p89 = por %p87, %p88
      %p90 = scmp.ne.s32.totalorder %s81, %s82
      %p91 = scmp.eq.s32.totalorder %s29, 0
      %p92 = por %p90, %p91
      %p93 = scmp.ne.s32.totalorder %s81, %s82
      %p94 = scmp.eq.s32.totalorder %s30, 1
      %p95 = por %p93, %p94
      %p97 = scmp.ne.s32.totalorder %s82, %s96
      %p98 = scmp.eq.s32.totalorder %s30, 0
      %p99 = por %p97, %p98
      %s101 = sadd.s32 %s100, 1
      %p104 = scmp.eq.s32.totalorder %s24, 1
      %p105 = scmp.ne.s32.totalorder %s100, %s102
      %p106 = scmp.eq.s32.totalorder %s24, 0
      %p107 = por %p105, %p106
      %p108 = scmp.ne.s32.totalorder %s100, %s102
      %p109 = scmp.eq.s32.totalorder %s29, 1
      %p110 = por %p108, %p109
      %p111 = scmp.ne.s32.totalorder %s102, %s103
      %p112 = scmp.eq.s32.totalorder %s29, 0
      %p113 = por %p111, %p112
      %p114 = scmp.ne.s32.totalorder %s102, %s103
      %p115 = scmp.eq.s32.totalorder %s30, 1
      %p116 = por %p114, %p115
      %p118 = scmp.ne.s32.totalorder %s103, %s117
      %p119 = scmp.eq.s32.totalorder %s30, 0
      %p120 = por %p118, %p119
      %s122 = sadd.s32 %s121, 1
      %p125 = scmp.eq.s32.totalorder %s24, 1
      %p126 = scmp.ne.s32.totalorder %s121, %s123
      %p127 = scmp.eq.s32.totalorder %s24, 0
      %p128 = por %p126, %p127
      %p129 = scmp.ne.s32.totalorder %s121, %s123
      %p130 = scmp.eq.s32.totalorder %s29, 1
      %p131 = por %p129, %p130
      %p132 = scmp.ne.s32.totalorder %s123, %s124
      %p133 = scmp.eq.s32.totalorder %s29, 0
      %p134 = por %p132, %p133
      %p135 = scmp.ne.s32.totalorder %s123, %s124
      %p136 = scmp.eq.s32.totalorder %s30, 1
      %p137 = por %p135, %p136
      %p139 = scmp.ne.s32.totalorder %s124, %s138
      %p140 = scmp.eq.s32.totalorder %s30, 0
      %p141 = por %p139, %p140
      %s143 = sadd.s32 %s142, 1
      %p146 = scmp.eq.s32.totalorder %s24, 1
      %p147 = scmp.ne.s32.totalorder %s142, %s144
      %p148 = scmp.eq.s32.totalorder %s24, 0
      %p149 = por %p147, %p148
      %p150 = scmp.ne.s32.totalorder %s142, %s144
      %p151 = scmp.eq.s32.totalorder %s29, 1
      %p152 = por %p150, %p151
      %p153 = scmp.ne.s32.totalorder %s144, %s145
      %p154 = scmp.eq.s32.totalorder %s29, 0
      %p155 = por %p153, %p154
      %p156 = scmp.ne.s32.totalorder %s144, %s145
      %p157 = scmp.eq.s32.totalorder %s30, 1
      %p158 = por %p156, %p157
      %p160 = scmp.ne.s32.totalorder %s145, %s159
      %p161 = scmp.eq.s32.totalorder %s30, 0
      %p162 = por %p160, %p161
      %s164 = sadd.s32 %s163, 1
      %p167 = scmp.eq.s32.totalorder %s24, 1
      %p168 = scmp.ne.s32.totalorder %s163, %s165
      %p169 = scmp.eq.s32.totalorder %s24, 0
      %p170 = por %p168, %p169
      %p171 = scmp.ne.s32.totalorder %s163, %s165
      %p172 = scmp.eq.s32.totalorder %s29, 1
      %p173 = por %p171, %p172
      %p174 = scmp.ne.s32.totalorder %s165, %s166
      %p175 = scmp.eq.s32.totalorder %s29, 0
      %p176 = por %p174, %p175
      %p177 = scmp.ne.s32.totalorder %s165, %s166
      %p178 = scmp.eq.s32.totalorder %s30, 1
      %p179 = por %p177, %p178
      %p181 = scmp.ne.s32.totalorder %s166, %s180
      %p182 = scmp.eq.s32.totalorder %s30, 0
      %p183 = por %p181, %p182
      %s185 = sadd.s32 %s184, 1
      %p188 = scmp.eq.s32.totalorder %s24, 1
      %p189 = scmp.ne.s32.totalorder %s184, %s186
      %p190 = scmp.eq.s32.totalorder %s24, 0
      %p191 = por %p189, %p190
      %p192 = scmp.ne.s32.totalorder %s184, %s186
      %p193 = scmp.eq.s32.totalorder %s29, 1
      %p194 = por %p192, %p193
      %p195 = scmp.ne.s32.totalorder %s186, %s187
      %p196 = scmp.eq.s32.totalorder %s29, 0
      %p197 = por %p195, %p196
      %p198 = scmp.ne.s32.totalorder %s186, %s187
      %p199 = scmp.eq.s32.totalorder %s30, 1
      %p200 = por %p198, %p199
      %p202 = scmp.ne.s32.totalorder %s187, %s201
      %p203 = scmp.eq.s32.totalorder %s30, 0
      %p204 = por %p202, %p203
      %s206 = sadd.s32 %s205, 1
      %p209 = scmp.eq.s32.totalorder %s24, 1
      %p210 = scmp.ne.s32.totalorder %s205, %s207
      %p211 = scmp.eq.s32.totalorder %s24, 0
      %p212 = por %p210, %p211
      %p213 = scmp.ne.s32.totalorder %s205, %s207
      %p214 = scmp.eq.s32.totalorder %s29, 1
      %p215 = por %p213, %p214
      %p216 = scmp.ne.s32.totalorder %s207, %s208
      %p217 = scmp.eq.s32.totalorder %s29, 0
      %p218 = por %p216, %p217
      %p219 = scmp.ne.s32.totalorder %s207, %s208
      %p220 = scmp.eq.s32.totalorder %s30, 1
      %p221 = por %p219, %p220
      %p223 = scmp.ne.s32.totalorder %s208, %s222
      %p224 = scmp.eq.s32.totalorder %s30, 0
      %p225 = por %p223, %p224
      %s227 = sadd.s32 %s226, 1
      %p230 = scmp.eq.s32.totalorder %s24, 1
      %p231 = scmp.ne.s32.totalorder %s226, %s228
      %p232 = scmp.eq.s32.totalorder %s24, 0
      %p233 = por %p231, %p232
      %p234 = scmp.ne.s32.totalorder %s226, %s228
      %p235 = scmp.eq.s32.totalorder %s29, 1
      %p236 = por %p234, %p235
      %p237 = scmp.ne.s32.totalorder %s228, %s229
      %p238 = scmp.eq.s32.totalorder %s29, 0
      %p239 = por %p237, %p238
      %p240 = scmp.ne.s32.totalorder %s228, %s229
      %p241 = scmp.eq.s32.totalorder %s30, 1
      %p242 = por %p240, %p241
      %p244 = scmp.ne.s32.totalorder %s229, %s243
      %p245 = scmp.eq.s32.totalorder %s30, 0
      %p246 = por %p244, %p245
      %s248 = sadd.s32 %s247, 1
      %p251 = scmp.eq.s32.totalorder %s24, 1
      %p252 = scmp.ne.s32.totalorder %s247, %s249
      %p253 = scmp.eq.s32.totalorder %s24, 0
      %p254 = por %p252, %p253
      %p255 = scmp.ne.s32.totalorder %s247, %s249
      %p256 = scmp.eq.s32.totalorder %s29, 1
      %p257 = por %p255, %p256
      %p258 = scmp.ne.s32.totalorder %s249, %s250
      %p259 = scmp.eq.s32.totalorder %s29, 0
      %p260 = por %p258, %p259
      %p261 = scmp.ne.s32.totalorder %s249, %s250
      %p262 = scmp.eq.s32.totalorder %s30, 1
      %p263 = por %p261, %p262
      %p265 = scmp.ne.s32.totalorder %s250, %s264
      %p266 = scmp.eq.s32.totalorder %s30, 0
      %p267 = por %p265, %p266
      %s269 = sadd.s32 %s268, 1
      %p272 = scmp.eq.s32.totalorder %s24, 1
      %p273 = scmp.ne.s32.totalorder %s268, %s270
      %p274 = scmp.eq.s32.totalorder %s24, 0
      %p275 = por %p273, %p274
      %p276 = scmp.ne.s32.totalorder %s268, %s270
      %p277 = scmp.eq.s32.totalorder %s29, 1
      %p278 = por %p276, %p277
      %p279 = scmp.ne.s32.totalorder %s270, %s271
      %p280 = scmp.eq.s32.totalorder %s29, 0
      %p281 = por %p279, %p280
      %p282 = scmp.ne.s32.totalorder %s270, %s271
      %p283 = scmp.eq.s32.totalorder %s30, 1
      %p284 = por %p282, %p283
      %p286 = scmp.ne.s32.totalorder %s271, %s285
      %p287 = scmp.eq.s32.totalorder %s30, 0
      %p288 = por %p286, %p287
      %s290 = sadd.s32 %s289, 1
      %p293 = scmp.eq.s32.totalorder %s24, 1
      %p294 = scmp.ne.s32.totalorder %s289, %s291
      %p295 = scmp.eq.s32.totalorder %s24, 0
      %p296 = por %p294, %p295
      %p297 = scmp.ne.s32.totalorder %s289, %s291
      %p298 = scmp.eq.s32.totalorder %s29, 1
      %p299 = por %p297, %p298
      %p300 = scmp.ne.s32.totalorder %s291, %s292
      %p301 = scmp.eq.s32.totalorder %s29, 0
      %p302 = por %p300, %p301
      %p303 = scmp.ne.s32.totalorder %s291, %s292
      %p304 = scmp.eq.s32.totalorder %s30, 1
      %p305 = por %p303, %p304
      %p307 = scmp.ne.s32.totalorder %s292, %s306
      %p308 = scmp.eq.s32.totalorder %s30, 0
      %p309 = por %p307, %p308
      %s311 = sadd.s32 %s310, 1
      %p314 = scmp.eq.s32.totalorder %s24, 1
      %p315 = scmp.ne.s32.totalorder %s310, %s312
      %p316 = scmp.eq.s32.totalorder %s24, 0
      %p317 = por %p315, %p316
      %p318 = scmp.ne.s32.totalorder %s310, %s312
      %p319 = scmp.eq.s32.totalorder %s29, 1
      %p320 = por %p318, %p319
      %p321 = scmp.ne.s32.totalorder %s312, %s313
      %p322 = scmp.eq.s32.totalorder %s29, 0
      %p323 = por %p321, %p322
      %p324 = scmp.ne.s32.totalorder %s312, %s313
      %p325 = scmp.eq.s32.totalorder %s30, 1
      %p326 = por %p324, %p325
      %p328 = scmp.ne.s32.totalorder %s313, %s327
      %p329 = scmp.eq.s32.totalorder %s30, 0
      %p330 = por %p328, %p329
      %s332 = sadd.s32 %s331, 1
      %p335 = scmp.eq.s32.totalorder %s24, 1
      %p336 = scmp.ne.s32.totalorder %s331, %s333
      %p337 = scmp.eq.s32.totalorder %s24, 0
      %p338 = por %p336, %p337
      %p339 = scmp.ne.s32.totalorder %s331, %s333
      %p340 = scmp.eq.s32.totalorder %s29, 1
      %p341 = por %p339, %p340
      %p342 = scmp.ne.s32.totalorder %s333, %s334
      %p343 = scmp.eq.s32.totalorder %s29, 0
      %p344 = por %p342, %p343
      %p345 = scmp.ne.s32.totalorder %s333, %s334
      %p346 = scmp.eq.s32.totalorder %s30, 1
      %p347 = por %p345, %p346
      %p349 = scmp.ne.s32.totalorder %s334, %s348
      %p350 = scmp.eq.s32.totalorder %s30, 0
      %p351 = por %p349, %p350
      %s352 = ssub.s32 %s24, %s31
      %p353 = scmp.eq.s32.totalorder %s352, 0
      %s355 = sadd.s32 %s354, 1
      %s356 = scalar_select %p353, %s354, %s355
      %p359 = pneg %p353
      %p360 = scmp.eq.s32.totalorder %s24, 1
      %p361 = por %p359, %p360
      %p362 = scmp.ne.s32.totalorder %s354, %s357
      %p363 = scmp.eq.s32.totalorder %s24, 0
      %p364 = por %p362, %p363
      %p365 = scmp.ne.s32.totalorder %s354, %s357
      %p366 = scmp.eq.s32.totalorder %s29, 1
      %p367 = por %p365, %p366
      %p368 = scmp.ne.s32.totalorder %s357, %s358
      %p369 = scmp.eq.s32.totalorder %s29, 0
      %p370 = por %p368, %p369
      %p371 = scmp.ne.s32.totalorder %s357, %s358
      %p372 = scmp.eq.s32.totalorder %s30, 1
      %p373 = por %p371, %p372
      %p375 = scmp.ne.s32.totalorder %s358, %s374
      %p376 = scmp.eq.s32.totalorder %s30, 0
      %p377 = por %p375, %p376
      %p378 = scmp.le.s32.totalorder 1, %s24
      %p379 = scmp.lt.s32.totalorder %s24, 3
      %p380 = pnand %p378, %p379
      %p381 = pneg %p380
      // Predicated region
      $region9: #{inception_a.1} parent=5 // pred_check
        _
      $region10: #{inception_a.1} parent=5 // pred_check_branch
        %383 = sbr.rel (%p380) target = $region12
      $region11: #{inception_a.1} parent=5 // pred_region
        %s384 = ssub.s32 %s24, 1
        // Predicated region
        $region13: #{inception_a.1} parent=11 // pred_check
          %p385 = pneg %p71
        $region14: #{inception_a.1} parent=11 // pred_check_branch
          %387 = sbr.rel (%p385) target = $region16
        $region15: #{inception_a.1} parent=11 // pred_region
          _
        $region16: #{inception_a.1} parent=11 // pred_fallthru
          _
        // Predicated region
        $region17: #{inception_a.1} parent=11 // pred_check
          %p388 = pneg %p92
        $region18: #{inception_a.1} parent=11 // pred_check_branch
          %390 = sbr.rel (%p388) target = $region20
        $region19: #{inception_a.1} parent=11 // pred_region
          _
        $region20: #{inception_a.1} parent=11 // pred_fallthru
          _
        // Predicated region
        $region21: #{inception_a.1} parent=11 // pred_check
          %p391 = pneg %p113
        $region22: #{inception_a.1} parent=11 // pred_check_branch
          %393 = sbr.rel (%p391) target = $region24
        $region23: #{inception_a.1} parent=11 // pred_region
          _
        $region24: #{inception_a.1} parent=11 // pred_fallthru
          _
        // Predicated region
        $region25: #{inception_a.1} parent=11 // pred_check
          %p394 = pneg %p134
        $region26: #{inception_a.1} parent=11 // pred_check_branch
          %396 = sbr.rel (%p394) target = $region28
        $region27: #{inception_a.1} parent=11 // pred_region
          _
        $region28: #{inception_a.1} parent=11 // pred_fallthru
          _
        // Predicated region
        $region29: #{inception_a.1} parent=11 // pred_check
          %p397 = pneg %p155
        $region30: #{inception_a.1} parent=11 // pred_check_branch
          %399 = sbr.rel (%p397) target = $region32
        $region31: #{inception_a.1} parent=11 // pred_region
          _
        $region32: #{inception_a.1} parent=11 // pred_fallthru
          _
        // Predicated region
        $region33: #{inception_a.1} parent=11 // pred_check
          %p400 = pneg %p176
        $region34: #{inception_a.1} parent=11 // pred_check_branch
          %402 = sbr.rel (%p400) target = $region36
        $region35: #{inception_a.1} parent=11 // pred_region
          _
        $region36: #{inception_a.1} parent=11 // pred_fallthru
          _
        // Predicated region
        $region37: #{inception_a.1} parent=11 // pred_check
          %p403 = pneg %p197
        $region38: #{inception_a.1} parent=11 // pred_check_branch
          %405 = sbr.rel (%p403) target = $region40
        $region39: #{inception_a.1} parent=11 // pred_region
          _
        $region40: #{inception_a.1} parent=11 // pred_fallthru
          _
        // Predicated region
        $region41: #{inception_a.1} parent=11 // pred_check
          %p406 = pneg %p218
        $region42: #{inception_a.1} parent=11 // pred_check_branch
          %408 = sbr.rel (%p406) target = $region44
        $region43: #{inception_a.1} parent=11 // pred_region
          _
        $region44: #{inception_a.1} parent=11 // pred_fallthru
          _
        // Predicated region
        $region45: #{inception_a.1} parent=11 // pred_check
          %p409 = pneg %p239
        $region46: #{inception_a.1} parent=11 // pred_check_branch
          %411 = sbr.rel (%p409) target = $region48
        $region47: #{inception_a.1} parent=11 // pred_region
          _
        $region48: #{inception_a.1} parent=11 // pred_fallthru
          _
        // Predicated region
        $region49: #{inception_a.1} parent=11 // pred_check
          %p412 = pneg %p260
        $region50: #{inception_a.1} parent=11 // pred_check_branch
          %414 = sbr.rel (%p412) target = $region52
        $region51: #{inception_a.1} parent=11 // pred_region
          _
        $region52: #{inception_a.1} parent=11 // pred_fallthru
          _
        // Predicated region
        $region53: #{inception_a.1} parent=11 // pred_check
          %p415 = pneg %p281
        $region54: #{inception_a.1} parent=11 // pred_check_branch
          %417 = sbr.rel (%p415) target = $region56
        $region55: #{inception_a.1} parent=11 // pred_region
          _
        $region56: #{inception_a.1} parent=11 // pred_fallthru
          _
        // Predicated region
        $region57: #{inception_a.1} parent=11 // pred_check
          %p418 = pneg %p302
        $region58: #{inception_a.1} parent=11 // pred_check_branch
          %420 = sbr.rel (%p418) target = $region60
        $region59: #{inception_a.1} parent=11 // pred_region
          _
        $region60: #{inception_a.1} parent=11 // pred_fallthru
          _
        // Predicated region
        $region61: #{inception_a.1} parent=11 // pred_check
          %p421 = pneg %p323
        $region62: #{inception_a.1} parent=11 // pred_check_branch
          %423 = sbr.rel (%p421) target = $region64
        $region63: #{inception_a.1} parent=11 // pred_region
          _
        $region64: #{inception_a.1} parent=11 // pred_fallthru
          _
        // Predicated region
        $region65: #{inception_a.1} parent=11 // pred_check
          %p424 = pneg %p344
        $region66: #{inception_a.1} parent=11 // pred_check_branch
          %426 = sbr.rel (%p424) target = $region68
        $region67: #{inception_a.1} parent=11 // pred_region
          _
        $region68: #{inception_a.1} parent=11 // pred_fallthru
          _
      $region12: #{inception_a.1} parent=5 // pred_fallthru
        _
      %p427 = scmp.lt.s32.totalorder %s24, 2
      // Predicated region
      $region69: #{inception_a.1} parent=5 // pred_check
        %p428 = pneg %p427
      $region70: #{inception_a.1} parent=5 // pred_check_branch
        %430 = sbr.rel (%p428) target = $region72
      $region71: #{inception_a.1} parent=5 // pred_region
        // Predicated region
        $region73: #{inception_a.1} parent=71 // pred_check
          %p431 = pneg %p44
        $region74: #{inception_a.1} parent=71 // pred_check_branch
          %433 = sbr.rel (%p431) target = $region76
        $region75: #{inception_a.1} parent=71 // pred_region
          %p434 = scmp.lt.s32.totalorder %s24, 1
          %s435 = scalar_select %p434, %s24, 1
          %s436 = smul.addr %s435, 32
          %s437 = smul.addr %s436, 8
          %s438 = scalar_lea.vmem %s0, %s437
        $region76: #{inception_a.1} parent=71 // pred_fallthru
          _
      $region72: #{inception_a.1} parent=5 // pred_fallthru
        _
      %p439 = scmp.le.s32.totalorder 1, %s24
      %p440 = scmp.lt.s32.totalorder %s24, 3
      %p441 = pnand %p439, %p440
      %p442 = pneg %p441
      // Predicated region
      $region77: #{inception_a.1} parent=5 // pred_check
        _
      $region78: #{inception_a.1} parent=5 // pred_check_branch
        %444 = sbr.rel (%p441) target = $region80
      $region79: #{inception_a.1} parent=5 // pred_region
        %s445 = ssub.s32 %s24, 1
        %p446 = scmp.lt.s32.totalorder %s29, 1
        %s447 = scalar_select %p446, %s29, 1
        %s448 = smul.addr %s447, 32
        %s449 = smul.addr %s448, 8
        %s450 = scalar_lea.vmem %s0, %s449
        %p451 = pneg %p50
        %p452 = pneg %p47
        %p453 = pneg %p71
        %p454 = pneg %p68
        %p455 = pneg %p92
        %p456 = pneg %p89
        %p457 = pneg %p113
        %p458 = pneg %p110
        %p459 = pneg %p134
        %p460 = pneg %p131
        %p461 = pneg %p155
        %p462 = pneg %p152
        %p463 = pneg %p176
        %p464 = pneg %p173
        %p465 = pneg %p197
        %p466 = pneg %p194
        %p467 = pneg %p218
        %p468 = pneg %p215
        %p469 = pneg %p239
        %p470 = pneg %p236
        %p471 = pneg %p260
        %p472 = pneg %p257
        %p473 = pneg %p281
        %p474 = pneg %p278
        %p475 = pneg %p302
        %p476 = pneg %p299
        %p477 = pneg %p323
        %p478 = pneg %p320
        %p479 = pneg %p344
        %p480 = pneg %p341
        %p481 = pneg %p370
        %p482 = pneg %p367
        %s483 = sand.u32 %s357, 1
        %s484 = scalar_lea.sflag [#allocation7], %s483
        %s485 = sand.u32 %s357, 1
        %s486 = smul.addr %s485, 512
        %s487 = scalar_lea.vmem [#allocation6], %s486
        %p488 = scmp.lt.s32.totalorder %s29, 1
        %s489 = scalar_select %p488, %s29, 1
        %s490 = smul.addr %s489, 32
        %s491 = smul.addr %s490, 8
        %s492 = scalar_lea.vmem %s0, %s491
        %v493 = vld [vmem:[%s492] sm:$0xff]
        %v494 = vld [vmem:[%s492 + $0x8] sm:$0xff]
        %v495 = vld [vmem:[%s492 + $0x10] sm:$0xff]
        %v496 = vld [vmem:[%s492 + $0x18] sm:$0xff]
        %v497 = vld [vmem:[%s492 + $0x20] sm:$0xff]
        %v498 = vld [vmem:[%s492 + $0x28] sm:$0xff]
        %v499 = vld [vmem:[%s492 + $0x30] sm:$0xff]
        %v500 = vld [vmem:[%s492 + $0x38] sm:$0xff]
        %v501 = vld [vmem:[%s492 + $0x40] sm:$0xff]
        %v502 = vld [vmem:[%s492 + $0x48] sm:$0xff]
        %v503 = vld [vmem:[%s492 + $0x50] sm:$0xff]
        %v504 = vld [vmem:[%s492 + $0x58] sm:$0xff]
        %v505 = vld [vmem:[%s492 + $0x60] sm:$0xff]
        %v506 = vld [vmem:[%s492 + $0x68] sm:$0xff]
        %v507 = vld [vmem:[%s492 + $0x70] sm:$0xff]
        %v508 = vld [vmem:[%s492 + $0x78] sm:$0xff]
        %v509 = vld [vmem:[%s492 + $0x80] sm:$0xff]
        %v510 = vld [vmem:[%s492 + $0x88] sm:$0xff]
        %v511 = vld [vmem:[%s492 + $0x90] sm:$0xff]
        %v512 = vld [vmem:[%s492 + $0x98] sm:$0xff]
        %v513 = vld [vmem:[%s492 + $0xa0] sm:$0xff]
        %v514 = vld [vmem:[%s492 + $0xa8] sm:$0xff]
        %v515 = vld [vmem:[%s492 + $0xb0] sm:$0xff]
        %v516 = vld [vmem:[%s492 + $0xb8] sm:$0xff]
        %v517 = vld [vmem:[%s492 + $0xc0] sm:$0xff]
        %v518 = vld [vmem:[%s492 + $0xc8] sm:$0xff]
        %v519 = vld [vmem:[%s492 + $0xd0] sm:$0xff]
        %v520 = vld [vmem:[%s492 + $0xd8] sm:$0xff]
        %v521 = vld [vmem:[%s492 + $0xe0] sm:$0xff]
        %v522 = vld [vmem:[%s492 + $0xe8] sm:$0xff]
        %v523 = vld [vmem:[%s492 + $0xf0] sm:$0xff]
        %v524 = vld [vmem:[%s492 + $0xf8] sm:$0xff]
        %v525 = vld [vmem:[%s1] sm:$0xff]
        %v527 = vcombine.high %v525, %v525
        %vm528 = vcmask 31744
        %v530 = vsel %vm528, %v493, 0
        %v533 = vsel %vm528, %v494, 0
        %v536 = vsel %vm528, %v495, 0
        %v539 = vsel %vm528, %v496, 0
        %v542 = vsel %vm528, %v497, 0
        %v545 = vsel %vm528, %v498, 0
        %v548 = vsel %vm528, %v499, 0
        %v551 = vsel %vm528, %v500, 0
        %v554 = vsel %vm528, %v501, 0
        %v557 = vsel %vm528, %v502, 0
        %v560 = vsel %vm528, %v503, 0
        %v563 = vsel %vm528, %v504, 0
        %v566 = vsel %vm528, %v505, 0
        %v569 = vsel %vm528, %v506, 0
        %v572 = vsel %vm528, %v507, 0
        %v575 = vsel %vm528, %v508, 0
        %v578 = vsel %vm528, %v509, 0
        %v581 = vsel %vm528, %v510, 0
        %v584 = vsel %vm528, %v511, 0
        %v587 = vsel %vm528, %v512, 0
        %v590 = vsel %vm528, %v513, 0
        %v593 = vsel %vm528, %v514, 0
        %v596 = vsel %vm528, %v515, 0
        %v599 = vsel %vm528, %v516, 0
        %v602 = vsel %vm528, %v517, 0
        %v605 = vsel %vm528, %v518, 0
        %v608 = vsel %vm528, %v519, 0
        %v611 = vsel %vm528, %v520, 0
        %v614 = vsel %vm528, %v521, 0
        %v617 = vsel %vm528, %v522, 0
        %v620 = vsel %vm528, %v523, 0
        %v623 = vsel %vm528, %v524, 0
        %vm625 = vcmask 1043456
        %v626 = vsel %vm625, %v525, 0
        %v628 = vsel %vm625, %v527, 0
        %630 = vmatprep.subr.mxu0 0.0
        %631 = vmatpush1.msra.mxu0 0.0
        %632 = vmatprep.subr.mxu0 0.0
        %633 = vmatpush1.msra.mxu0 0.0
        %634 = vmatprep.subr.mxu0 0.0
        %635 = vmatpush1.msra.mxu0 0.0
        %636 = vmatprep.subr.mxu0 0.0
        %637 = vmatpush1.msra.mxu0 0.0
        %638 = vmatprep.subr.mxu0 0.0
        %639 = vmatpush1.msra.mxu0 0.0
        %640 = vmatprep.subr.mxu0 0.0
        %641 = vmatpush1.msra.mxu0 0.0
        %642 = vmatprep.subr.mxu0 0.0
        %643 = vmatpush1.msra.mxu0 0.0
        %644 = vmatprep.subr.mxu0 0.0
        %645 = vmatpush1.msra.mxu0 0.0
        %646 = vmatprep.subr.mxu0 0.0
        %647 = vmatpush1.msra.mxu0 0.0
        %648 = vmatprep.subr.mxu0 0.0
        %649 = vmatpush1.msra.mxu0 0.0
        %650 = vmatprep.subr.mxu0 0.0
        %651 = vmatpush1.msra.mxu0 0.0
        %652 = vmatprep.subr.mxu0 0.0
        %653 = vmatpush1.msra.mxu0 0.0
        %654 = vmatprep.subr.mxu0 0.0
        %655 = vmatpush1.msra.mxu0 0.0
        %656 = vmatprep.subr.mxu0 0.0
        %657 = vmatpush1.msra.mxu0 0.0
        %658 = vmatprep.subr.mxu0 0.0
        %659 = vmatpush1.msra.mxu0 0.0
        %660 = vmatprep.subr.mxu0 %v628
        %661 = vmatpush1.msra.mxu0 %v626
        %662 = vmatprep.subr.mxu0 0.0
        %663 = vmatpush2.msra.mxu0 0.0
        %664 = vmatprep.subr.mxu0 0.0
        %665 = vmatpush2.msra.mxu0 0.0
        %666 = vmatprep.subr.mxu0 0.0
        %667 = vmatpush2.msra.mxu0 0.0
        %668 = vmatprep.subr.mxu0 0.0
        %669 = vmatpush2.msra.mxu0 0.0
        %670 = vmatprep.subr.mxu0 0.0
        %671 = vmatpush2.msra.mxu0 0.0
        %672 = vmatprep.subr.mxu0 0.0
        %673 = vmatpush2.msra.mxu0 0.0
        %674 = vmatprep.subr.mxu0 0.0
        %675 = vmatpush2.msra.mxu0 0.0
        %676 = vmatprep.subr.mxu0 0.0
        %677 = vmatpush2.msra.mxu0 0.0
        %678 = vmatprep.subr.mxu0 0.0
        %679 = vmatpush2.msra.mxu0 0.0
        %680 = vmatprep.subr.mxu0 0.0
        %681 = vmatpush2.msra.mxu0 0.0
        %682 = vmatprep.subr.mxu0 0.0
        %683 = vmatpush2.msra.mxu0 0.0
        %684 = vmatprep.subr.mxu0 0.0
        %685 = vmatpush2.msra.mxu0 0.0
        %686 = vmatprep.subr.mxu0 0.0
        %687 = vmatpush2.msra.mxu0 0.0
        %688 = vmatprep.subr.mxu0 0.0
        %689 = vmatpush2.msra.mxu0 0.0
        %690 = vmatprep.subr.mxu0 0.0
        %691 = vmatpush2.msra.mxu0 0.0
        %692 = vmatprep.subr.mxu0 0.0
        %693 = vmatpush2.msra.mxu0 0.0
        %694 = vmatprep.mubr.f32.mxu0 0.0
        %695 = vmatmul.mubr.f32.gmra.mxu0 %v530
        %v696 = vpop.f32.mrf.mxu0
        %v697 = vadd.f32 0.0, %v696
        %v698 = vpop.f32.mrf.mxu0
        %v699 = vadd.f32 0.0, %v698
        %700 = vmatprep.mubr.f32.mxu0 0.0
        %701 = vmatmul.mubr.f32.gmra.mxu0 %v533
        %v702 = vpop.f32.mrf.mxu0
        %v703 = vadd.f32 0.0, %v702
        %v704 = vpop.f32.mrf.mxu0
        %v705 = vadd.f32 0.0, %v704
        %706 = vmatprep.mubr.f32.mxu0 0.0
        %707 = vmatmul.mubr.f32.gmra.mxu0 %v536
        %v708 = vpop.f32.mrf.mxu0
        %v709 = vadd.f32 0.0, %v708
        %v710 = vpop.f32.mrf.mxu0
        %v711 = vadd.f32 0.0, %v710
        %712 = vmatprep.mubr.f32.mxu0 0.0
        %713 = vmatmul.mubr.f32.gmra.mxu0 %v539
        %v714 = vpop.f32.mrf.mxu0
        %v715 = vadd.f32 0.0, %v714
        %v716 = vpop.f32.mrf.mxu0
        %v717 = vadd.f32 0.0, %v716
        %718 = vmatprep.mubr.f32.mxu0 0.0
        %719 = vmatmul.mubr.f32.gmra.mxu0 %v542
        %v720 = vpop.f32.mrf.mxu0
        %v721 = vadd.f32 0.0, %v720
        %v722 = vpop.f32.mrf.mxu0
        %v723 = vadd.f32 0.0, %v722
        %724 = vmatprep.mubr.f32.mxu0 0.0
        %725 = vmatmul.mubr.f32.gmra.mxu0 %v545
        %v726 = vpop.f32.mrf.mxu0
        %v727 = vadd.f32 0.0, %v726
        %v728 = vpop.f32.mrf.mxu0
        %v729 = vadd.f32 0.0, %v728
        %730 = vmatprep.mubr.f32.mxu0 0.0
        %731 = vmatmul.mubr.f32.gmra.mxu0 %v548
        %v732 = vpop.f32.mrf.mxu0
        %v733 = vadd.f32 0.0, %v732
        %v734 = vpop.f32.mrf.mxu0
        %v735 = vadd.f32 0.0, %v734
        %736 = vmatprep.mubr.f32.mxu0 0.0
        %737 = vmatmul.mubr.f32.gmra.mxu0 %v551
        %v738 = vpop.f32.mrf.mxu0
        %v739 = vadd.f32 0.0, %v738
        %v740 = vpop.f32.mrf.mxu0
        %v741 = vadd.f32 0.0, %v740
        %742 = vmatprep.mubr.f32.mxu0 0.0
        %743 = vmatmul.mubr.f32.gmra.mxu0 %v554
        %v744 = vpop.f32.mrf.mxu0
        %v745 = vadd.f32 0.0, %v744
        %v746 = vpop.f32.mrf.mxu0
        %v747 = vadd.f32 0.0, %v746
        %748 = vmatprep.mubr.f32.mxu0 0.0
        %749 = vmatmul.mubr.f32.gmra.mxu0 %v557
        %v750 = vpop.f32.mrf.mxu0
        %v751 = vadd.f32 0.0, %v750
        %v752 = vpop.f32.mrf.mxu0
        %v753 = vadd.f32 0.0, %v752
        %754 = vmatprep.mubr.f32.mxu0 0.0
        %755 = vmatmul.mubr.f32.gmra.mxu0 %v560
        %v756 = vpop.f32.mrf.mxu0
        %v757 = vadd.f32 0.0, %v756
        %v758 = vpop.f32.mrf.mxu0
        %v759 = vadd.f32 0.0, %v758
        %760 = vmatprep.mubr.f32.mxu0 0.0
        %761 = vmatmul.mubr.f32.gmra.mxu0 %v563
        %v762 = vpop.f32.mrf.mxu0
        %v763 = vadd.f32 0.0, %v762
        %v764 = vpop.f32.mrf.mxu0
        %v765 = vadd.f32 0.0, %v764
        %766 = vmatprep.mubr.f32.mxu0 0.0
        %767 = vmatmul.mubr.f32.gmra.mxu0 %v566
        %v768 = vpop.f32.mrf.mxu0
        %v769 = vadd.f32 0.0, %v768
        %v770 = vpop.f32.mrf.mxu0
        %v771 = vadd.f32 0.0, %v770
        %772 = vmatprep.mubr.f32.mxu0 0.0
        %773 = vmatmul.mubr.f32.gmra.mxu0 %v569
        %v774 = vpop.f32.mrf.mxu0
        %v775 = vadd.f32 0.0, %v774
        %v776 = vpop.f32.mrf.mxu0
        %v777 = vadd.f32 0.0, %v776
        %778 = vmatprep.mubr.f32.mxu0 0.0
        %779 = vmatmul.mubr.f32.gmra.mxu0 %v572
        %v780 = vpop.f32.mrf.mxu0
        %v781 = vadd.f32 0.0, %v780
        %v782 = vpop.f32.mrf.mxu0
        %v783 = vadd.f32 0.0, %v782
        %784 = vmatprep.mubr.f32.mxu0 0.0
        %785 = vmatmul.mubr.f32.gmra.mxu0 %v575
        %v786 = vpop.f32.mrf.mxu0
        %v787 = vadd.f32 0.0, %v786
        %v788 = vpop.f32.mrf.mxu0
        %v789 = vadd.f32 0.0, %v788
        %790 = vmatprep.mubr.f32.mxu0 0.0
        %791 = vmatmul.mubr.f32.gmra.mxu0 %v578
        %v792 = vpop.f32.mrf.mxu0
        %v793 = vadd.f32 0.0, %v792
        %v794 = vpop.f32.mrf.mxu0
        %v795 = vadd.f32 0.0, %v794
        %796 = vmatprep.mubr.f32.mxu0 0.0
        %797 = vmatmul.mubr.f32.gmra.mxu0 %v581
        %v798 = vpop.f32.mrf.mxu0
        %v799 = vadd.f32 0.0, %v798
        %v800 = vpop.f32.mrf.mxu0
        %v801 = vadd.f32 0.0, %v800
        %802 = vmatprep.mubr.f32.mxu0 0.0
        %803 = vmatmul.mubr.f32.gmra.mxu0 %v584
        %v804 = vpop.f32.mrf.mxu0
        %v805 = vadd.f32 0.0, %v804
        %v806 = vpop.f32.mrf.mxu0
        %v807 = vadd.f32 0.0, %v806
        %808 = vmatprep.mubr.f32.mxu0 0.0
        %809 = vmatmul.mubr.f32.gmra.mxu0 %v587
        %v810 = vpop.f32.mrf.mxu0
        %v811 = vadd.f32 0.0, %v810
        %v812 = vpop.f32.mrf.mxu0
        %v813 = vadd.f32 0.0, %v812
        %814 = vmatprep.mubr.f32.mxu0 0.0
        %815 = vmatmul.mubr.f32.gmra.mxu0 %v590
        %v816 = vpop.f32.mrf.mxu0
        %v817 = vadd.f32 0.0, %v816
        %v818 = vpop.f32.mrf.mxu0
        %v819 = vadd.f32 0.0, %v818
        %820 = vmatprep.mubr.f32.mxu0 0.0
        %821 = vmatmul.mubr.f32.gmra.mxu0 %v593
        %v822 = vpop.f32.mrf.mxu0
        %v823 = vadd.f32 0.0, %v822
        %v824 = vpop.f32.mrf.mxu0
        %v825 = vadd.f32 0.0, %v824
        %826 = vmatprep.mubr.f32.mxu0 0.0
        %827 = vmatmul.mubr.f32.gmra.mxu0 %v596
        %v828 = vpop.f32.mrf.mxu0
        %v829 = vadd.f32 0.0, %v828
        %v830 = vpop.f32.mrf.mxu0
        %v831 = vadd.f32 0.0, %v830
        %832 = vmatprep.mubr.f32.mxu0 0.0
        %833 = vmatmul.mubr.f32.gmra.mxu0 %v599
        %v834 = vpop.f32.mrf.mxu0
        %v835 = vadd.f32 0.0, %v834
        %v836 = vpop.f32.mrf.mxu0
        %v837 = vadd.f32 0.0, %v836
        %838 = vmatprep.mubr.f32.mxu0 0.0
        %839 = vmatmul.mubr.f32.gmra.mxu0 %v602
        %v840 = vpop.f32.mrf.mxu0
        %v841 = vadd.f32 0.0, %v840
        %v842 = vpop.f32.mrf.mxu0
        %v843 = vadd.f32 0.0, %v842
        %844 = vmatprep.mubr.f32.mxu0 0.0
        %845 = vmatmul.mubr.f32.gmra.mxu0 %v605
        %v846 = vpop.f32.mrf.mxu0
        %v847 = vadd.f32 0.0, %v846
        %v848 = vpop.f32.mrf.mxu0
        %v849 = vadd.f32 0.0, %v848
        %850 = vmatprep.mubr.f32.mxu0 0.0
        %851 = vmatmul.mubr.f32.gmra.mxu0 %v608
        %v852 = vpop.f32.mrf.mxu0
        %v853 = vadd.f32 0.0, %v852
        %v854 = vpop.f32.mrf.mxu0
        %v855 = vadd.f32 0.0, %v854
        %856 = vmatprep.mubr.f32.mxu0 0.0
        %857 = vmatmul.mubr.f32.gmra.mxu0 %v611
        %v858 = vpop.f32.mrf.mxu0
        %v859 = vadd.f32 0.0, %v858
        %v860 = vpop.f32.mrf.mxu0
        %v861 = vadd.f32 0.0, %v860
        %862 = vmatprep.mubr.f32.mxu0 0.0
        %863 = vmatmul.mubr.f32.gmra.mxu0 %v614
        %v864 = vpop.f32.mrf.mxu0
        %v865 = vadd.f32 0.0, %v864
        %v866 = vpop.f32.mrf.mxu0
        %v867 = vadd.f32 0.0, %v866
        %868 = vmatprep.mubr.f32.mxu0 0.0
        %869 = vmatmul.mubr.f32.gmra.mxu0 %v617
        %v870 = vpop.f32.mrf.mxu0
        %v871 = vadd.f32 0.0, %v870
        %v872 = vpop.f32.mrf.mxu0
        %v873 = vadd.f32 0.0, %v872
        %874 = vmatprep.mubr.f32.mxu0 0.0
        %875 = vmatmul.mubr.f32.gmra.mxu0 %v620
        %v876 = vpop.f32.mrf.mxu0
        %v877 = vadd.f32 0.0, %v876
        %v878 = vpop.f32.mrf.mxu0
        %v879 = vadd.f32 0.0, %v878
        %880 = vmatprep.mubr.f32.mxu0 0.0
        %881 = vmatmul.mubr.f32.gmra.mxu0 %v623
        %v882 = vpop.f32.mrf.mxu0
        %v883 = vadd.f32 0.0, %v882
        %v884 = vpop.f32.mrf.mxu0
        %v885 = vadd.f32 0.0, %v884
        %886 = vdwg.mxu0
        %v887 = vld [vmem:[%s2] sm:$0x3]
        %v889 = vlaneseq
        %v890 = vshrl.u32 %v889, 7
        %v891 = vsub.s32 0, %v890
        %v892 = vrot.slane %v887, %v891
        %v893 = vlaneseq
        %v894 = vshrl.u32 %v893, 7
        %v895 = vsub.s32 1, %v894
        %v896 = vrot.slane %v887, %v895
        %v899 = vmul.f32 %v697, %v892
        %v900 = vmul.f32 %v699, %v896
        %v901 = vmul.f32 %v703, %v892
        %v902 = vmul.f32 %v705, %v896
        %v903 = vmul.f32 %v709, %v892
        %v904 = vmul.f32 %v711, %v896
        %v905 = vmul.f32 %v715, %v892
        %v906 = vmul.f32 %v717, %v896
        %v907 = vmul.f32 %v721, %v892
        %v908 = vmul.f32 %v723, %v896
        %v909 = vmul.f32 %v727, %v892
        %v910 = vmul.f32 %v729, %v896
        %v911 = vmul.f32 %v733, %v892
        %v912 = vmul.f32 %v735, %v896
        %v913 = vmul.f32 %v739, %v892
        %v914 = vmul.f32 %v741, %v896
        %v915 = vmul.f32 %v745, %v892
        %v916 = vmul.f32 %v747, %v896
        %v917 = vmul.f32 %v751, %v892
        %v918 = vmul.f32 %v753, %v896
        %v919 = vmul.f32 %v757, %v892
        %v920 = vmul.f32 %v759, %v896
        %v921 = vmul.f32 %v763, %v892
        %v922 = vmul.f32 %v765, %v896
        %v923 = vmul.f32 %v769, %v892
        %v924 = vmul.f32 %v771, %v896
        %v925 = vmul.f32 %v775, %v892
        %v926 = vmul.f32 %v777, %v896
        %v927 = vmul.f32 %v781, %v892
        %v928 = vmul.f32 %v783, %v896
        %v929 = vmul.f32 %v787, %v892
        %v930 = vmul.f32 %v789, %v896
        %v931 = vmul.f32 %v793, %v892
        %v932 = vmul.f32 %v795, %v896
        %v933 = vmul.f32 %v799, %v892
        %v934 = vmul.f32 %v801, %v896
        %v935 = vmul.f32 %v805, %v892
        %v936 = vmul.f32 %v807, %v896
        %v937 = vmul.f32 %v811, %v892
        %v938 = vmul.f32 %v813, %v896
        %v939 = vmul.f32 %v817, %v892
        %v940 = vmul.f32 %v819, %v896
        %v941 = vmul.f32 %v823, %v892
        %v942 = vmul.f32 %v825, %v896
        %v943 = vmul.f32 %v829, %v892
        %v944 = vmul.f32 %v831, %v896
        %v945 = vmul.f32 %v835, %v892
        %v946 = vmul.f32 %v837, %v896
        %v947 = vmul.f32 %v841, %v892
        %v948 = vmul.f32 %v843, %v896
        %v949 = vmul.f32 %v847, %v892
        %v950 = vmul.f32 %v849, %v896
        %v951 = vmul.f32 %v853, %v892
        %v952 = vmul.f32 %v855, %v896
        %v953 = vmul.f32 %v859, %v892
        %v954 = vmul.f32 %v861, %v896
        %v955 = vmul.f32 %v865, %v892
        %v956 = vmul.f32 %v867, %v896
        %v957 = vmul.f32 %v871, %v892
        %v958 = vmul.f32 %v873, %v896
        %v959 = vmul.f32 %v877, %v892
        %v960 = vmul.f32 %v879, %v896
        %v961 = vmul.f32 %v883, %v892
        %v962 = vmul.f32 %v885, %v896
        %v963 = vld [vmem:[%s3] sm:$0x3]
        %v965 = vlaneseq
        %v966 = vshrl.u32 %v965, 7
        %v967 = vsub.s32 0, %v966
        %v968 = vrot.slane %v963, %v967
        %v969 = vlaneseq
        %v970 = vshrl.u32 %v969, 7
        %v971 = vsub.s32 1, %v970
        %v972 = vrot.slane %v963, %v971
        %v975 = vadd.f32 %v899, %v968
        %v976 = vadd.f32 %v900, %v972
        %v977 = vadd.f32 %v901, %v968
        %v978 = vadd.f32 %v902, %v972
        %v979 = vadd.f32 %v903, %v968
        %v980 = vadd.f32 %v904, %v972
        %v981 = vadd.f32 %v905, %v968
        %v982 = vadd.f32 %v906, %v972
        %v983 = vadd.f32 %v907, %v968
        %v984 = vadd.f32 %v908, %v972
        %v985 = vadd.f32 %v909, %v968
        %v986 = vadd.f32 %v910, %v972
        %v987 = vadd.f32 %v911, %v968
        %v988 = vadd.f32 %v912, %v972
        %v989 = vadd.f32 %v913, %v968
        %v990 = vadd.f32 %v914, %v972
        %v991 = vadd.f32 %v915, %v968
        %v992 = vadd.f32 %v916, %v972
        %v993 = vadd.f32 %v917, %v968
        %v994 = vadd.f32 %v918, %v972
        %v995 = vadd.f32 %v919, %v968
        %v996 = vadd.f32 %v920, %v972
        %v997 = vadd.f32 %v921, %v968
        %v998 = vadd.f32 %v922, %v972
        %v999 = vadd.f32 %v923, %v968
        %v1000 = vadd.f32 %v924, %v972
        %v1001 = vadd.f32 %v925, %v968
        %v1002 = vadd.f32 %v926, %v972
        %v1003 = vadd.f32 %v927, %v968
        %v1004 = vadd.f32 %v928, %v972
        %v1005 = vadd.f32 %v929, %v968
        %v1006 = vadd.f32 %v930, %v972
        %v1007 = vadd.f32 %v931, %v968
        %v1008 = vadd.f32 %v932, %v972
        %v1009 = vadd.f32 %v933, %v968
        %v1010 = vadd.f32 %v934, %v972
        %v1011 = vadd.f32 %v935, %v968
        %v1012 = vadd.f32 %v936, %v972
        %v1013 = vadd.f32 %v937, %v968
        %v1014 = vadd.f32 %v938, %v972
        %v1015 = vadd.f32 %v939, %v968
        %v1016 = vadd.f32 %v940, %v972
        %v1017 = vadd.f32 %v941, %v968
        %v1018 = vadd.f32 %v942, %v972
        %v1019 = vadd.f32 %v943, %v968
        %v1020 = vadd.f32 %v944, %v972
        %v1021 = vadd.f32 %v945, %v968
        %v1022 = vadd.f32 %v946, %v972
        %v1023 = vadd.f32 %v947, %v968
        %v1024 = vadd.f32 %v948, %v972
        %v1025 = vadd.f32 %v949, %v968
        %v1026 = vadd.f32 %v950, %v972
        %v1027 = vadd.f32 %v951, %v968
        %v1028 = vadd.f32 %v952, %v972
        %v1029 = vadd.f32 %v953, %v968
        %v1030 = vadd.f32 %v954, %v972
        %v1031 = vadd.f32 %v955, %v968
        %v1032 = vadd.f32 %v956, %v972
        %v1033 = vadd.f32 %v957, %v968
        %v1034 = vadd.f32 %v958, %v972
        %v1035 = vadd.f32 %v959, %v968
        %v1036 = vadd.f32 %v960, %v972
        %v1037 = vadd.f32 %v961, %v968
        %v1038 = vadd.f32 %v962, %v972
        %v1039 = vmax.f32 %v975, 0.0
        %v1040 = vmax.f32 %v976, 0.0
        %v1041 = vmax.f32 %v977, 0.0
        %v1042 = vmax.f32 %v978, 0.0
        %v1043 = vmax.f32 %v979, 0.0
        %v1044 = vmax.f32 %v980, 0.0
        %v1045 = vmax.f32 %v981, 0.0
        %v1046 = vmax.f32 %v982, 0.0
        %v1047 = vmax.f32 %v983, 0.0
        %v1048 = vmax.f32 %v984, 0.0
        %v1049 = vmax.f32 %v985, 0.0
        %v1050 = vmax.f32 %v986, 0.0
        %v1051 = vmax.f32 %v987, 0.0
        %v1052 = vmax.f32 %v988, 0.0
        %v1053 = vmax.f32 %v989, 0.0
        %v1054 = vmax.f32 %v990, 0.0
        %v1055 = vmax.f32 %v991, 0.0
        %v1056 = vmax.f32 %v992, 0.0
        %v1057 = vmax.f32 %v993, 0.0
        %v1058 = vmax.f32 %v994, 0.0
        %v1059 = vmax.f32 %v995, 0.0
        %v1060 = vmax.f32 %v996, 0.0
        %v1061 = vmax.f32 %v997, 0.0
        %v1062 = vmax.f32 %v998, 0.0
        %v1063 = vmax.f32 %v999, 0.0
        %v1064 = vmax.f32 %v1000, 0.0
        %v1065 = vmax.f32 %v1001, 0.0
        %v1066 = vmax.f32 %v1002, 0.0
        %v1067 = vmax.f32 %v1003, 0.0
        %v1068 = vmax.f32 %v1004, 0.0
        %v1069 = vmax.f32 %v1005, 0.0
        %v1070 = vmax.f32 %v1006, 0.0
        %v1071 = vmax.f32 %v1007, 0.0
        %v1072 = vmax.f32 %v1008, 0.0
        %v1073 = vmax.f32 %v1009, 0.0
        %v1074 = vmax.f32 %v1010, 0.0
        %v1075 = vmax.f32 %v1011, 0.0
        %v1076 = vmax.f32 %v1012, 0.0
        %v1077 = vmax.f32 %v1013, 0.0
        %v1078 = vmax.f32 %v1014, 0.0
        %v1079 = vmax.f32 %v1015, 0.0
        %v1080 = vmax.f32 %v1016, 0.0
        %v1081 = vmax.f32 %v1017, 0.0
        %v1082 = vmax.f32 %v1018, 0.0
        %v1083 = vmax.f32 %v1019, 0.0
        %v1084 = vmax.f32 %v1020, 0.0
        %v1085 = vmax.f32 %v1021, 0.0
        %v1086 = vmax.f32 %v1022, 0.0
        %v1087 = vmax.f32 %v1023, 0.0
        %v1088 = vmax.f32 %v1024, 0.0
        %v1089 = vmax.f32 %v1025, 0.0
        %v1090 = vmax.f32 %v1026, 0.0
        %v1091 = vmax.f32 %v1027, 0.0
        %v1092 = vmax.f32 %v1028, 0.0
        %v1093 = vmax.f32 %v1029, 0.0
        %v1094 = vmax.f32 %v1030, 0.0
        %v1095 = vmax.f32 %v1031, 0.0
        %v1096 = vmax.f32 %v1032, 0.0
        %v1097 = vmax.f32 %v1033, 0.0
        %v1098 = vmax.f32 %v1034, 0.0
        %v1099 = vmax.f32 %v1035, 0.0
        %v1100 = vmax.f32 %v1036, 0.0
        %v1101 = vmax.f32 %v1037, 0.0
        %v1102 = vmax.f32 %v1038, 0.0
        %vm1103 = vcmask 64512
        %1104 = vst.msk [vmem:[#allocation2] sm:$0xff] %vm1103, 0.0
        %1105 = vst.msk [vmem:[#allocation2 + $0x8] sm:$0xff] %vm1103, 0.0
        %vm1106 = vcmask 58368
        %1107 = vst.msk [vmem:[#allocation2 + $0x10] sm:$0x3] %vm1106, 0.0
        %1108 = vst.msk [vmem:[#allocation2 + $0x18] sm:$0xff] %vm1103, 0.0
        %1109 = vst.msk [vmem:[#allocation2 + $0x20] sm:$0xff] %vm1103, 0.0
        %1110 = vst.msk [vmem:[#allocation2 + $0x28] sm:$0x3] %vm1106, 0.0
        %1111 = vst.msk [vmem:[#allocation2 + $0x30] sm:$0xff] %vm1103, 0.0
        %1112 = vst.msk [vmem:[#allocation2 + $0x38] sm:$0xff] %vm1103, 0.0
        %1113 = vst.msk [vmem:[#allocation2 + $0x40] sm:$0x3] %vm1106, 0.0
        %1114 = vst.msk [vmem:[#allocation2 + $0x48] sm:$0xff] %vm1103, 0.0
        %1115 = vst.msk [vmem:[#allocation2 + $0x50] sm:$0xff] %vm1103, 0.0
        %1116 = vst.msk [vmem:[#allocation2 + $0x58] sm:$0x3] %vm1106, 0.0
        %1117 = vst.msk [vmem:[#allocation2 + $0x60] sm:$0xff] %vm1103, 0.0
        %1118 = vst.msk [vmem:[#allocation2 + $0x68] sm:$0xff] %vm1103, 0.0
        %1119 = vst.msk [vmem:[#allocation2 + $0x70] sm:$0x3] %vm1106, 0.0
        %1120 = vst.msk [vmem:[#allocation2 + $0x78] sm:$0xff] %vm1103, 0.0
        %1121 = vst.msk [vmem:[#allocation2 + $0x80] sm:$0xff] %vm1103, 0.0
        %1122 = vst.msk [vmem:[#allocation2 + $0x88] sm:$0x3] %vm1106, 0.0
        %1123 = vst.msk [vmem:[#allocation2 + $0x90] sm:$0xff] %vm1103, 0.0
        %1124 = vst.msk [vmem:[#allocation2 + $0x98] sm:$0xff] %vm1103, 0.0
        %1125 = vst.msk [vmem:[#allocation2 + $0xa0] sm:$0x3] %vm1106, 0.0
        %1126 = vst.msk [vmem:[#allocation2 + $0xa8] sm:$0xff] %vm1103, 0.0
        %1127 = vst.msk [vmem:[#allocation2 + $0xb0] sm:$0xff] %vm1103, 0.0
        %1128 = vst.msk [vmem:[#allocation2 + $0xb8] sm:$0x3] %vm1106, 0.0
        %1129 = vst.msk [vmem:[#allocation2 + $0xc0] sm:$0xff] %vm1103, 0.0
        %1130 = vst.msk [vmem:[#allocation2 + $0xc8] sm:$0xff] %vm1103, 0.0
        %1131 = vst.msk [vmem:[#allocation2 + $0xd0] sm:$0x3] %vm1106, 0.0
        %1132 = vst.msk [vmem:[#allocation2 + $0xd8] sm:$0xff] %vm1103, 0.0
        %1133 = vst.msk [vmem:[#allocation2 + $0xe0] sm:$0xff] %vm1103, 0.0
        %1134 = vst.msk [vmem:[#allocation2 + $0xe8] sm:$0x3] %vm1106, 0.0
        %1135 = vst.msk [vmem:[#allocation2 + $0xf0] sm:$0xff] %vm1103, 0.0
        %1136 = vst.msk [vmem:[#allocation2 + $0xf8] sm:$0xff] %vm1103, 0.0
        %1137 = vst.msk [vmem:[#allocation2 + $0x100] sm:$0x3] %vm1106, 0.0
        %1138 = vst.msk [vmem:[#allocation2 + $0x108] sm:$0xff] %vm1103, 0.0
        %1139 = vst.msk [vmem:[#allocation2 + $0x110] sm:$0xff] %vm1103, 0.0
        %1140 = vst.msk [vmem:[#allocation2 + $0x118] sm:$0x3] %vm1106, 0.0
        %1141 = vst.msk [vmem:[#allocation2 + $0x120] sm:$0xff] %vm1103, 0.0
        %1142 = vst.msk [vmem:[#allocation2 + $0x128] sm:$0xff] %vm1103, 0.0
        %1143 = vst.msk [vmem:[#allocation2 + $0x130] sm:$0x3] %vm1106, 0.0
        %1144 = vst.msk [vmem:[#allocation2 + $0x138] sm:$0xff] %vm1103, 0.0
        %1145 = vst.msk [vmem:[#allocation2 + $0x140] sm:$0xff] %vm1103, 0.0
        %1146 = vst.msk [vmem:[#allocation2 + $0x148] sm:$0x3] %vm1106, 0.0
        %1147 = vst.msk [vmem:[#allocation2 + $0x150] sm:$0xff] %vm1103, 0.0
        %1148 = vst.msk [vmem:[#allocation2 + $0x158] sm:$0xff] %vm1103, 0.0
        %1149 = vst.msk [vmem:[#allocation2 + $0x160] sm:$0x3] %vm1106, 0.0
        %1150 = vst.msk [vmem:[#allocation2 + $0x168] sm:$0xff] %vm1103, 0.0
        %1151 = vst.msk [vmem:[#allocation2 + $0x170] sm:$0xff] %vm1103, 0.0
        %1152 = vst.msk [vmem:[#allocation2 + $0x178] sm:$0x3] %vm1106, 0.0
        %1153 = vst.msk [vmem:[#allocation2 + $0x180] sm:$0xff] %vm1103, 0.0
        %1154 = vst.msk [vmem:[#allocation2 + $0x188] sm:$0xff] %vm1103, 0.0
        %1155 = vst.msk [vmem:[#allocation2 + $0x190] sm:$0x3] %vm1106, 0.0
        %1156 = vst.msk [vmem:[#allocation2 + $0x198] sm:$0xff] %vm1103, 0.0
        %1157 = vst.msk [vmem:[#allocation2 + $0x1a0] sm:$0xff] %vm1103, 0.0
        %1158 = vst.msk [vmem:[#allocation2 + $0x1a8] sm:$0x3] %vm1106, 0.0
        %1191 = vrot.lane.b32.xlu0 %v699, 80
        %v1192 = vpop.permute.xlu0 %1191
        %1193 = vrot.lane.b32.xlu0 %v705, 80
        %v1194 = vpop.permute.xlu0 %1193
        %1195 = vrot.lane.b32.xlu0 %v711, 80
        %v1196 = vpop.permute.xlu0 %1195
        %1197 = vrot.lane.b32.xlu0 %v717, 80
        %v1198 = vpop.permute.xlu0 %1197
        %1199 = vrot.lane.b32.xlu0 %v723, 80
        %v1200 = vpop.permute.xlu0 %1199
        %1201 = vrot.lane.b32.xlu0 %v729, 80
        %v1202 = vpop.permute.xlu0 %1201
        %1203 = vrot.lane.b32.xlu0 %v735, 80
        %v1204 = vpop.permute.xlu0 %1203
        %1205 = vrot.lane.b32.xlu0 %v741, 80
        %v1206 = vpop.permute.xlu0 %1205
        %1207 = vrot.lane.b32.xlu0 %v747, 80
        %v1208 = vpop.permute.xlu0 %1207
        %1209 = vrot.lane.b32.xlu0 %v753, 80
        %v1210 = vpop.permute.xlu0 %1209
        %1211 = vrot.lane.b32.xlu0 %v759, 80
        %v1212 = vpop.permute.xlu0 %1211
        %1213 = vrot.lane.b32.xlu0 %v765, 80
        %v1214 = vpop.permute.xlu0 %1213
        %1215 = vrot.lane.b32.xlu0 %v771, 80
        %v1216 = vpop.permute.xlu0 %1215
        %1217 = vrot.lane.b32.xlu0 %v777, 80
        %v1218 = vpop.permute.xlu0 %1217
        %1219 = vrot.lane.b32.xlu0 %v783, 80
        %v1220 = vpop.permute.xlu0 %1219
        %1221 = vrot.lane.b32.xlu0 %v789, 80
        %v1222 = vpop.permute.xlu0 %1221
        %1223 = vrot.lane.b32.xlu0 %v795, 80
        %v1224 = vpop.permute.xlu0 %1223
        %1225 = vrot.lane.b32.xlu0 %v801, 80
        %v1226 = vpop.permute.xlu0 %1225
        %1227 = vrot.lane.b32.xlu0 %v807, 80
        %v1228 = vpop.permute.xlu0 %1227
        %1229 = vrot.lane.b32.xlu0 %v813, 80
        %v1230 = vpop.permute.xlu0 %1229
        %1231 = vrot.lane.b32.xlu0 %v819, 80
        %v1232 = vpop.permute.xlu0 %1231
        %1233 = vrot.lane.b32.xlu0 %v825, 80
        %v1234 = vpop.permute.xlu0 %1233
        %1235 = vrot.lane.b32.xlu0 %v831, 80
        %v1236 = vpop.permute.xlu0 %1235
        %1237 = vrot.lane.b32.xlu0 %v837, 80
        %v1238 = vpop.permute.xlu0 %1237
        %1239 = vrot.lane.b32.xlu0 %v843, 80
        %v1240 = vpop.permute.xlu0 %1239
        %1241 = vrot.lane.b32.xlu0 %v849, 80
        %v1242 = vpop.permute.xlu0 %1241
        %1243 = vrot.lane.b32.xlu0 %v855, 80
        %v1244 = vpop.permute.xlu0 %1243
        %1245 = vrot.lane.b32.xlu0 %v861, 80
        %v1246 = vpop.permute.xlu0 %1245
        %1247 = vrot.lane.b32.xlu0 %v867, 80
        %v1248 = vpop.permute.xlu0 %1247
        %1249 = vrot.lane.b32.xlu0 %v873, 80
        %v1250 = vpop.permute.xlu0 %1249
        %1251 = vrot.lane.b32.xlu0 %v879, 80
        %v1252 = vpop.permute.xlu0 %1251
        %1253 = vrot.lane.b32.xlu0 %v885, 80
        %v1254 = vpop.permute.xlu0 %1253
        %s1287 = scalar_lea.vmem [#allocation2], 24
        %1288 = vst.msk [vmem:[%s1287 + $0x1] sm:$0xff] %vm1103, %v1192
        %1289 = vst.msk [vmem:[%s1287 + $0x9] sm:$0xff] %vm1103, %v1194
        %1290 = vst.msk [vmem:[%s1287 + $0x19] sm:$0xff] %vm1103, %v1196
        %1291 = vst.msk [vmem:[%s1287 + $0x21] sm:$0xff] %vm1103, %v1198
        %1292 = vst.msk [vmem:[%s1287 + $0x31] sm:$0xff] %vm1103, %v1200
        %1293 = vst.msk [vmem:[%s1287 + $0x39] sm:$0xff] %vm1103, %v1202
        %1294 = vst.msk [vmem:[%s1287 + $0x49] sm:$0xff] %vm1103, %v1204
        %1295 = vst.msk [vmem:[%s1287 + $0x51] sm:$0xff] %vm1103, %v1206
        %1296 = vst.msk [vmem:[%s1287 + $0x61] sm:$0xff] %vm1103, %v1208
        %1297 = vst.msk [vmem:[%s1287 + $0x69] sm:$0xff] %vm1103, %v1210
        %1298 = vst.msk [vmem:[%s1287 + $0x79] sm:$0xff] %vm1103, %v1212
        %1299 = vst.msk [vmem:[%s1287 + $0x81] sm:$0xff] %vm1103, %v1214
        %1300 = vst.msk [vmem:[%s1287 + $0x91] sm:$0xff] %vm1103, %v1216
        %1301 = vst.msk [vmem:[%s1287 + $0x99] sm:$0xff] %vm1103, %v1218
        %1302 = vst.msk [vmem:[%s1287 + $0xa9] sm:$0xff] %vm1103, %v1220
        %1303 = vst.msk [vmem:[%s1287 + $0xb1] sm:$0xff] %vm1103, %v1222
        %1304 = vst.msk [vmem:[%s1287 + $0xc1] sm:$0xff] %vm1103, %v1224
        %1305 = vst.msk [vmem:[%s1287 + $0xc9] sm:$0xff] %vm1103, %v1226
        %1306 = vst.msk [vmem:[%s1287 + $0xd9] sm:$0xff] %vm1103, %v1228
        %1307 = vst.msk [vmem:[%s1287 + $0xe1] sm:$0xff] %vm1103, %v1230
        %1308 = vst.msk [vmem:[%s1287 + $0xf1] sm:$0xff] %vm1103, %v1232
        %1309 = vst.msk [vmem:[%s1287 + $0xf9] sm:$0xff] %vm1103, %v1234
        %1310 = vst.msk [vmem:[%s1287 + $0x109] sm:$0xff] %vm1103, %v1236
        %1311 = vst.msk [vmem:[%s1287 + $0x111] sm:$0xff] %vm1103, %v1238
        %1312 = vst.msk [vmem:[%s1287 + $0x121] sm:$0xff] %vm1103, %v1240
        %1313 = vst.msk [vmem:[%s1287 + $0x129] sm:$0xff] %vm1103, %v1242
        %1314 = vst.msk [vmem:[%s1287 + $0x139] sm:$0xff] %vm1103, %v1244
        %1315 = vst.msk [vmem:[%s1287 + $0x141] sm:$0xff] %vm1103, %v1246
        %1316 = vst.msk [vmem:[%s1287 + $0x151] sm:$0xff] %vm1103, %v1248
        %1317 = vst.msk [vmem:[%s1287 + $0x159] sm:$0xff] %vm1103, %v1250
        %1318 = vst.msk [vmem:[%s1287 + $0x169] sm:$0xff] %vm1103, %v1252
        %1319 = vst.msk [vmem:[%s1287 + $0x171] sm:$0xff] %vm1103, %v1254
        %v1320 = vld [vmem:[#allocation2] sm:$0xff]
        %v1321 = vld [vmem:[#allocation2 + $0x8] sm:$0xff]
        %v1322 = vld [vmem:[#allocation2 + $0x10] sm:$0x3]
        %v1323 = vld [vmem:[#allocation2 + $0x18] sm:$0xff]
        %v1324 = vld [vmem:[#allocation2 + $0x20] sm:$0xff]
        %v1325 = vld [vmem:[#allocation2 + $0x28] sm:$0x3]
        %v1326 = vld [vmem:[#allocation2 + $0x30] sm:$0xff]
        %v1327 = vld [vmem:[#allocation2 + $0x38] sm:$0xff]
        %v1328 = vld [vmem:[#allocation2 + $0x40] sm:$0x3]
        %v1329 = vld [vmem:[#allocation2 + $0x48] sm:$0xff]
        %v1330 = vld [vmem:[#allocation2 + $0x50] sm:$0xff]
        %v1331 = vld [vmem:[#allocation2 + $0x58] sm:$0x3]
        %v1332 = vld [vmem:[#allocation2 + $0x60] sm:$0xff]
        %v1333 = vld [vmem:[#allocation2 + $0x68] sm:$0xff]
        %v1334 = vld [vmem:[#allocation2 + $0x70] sm:$0x3]
        %v1335 = vld [vmem:[#allocation2 + $0x78] sm:$0xff]
        %v1336 = vld [vmem:[#allocation2 + $0x80] sm:$0xff]
        %v1337 = vld [vmem:[#allocation2 + $0x88] sm:$0x3]
        %v1338 = vld [vmem:[#allocation2 + $0x90] sm:$0xff]
        %v1339 = vld [vmem:[#allocation2 + $0x98] sm:$0xff]
        %v1340 = vld [vmem:[#allocation2 + $0xa0] sm:$0x3]
        %v1341 = vld [vmem:[#allocation2 + $0xa8] sm:$0xff]
        %v1342 = vld [vmem:[#allocation2 + $0xb0] sm:$0xff]
        %v1343 = vld [vmem:[#allocation2 + $0xb8] sm:$0x3]
        %v1344 = vld [vmem:[#allocation2 + $0xc0] sm:$0xff]
        %v1345 = vld [vmem:[#allocation2 + $0xc8] sm:$0xff]
        %v1346 = vld [vmem:[#allocation2 + $0xd0] sm:$0x3]
        %v1347 = vld [vmem:[#allocation2 + $0xd8] sm:$0xff]
        %v1348 = vld [vmem:[#allocation2 + $0xe0] sm:$0xff]
        %v1349 = vld [vmem:[#allocation2 + $0xe8] sm:$0x3]
        %v1350 = vld [vmem:[#allocation2 + $0xf0] sm:$0xff]
        %v1351 = vld [vmem:[#allocation2 + $0xf8] sm:$0xff]
        %v1352 = vld [vmem:[#allocation2 + $0x100] sm:$0x3]
        %v1353 = vld [vmem:[#allocation2 + $0x108] sm:$0xff]
        %v1354 = vld [vmem:[#allocation2 + $0x110] sm:$0xff]
        %v1355 = vld [vmem:[#allocation2 + $0x118] sm:$0x3]
        %v1356 = vld [vmem:[#allocation2 + $0x120] sm:$0xff]
        %v1357 = vld [vmem:[#allocation2 + $0x128] sm:$0xff]
        %v1358 = vld [vmem:[#allocation2 + $0x130] sm:$0x3]
        %v1359 = vld [vmem:[#allocation2 + $0x138] sm:$0xff]
        %v1360 = vld [vmem:[#allocation2 + $0x140] sm:$0xff]
        %v1361 = vld [vmem:[#allocation2 + $0x148] sm:$0x3]
        %v1362 = vld [vmem:[#allocation2 + $0x150] sm:$0xff]
        %v1363 = vld [vmem:[#allocation2 + $0x158] sm:$0xff]
        %v1364 = vld [vmem:[#allocation2 + $0x160] sm:$0x3]
        %v1365 = vld [vmem:[#allocation2 + $0x168] sm:$0xff]
        %v1366 = vld [vmem:[#allocation2 + $0x170] sm:$0xff]
        %v1367 = vld [vmem:[#allocation2 + $0x178] sm:$0x3]
        %v1368 = vld [vmem:[#allocation2 + $0x180] sm:$0xff]
        %v1369 = vld [vmem:[#allocation2 + $0x188] sm:$0xff]
        %v1370 = vld [vmem:[#allocation2 + $0x190] sm:$0x3]
        %v1371 = vld [vmem:[#allocation2 + $0x198] sm:$0xff]
        %v1372 = vld [vmem:[#allocation2 + $0x1a0] sm:$0xff]
        %v1373 = vld [vmem:[#allocation2 + $0x1a8] sm:$0x3]
        %v1374 = vadd.f32 %v1320, 0.0
        %v1375 = vadd.f32 %v1321, 0.0
        %v1376 = vadd.f32 %v1323, 0.0
        %v1377 = vadd.f32 %v1324, 0.0
        %v1378 = vadd.f32 %v1326, 0.0
        %v1379 = vadd.f32 %v1327, 0.0
        %v1380 = vadd.f32 %v1329, 0.0
        %v1381 = vadd.f32 %v1330, 0.0
        %v1382 = vadd.f32 %v1332, 0.0
        %v1383 = vadd.f32 %v1333, 0.0
        %v1384 = vadd.f32 %v1335, 0.0
        %v1385 = vadd.f32 %v1336, 0.0
        %v1386 = vadd.f32 %v1338, 0.0
        %v1387 = vadd.f32 %v1339, 0.0
        %v1388 = vadd.f32 %v1341, 0.0
        %v1389 = vadd.f32 %v1342, 0.0
        %v1390 = vadd.f32 %v1344, 0.0
        %v1391 = vadd.f32 %v1345, 0.0
        %v1392 = vadd.f32 %v1347, 0.0
        %v1393 = vadd.f32 %v1348, 0.0
        %v1394 = vadd.f32 %v1350, 0.0
        %v1395 = vadd.f32 %v1351, 0.0
        %v1396 = vadd.f32 %v1353, 0.0
        %v1397 = vadd.f32 %v1354, 0.0
        %v1398 = vadd.f32 %v1356, 0.0
        %v1399 = vadd.f32 %v1357, 0.0
        %v1400 = vadd.f32 %v1359, 0.0
        %v1401 = vadd.f32 %v1360, 0.0
        %v1402 = vadd.f32 %v1362, 0.0
        %v1403 = vadd.f32 %v1363, 0.0
        %v1404 = vadd.f32 %v1365, 0.0
        %v1405 = vadd.f32 %v1366, 0.0
        %vm1454 = vcmask 1046528
        %v1455 = vrot.slane %v1320, 1
        %v1456 = vrot.slane %v1321, 1
        %v1457 = vsel %vm1454, %v1455, %v1456
        %v1458 = vrot.slane %v1322, 1
        %v1459 = vsel %vm1454, %v1456, %v1458
        %v1460 = vrot.slane %v1323, 1
        %v1461 = vrot.slane %v1324, 1
        %v1462 = vsel %vm1454, %v1460, %v1461
        %v1463 = vrot.slane %v1325, 1
        %v1464 = vsel %vm1454, %v1461, %v1463
        %v1465 = vrot.slane %v1326, 1
        %v1466 = vrot.slane %v1327, 1
        %v1467 = vsel %vm1454, %v1465, %v1466
        %v1468 = vrot.slane %v1328, 1
        %v1469 = vsel %vm1454, %v1466, %v1468
        %v1470 = vrot.slane %v1329, 1
        %v1471 = vrot.slane %v1330, 1
        %v1472 = vsel %vm1454, %v1470, %v1471
        %v1473 = vrot.slane %v1331, 1
        %v1474 = vsel %vm1454, %v1471, %v1473
        %v1475 = vrot.slane %v1332, 1
        %v1476 = vrot.slane %v1333, 1
        %v1477 = vsel %vm1454, %v1475, %v1476
        %v1478 = vrot.slane %v1334, 1
        %v1479 = vsel %vm1454, %v1476, %v1478
        %v1480 = vrot.slane %v1335, 1
        %v1481 = vrot.slane %v1336, 1
        %v1482 = vsel %vm1454, %v1480, %v1481
        %v1483 = vrot.slane %v1337, 1
        %v1484 = vsel %vm1454, %v1481, %v1483
        %v1485 = vrot.slane %v1338, 1
        %v1486 = vrot.slane %v1339, 1
        %v1487 = vsel %vm1454, %v1485, %v1486
        %v1488 = vrot.slane %v1340, 1
        %v1489 = vsel %vm1454, %v1486, %v1488
        %v1490 = vrot.slane %v1341, 1
        %v1491 = vrot.slane %v1342, 1
        %v1492 = vsel %vm1454, %v1490, %v1491
        %v1493 = vrot.slane %v1343, 1
        %v1494 = vsel %vm1454, %v1491, %v1493
        %v1495 = vrot.slane %v1344, 1
        %v1496 = vrot.slane %v1345, 1
        %v1497 = vsel %vm1454, %v1495, %v1496
        %v1498 = vrot.slane %v1346, 1
        %v1499 = vsel %vm1454, %v1496, %v1498
        %v1500 = vrot.slane %v1347, 1
        %v1501 = vrot.slane %v1348, 1
        %v1502 = vsel %vm1454, %v1500, %v1501
        %v1503 = vrot.slane %v1349, 1
        %v1504 = vsel %vm1454, %v1501, %v1503
        %v1505 = vrot.slane %v1350, 1
        %v1506 = vrot.slane %v1351, 1
        %v1507 = vsel %vm1454, %v1505, %v1506
        %v1508 = vrot.slane %v1352, 1
        %v1509 = vsel %vm1454, %v1506, %v1508
        %v1510 = vrot.slane %v1353, 1
        %v1511 = vrot.slane %v1354, 1
        %v1512 = vsel %vm1454, %v1510, %v1511
        %v1513 = vrot.slane %v1355, 1
        %v1514 = vsel %vm1454, %v1511, %v1513
        %v1515 = vrot.slane %v1356, 1
        %v1516 = vrot.slane %v1357, 1
        %v1517 = vsel %vm1454, %v1515, %v1516
        %v1518 = vrot.slane %v1358, 1
        %v1519 = vsel %vm1454, %v1516, %v1518
        %v1520 = vrot.slane %v1359, 1
        %v1521 = vrot.slane %v1360, 1
        %v1522 = vsel %vm1454, %v1520, %v1521
        %v1523 = vrot.slane %v1361, 1
        %v1524 = vsel %vm1454, %v1521, %v1523
        %v1525 = vrot.slane %v1362, 1
        %v1526 = vrot.slane %v1363, 1
        %v1527 = vsel %vm1454, %v1525, %v1526
        %v1528 = vrot.slane %v1364, 1
        %v1529 = vsel %vm1454, %v1526, %v1528
        %v1530 = vrot.slane %v1365, 1
        %v1531 = vrot.slane %v1366, 1
        %v1532 = vsel %vm1454, %v1530, %v1531
        %v1533 = vrot.slane %v1367, 1
        %v1534 = vsel %vm1454, %v1531, %v1533
        %v1567 = vadd.f32 %v1374, %v1457
        %v1568 = vadd.f32 %v1375, %v1459
        %v1569 = vadd.f32 %v1376, %v1462
        %v1570 = vadd.f32 %v1377, %v1464
        %v1571 = vadd.f32 %v1378, %v1467
        %v1572 = vadd.f32 %v1379, %v1469
        %v1573 = vadd.f32 %v1380, %v1472
        %v1574 = vadd.f32 %v1381, %v1474
        %v1575 = vadd.f32 %v1382, %v1477
        %v1576 = vadd.f32 %v1383, %v1479
        %v1577 = vadd.f32 %v1384, %v1482
        %v1578 = vadd.f32 %v1385, %v1484
        %v1579 = vadd.f32 %v1386, %v1487
        %v1580 = vadd.f32 %v1387, %v1489
        %v1581 = vadd.f32 %v1388, %v1492
        %v1582 = vadd.f32 %v1389, %v1494
        %v1583 = vadd.f32 %v1390, %v1497
        %v1584 = vadd.f32 %v1391, %v1499
        %v1585 = vadd.f32 %v1392, %v1502
        %v1586 = vadd.f32 %v1393, %v1504
        %v1587 = vadd.f32 %v1394, %v1507
        %v1588 = vadd.f32 %v1395, %v1509
        %v1589 = vadd.f32 %v1396, %v1512
        %v1590 = vadd.f32 %v1397, %v1514
        %v1591 = vadd.f32 %v1398, %v1517
        %v1592 = vadd.f32 %v1399, %v1519
        %v1593 = vadd.f32 %v1400, %v1522
        %v1594 = vadd.f32 %v1401, %v1524
        %v1595 = vadd.f32 %v1402, %v1527
        %v1596 = vadd.f32 %v1403, %v1529
        %v1597 = vadd.f32 %v1404, %v1532
        %v1598 = vadd.f32 %v1405, %v1534
        %vm1599 = vcmask 1045504
        %v1600 = vrot.slane %v1320, 2
        %v1601 = vrot.slane %v1321, 2
        %v1602 = vsel %vm1599, %v1600, %v1601
        %v1603 = vrot.slane %v1322, 2
        %v1604 = vsel %vm1599, %v1601, %v1603
        %v1605 = vrot.slane %v1323, 2
        %v1606 = vrot.slane %v1324, 2
        %v1607 = vsel %vm1599, %v1605, %v1606
        %v1608 = vrot.slane %v1325, 2
        %v1609 = vsel %vm1599, %v1606, %v1608
        %v1610 = vrot.slane %v1326, 2
        %v1611 = vrot.slane %v1327, 2
        %v1612 = vsel %vm1599, %v1610, %v1611
        %v1613 = vrot.slane %v1328, 2
        %v1614 = vsel %vm1599, %v1611, %v1613
        %v1615 = vrot.slane %v1329, 2
        %v1616 = vrot.slane %v1330, 2
        %v1617 = vsel %vm1599, %v1615, %v1616
        %v1618 = vrot.slane %v1331, 2
        %v1619 = vsel %vm1599, %v1616, %v1618
        %v1620 = vrot.slane %v1332, 2
        %v1621 = vrot.slane %v1333, 2
        %v1622 = vsel %vm1599, %v1620, %v1621
        %v1623 = vrot.slane %v1334, 2
        %v1624 = vsel %vm1599, %v1621, %v1623
        %v1625 = vrot.slane %v1335, 2
        %v1626 = vrot.slane %v1336, 2
        %v1627 = vsel %vm1599, %v1625, %v1626
        %v1628 = vrot.slane %v1337, 2
        %v1629 = vsel %vm1599, %v1626, %v1628
        %v1630 = vrot.slane %v1338, 2
        %v1631 = vrot.slane %v1339, 2
        %v1632 = vsel %vm1599, %v1630, %v1631
        %v1633 = vrot.slane %v1340, 2
        %v1634 = vsel %vm1599, %v1631, %v1633
        %v1635 = vrot.slane %v1341, 2
        %v1636 = vrot.slane %v1342, 2
        %v1637 = vsel %vm1599, %v1635, %v1636
        %v1638 = vrot.slane %v1343, 2
        %v1639 = vsel %vm1599, %v1636, %v1638
        %v1640 = vrot.slane %v1344, 2
        %v1641 = vrot.slane %v1345, 2
        %v1642 = vsel %vm1599, %v1640, %v1641
        %v1643 = vrot.slane %v1346, 2
        %v1644 = vsel %vm1599, %v1641, %v1643
        %v1645 = vrot.slane %v1347, 2
        %v1646 = vrot.slane %v1348, 2
        %v1647 = vsel %vm1599, %v1645, %v1646
        %v1648 = vrot.slane %v1349, 2
        %v1649 = vsel %vm1599, %v1646, %v1648
        %v1650 = vrot.slane %v1350, 2
        %v1651 = vrot.slane %v1351, 2
        %v1652 = vsel %vm1599, %v1650, %v1651
        %v1653 = vrot.slane %v1352, 2
        %v1654 = vsel %vm1599, %v1651, %v1653
        %v1655 = vrot.slane %v1353, 2
        %v1656 = vrot.slane %v1354, 2
        %v1657 = vsel %vm1599, %v1655, %v1656
        %v1658 = vrot.slane %v1355, 2
        %v1659 = vsel %vm1599, %v1656, %v1658
        %v1660 = vrot.slane %v1356, 2
        %v1661 = vrot.slane %v1357, 2
        %v1662 = vsel %vm1599, %v1660, %v1661
        %v1663 = vrot.slane %v1358, 2
        %v1664 = vsel %vm1599, %v1661, %v1663
        %v1665 = vrot.slane %v1359, 2
        %v1666 = vrot.slane %v1360, 2
        %v1667 = vsel %vm1599, %v1665, %v1666
        %v1668 = vrot.slane %v1361, 2
        %v1669 = vsel %vm1599, %v1666, %v1668
        %v1670 = vrot.slane %v1362, 2
        %v1671 = vrot.slane %v1363, 2
        %v1672 = vsel %vm1599, %v1670, %v1671
        %v1673 = vrot.slane %v1364, 2
        %v1674 = vsel %vm1599, %v1671, %v1673
        %v1675 = vrot.slane %v1365, 2
        %v1676 = vrot.slane %v1366, 2
        %v1677 = vsel %vm1599, %v1675, %v1676
        %v1678 = vrot.slane %v1367, 2
        %v1679 = vsel %vm1599, %v1676, %v1678
        %v1712 = vadd.f32 %v1567, %v1602
        %v1713 = vadd.f32 %v1568, %v1604
        %v1714 = vadd.f32 %v1569, %v1607
        %v1715 = vadd.f32 %v1570, %v1609
        %v1716 = vadd.f32 %v1571, %v1612
        %v1717 = vadd.f32 %v1572, %v1614
        %v1718 = vadd.f32 %v1573, %v1617
        %v1719 = vadd.f32 %v1574, %v1619
        %v1720 = vadd.f32 %v1575, %v1622
        %v1721 = vadd.f32 %v1576, %v1624
        %v1722 = vadd.f32 %v1577, %v1627
        %v1723 = vadd.f32 %v1578, %v1629
        %v1724 = vadd.f32 %v1579, %v1632
        %v1725 = vadd.f32 %v1580, %v1634
        %v1726 = vadd.f32 %v1581, %v1637
        %v1727 = vadd.f32 %v1582, %v1639
        %v1728 = vadd.f32 %v1583, %v1642
        %v1729 = vadd.f32 %v1584, %v1644
        %v1730 = vadd.f32 %v1585, %v1647
        %v1731 = vadd.f32 %v1586, %v1649
        %v1732 = vadd.f32 %v1587, %v1652
        %v1733 = vadd.f32 %v1588, %v1654
        %v1734 = vadd.f32 %v1589, %v1657
        %v1735 = vadd.f32 %v1590, %v1659
        %v1736 = vadd.f32 %v1591, %v1662
        %v1737 = vadd.f32 %v1592, %v1664
        %v1738 = vadd.f32 %v1593, %v1667
        %v1739 = vadd.f32 %v1594, %v1669
        %v1740 = vadd.f32 %v1595, %v1672
        %v1741 = vadd.f32 %v1596, %v1674
        %v1742 = vadd.f32 %v1597, %v1677
        %v1743 = vadd.f32 %v1598, %v1679
        %v1744 = vadd.f32 %v1712, %v1323
        %v1745 = vadd.f32 %v1713, %v1324
        %v1746 = vadd.f32 %v1714, %v1326
        %v1747 = vadd.f32 %v1715, %v1327
        %v1748 = vadd.f32 %v1716, %v1329
        %v1749 = vadd.f32 %v1717, %v1330
        %v1750 = vadd.f32 %v1718, %v1332
        %v1751 = vadd.f32 %v1719, %v1333
        %v1752 = vadd.f32 %v1720, %v1335
        %v1753 = vadd.f32 %v1721, %v1336
        %v1754 = vadd.f32 %v1722, %v1338
        %v1755 = vadd.f32 %v1723, %v1339
        %v1756 = vadd.f32 %v1724, %v1341
        %v1757 = vadd.f32 %v1725, %v1342
        %v1758 = vadd.f32 %v1726, %v1344
        %v1759 = vadd.f32 %v1727, %v1345
        %v1760 = vadd.f32 %v1728, %v1347
        %v1761 = vadd.f32 %v1729, %v1348
        %v1762 = vadd.f32 %v1730, %v1350
        %v1763 = vadd.f32 %v1731, %v1351
        %v1764 = vadd.f32 %v1732, %v1353
        %v1765 = vadd.f32 %v1733, %v1354
        %v1766 = vadd.f32 %v1734, %v1356
        %v1767 = vadd.f32 %v1735, %v1357
        %v1768 = vadd.f32 %v1736, %v1359
        %v1769 = vadd.f32 %v1737, %v1360
        %v1770 = vadd.f32 %v1738, %v1362
        %v1771 = vadd.f32 %v1739, %v1363
        %v1772 = vadd.f32 %v1740, %v1365
        %v1773 = vadd.f32 %v1741, %v1366
        %v1774 = vadd.f32 %v1742, %v1368
        %v1775 = vadd.f32 %v1743, %v1369
        %v1779 = vrot.slane %v1368, 1
        %v1780 = vrot.slane %v1369, 1
        %v1781 = vsel %vm1454, %v1779, %v1780
        %v1782 = vrot.slane %v1370, 1
        %v1783 = vsel %vm1454, %v1780, %v1782
        %v1786 = vadd.f32 %v1744, %v1462
        %v1787 = vadd.f32 %v1745, %v1464
        %v1788 = vadd.f32 %v1746, %v1467
        %v1789 = vadd.f32 %v1747, %v1469
        %v1790 = vadd.f32 %v1748, %v1472
        %v1791 = vadd.f32 %v1749, %v1474
        %v1792 = vadd.f32 %v1750, %v1477
        %v1793 = vadd.f32 %v1751, %v1479
        %v1794 = vadd.f32 %v1752, %v1482
        %v1795 = vadd.f32 %v1753, %v1484
        %v1796 = vadd.f32 %v1754, %v1487
        %v1797 = vadd.f32 %v1755, %v1489
        %v1798 = vadd.f32 %v1756, %v1492
        %v1799 = vadd.f32 %v1757, %v1494
        %v1800 = vadd.f32 %v1758, %v1497
        %v1801 = vadd.f32 %v1759, %v1499
        %v1802 = vadd.f32 %v1760, %v1502
        %v1803 = vadd.f32 %v1761, %v1504
        %v1804 = vadd.f32 %v1762, %v1507
        %v1805 = vadd.f32 %v1763, %v1509
        %v1806 = vadd.f32 %v1764, %v1512
        %v1807 = vadd.f32 %v1765, %v1514
        %v1808 = vadd.f32 %v1766, %v1517
        %v1809 = vadd.f32 %v1767, %v1519
        %v1810 = vadd.f32 %v1768, %v1522
        %v1811 = vadd.f32 %v1769, %v1524
        %v1812 = vadd.f32 %v1770, %v1527
        %v1813 = vadd.f32 %v1771, %v1529
        %v1814 = vadd.f32 %v1772, %v1532
        %v1815 = vadd.f32 %v1773, %v1534
        %v1816 = vadd.f32 %v1774, %v1781
        %v1817 = vadd.f32 %v1775, %v1783
        %v1818 = vrot.slane %v1368, 2
        %v1819 = vrot.slane %v1369, 2
        %v1820 = vsel %vm1599, %v1818, %v1819
        %v1821 = vrot.slane %v1370, 2
        %v1822 = vsel %vm1599, %v1819, %v1821
        %v1825 = vadd.f32 %v1786, %v1607
        %v1826 = vadd.f32 %v1787, %v1609
        %v1827 = vadd.f32 %v1788, %v1612
        %v1828 = vadd.f32 %v1789, %v1614
        %v1829 = vadd.f32 %v1790, %v1617
        %v1830 = vadd.f32 %v1791, %v1619
        %v1831 = vadd.f32 %v1792, %v1622
        %v1832 = vadd.f32 %v1793, %v1624
        %v1833 = vadd.f32 %v1794, %v1627
        %v1834 = vadd.f32 %v1795, %v1629
        %v1835 = vadd.f32 %v1796, %v1632
        %v1836 = vadd.f32 %v1797, %v1634
        %v1837 = vadd.f32 %v1798, %v1637
        %v1838 = vadd.f32 %v1799, %v1639
        %v1839 = vadd.f32 %v1800, %v1642
        %v1840 = vadd.f32 %v1801, %v1644
        %v1841 = vadd.f32 %v1802, %v1647
        %v1842 = vadd.f32 %v1803, %v1649
        %v1843 = vadd.f32 %v1804, %v1652
        %v1844 = vadd.f32 %v1805, %v1654
        %v1845 = vadd.f32 %v1806, %v1657
        %v1846 = vadd.f32 %v1807, %v1659
        %v1847 = vadd.f32 %v1808, %v1662
        %v1848 = vadd.f32 %v1809, %v1664
        %v1849 = vadd.f32 %v1810, %v1667
        %v1850 = vadd.f32 %v1811, %v1669
        %v1851 = vadd.f32 %v1812, %v1672
        %v1852 = vadd.f32 %v1813, %v1674
        %v1853 = vadd.f32 %v1814, %v1677
        %v1854 = vadd.f32 %v1815, %v1679
        %v1855 = vadd.f32 %v1816, %v1820
        %v1856 = vadd.f32 %v1817, %v1822
        %v1857 = vadd.f32 %v1825, %v1326
        %v1858 = vadd.f32 %v1826, %v1327
        %v1859 = vadd.f32 %v1827, %v1329
        %v1860 = vadd.f32 %v1828, %v1330
        %v1861 = vadd.f32 %v1829, %v1332
        %v1862 = vadd.f32 %v1830, %v1333
        %v1863 = vadd.f32 %v1831, %v1335
        %v1864 = vadd.f32 %v1832, %v1336
        %v1865 = vadd.f32 %v1833, %v1338
        %v1866 = vadd.f32 %v1834, %v1339
        %v1867 = vadd.f32 %v1835, %v1341
        %v1868 = vadd.f32 %v1836, %v1342
        %v1869 = vadd.f32 %v1837, %v1344
        %v1870 = vadd.f32 %v1838, %v1345
        %v1871 = vadd.f32 %v1839, %v1347
        %v1872 = vadd.f32 %v1840, %v1348
        %v1873 = vadd.f32 %v1841, %v1350
        %v1874 = vadd.f32 %v1842, %v1351
        %v1875 = vadd.f32 %v1843, %v1353
        %v1876 = vadd.f32 %v1844, %v1354
        %v1877 = vadd.f32 %v1845, %v1356
        %v1878 = vadd.f32 %v1846, %v1357
        %v1879 = vadd.f32 %v1847, %v1359
        %v1880 = vadd.f32 %v1848, %v1360
        %v1881 = vadd.f32 %v1849, %v1362
        %v1882 = vadd.f32 %v1850, %v1363
        %v1883 = vadd.f32 %v1851, %v1365
        %v1884 = vadd.f32 %v1852, %v1366
        %v1885 = vadd.f32 %v1853, %v1368
        %v1886 = vadd.f32 %v1854, %v1369
        %v1887 = vadd.f32 %v1855, %v1371
        %v1888 = vadd.f32 %v1856, %v1372
        %v1892 = vrot.slane %v1371, 1
        %v1893 = vrot.slane %v1372, 1
        %v1894 = vsel %vm1454, %v1892, %v1893
        %v1895 = vrot.slane %v1373, 1
        %v1896 = vsel %vm1454, %v1893, %v1895
        %v1899 = vadd.f32 %v1857, %v1467
        %v1900 = vadd.f32 %v1858, %v1469
        %v1901 = vadd.f32 %v1859, %v1472
        %v1902 = vadd.f32 %v1860, %v1474
        %v1903 = vadd.f32 %v1861, %v1477
        %v1904 = vadd.f32 %v1862, %v1479
        %v1905 = vadd.f32 %v1863, %v1482
        %v1906 = vadd.f32 %v1864, %v1484
        %v1907 = vadd.f32 %v1865, %v1487
        %v1908 = vadd.f32 %v1866, %v1489
        %v1909 = vadd.f32 %v1867, %v1492
        %v1910 = vadd.f32 %v1868, %v1494
        %v1911 = vadd.f32 %v1869, %v1497
        %v1912 = vadd.f32 %v1870, %v1499
        %v1913 = vadd.f32 %v1871, %v1502
        %v1914 = vadd.f32 %v1872, %v1504
        %v1915 = vadd.f32 %v1873, %v1507
        %v1916 = vadd.f32 %v1874, %v1509
        %v1917 = vadd.f32 %v1875, %v1512
        %v1918 = vadd.f32 %v1876, %v1514
        %v1919 = vadd.f32 %v1877, %v1517
        %v1920 = vadd.f32 %v1878, %v1519
        %v1921 = vadd.f32 %v1879, %v1522
        %v1922 = vadd.f32 %v1880, %v1524
        %v1923 = vadd.f32 %v1881, %v1527
        %v1924 = vadd.f32 %v1882, %v1529
        %v1925 = vadd.f32 %v1883, %v1532
        %v1926 = vadd.f32 %v1884, %v1534
        %v1927 = vadd.f32 %v1885, %v1781
        %v1928 = vadd.f32 %v1886, %v1783
        %v1929 = vadd.f32 %v1887, %v1894
        %v1930 = vadd.f32 %v1888, %v1896
        %v1931 = vrot.slane %v1371, 2
        %v1932 = vrot.slane %v1372, 2
        %v1933 = vsel %vm1599, %v1931, %v1932
        %v1934 = vrot.slane %v1373, 2
        %v1935 = vsel %vm1599, %v1932, %v1934
        %v1938 = vadd.f32 %v1899, %v1612
        %v1939 = vadd.f32 %v1900, %v1614
        %v1940 = vadd.f32 %v1901, %v1617
        %v1941 = vadd.f32 %v1902, %v1619
        %v1942 = vadd.f32 %v1903, %v1622
        %v1943 = vadd.f32 %v1904, %v1624
        %v1944 = vadd.f32 %v1905, %v1627
        %v1945 = vadd.f32 %v1906, %v1629
        %v1946 = vadd.f32 %v1907, %v1632
        %v1947 = vadd.f32 %v1908, %v1634
        %v1948 = vadd.f32 %v1909, %v1637
        %v1949 = vadd.f32 %v1910, %v1639
        %v1950 = vadd.f32 %v1911, %v1642
        %v1951 = vadd.f32 %v1912, %v1644
        %v1952 = vadd.f32 %v1913, %v1647
        %v1953 = vadd.f32 %v1914, %v1649
        %v1954 = vadd.f32 %v1915, %v1652
        %v1955 = vadd.f32 %v1916, %v1654
        %v1956 = vadd.f32 %v1917, %v1657
        %v1957 = vadd.f32 %v1918, %v1659
        %v1958 = vadd.f32 %v1919, %v1662
        %v1959 = vadd.f32 %v1920, %v1664
        %v1960 = vadd.f32 %v1921, %v1667
        %v1961 = vadd.f32 %v1922, %v1669
        %v1962 = vadd.f32 %v1923, %v1672
        %v1963 = vadd.f32 %v1924, %v1674
        %v1964 = vadd.f32 %v1925, %v1677
        %v1965 = vadd.f32 %v1926, %v1679
        %v1966 = vadd.f32 %v1927, %v1820
        %v1967 = vadd.f32 %v1928, %v1822
        %v1968 = vadd.f32 %v1929, %v1933
        %v1969 = vadd.f32 %v1930, %v1935
        %v1970 = vld [vmem:[%s4] sm:$0x1]
        %v1972 = vlaneseq
        %v1973 = vshrl.u32 %v1972, 7
        %v1974 = vsub.s32 0, %v1973
        %v1975 = vrot.slane %v1970, %v1974
        %v1977 = vmul.f32 %v1938, %v1975
        %v1978 = vmul.f32 %v1939, %v1975
        %v1979 = vmul.f32 %v1940, %v1975
        %v1980 = vmul.f32 %v1941, %v1975
        %v1981 = vmul.f32 %v1942, %v1975
        %v1982 = vmul.f32 %v1943, %v1975
        %v1983 = vmul.f32 %v1944, %v1975
        %v1984 = vmul.f32 %v1945, %v1975
        %v1985 = vmul.f32 %v1946, %v1975
        %v1986 = vmul.f32 %v1947, %v1975
        %v1987 = vmul.f32 %v1948, %v1975
        %v1988 = vmul.f32 %v1949, %v1975
        %v1989 = vmul.f32 %v1950, %v1975
        %v1990 = vmul.f32 %v1951, %v1975
        %v1991 = vmul.f32 %v1952, %v1975
        %v1992 = vmul.f32 %v1953, %v1975
        %v1993 = vmul.f32 %v1954, %v1975
        %v1994 = vmul.f32 %v1955, %v1975
        %v1995 = vmul.f32 %v1956, %v1975
        %v1996 = vmul.f32 %v1957, %v1975
        %v1997 = vmul.f32 %v1958, %v1975
        %v1998 = vmul.f32 %v1959, %v1975
        %v1999 = vmul.f32 %v1960, %v1975
        %v2000 = vmul.f32 %v1961, %v1975
        %v2001 = vmul.f32 %v1962, %v1975
        %v2002 = vmul.f32 %v1963, %v1975
        %v2003 = vmul.f32 %v1964, %v1975
        %v2004 = vmul.f32 %v1965, %v1975
        %v2005 = vmul.f32 %v1966, %v1975
        %v2006 = vmul.f32 %v1967, %v1975
        %v2007 = vmul.f32 %v1968, %v1975
        %v2008 = vmul.f32 %v1969, %v1975
        %v2009 = vld [vmem:[%s5] sm:$0x1]
        %v2011 = vlaneseq
        %v2012 = vshrl.u32 %v2011, 7
        %v2013 = vsub.s32 0, %v2012
        %v2014 = vrot.slane %v2009, %v2013
        %v2016 = vadd.f32 %v1977, %v2014
        %v2017 = vadd.f32 %v1978, %v2014
        %v2018 = vadd.f32 %v1979, %v2014
        %v2019 = vadd.f32 %v1980, %v2014
        %v2020 = vadd.f32 %v1981, %v2014
        %v2021 = vadd.f32 %v1982, %v2014
        %v2022 = vadd.f32 %v1983, %v2014
        %v2023 = vadd.f32 %v1984, %v2014
        %v2024 = vadd.f32 %v1985, %v2014
        %v2025 = vadd.f32 %v1986, %v2014
        %v2026 = vadd.f32 %v1987, %v2014
        %v2027 = vadd.f32 %v1988, %v2014
        %v2028 = vadd.f32 %v1989, %v2014
        %v2029 = vadd.f32 %v1990, %v2014
        %v2030 = vadd.f32 %v1991, %v2014
        %v2031 = vadd.f32 %v1992, %v2014
        %v2032 = vadd.f32 %v1993, %v2014
        %v2033 = vadd.f32 %v1994, %v2014
        %v2034 = vadd.f32 %v1995, %v2014
        %v2035 = vadd.f32 %v1996, %v2014
        %v2036 = vadd.f32 %v1997, %v2014
        %v2037 = vadd.f32 %v1998, %v2014
        %v2038 = vadd.f32 %v1999, %v2014
        %v2039 = vadd.f32 %v2000, %v2014
        %v2040 = vadd.f32 %v2001, %v2014
        %v2041 = vadd.f32 %v2002, %v2014
        %v2042 = vadd.f32 %v2003, %v2014
        %v2043 = vadd.f32 %v2004, %v2014
        %v2044 = vadd.f32 %v2005, %v2014
        %v2045 = vadd.f32 %v2006, %v2014
        %v2046 = vadd.f32 %v2007, %v2014
        %v2047 = vadd.f32 %v2008, %v2014
        %v2048 = vmax.f32 %v2016, 0.0
        %v2049 = vmax.f32 %v2017, 0.0
        %v2050 = vmax.f32 %v2018, 0.0
        %v2051 = vmax.f32 %v2019, 0.0
        %v2052 = vmax.f32 %v2020, 0.0
        %v2053 = vmax.f32 %v2021, 0.0
        %v2054 = vmax.f32 %v2022, 0.0
        %v2055 = vmax.f32 %v2023, 0.0
        %v2056 = vmax.f32 %v2024, 0.0
        %v2057 = vmax.f32 %v2025, 0.0
        %v2058 = vmax.f32 %v2026, 0.0
        %v2059 = vmax.f32 %v2027, 0.0
        %v2060 = vmax.f32 %v2028, 0.0
        %v2061 = vmax.f32 %v2029, 0.0
        %v2062 = vmax.f32 %v2030, 0.0
        %v2063 = vmax.f32 %v2031, 0.0
        %v2064 = vmax.f32 %v2032, 0.0
        %v2065 = vmax.f32 %v2033, 0.0
        %v2066 = vmax.f32 %v2034, 0.0
        %v2067 = vmax.f32 %v2035, 0.0
        %v2068 = vmax.f32 %v2036, 0.0
        %v2069 = vmax.f32 %v2037, 0.0
        %v2070 = vmax.f32 %v2038, 0.0
        %v2071 = vmax.f32 %v2039, 0.0
        %v2072 = vmax.f32 %v2040, 0.0
        %v2073 = vmax.f32 %v2041, 0.0
        %v2074 = vmax.f32 %v2042, 0.0
        %v2075 = vmax.f32 %v2043, 0.0
        %v2076 = vmax.f32 %v2044, 0.0
        %v2077 = vmax.f32 %v2045, 0.0
        %v2078 = vmax.f32 %v2046, 0.0
        %v2079 = vmax.f32 %v2047, 0.0
        %vm2080 = vcmask 392192
        %2081 = vst.msk [vmem:[#allocation3] sm:$0xff] %vm2080, 0.0
        %2082 = vst.msk [vmem:[#allocation3 + $0x8] sm:$0xff] %vm2080, 0.0
        %vm2083 = vcmask 388096
        %2084 = vst.msk [vmem:[#allocation3 + $0x10] sm:$0xf] %vm2083, 0.0
        %2085 = vst.msk [vmem:[#allocation3 + $0x18] sm:$0xff] %vm2080, 0.0
        %2086 = vst.msk [vmem:[#allocation3 + $0x20] sm:$0xff] %vm2080, 0.0
        %2087 = vst.msk [vmem:[#allocation3 + $0x28] sm:$0xf] %vm2083, 0.0
        %2088 = vst.msk [vmem:[#allocation3 + $0x30] sm:$0xff] %vm2080, 0.0
        %2089 = vst.msk [vmem:[#allocation3 + $0x38] sm:$0xff] %vm2080, 0.0
        %2090 = vst.msk [vmem:[#allocation3 + $0x40] sm:$0xf] %vm2083, 0.0
        %2091 = vst.msk [vmem:[#allocation3 + $0x48] sm:$0xff] %vm2080, 0.0
        %2092 = vst.msk [vmem:[#allocation3 + $0x50] sm:$0xff] %vm2080, 0.0
        %2093 = vst.msk [vmem:[#allocation3 + $0x58] sm:$0xf] %vm2083, 0.0
        %2094 = vst.msk [vmem:[#allocation3 + $0x60] sm:$0xff] %vm2080, 0.0
        %2095 = vst.msk [vmem:[#allocation3 + $0x68] sm:$0xff] %vm2080, 0.0
        %2096 = vst.msk [vmem:[#allocation3 + $0x70] sm:$0xf] %vm2083, 0.0
        %2097 = vst.msk [vmem:[#allocation3 + $0x78] sm:$0xff] %vm2080, 0.0
        %2098 = vst.msk [vmem:[#allocation3 + $0x80] sm:$0xff] %vm2080, 0.0
        %2099 = vst.msk [vmem:[#allocation3 + $0x88] sm:$0xf] %vm2083, 0.0
        %2100 = vst.msk [vmem:[#allocation3 + $0x90] sm:$0xff] %vm2080, 0.0
        %2101 = vst.msk [vmem:[#allocation3 + $0x98] sm:$0xff] %vm2080, 0.0
        %2102 = vst.msk [vmem:[#allocation3 + $0xa0] sm:$0xf] %vm2083, 0.0
        %2103 = vst.msk [vmem:[#allocation3 + $0xa8] sm:$0xff] %vm2080, 0.0
        %2104 = vst.msk [vmem:[#allocation3 + $0xb0] sm:$0xff] %vm2080, 0.0
        %2105 = vst.msk [vmem:[#allocation3 + $0xb8] sm:$0xf] %vm2083, 0.0
        %2106 = vst.msk [vmem:[#allocation3 + $0xc0] sm:$0xff] %vm2080, 0.0
        %2107 = vst.msk [vmem:[#allocation3 + $0xc8] sm:$0xff] %vm2080, 0.0
        %2108 = vst.msk [vmem:[#allocation3 + $0xd0] sm:$0xf] %vm2083, 0.0
        %2109 = vst.msk [vmem:[#allocation3 + $0xd8] sm:$0xff] %vm2080, 0.0
        %2110 = vst.msk [vmem:[#allocation3 + $0xe0] sm:$0xff] %vm2080, 0.0
        %2111 = vst.msk [vmem:[#allocation3 + $0xe8] sm:$0xf] %vm2083, 0.0
        %2112 = vst.msk [vmem:[#allocation3 + $0xf0] sm:$0xff] %vm2080, 0.0
        %2113 = vst.msk [vmem:[#allocation3 + $0xf8] sm:$0xff] %vm2080, 0.0
        %2114 = vst.msk [vmem:[#allocation3 + $0x100] sm:$0xf] %vm2083, 0.0
        %2115 = vst.msk [vmem:[#allocation3 + $0x108] sm:$0xff] %vm2080, 0.0
        %2116 = vst.msk [vmem:[#allocation3 + $0x110] sm:$0xff] %vm2080, 0.0
        %2117 = vst.msk [vmem:[#allocation3 + $0x118] sm:$0xf] %vm2083, 0.0
        %2118 = vst.msk [vmem:[#allocation3 + $0x120] sm:$0xff] %vm2080, 0.0
        %2119 = vst.msk [vmem:[#allocation3 + $0x128] sm:$0xff] %vm2080, 0.0
        %2120 = vst.msk [vmem:[#allocation3 + $0x130] sm:$0xf] %vm2083, 0.0
        %2121 = vst.msk [vmem:[#allocation3 + $0x138] sm:$0xff] %vm2080, 0.0
        %2122 = vst.msk [vmem:[#allocation3 + $0x140] sm:$0xff] %vm2080, 0.0
        %2123 = vst.msk [vmem:[#allocation3 + $0x148] sm:$0xf] %vm2083, 0.0
        %2124 = vst.msk [vmem:[#allocation3 + $0x150] sm:$0xff] %vm2080, 0.0
        %2125 = vst.msk [vmem:[#allocation3 + $0x158] sm:$0xff] %vm2080, 0.0
        %2126 = vst.msk [vmem:[#allocation3 + $0x160] sm:$0xf] %vm2083, 0.0
        %2127 = vst.msk [vmem:[#allocation3 + $0x168] sm:$0xff] %vm2080, 0.0
        %2128 = vst.msk [vmem:[#allocation3 + $0x170] sm:$0xff] %vm2080, 0.0
        %2129 = vst.msk [vmem:[#allocation3 + $0x178] sm:$0xf] %vm2083, 0.0
        %2130 = vst.msk [vmem:[#allocation3 + $0x180] sm:$0xff] %vm2080, 0.0
        %2131 = vst.msk [vmem:[#allocation3 + $0x188] sm:$0xff] %vm2080, 0.0
        %2132 = vst.msk [vmem:[#allocation3 + $0x190] sm:$0xf] %vm2083, 0.0
        %2133 = vst.msk [vmem:[#allocation3 + $0x198] sm:$0xff] %vm2080, 0.0
        %2134 = vst.msk [vmem:[#allocation3 + $0x1a0] sm:$0xff] %vm2080, 0.0
        %2135 = vst.msk [vmem:[#allocation3 + $0x1a8] sm:$0xf] %vm2083, 0.0
        %2136 = vst.msk [vmem:[#allocation3 + $0x1b0] sm:$0xff] %vm2080, 0.0
        %2137 = vst.msk [vmem:[#allocation3 + $0x1b8] sm:$0xff] %vm2080, 0.0
        %2138 = vst.msk [vmem:[#allocation3 + $0x1c0] sm:$0xf] %vm2083, 0.0
        %2139 = vst.msk [vmem:[#allocation3 + $0x1c8] sm:$0xff] %vm2080, 0.0
        %2140 = vst.msk [vmem:[#allocation3 + $0x1d0] sm:$0xff] %vm2080, 0.0
        %2141 = vst.msk [vmem:[#allocation3 + $0x1d8] sm:$0xf] %vm2083, 0.0
        %2174 = vrot.lane.b32.xlu0 %v1039, 64
        %v2175 = vpop.permute.xlu0 %2174
        %2176 = vrot.lane.b32.xlu0 %v1041, 64
        %v2177 = vpop.permute.xlu0 %2176
        %2178 = vrot.lane.b32.xlu0 %v1043, 64
        %v2179 = vpop.permute.xlu0 %2178
        %2180 = vrot.lane.b32.xlu0 %v1045, 64
        %v2181 = vpop.permute.xlu0 %2180
        %2182 = vrot.lane.b32.xlu0 %v1047, 64
        %v2183 = vpop.permute.xlu0 %2182
        %2184 = vrot.lane.b32.xlu0 %v1049, 64
        %v2185 = vpop.permute.xlu0 %2184
        %2186 = vrot.lane.b32.xlu0 %v1051, 64
        %v2187 = vpop.permute.xlu0 %2186
        %2188 = vrot.lane.b32.xlu0 %v1053, 64
        %v2189 = vpop.permute.xlu0 %2188
        %2190 = vrot.lane.b32.xlu0 %v1055, 64
        %v2191 = vpop.permute.xlu0 %2190
        %2192 = vrot.lane.b32.xlu0 %v1057, 64
        %v2193 = vpop.permute.xlu0 %2192
        %2194 = vrot.lane.b32.xlu0 %v1059, 64
        %v2195 = vpop.permute.xlu0 %2194
        %2196 = vrot.lane.b32.xlu0 %v1061, 64
        %v2197 = vpop.permute.xlu0 %2196
        %2198 = vrot.lane.b32.xlu0 %v1063, 64
        %v2199 = vpop.permute.xlu0 %2198
        %2200 = vrot.lane.b32.xlu0 %v1065, 64
        %v2201 = vpop.permute.xlu0 %2200
        %2202 = vrot.lane.b32.xlu0 %v1067, 64
        %v2203 = vpop.permute.xlu0 %2202
        %2204 = vrot.lane.b32.xlu0 %v1069, 64
        %v2205 = vpop.permute.xlu0 %2204
        %2206 = vrot.lane.b32.xlu0 %v1071, 64
        %v2207 = vpop.permute.xlu0 %2206
        %2208 = vrot.lane.b32.xlu0 %v1073, 64
        %v2209 = vpop.permute.xlu0 %2208
        %2210 = vrot.lane.b32.xlu0 %v1075, 64
        %v2211 = vpop.permute.xlu0 %2210
        %2212 = vrot.lane.b32.xlu0 %v1077, 64
        %v2213 = vpop.permute.xlu0 %2212
        %2214 = vrot.lane.b32.xlu0 %v1079, 64
        %v2215 = vpop.permute.xlu0 %2214
        %2216 = vrot.lane.b32.xlu0 %v1081, 64
        %v2217 = vpop.permute.xlu0 %2216
        %2218 = vrot.lane.b32.xlu0 %v1083, 64
        %v2219 = vpop.permute.xlu0 %2218
        %2220 = vrot.lane.b32.xlu0 %v1085, 64
        %v2221 = vpop.permute.xlu0 %2220
        %2222 = vrot.lane.b32.xlu0 %v1087, 64
        %v2223 = vpop.permute.xlu0 %2222
        %2224 = vrot.lane.b32.xlu0 %v1089, 64
        %v2225 = vpop.permute.xlu0 %2224
        %2226 = vrot.lane.b32.xlu0 %v1091, 64
        %v2227 = vpop.permute.xlu0 %2226
        %2228 = vrot.lane.b32.xlu0 %v1093, 64
        %v2229 = vpop.permute.xlu0 %2228
        %2230 = vrot.lane.b32.xlu0 %v1095, 64
        %v2231 = vpop.permute.xlu0 %2230
        %2232 = vrot.lane.b32.xlu0 %v1097, 64
        %v2233 = vpop.permute.xlu0 %2232
        %2234 = vrot.lane.b32.xlu0 %v1099, 64
        %v2235 = vpop.permute.xlu0 %2234
        %2236 = vrot.lane.b32.xlu0 %v1101, 64
        %v2237 = vpop.permute.xlu0 %2236
        %s2270 = scalar_lea.vmem [#allocation3], 48
        %2271 = vst.msk [vmem:[%s2270 + $0x2] sm:$0xff] %vm2080, %v2175
        %2272 = vst.msk [vmem:[%s2270 + $0xa] sm:$0xff] %vm2080, %v2177
        %2273 = vst.msk [vmem:[%s2270 + $0x1a] sm:$0xff] %vm2080, %v2179
        %2274 = vst.msk [vmem:[%s2270 + $0x22] sm:$0xff] %vm2080, %v2181
        %2275 = vst.msk [vmem:[%s2270 + $0x32] sm:$0xff] %vm2080, %v2183
        %2276 = vst.msk [vmem:[%s2270 + $0x3a] sm:$0xff] %vm2080, %v2185
        %2277 = vst.msk [vmem:[%s2270 + $0x4a] sm:$0xff] %vm2080, %v2187
        %2278 = vst.msk [vmem:[%s2270 + $0x52] sm:$0xff] %vm2080, %v2189
        %2279 = vst.msk [vmem:[%s2270 + $0x62] sm:$0xff] %vm2080, %v2191
        %2280 = vst.msk [vmem:[%s2270 + $0x6a] sm:$0xff] %vm2080, %v2193
        %2281 = vst.msk [vmem:[%s2270 + $0x7a] sm:$0xff] %vm2080, %v2195
        %2282 = vst.msk [vmem:[%s2270 + $0x82] sm:$0xff] %vm2080, %v2197
        %2283 = vst.msk [vmem:[%s2270 + $0x92] sm:$0xff] %vm2080, %v2199
        %2284 = vst.msk [vmem:[%s2270 + $0x9a] sm:$0xff] %vm2080, %v2201
        %2285 = vst.msk [vmem:[%s2270 + $0xaa] sm:$0xff] %vm2080, %v2203
        %2286 = vst.msk [vmem:[%s2270 + $0xb2] sm:$0xff] %vm2080, %v2205
        %2287 = vst.msk [vmem:[%s2270 + $0xc2] sm:$0xff] %vm2080, %v2207
        %2288 = vst.msk [vmem:[%s2270 + $0xca] sm:$0xff] %vm2080, %v2209
        %2289 = vst.msk [vmem:[%s2270 + $0xda] sm:$0xff] %vm2080, %v2211
        %2290 = vst.msk [vmem:[%s2270 + $0xe2] sm:$0xff] %vm2080, %v2213
        %2291 = vst.msk [vmem:[%s2270 + $0xf2] sm:$0xff] %vm2080, %v2215
        %2292 = vst.msk [vmem:[%s2270 + $0xfa] sm:$0xff] %vm2080, %v2217
        %2293 = vst.msk [vmem:[%s2270 + $0x10a] sm:$0xff] %vm2080, %v2219
        %2294 = vst.msk [vmem:[%s2270 + $0x112] sm:$0xff] %vm2080, %v2221
        %2295 = vst.msk [vmem:[%s2270 + $0x122] sm:$0xff] %vm2080, %v2223
        %2296 = vst.msk [vmem:[%s2270 + $0x12a] sm:$0xff] %vm2080, %v2225
        %2297 = vst.msk [vmem:[%s2270 + $0x13a] sm:$0xff] %vm2080, %v2227
        %2298 = vst.msk [vmem:[%s2270 + $0x142] sm:$0xff] %vm2080, %v2229
        %2299 = vst.msk [vmem:[%s2270 + $0x152] sm:$0xff] %vm2080, %v2231
        %2300 = vst.msk [vmem:[%s2270 + $0x15a] sm:$0xff] %vm2080, %v2233
        %2301 = vst.msk [vmem:[%s2270 + $0x16a] sm:$0xff] %vm2080, %v2235
        %2302 = vst.msk [vmem:[%s2270 + $0x172] sm:$0xff] %vm2080, %v2237
        %v2303 = vld [vmem:[#allocation3] sm:$0xff]
        %v2304 = vld [vmem:[#allocation3 + $0x8] sm:$0xff]
        %v2305 = vld [vmem:[#allocation3 + $0x10] sm:$0xf]
        %v2306 = vld [vmem:[#allocation3 + $0x18] sm:$0xff]
        %v2307 = vld [vmem:[#allocation3 + $0x20] sm:$0xff]
        %v2308 = vld [vmem:[#allocation3 + $0x28] sm:$0xf]
        %v2309 = vld [vmem:[#allocation3 + $0x30] sm:$0xff]
        %v2310 = vld [vmem:[#allocation3 + $0x38] sm:$0xff]
        %v2311 = vld [vmem:[#allocation3 + $0x40] sm:$0xf]
        %v2312 = vld [vmem:[#allocation3 + $0x48] sm:$0xff]
        %v2313 = vld [vmem:[#allocation3 + $0x50] sm:$0xff]
        %v2314 = vld [vmem:[#allocation3 + $0x58] sm:$0xf]
        %v2315 = vld [vmem:[#allocation3 + $0x60] sm:$0xff]
        %v2316 = vld [vmem:[#allocation3 + $0x68] sm:$0xff]
        %v2317 = vld [vmem:[#allocation3 + $0x70] sm:$0xf]
        %v2318 = vld [vmem:[#allocation3 + $0x78] sm:$0xff]
        %v2319 = vld [vmem:[#allocation3 + $0x80] sm:$0xff]
        %v2320 = vld [vmem:[#allocation3 + $0x88] sm:$0xf]
        %v2321 = vld [vmem:[#allocation3 + $0x90] sm:$0xff]
        %v2322 = vld [vmem:[#allocation3 + $0x98] sm:$0xff]
        %v2323 = vld [vmem:[#allocation3 + $0xa0] sm:$0xf]
        %v2324 = vld [vmem:[#allocation3 + $0xa8] sm:$0xff]
        %v2325 = vld [vmem:[#allocation3 + $0xb0] sm:$0xff]
        %v2326 = vld [vmem:[#allocation3 + $0xb8] sm:$0xf]
        %v2327 = vld [vmem:[#allocation3 + $0xc0] sm:$0xff]
        %v2328 = vld [vmem:[#allocation3 + $0xc8] sm:$0xff]
        %v2329 = vld [vmem:[#allocation3 + $0xd0] sm:$0xf]
        %v2330 = vld [vmem:[#allocation3 + $0xd8] sm:$0xff]
        %v2331 = vld [vmem:[#allocation3 + $0xe0] sm:$0xff]
        %v2332 = vld [vmem:[#allocation3 + $0xe8] sm:$0xf]
        %v2333 = vld [vmem:[#allocation3 + $0xf0] sm:$0xff]
        %v2334 = vld [vmem:[#allocation3 + $0xf8] sm:$0xff]
        %v2335 = vld [vmem:[#allocation3 + $0x100] sm:$0xf]
        %v2336 = vld [vmem:[#allocation3 + $0x108] sm:$0xff]
        %v2337 = vld [vmem:[#allocation3 + $0x110] sm:$0xff]
        %v2338 = vld [vmem:[#allocation3 + $0x118] sm:$0xf]
        %v2339 = vld [vmem:[#allocation3 + $0x120] sm:$0xff]
        %v2340 = vld [vmem:[#allocation3 + $0x128] sm:$0xff]
        %v2341 = vld [vmem:[#allocation3 + $0x130] sm:$0xf]
        %v2342 = vld [vmem:[#allocation3 + $0x138] sm:$0xff]
        %v2343 = vld [vmem:[#allocation3 + $0x140] sm:$0xff]
        %v2344 = vld [vmem:[#allocation3 + $0x148] sm:$0xf]
        %v2345 = vld [vmem:[#allocation3 + $0x150] sm:$0xff]
        %v2346 = vld [vmem:[#allocation3 + $0x158] sm:$0xff]
        %v2347 = vld [vmem:[#allocation3 + $0x160] sm:$0xf]
        %v2348 = vld [vmem:[#allocation3 + $0x168] sm:$0xff]
        %v2349 = vld [vmem:[#allocation3 + $0x170] sm:$0xff]
        %v2350 = vld [vmem:[#allocation3 + $0x178] sm:$0xf]
        %v2351 = vld [vmem:[#allocation3 + $0x180] sm:$0xff]
        %v2352 = vld [vmem:[#allocation3 + $0x188] sm:$0xff]
        %v2353 = vld [vmem:[#allocation3 + $0x190] sm:$0xf]
        %v2354 = vld [vmem:[#allocation3 + $0x198] sm:$0xff]
        %v2355 = vld [vmem:[#allocation3 + $0x1a0] sm:$0xff]
        %v2356 = vld [vmem:[#allocation3 + $0x1a8] sm:$0xf]
        %v2357 = vld [vmem:[#allocation3 + $0x1b0] sm:$0xff]
        %v2358 = vld [vmem:[#allocation3 + $0x1b8] sm:$0xff]
        %v2359 = vld [vmem:[#allocation3 + $0x1c0] sm:$0xf]
        %v2360 = vld [vmem:[#allocation3 + $0x1c8] sm:$0xff]
        %v2361 = vld [vmem:[#allocation3 + $0x1d0] sm:$0xff]
        %v2362 = vld [vmem:[#allocation3 + $0x1d8] sm:$0xf]
        %v2411 = vrot.slane %v2303, 1
        %v2412 = vrot.slane %v2304, 1
        %v2413 = vsel %vm1454, %v2411, %v2412
        %v2414 = vrot.slane %v2305, 1
        %v2415 = vsel %vm1454, %v2412, %v2414
        %v2416 = vrot.slane %v2306, 1
        %v2417 = vrot.slane %v2307, 1
        %v2418 = vsel %vm1454, %v2416, %v2417
        %v2419 = vrot.slane %v2308, 1
        %v2420 = vsel %vm1454, %v2417, %v2419
        %v2421 = vrot.slane %v2309, 1
        %v2422 = vrot.slane %v2310, 1
        %v2423 = vsel %vm1454, %v2421, %v2422
        %v2424 = vrot.slane %v2311, 1
        %v2425 = vsel %vm1454, %v2422, %v2424
        %v2426 = vrot.slane %v2312, 1
        %v2427 = vrot.slane %v2313, 1
        %v2428 = vsel %vm1454, %v2426, %v2427
        %v2429 = vrot.slane %v2314, 1
        %v2430 = vsel %vm1454, %v2427, %v2429
        %v2431 = vrot.slane %v2315, 1
        %v2432 = vrot.slane %v2316, 1
        %v2433 = vsel %vm1454, %v2431, %v2432
        %v2434 = vrot.slane %v2317, 1
        %v2435 = vsel %vm1454, %v2432, %v2434
        %v2436 = vrot.slane %v2318, 1
        %v2437 = vrot.slane %v2319, 1
        %v2438 = vsel %vm1454, %v2436, %v2437
        %v2439 = vrot.slane %v2320, 1
        %v2440 = vsel %vm1454, %v2437, %v2439
        %v2441 = vrot.slane %v2321, 1
        %v2442 = vrot.slane %v2322, 1
        %v2443 = vsel %vm1454, %v2441, %v2442
        %v2444 = vrot.slane %v2323, 1
        %v2445 = vsel %vm1454, %v2442, %v2444
        %v2446 = vrot.slane %v2324, 1
        %v2447 = vrot.slane %v2325, 1
        %v2448 = vsel %vm1454, %v2446, %v2447
        %v2449 = vrot.slane %v2326, 1
        %v2450 = vsel %vm1454, %v2447, %v2449
        %v2451 = vrot.slane %v2327, 1
        %v2452 = vrot.slane %v2328, 1
        %v2453 = vsel %vm1454, %v2451, %v2452
        %v2454 = vrot.slane %v2329, 1
        %v2455 = vsel %vm1454, %v2452, %v2454
        %v2456 = vrot.slane %v2330, 1
        %v2457 = vrot.slane %v2331, 1
        %v2458 = vsel %vm1454, %v2456, %v2457
        %v2459 = vrot.slane %v2332, 1
        %v2460 = vsel %vm1454, %v2457, %v2459
        %v2461 = vrot.slane %v2333, 1
        %v2462 = vrot.slane %v2334, 1
        %v2463 = vsel %vm1454, %v2461, %v2462
        %v2464 = vrot.slane %v2335, 1
        %v2465 = vsel %vm1454, %v2462, %v2464
        %v2466 = vrot.slane %v2336, 1
        %v2467 = vrot.slane %v2337, 1
        %v2468 = vsel %vm1454, %v2466, %v2467
        %v2469 = vrot.slane %v2338, 1
        %v2470 = vsel %vm1454, %v2467, %v2469
        %v2471 = vrot.slane %v2339, 1
        %v2472 = vrot.slane %v2340, 1
        %v2473 = vsel %vm1454, %v2471, %v2472
        %v2474 = vrot.slane %v2341, 1
        %v2475 = vsel %vm1454, %v2472, %v2474
        %v2476 = vrot.slane %v2342, 1
        %v2477 = vrot.slane %v2343, 1
        %v2478 = vsel %vm1454, %v2476, %v2477
        %v2479 = vrot.slane %v2344, 1
        %v2480 = vsel %vm1454, %v2477, %v2479
        %v2481 = vrot.slane %v2345, 1
        %v2482 = vrot.slane %v2346, 1
        %v2483 = vsel %vm1454, %v2481, %v2482
        %v2484 = vrot.slane %v2347, 1
        %v2485 = vsel %vm1454, %v2482, %v2484
        %v2486 = vrot.slane %v2348, 1
        %v2487 = vrot.slane %v2349, 1
        %v2488 = vsel %vm1454, %v2486, %v2487
        %v2489 = vrot.slane %v2350, 1
        %v2490 = vsel %vm1454, %v2487, %v2489
        %2491 = vrot.lane.b32.xlu0 %v2413, 48
        %v2492 = vpop.permute.xlu0 %2491
        %2493 = vrot.lane.b32.xlu0 %v2415, 48
        %v2494 = vpop.permute.xlu0 %2493
        %2495 = vrot.lane.b32.xlu0 %v2418, 48
        %v2496 = vpop.permute.xlu0 %2495
        %2497 = vrot.lane.b32.xlu0 %v2420, 48
        %v2498 = vpop.permute.xlu0 %2497
        %2499 = vrot.lane.b32.xlu0 %v2423, 48
        %v2500 = vpop.permute.xlu0 %2499
        %2501 = vrot.lane.b32.xlu0 %v2425, 48
        %v2502 = vpop.permute.xlu0 %2501
        %2503 = vrot.lane.b32.xlu0 %v2428, 48
        %v2504 = vpop.permute.xlu0 %2503
        %2505 = vrot.lane.b32.xlu0 %v2430, 48
        %v2506 = vpop.permute.xlu0 %2505
        %2507 = vrot.lane.b32.xlu0 %v2433, 48
        %v2508 = vpop.permute.xlu0 %2507
        %2509 = vrot.lane.b32.xlu0 %v2435, 48
        %v2510 = vpop.permute.xlu0 %2509
        %2511 = vrot.lane.b32.xlu0 %v2438, 48
        %v2512 = vpop.permute.xlu0 %2511
        %2513 = vrot.lane.b32.xlu0 %v2440, 48
        %v2514 = vpop.permute.xlu0 %2513
        %2515 = vrot.lane.b32.xlu0 %v2443, 48
        %v2516 = vpop.permute.xlu0 %2515
        %2517 = vrot.lane.b32.xlu0 %v2445, 48
        %v2518 = vpop.permute.xlu0 %2517
        %2519 = vrot.lane.b32.xlu0 %v2448, 48
        %v2520 = vpop.permute.xlu0 %2519
        %2521 = vrot.lane.b32.xlu0 %v2450, 48
        %v2522 = vpop.permute.xlu0 %2521
        %2523 = vrot.lane.b32.xlu0 %v2453, 48
        %v2524 = vpop.permute.xlu0 %2523
        %2525 = vrot.lane.b32.xlu0 %v2455, 48
        %v2526 = vpop.permute.xlu0 %2525
        %2527 = vrot.lane.b32.xlu0 %v2458, 48
        %v2528 = vpop.permute.xlu0 %2527
        %2529 = vrot.lane.b32.xlu0 %v2460, 48
        %v2530 = vpop.permute.xlu0 %2529
        %2531 = vrot.lane.b32.xlu0 %v2463, 48
        %v2532 = vpop.permute.xlu0 %2531
        %2533 = vrot.lane.b32.xlu0 %v2465, 48
        %v2534 = vpop.permute.xlu0 %2533
        %2535 = vrot.lane.b32.xlu0 %v2468, 48
        %v2536 = vpop.permute.xlu0 %2535
        %2537 = vrot.lane.b32.xlu0 %v2470, 48
        %v2538 = vpop.permute.xlu0 %2537
        %2539 = vrot.lane.b32.xlu0 %v2473, 48
        %v2540 = vpop.permute.xlu0 %2539
        %2541 = vrot.lane.b32.xlu0 %v2475, 48
        %v2542 = vpop.permute.xlu0 %2541
        %2543 = vrot.lane.b32.xlu0 %v2478, 48
        %v2544 = vpop.permute.xlu0 %2543
        %2545 = vrot.lane.b32.xlu0 %v2480, 48
        %v2546 = vpop.permute.xlu0 %2545
        %2547 = vrot.lane.b32.xlu0 %v2483, 48
        %v2548 = vpop.permute.xlu0 %2547
        %2549 = vrot.lane.b32.xlu0 %v2485, 48
        %v2550 = vpop.permute.xlu0 %2549
        %2551 = vrot.lane.b32.xlu0 %v2488, 48
        %v2552 = vpop.permute.xlu0 %2551
        %2553 = vrot.lane.b32.xlu0 %v2490, 48
        %v2554 = vpop.permute.xlu0 %2553
        %v2587 = vrot.slane %v2303, 2
        %v2588 = vrot.slane %v2304, 2
        %v2589 = vsel %vm1599, %v2587, %v2588
        %v2590 = vrot.slane %v2305, 2
        %v2591 = vsel %vm1599, %v2588, %v2590
        %v2592 = vrot.slane %v2306, 2
        %v2593 = vrot.slane %v2307, 2
        %v2594 = vsel %vm1599, %v2592, %v2593
        %v2595 = vrot.slane %v2308, 2
        %v2596 = vsel %vm1599, %v2593, %v2595
        %v2597 = vrot.slane %v2309, 2
        %v2598 = vrot.slane %v2310, 2
        %v2599 = vsel %vm1599, %v2597, %v2598
        %v2600 = vrot.slane %v2311, 2
        %v2601 = vsel %vm1599, %v2598, %v2600
        %v2602 = vrot.slane %v2312, 2
        %v2603 = vrot.slane %v2313, 2
        %v2604 = vsel %vm1599, %v2602, %v2603
        %v2605 = vrot.slane %v2314, 2
        %v2606 = vsel %vm1599, %v2603, %v2605
        %v2607 = vrot.slane %v2315, 2
        %v2608 = vrot.slane %v2316, 2
        %v2609 = vsel %vm1599, %v2607, %v2608
        %v2610 = vrot.slane %v2317, 2
        %v2611 = vsel %vm1599, %v2608, %v2610
        %v2612 = vrot.slane %v2318, 2
        %v2613 = vrot.slane %v2319, 2
        %v2614 = vsel %vm1599, %v2612, %v2613
        %v2615 = vrot.slane %v2320, 2
        %v2616 = vsel %vm1599, %v2613, %v2615
        %v2617 = vrot.slane %v2321, 2
        %v2618 = vrot.slane %v2322, 2
        %v2619 = vsel %vm1599, %v2617, %v2618
        %v2620 = vrot.slane %v2323, 2
        %v2621 = vsel %vm1599, %v2618, %v2620
        %v2622 = vrot.slane %v2324, 2
        %v2623 = vrot.slane %v2325, 2
        %v2624 = vsel %vm1599, %v2622, %v2623
        %v2625 = vrot.slane %v2326, 2
        %v2626 = vsel %vm1599, %v2623, %v2625
        %v2627 = vrot.slane %v2327, 2
        %v2628 = vrot.slane %v2328, 2
        %v2629 = vsel %vm1599, %v2627, %v2628
        %v2630 = vrot.slane %v2329, 2
        %v2631 = vsel %vm1599, %v2628, %v2630
        %v2632 = vrot.slane %v2330, 2
        %v2633 = vrot.slane %v2331, 2
        %v2634 = vsel %vm1599, %v2632, %v2633
        %v2635 = vrot.slane %v2332, 2
        %v2636 = vsel %vm1599, %v2633, %v2635
        %v2637 = vrot.slane %v2333, 2
        %v2638 = vrot.slane %v2334, 2
        %v2639 = vsel %vm1599, %v2637, %v2638
        %v2640 = vrot.slane %v2335, 2
        %v2641 = vsel %vm1599, %v2638, %v2640
        %v2642 = vrot.slane %v2336, 2
        %v2643 = vrot.slane %v2337, 2
        %v2644 = vsel %vm1599, %v2642, %v2643
        %v2645 = vrot.slane %v2338, 2
        %v2646 = vsel %vm1599, %v2643, %v2645
        %v2647 = vrot.slane %v2339, 2
        %v2648 = vrot.slane %v2340, 2
        %v2649 = vsel %vm1599, %v2647, %v2648
        %v2650 = vrot.slane %v2341, 2
        %v2651 = vsel %vm1599, %v2648, %v2650
        %v2652 = vrot.slane %v2342, 2
        %v2653 = vrot.slane %v2343, 2
        %v2654 = vsel %vm1599, %v2652, %v2653
        %v2655 = vrot.slane %v2344, 2
        %v2656 = vsel %vm1599, %v2653, %v2655
        %v2657 = vrot.slane %v2345, 2
        %v2658 = vrot.slane %v2346, 2
        %v2659 = vsel %vm1599, %v2657, %v2658
        %v2660 = vrot.slane %v2347, 2
        %v2661 = vsel %vm1599, %v2658, %v2660
        %v2662 = vrot.slane %v2348, 2
        %v2663 = vrot.slane %v2349, 2
        %v2664 = vsel %vm1599, %v2662, %v2663
        %v2665 = vrot.slane %v2350, 2
        %v2666 = vsel %vm1599, %v2663, %v2665
        %2667 = vrot.lane.b32.xlu0 %v2589, 96
        %v2668 = vpop.permute.xlu0 %2667
        %2669 = vrot.lane.b32.xlu0 %v2591, 96
        %v2670 = vpop.permute.xlu0 %2669
        %2671 = vrot.lane.b32.xlu0 %v2594, 96
        %v2672 = vpop.permute.xlu0 %2671
        %2673 = vrot.lane.b32.xlu0 %v2596, 96
        %v2674 = vpop.permute.xlu0 %2673
        %2675 = vrot.lane.b32.xlu0 %v2599, 96
        %v2676 = vpop.permute.xlu0 %2675
        %2677 = vrot.lane.b32.xlu0 %v2601, 96
        %v2678 = vpop.permute.xlu0 %2677
        %2679 = vrot.lane.b32.xlu0 %v2604, 96
        %v2680 = vpop.permute.xlu0 %2679
        %2681 = vrot.lane.b32.xlu0 %v2606, 96
        %v2682 = vpop.permute.xlu0 %2681
        %2683 = vrot.lane.b32.xlu0 %v2609, 96
        %v2684 = vpop.permute.xlu0 %2683
        %2685 = vrot.lane.b32.xlu0 %v2611, 96
        %v2686 = vpop.permute.xlu0 %2685
        %2687 = vrot.lane.b32.xlu0 %v2614, 96
        %v2688 = vpop.permute.xlu0 %2687
        %2689 = vrot.lane.b32.xlu0 %v2616, 96
        %v2690 = vpop.permute.xlu0 %2689
        %2691 = vrot.lane.b32.xlu0 %v2619, 96
        %v2692 = vpop.permute.xlu0 %2691
        %2693 = vrot.lane.b32.xlu0 %v2621, 96
        %v2694 = vpop.permute.xlu0 %2693
        %2695 = vrot.lane.b32.xlu0 %v2624, 96
        %v2696 = vpop.permute.xlu0 %2695
        %2697 = vrot.lane.b32.xlu0 %v2626, 96
        %v2698 = vpop.permute.xlu0 %2697
        %2699 = vrot.lane.b32.xlu0 %v2629, 96
        %v2700 = vpop.permute.xlu0 %2699
        %2701 = vrot.lane.b32.xlu0 %v2631, 96
        %v2702 = vpop.permute.xlu0 %2701
        %2703 = vrot.lane.b32.xlu0 %v2634, 96
        %v2704 = vpop.permute.xlu0 %2703
        %2705 = vrot.lane.b32.xlu0 %v2636, 96
        %v2706 = vpop.permute.xlu0 %2705
        %2707 = vrot.lane.b32.xlu0 %v2639, 96
        %v2708 = vpop.permute.xlu0 %2707
        %2709 = vrot.lane.b32.xlu0 %v2641, 96
        %v2710 = vpop.permute.xlu0 %2709
        %2711 = vrot.lane.b32.xlu0 %v2644, 96
        %v2712 = vpop.permute.xlu0 %2711
        %2713 = vrot.lane.b32.xlu0 %v2646, 96
        %v2714 = vpop.permute.xlu0 %2713
        %2715 = vrot.lane.b32.xlu0 %v2649, 96
        %v2716 = vpop.permute.xlu0 %2715
        %2717 = vrot.lane.b32.xlu0 %v2651, 96
        %v2718 = vpop.permute.xlu0 %2717
        %2719 = vrot.lane.b32.xlu0 %v2654, 96
        %v2720 = vpop.permute.xlu0 %2719
        %2721 = vrot.lane.b32.xlu0 %v2656, 96
        %v2722 = vpop.permute.xlu0 %2721
        %2723 = vrot.lane.b32.xlu0 %v2659, 96
        %v2724 = vpop.permute.xlu0 %2723
        %2725 = vrot.lane.b32.xlu0 %v2661, 96
        %v2726 = vpop.permute.xlu0 %2725
        %2727 = vrot.lane.b32.xlu0 %v2664, 96
        %v2728 = vpop.permute.xlu0 %2727
        %2729 = vrot.lane.b32.xlu0 %v2666, 96
        %v2730 = vpop.permute.xlu0 %2729
        %vm2763 = vcmask 1044480
        %v2764 = vrot.slane %v2303, 3
        %v2765 = vrot.slane %v2304, 3
        %v2766 = vsel %vm2763, %v2764, %v2765
        %v2767 = vrot.slane %v2305, 3
        %v2768 = vsel %vm2763, %v2765, %v2767
        %v2769 = vrot.slane %v2306, 3
        %v2770 = vrot.slane %v2307, 3
        %v2771 = vsel %vm2763, %v2769, %v2770
        %v2772 = vrot.slane %v2308, 3
        %v2773 = vsel %vm2763, %v2770, %v2772
        %v2774 = vrot.slane %v2309, 3
        %v2775 = vrot.slane %v2310, 3
        %v2776 = vsel %vm2763, %v2774, %v2775
        %v2777 = vrot.slane %v2311, 3
        %v2778 = vsel %vm2763, %v2775, %v2777
        %v2779 = vrot.slane %v2312, 3
        %v2780 = vrot.slane %v2313, 3
        %v2781 = vsel %vm2763, %v2779, %v2780
        %v2782 = vrot.slane %v2314, 3
        %v2783 = vsel %vm2763, %v2780, %v2782
        %v2784 = vrot.slane %v2315, 3
        %v2785 = vrot.slane %v2316, 3
        %v2786 = vsel %vm2763, %v2784, %v2785
        %v2787 = vrot.slane %v2317, 3
        %v2788 = vsel %vm2763, %v2785, %v2787
        %v2789 = vrot.slane %v2318, 3
        %v2790 = vrot.slane %v2319, 3
        %v2791 = vsel %vm2763, %v2789, %v2790
        %v2792 = vrot.slane %v2320, 3
        %v2793 = vsel %vm2763, %v2790, %v2792
        %v2794 = vrot.slane %v2321, 3
        %v2795 = vrot.slane %v2322, 3
        %v2796 = vsel %vm2763, %v2794, %v2795
        %v2797 = vrot.slane %v2323, 3
        %v2798 = vsel %vm2763, %v2795, %v2797
        %v2799 = vrot.slane %v2324, 3
        %v2800 = vrot.slane %v2325, 3
        %v2801 = vsel %vm2763, %v2799, %v2800
        %v2802 = vrot.slane %v2326, 3
        %v2803 = vsel %vm2763, %v2800, %v2802
        %v2804 = vrot.slane %v2327, 3
        %v2805 = vrot.slane %v2328, 3
        %v2806 = vsel %vm2763, %v2804, %v2805
        %v2807 = vrot.slane %v2329, 3
        %v2808 = vsel %vm2763, %v2805, %v2807
        %v2809 = vrot.slane %v2330, 3
        %v2810 = vrot.slane %v2331, 3
        %v2811 = vsel %vm2763, %v2809, %v2810
        %v2812 = vrot.slane %v2332, 3
        %v2813 = vsel %vm2763, %v2810, %v2812
        %v2814 = vrot.slane %v2333, 3
        %v2815 = vrot.slane %v2334, 3
        %v2816 = vsel %vm2763, %v2814, %v2815
        %v2817 = vrot.slane %v2335, 3
        %v2818 = vsel %vm2763, %v2815, %v2817
        %v2819 = vrot.slane %v2336, 3
        %v2820 = vrot.slane %v2337, 3
        %v2821 = vsel %vm2763, %v2819, %v2820
        %v2822 = vrot.slane %v2338, 3
        %v2823 = vsel %vm2763, %v2820, %v2822
        %v2824 = vrot.slane %v2339, 3
        %v2825 = vrot.slane %v2340, 3
        %v2826 = vsel %vm2763, %v2824, %v2825
        %v2827 = vrot.slane %v2341, 3
        %v2828 = vsel %vm2763, %v2825, %v2827
        %v2829 = vrot.slane %v2342, 3
        %v2830 = vrot.slane %v2343, 3
        %v2831 = vsel %vm2763, %v2829, %v2830
        %v2832 = vrot.slane %v2344, 3
        %v2833 = vsel %vm2763, %v2830, %v2832
        %v2834 = vrot.slane %v2345, 3
        %v2835 = vrot.slane %v2346, 3
        %v2836 = vsel %vm2763, %v2834, %v2835
        %v2837 = vrot.slane %v2347, 3
        %v2838 = vsel %vm2763, %v2835, %v2837
        %v2839 = vrot.slane %v2348, 3
        %v2840 = vrot.slane %v2349, 3
        %v2841 = vsel %vm2763, %v2839, %v2840
        %v2842 = vrot.slane %v2350, 3
        %v2843 = vsel %vm2763, %v2840, %v2842
        %2844 = vrot.lane.b32.xlu0 %v2766, 16
        %v2845 = vpop.permute.xlu0 %2844
        %2846 = vrot.lane.b32.xlu0 %v2768, 16
        %v2847 = vpop.permute.xlu0 %2846
        %2848 = vrot.lane.b32.xlu0 %v2771, 16
        %v2849 = vpop.permute.xlu0 %2848
        %2850 = vrot.lane.b32.xlu0 %v2773, 16
        %v2851 = vpop.permute.xlu0 %2850
        %2852 = vrot.lane.b32.xlu0 %v2776, 16
        %v2853 = vpop.permute.xlu0 %2852
        %2854 = vrot.lane.b32.xlu0 %v2778, 16
        %v2855 = vpop.permute.xlu0 %2854
        %2856 = vrot.lane.b32.xlu0 %v2781, 16
        %v2857 = vpop.permute.xlu0 %2856
        %2858 = vrot.lane.b32.xlu0 %v2783, 16
        %v2859 = vpop.permute.xlu0 %2858
        %2860 = vrot.lane.b32.xlu0 %v2786, 16
        %v2861 = vpop.permute.xlu0 %2860
        %2862 = vrot.lane.b32.xlu0 %v2788, 16
        %v2863 = vpop.permute.xlu0 %2862
        %2864 = vrot.lane.b32.xlu0 %v2791, 16
        %v2865 = vpop.permute.xlu0 %2864
        %2866 = vrot.lane.b32.xlu0 %v2793, 16
        %v2867 = vpop.permute.xlu0 %2866
        %2868 = vrot.lane.b32.xlu0 %v2796, 16
        %v2869 = vpop.permute.xlu0 %2868
        %2870 = vrot.lane.b32.xlu0 %v2798, 16
        %v2871 = vpop.permute.xlu0 %2870
        %2872 = vrot.lane.b32.xlu0 %v2801, 16
        %v2873 = vpop.permute.xlu0 %2872
        %2874 = vrot.lane.b32.xlu0 %v2803, 16
        %v2875 = vpop.permute.xlu0 %2874
        %2876 = vrot.lane.b32.xlu0 %v2806, 16
        %v2877 = vpop.permute.xlu0 %2876
        %2878 = vrot.lane.b32.xlu0 %v2808, 16
        %v2879 = vpop.permute.xlu0 %2878
        %2880 = vrot.lane.b32.xlu0 %v2811, 16
        %v2881 = vpop.permute.xlu0 %2880
        %2882 = vrot.lane.b32.xlu0 %v2813, 16
        %v2883 = vpop.permute.xlu0 %2882
        %2884 = vrot.lane.b32.xlu0 %v2816, 16
        %v2885 = vpop.permute.xlu0 %2884
        %2886 = vrot.lane.b32.xlu0 %v2818, 16
        %v2887 = vpop.permute.xlu0 %2886
        %2888 = vrot.lane.b32.xlu0 %v2821, 16
        %v2889 = vpop.permute.xlu0 %2888
        %2890 = vrot.lane.b32.xlu0 %v2823, 16
        %v2891 = vpop.permute.xlu0 %2890
        %2892 = vrot.lane.b32.xlu0 %v2826, 16
        %v2893 = vpop.permute.xlu0 %2892
        %2894 = vrot.lane.b32.xlu0 %v2828, 16
        %v2895 = vpop.permute.xlu0 %2894
        %2896 = vrot.lane.b32.xlu0 %v2831, 16
        %v2897 = vpop.permute.xlu0 %2896
        %2898 = vrot.lane.b32.xlu0 %v2833, 16
        %v2899 = vpop.permute.xlu0 %2898
        %2900 = vrot.lane.b32.xlu0 %v2836, 16
        %v2901 = vpop.permute.xlu0 %2900
        %2902 = vrot.lane.b32.xlu0 %v2838, 16
        %v2903 = vpop.permute.xlu0 %2902
        %2904 = vrot.lane.b32.xlu0 %v2841, 16
        %v2905 = vpop.permute.xlu0 %2904
        %2906 = vrot.lane.b32.xlu0 %v2843, 16
        %v2907 = vpop.permute.xlu0 %2906
        %v2940 = vrot.slane %v2303, 4
        %v2941 = vrot.slane %v2304, 4
        %v2942 = vsel %vm625, %v2940, %v2941
        %v2943 = vrot.slane %v2305, 4
        %v2944 = vsel %vm625, %v2941, %v2943
        %v2945 = vrot.slane %v2306, 4
        %v2946 = vrot.slane %v2307, 4
        %v2947 = vsel %vm625, %v2945, %v2946
        %v2948 = vrot.slane %v2308, 4
        %v2949 = vsel %vm625, %v2946, %v2948
        %v2950 = vrot.slane %v2309, 4
        %v2951 = vrot.slane %v2310, 4
        %v2952 = vsel %vm625, %v2950, %v2951
        %v2953 = vrot.slane %v2311, 4
        %v2954 = vsel %vm625, %v2951, %v2953
        %v2955 = vrot.slane %v2312, 4
        %v2956 = vrot.slane %v2313, 4
        %v2957 = vsel %vm625, %v2955, %v2956
        %v2958 = vrot.slane %v2314, 4
        %v2959 = vsel %vm625, %v2956, %v2958
        %v2960 = vrot.slane %v2315, 4
        %v2961 = vrot.slane %v2316, 4
        %v2962 = vsel %vm625, %v2960, %v2961
        %v2963 = vrot.slane %v2317, 4
        %v2964 = vsel %vm625, %v2961, %v2963
        %v2965 = vrot.slane %v2318, 4
        %v2966 = vrot.slane %v2319, 4
        %v2967 = vsel %vm625, %v2965, %v2966
        %v2968 = vrot.slane %v2320, 4
        %v2969 = vsel %vm625, %v2966, %v2968
        %v2970 = vrot.slane %v2321, 4
        %v2971 = vrot.slane %v2322, 4
        %v2972 = vsel %vm625, %v2970, %v2971
        %v2973 = vrot.slane %v2323, 4
        %v2974 = vsel %vm625, %v2971, %v2973
        %v2975 = vrot.slane %v2324, 4
        %v2976 = vrot.slane %v2325, 4
        %v2977 = vsel %vm625, %v2975, %v2976
        %v2978 = vrot.slane %v2326, 4
        %v2979 = vsel %vm625, %v2976, %v2978
        %v2980 = vrot.slane %v2327, 4
        %v2981 = vrot.slane %v2328, 4
        %v2982 = vsel %vm625, %v2980, %v2981
        %v2983 = vrot.slane %v2329, 4
        %v2984 = vsel %vm625, %v2981, %v2983
        %v2985 = vrot.slane %v2330, 4
        %v2986 = vrot.slane %v2331, 4
        %v2987 = vsel %vm625, %v2985, %v2986
        %v2988 = vrot.slane %v2332, 4
        %v2989 = vsel %vm625, %v2986, %v2988
        %v2990 = vrot.slane %v2333, 4
        %v2991 = vrot.slane %v2334, 4
        %v2992 = vsel %vm625, %v2990, %v2991
        %v2993 = vrot.slane %v2335, 4
        %v2994 = vsel %vm625, %v2991, %v2993
        %v2995 = vrot.slane %v2336, 4
        %v2996 = vrot.slane %v2337, 4
        %v2997 = vsel %vm625, %v2995, %v2996
        %v2998 = vrot.slane %v2338, 4
        %v2999 = vsel %vm625, %v2996, %v2998
        %v3000 = vrot.slane %v2339, 4
        %v3001 = vrot.slane %v2340, 4
        %v3002 = vsel %vm625, %v3000, %v3001
        %v3003 = vrot.slane %v2341, 4
        %v3004 = vsel %vm625, %v3001, %v3003
        %v3005 = vrot.slane %v2342, 4
        %v3006 = vrot.slane %v2343, 4
        %v3007 = vsel %vm625, %v3005, %v3006
        %v3008 = vrot.slane %v2344, 4
        %v3009 = vsel %vm625, %v3006, %v3008
        %v3010 = vrot.slane %v2345, 4
        %v3011 = vrot.slane %v2346, 4
        %v3012 = vsel %vm625, %v3010, %v3011
        %v3013 = vrot.slane %v2347, 4
        %v3014 = vsel %vm625, %v3011, %v3013
        %v3015 = vrot.slane %v2348, 4
        %v3016 = vrot.slane %v2349, 4
        %v3017 = vsel %vm625, %v3015, %v3016
        %v3018 = vrot.slane %v2350, 4
        %v3019 = vsel %vm625, %v3016, %v3018
        %3020 = vrot.lane.b32.xlu0 %v2942, 64
        %v3021 = vpop.permute.xlu0 %3020
        %3022 = vrot.lane.b32.xlu0 %v2944, 64
        %v3023 = vpop.permute.xlu0 %3022
        %3024 = vrot.lane.b32.xlu0 %v2947, 64
        %v3025 = vpop.permute.xlu0 %3024
        %3026 = vrot.lane.b32.xlu0 %v2949, 64
        %v3027 = vpop.permute.xlu0 %3026
        %3028 = vrot.lane.b32.xlu0 %v2952, 64
        %v3029 = vpop.permute.xlu0 %3028
        %3030 = vrot.lane.b32.xlu0 %v2954, 64
        %v3031 = vpop.permute.xlu0 %3030
        %3032 = vrot.lane.b32.xlu0 %v2957, 64
        %v3033 = vpop.permute.xlu0 %3032
        %3034 = vrot.lane.b32.xlu0 %v2959, 64
        %v3035 = vpop.permute.xlu0 %3034
        %3036 = vrot.lane.b32.xlu0 %v2962, 64
        %v3037 = vpop.permute.xlu0 %3036
        %3038 = vrot.lane.b32.xlu0 %v2964, 64
        %v3039 = vpop.permute.xlu0 %3038
        %3040 = vrot.lane.b32.xlu0 %v2967, 64
        %v3041 = vpop.permute.xlu0 %3040
        %3042 = vrot.lane.b32.xlu0 %v2969, 64
        %v3043 = vpop.permute.xlu0 %3042
        %3044 = vrot.lane.b32.xlu0 %v2972, 64
        %v3045 = vpop.permute.xlu0 %3044
        %3046 = vrot.lane.b32.xlu0 %v2974, 64
        %v3047 = vpop.permute.xlu0 %3046
        %3048 = vrot.lane.b32.xlu0 %v2977, 64
        %v3049 = vpop.permute.xlu0 %3048
        %3050 = vrot.lane.b32.xlu0 %v2979, 64
        %v3051 = vpop.permute.xlu0 %3050
        %3052 = vrot.lane.b32.xlu0 %v2982, 64
        %v3053 = vpop.permute.xlu0 %3052
        %3054 = vrot.lane.b32.xlu0 %v2984, 64
        %v3055 = vpop.permute.xlu0 %3054
        %3056 = vrot.lane.b32.xlu0 %v2987, 64
        %v3057 = vpop.permute.xlu0 %3056
        %3058 = vrot.lane.b32.xlu0 %v2989, 64
        %v3059 = vpop.permute.xlu0 %3058
        %3060 = vrot.lane.b32.xlu0 %v2992, 64
        %v3061 = vpop.permute.xlu0 %3060
        %3062 = vrot.lane.b32.xlu0 %v2994, 64
        %v3063 = vpop.permute.xlu0 %3062
        %3064 = vrot.lane.b32.xlu0 %v2997, 64
        %v3065 = vpop.permute.xlu0 %3064
        %3066 = vrot.lane.b32.xlu0 %v2999, 64
        %v3067 = vpop.permute.xlu0 %3066
        %3068 = vrot.lane.b32.xlu0 %v3002, 64
        %v3069 = vpop.permute.xlu0 %3068
        %3070 = vrot.lane.b32.xlu0 %v3004, 64
        %v3071 = vpop.permute.xlu0 %3070
        %3072 = vrot.lane.b32.xlu0 %v3007, 64
        %v3073 = vpop.permute.xlu0 %3072
        %3074 = vrot.lane.b32.xlu0 %v3009, 64
        %v3075 = vpop.permute.xlu0 %3074
        %3076 = vrot.lane.b32.xlu0 %v3012, 64
        %v3077 = vpop.permute.xlu0 %3076
        %3078 = vrot.lane.b32.xlu0 %v3014, 64
        %v3079 = vpop.permute.xlu0 %3078
        %3080 = vrot.lane.b32.xlu0 %v3017, 64
        %v3081 = vpop.permute.xlu0 %3080
        %3082 = vrot.lane.b32.xlu0 %v3019, 64
        %v3083 = vpop.permute.xlu0 %3082
        %v3116 = vsel %vm2080, %v2303, %v2492
        %v3117 = vsel %vm2080, %v2304, %v2494
        %v3118 = vsel %vm2080, %v2306, %v2496
        %v3119 = vsel %vm2080, %v2307, %v2498
        %v3120 = vsel %vm2080, %v2309, %v2500
        %v3121 = vsel %vm2080, %v2310, %v2502
        %v3122 = vsel %vm2080, %v2312, %v2504
        %v3123 = vsel %vm2080, %v2313, %v2506
        %v3124 = vsel %vm2080, %v2315, %v2508
        %v3125 = vsel %vm2080, %v2316, %v2510
        %v3126 = vsel %vm2080, %v2318, %v2512
        %v3127 = vsel %vm2080, %v2319, %v2514
        %v3128 = vsel %vm2080, %v2321, %v2516
        %v3129 = vsel %vm2080, %v2322, %v2518
        %v3130 = vsel %vm2080, %v2324, %v2520
        %v3131 = vsel %vm2080, %v2325, %v2522
        %v3132 = vsel %vm2080, %v2327, %v2524
        %v3133 = vsel %vm2080, %v2328, %v2526
        %v3134 = vsel %vm2080, %v2330, %v2528
        %v3135 = vsel %vm2080, %v2331, %v2530
        %v3136 = vsel %vm2080, %v2333, %v2532
        %v3137 = vsel %vm2080, %v2334, %v2534
        %v3138 = vsel %vm2080, %v2336, %v2536
        %v3139 = vsel %vm2080, %v2337, %v2538
        %v3140 = vsel %vm2080, %v2339, %v2540
        %v3141 = vsel %vm2080, %v2340, %v2542
        %v3142 = vsel %vm2080, %v2342, %v2544
        %v3143 = vsel %vm2080, %v2343, %v2546
        %v3144 = vsel %vm2080, %v2345, %v2548
        %v3145 = vsel %vm2080, %v2346, %v2550
        %v3146 = vsel %vm2080, %v2348, %v2552
        %v3147 = vsel %vm2080, %v2349, %v2554
        %vm3148 = vcmask 785408
        %v3149 = vsel %vm3148, %v3116, %v2668
        %v3150 = vsel %vm3148, %v3117, %v2670
        %v3151 = vsel %vm3148, %v3118, %v2672
        %v3152 = vsel %vm3148, %v3119, %v2674
        %v3153 = vsel %vm3148, %v3120, %v2676
        %v3154 = vsel %vm3148, %v3121, %v2678
        %v3155 = vsel %vm3148, %v3122, %v2680
        %v3156 = vsel %vm3148, %v3123, %v2682
        %v3157 = vsel %vm3148, %v3124, %v2684
        %v3158 = vsel %vm3148, %v3125, %v2686
        %v3159 = vsel %vm3148, %v3126, %v2688
        %v3160 = vsel %vm3148, %v3127, %v2690
        %v3161 = vsel %vm3148, %v3128, %v2692
        %v3162 = vsel %vm3148, %v3129, %v2694
        %v3163 = vsel %vm3148, %v3130, %v2696
        %v3164 = vsel %vm3148, %v3131, %v2698
        %v3165 = vsel %vm3148, %v3132, %v2700
        %v3166 = vsel %vm3148, %v3133, %v2702
        %v3167 = vsel %vm3148, %v3134, %v2704
        %v3168 = vsel %vm3148, %v3135, %v2706
        %v3169 = vsel %vm3148, %v3136, %v2708
        %v3170 = vsel %vm3148, %v3137, %v2710
        %v3171 = vsel %vm3148, %v3138, %v2712
        %v3172 = vsel %vm3148, %v3139, %v2714
        %v3173 = vsel %vm3148, %v3140, %v2716
        %v3174 = vsel %vm3148, %v3141, %v2718
        %v3175 = vsel %vm3148, %v3142, %v2720
        %v3176 = vsel %vm3148, %v3143, %v2722
        %v3177 = vsel %vm3148, %v3144, %v2724
        %v3178 = vsel %vm3148, %v3145, %v2726
        %v3179 = vsel %vm3148, %v3146, %v2728
        %v3180 = vsel %vm3148, %v3147, %v2730
        %vm3181 = vcmask 130048
        %v3182 = vsel %vm3181, %v2668, %v2845
        %v3183 = vsel %vm3181, %v2670, %v2847
        %v3184 = vsel %vm3181, %v2672, %v2849
        %v3185 = vsel %vm3181, %v2674, %v2851
        %v3186 = vsel %vm3181, %v2676, %v2853
        %v3187 = vsel %vm3181, %v2678, %v2855
        %v3188 = vsel %vm3181, %v2680, %v2857
        %v3189 = vsel %vm3181, %v2682, %v2859
        %v3190 = vsel %vm3181, %v2684, %v2861
        %v3191 = vsel %vm3181, %v2686, %v2863
        %v3192 = vsel %vm3181, %v2688, %v2865
        %v3193 = vsel %vm3181, %v2690, %v2867
        %v3194 = vsel %vm3181, %v2692, %v2869
        %v3195 = vsel %vm3181, %v2694, %v2871
        %v3196 = vsel %vm3181, %v2696, %v2873
        %v3197 = vsel %vm3181, %v2698, %v2875
        %v3198 = vsel %vm3181, %v2700, %v2877
        %v3199 = vsel %vm3181, %v2702, %v2879
        %v3200 = vsel %vm3181, %v2704, %v2881
        %v3201 = vsel %vm3181, %v2706, %v2883
        %v3202 = vsel %vm3181, %v2708, %v2885
        %v3203 = vsel %vm3181, %v2710, %v2887
        %v3204 = vsel %vm3181, %v2712, %v2889
        %v3205 = vsel %vm3181, %v2714, %v2891
        %v3206 = vsel %vm3181, %v2716, %v2893
        %v3207 = vsel %vm3181, %v2718, %v2895
        %v3208 = vsel %vm3181, %v2720, %v2897
        %v3209 = vsel %vm3181, %v2722, %v2899
        %v3210 = vsel %vm3181, %v2724, %v2901
        %v3211 = vsel %vm3181, %v2726, %v2903
        %v3212 = vsel %vm3181, %v2728, %v2905
        %v3213 = vsel %vm3181, %v2730, %v2907
        %vm3214 = vcmask 523264
        %v3215 = vsel %vm3214, %v3182, %v3021
        %v3216 = vsel %vm3214, %v3183, %v3023
        %v3217 = vsel %vm3214, %v3184, %v3025
        %v3218 = vsel %vm3214, %v3185, %v3027
        %v3219 = vsel %vm3214, %v3186, %v3029
        %v3220 = vsel %vm3214, %v3187, %v3031
        %v3221 = vsel %vm3214, %v3188, %v3033
        %v3222 = vsel %vm3214, %v3189, %v3035
        %v3223 = vsel %vm3214, %v3190, %v3037
        %v3224 = vsel %vm3214, %v3191, %v3039
        %v3225 = vsel %vm3214, %v3192, %v3041
        %v3226 = vsel %vm3214, %v3193, %v3043
        %v3227 = vsel %vm3214, %v3194, %v3045
        %v3228 = vsel %vm3214, %v3195, %v3047
        %v3229 = vsel %vm3214, %v3196, %v3049
        %v3230 = vsel %vm3214, %v3197, %v3051
        %v3231 = vsel %vm3214, %v3198, %v3053
        %v3232 = vsel %vm3214, %v3199, %v3055
        %v3233 = vsel %vm3214, %v3200, %v3057
        %v3234 = vsel %vm3214, %v3201, %v3059
        %v3235 = vsel %vm3214, %v3202, %v3061
        %v3236 = vsel %vm3214, %v3203, %v3063
        %v3237 = vsel %vm3214, %v3204, %v3065
        %v3238 = vsel %vm3214, %v3205, %v3067
        %v3239 = vsel %vm3214, %v3206, %v3069
        %v3240 = vsel %vm3214, %v3207, %v3071
        %v3241 = vsel %vm3214, %v3208, %v3073
        %v3242 = vsel %vm3214, %v3209, %v3075
        %v3243 = vsel %vm3214, %v3210, %v3077
        %v3244 = vsel %vm3214, %v3211, %v3079
        %v3245 = vsel %vm3214, %v3212, %v3081
        %v3246 = vsel %vm3214, %v3213, %v3083
        %v3247 = vld [vmem:[%s6] sm:$0xff]
        %v3248 = vld [vmem:[%s6 + $0x8] sm:$0xff]
        %v3249 = vld [vmem:[%s6 + $0x10] sm:$0xff]
        %v3250 = vld [vmem:[%s6 + $0x18] sm:$0xff]
        %v3251 = vld [vmem:[%s6 + $0x20] sm:$0xff]
        %v3252 = vld [vmem:[%s6 + $0x28] sm:$0xff]
        %v3253 = vld [vmem:[%s6 + $0x30] sm:$0xff]
        %v3254 = vld [vmem:[%s6 + $0x38] sm:$0xff]
        %v3255 = vld [vmem:[%s6 + $0x40] sm:$0xff]
        %v3256 = vld [vmem:[%s6 + $0x48] sm:$0xff]
        %v3257 = vld [vmem:[%s6 + $0x50] sm:$0xff]
        %v3258 = vld [vmem:[%s6 + $0x58] sm:$0xff]
        %v3259 = vld [vmem:[%s6 + $0x60] sm:$0xff]
        %v3260 = vld [vmem:[%s6 + $0x68] sm:$0xff]
        %v3261 = vld [vmem:[%s6 + $0x70] sm:$0xff]
        %v3262 = vld [vmem:[%s6 + $0x78] sm:$0xff]
        %v3263 = vld [vmem:[%s6 + $0x80] sm:$0xff]
        %v3264 = vld [vmem:[%s6 + $0x88] sm:$0xff]
        %v3265 = vld [vmem:[%s6 + $0x90] sm:$0xff]
        %v3266 = vld [vmem:[%s6 + $0x98] sm:$0xff]
        %v3267 = vld [vmem:[%s6 + $0xa0] sm:$0xff]
        %v3268 = vld [vmem:[%s6 + $0xa8] sm:$0xff]
        %v3269 = vld [vmem:[%s6 + $0xb0] sm:$0xff]
        %v3270 = vld [vmem:[%s6 + $0xb8] sm:$0xff]
        %v3271 = vld [vmem:[%s6 + $0xc0] sm:$0xff]
        %v3272 = vld [vmem:[%s6 + $0xc8] sm:$0xff]
        %v3273 = vld [vmem:[%s6 + $0xd0] sm:$0xff]
        %v3274 = vld [vmem:[%s6 + $0xd8] sm:$0xff]
        %v3275 = vld [vmem:[%s6 + $0xe0] sm:$0xff]
        %v3276 = vld [vmem:[%s6 + $0xe8] sm:$0xff]
        %v3280 = vrot.slane %v2351, 1
        %v3281 = vrot.slane %v2352, 1
        %v3282 = vsel %vm1454, %v3280, %v3281
        %v3283 = vrot.slane %v2353, 1
        %v3284 = vsel %vm1454, %v3281, %v3283
        %3285 = vrot.lane.b32.xlu0 %v3282, 48
        %v3286 = vpop.permute.xlu0 %3285
        %3287 = vrot.lane.b32.xlu0 %v3284, 48
        %v3288 = vpop.permute.xlu0 %3287
        %v3291 = vrot.slane %v2351, 2
        %v3292 = vrot.slane %v2352, 2
        %v3293 = vsel %vm1599, %v3291, %v3292
        %v3294 = vrot.slane %v2353, 2
        %v3295 = vsel %vm1599, %v3292, %v3294
        %3296 = vrot.lane.b32.xlu0 %v3293, 96
        %v3297 = vpop.permute.xlu0 %3296
        %3298 = vrot.lane.b32.xlu0 %v3295, 96
        %v3299 = vpop.permute.xlu0 %3298
        %v3302 = vrot.slane %v2351, 3
        %v3303 = vrot.slane %v2352, 3
        %v3304 = vsel %vm2763, %v3302, %v3303
        %v3305 = vrot.slane %v2353, 3
        %v3306 = vsel %vm2763, %v3303, %v3305
        %3307 = vrot.lane.b32.xlu0 %v3304, 16
        %v3308 = vpop.permute.xlu0 %3307
        %3309 = vrot.lane.b32.xlu0 %v3306, 16
        %v3310 = vpop.permute.xlu0 %3309
        %v3313 = vrot.slane %v2351, 4
        %v3314 = vrot.slane %v2352, 4
        %v3315 = vsel %vm625, %v3313, %v3314
        %v3316 = vrot.slane %v2353, 4
        %v3317 = vsel %vm625, %v3314, %v3316
        %3318 = vrot.lane.b32.xlu0 %v3315, 64
        %v3319 = vpop.permute.xlu0 %3318
        %3320 = vrot.lane.b32.xlu0 %v3317, 64
        %v3321 = vpop.permute.xlu0 %3320
        %v3324 = vsel %vm2080, %v2351, %v3286
        %v3325 = vsel %vm2080, %v2352, %v3288
        %v3326 = vsel %vm3148, %v3324, %v3297
        %v3327 = vsel %vm3148, %v3325, %v3299
        %v3328 = vsel %vm3181, %v3297, %v3308
        %v3329 = vsel %vm3181, %v3299, %v3310
        %v3330 = vsel %vm3214, %v3328, %v3319
        %v3331 = vsel %vm3214, %v3329, %v3321
        %s3332 = scalar_lea.vmem %s6, 240
        %v3333 = vld [vmem:[%s3332] sm:$0xff]
        %v3334 = vld [vmem:[%s3332 + $0x8] sm:$0xff]
        %v3335 = vld [vmem:[%s3332 + $0x10] sm:$0xff]
        %v3336 = vld [vmem:[%s3332 + $0x18] sm:$0xff]
        %v3337 = vld [vmem:[%s3332 + $0x20] sm:$0xff]
        %v3338 = vld [vmem:[%s3332 + $0x28] sm:$0xff]
        %v3339 = vld [vmem:[%s3332 + $0x30] sm:$0xff]
        %v3340 = vld [vmem:[%s3332 + $0x38] sm:$0xff]
        %v3341 = vld [vmem:[%s3332 + $0x40] sm:$0xff]
        %v3342 = vld [vmem:[%s3332 + $0x48] sm:$0xff]
        %v3343 = vld [vmem:[%s3332 + $0x50] sm:$0xff]
        %v3344 = vld [vmem:[%s3332 + $0x58] sm:$0xff]
        %v3345 = vld [vmem:[%s3332 + $0x60] sm:$0xff]
        %v3346 = vld [vmem:[%s3332 + $0x68] sm:$0xff]
        %v3347 = vld [vmem:[%s3332 + $0x70] sm:$0xff]
        %v3348 = vld [vmem:[%s3332 + $0x78] sm:$0xff]
        %v3349 = vld [vmem:[%s3332 + $0x80] sm:$0xff]
        %v3350 = vld [vmem:[%s3332 + $0x88] sm:$0xff]
        %v3351 = vld [vmem:[%s3332 + $0x90] sm:$0xff]
        %v3352 = vld [vmem:[%s3332 + $0x98] sm:$0xff]
        %v3353 = vld [vmem:[%s3332 + $0xa0] sm:$0xff]
        %v3354 = vld [vmem:[%s3332 + $0xa8] sm:$0xff]
        %v3355 = vld [vmem:[%s3332 + $0xb0] sm:$0xff]
        %v3356 = vld [vmem:[%s3332 + $0xb8] sm:$0xff]
        %v3357 = vld [vmem:[%s3332 + $0xc0] sm:$0xff]
        %v3358 = vld [vmem:[%s3332 + $0xc8] sm:$0xff]
        %v3359 = vld [vmem:[%s3332 + $0xd0] sm:$0xff]
        %v3360 = vld [vmem:[%s3332 + $0xd8] sm:$0xff]
        %v3361 = vld [vmem:[%s3332 + $0xe0] sm:$0xff]
        %v3362 = vld [vmem:[%s3332 + $0xe8] sm:$0xff]
        %vm3363 = vcmask 916480
        %v3365 = vsel %vm3363, %v3217, 0
        %v3368 = vsel %vm3363, %v3218, 0
        %v3371 = vsel %vm3363, %v3219, 0
        %v3374 = vsel %vm3363, %v3220, 0
        %v3377 = vsel %vm3363, %v3221, 0
        %v3380 = vsel %vm3363, %v3222, 0
        %v3383 = vsel %vm3363, %v3223, 0
        %v3386 = vsel %vm3363, %v3224, 0
        %v3389 = vsel %vm3363, %v3225, 0
        %v3392 = vsel %vm3363, %v3226, 0
        %v3395 = vsel %vm3363, %v3227, 0
        %v3398 = vsel %vm3363, %v3228, 0
        %v3401 = vsel %vm3363, %v3229, 0
        %v3404 = vsel %vm3363, %v3230, 0
        %v3407 = vsel %vm3363, %v3231, 0
        %v3410 = vsel %vm3363, %v3232, 0
        %v3413 = vsel %vm3363, %v3233, 0
        %v3416 = vsel %vm3363, %v3234, 0
        %v3419 = vsel %vm3363, %v3235, 0
        %v3422 = vsel %vm3363, %v3236, 0
        %v3425 = vsel %vm3363, %v3237, 0
        %v3428 = vsel %vm3363, %v3238, 0
        %v3431 = vsel %vm3363, %v3239, 0
        %v3434 = vsel %vm3363, %v3240, 0
        %v3437 = vsel %vm3363, %v3241, 0
        %v3440 = vsel %vm3363, %v3242, 0
        %v3443 = vsel %vm3363, %v3243, 0
        %v3446 = vsel %vm3363, %v3244, 0
        %v3449 = vsel %vm3363, %v3245, 0
        %v3452 = vsel %vm3363, %v3246, 0
        %v3455 = vsel %vm3363, %v3330, 0
        %v3458 = vsel %vm3363, %v3331, 0
        %3460 = vmatprep.subr.mxu0 0.0
        %3461 = vmatpush1.msra.mxu0 %v3348
        %3462 = vmatprep.subr.mxu0 0.0
        %3463 = vmatpush1.msra.mxu0 %v3347
        %3464 = vmatprep.subr.mxu0 0.0
        %3465 = vmatpush1.msra.mxu0 %v3346
        %3466 = vmatprep.subr.mxu0 0.0
        %3467 = vmatpush1.msra.mxu0 %v3345
        %3468 = vmatprep.subr.mxu0 0.0
        %3469 = vmatpush1.msra.mxu0 %v3344
        %3470 = vmatprep.subr.mxu0 0.0
        %3471 = vmatpush1.msra.mxu0 %v3343
        %3472 = vmatprep.subr.mxu0 0.0
        %3473 = vmatpush1.msra.mxu0 %v3342
        %3474 = vmatprep.subr.mxu0 0.0
        %3475 = vmatpush1.msra.mxu0 %v3341
        %3476 = vmatprep.subr.mxu0 0.0
        %3477 = vmatpush1.msra.mxu0 %v3340
        %3478 = vmatprep.subr.mxu0 0.0
        %3479 = vmatpush1.msra.mxu0 %v3339
        %3480 = vmatprep.subr.mxu0 0.0
        %3481 = vmatpush1.msra.mxu0 %v3338
        %3482 = vmatprep.subr.mxu0 0.0
        %3483 = vmatpush1.msra.mxu0 %v3337
        %3484 = vmatprep.subr.mxu0 0.0
        %3485 = vmatpush1.msra.mxu0 %v3336
        %3486 = vmatprep.subr.mxu0 0.0
        %3487 = vmatpush1.msra.mxu0 %v3335
        %3488 = vmatprep.subr.mxu0 0.0
        %3489 = vmatpush1.msra.mxu0 %v3334
        %3490 = vmatprep.subr.mxu0 0.0
        %3491 = vmatpush1.msra.mxu0 %v3333
        %3492 = vmatprep.subr.mxu0 0.0
        %3493 = vmatpush2.msra.mxu0 0.0
        %3494 = vmatprep.subr.mxu0 0.0
        %3495 = vmatpush2.msra.mxu0 0.0
        %3496 = vmatprep.subr.mxu0 0.0
        %3497 = vmatpush2.msra.mxu0 %v3362
        %3498 = vmatprep.subr.mxu0 0.0
        %3499 = vmatpush2.msra.mxu0 %v3361
        %3500 = vmatprep.subr.mxu0 0.0
        %3501 = vmatpush2.msra.mxu0 %v3360
        %3502 = vmatprep.subr.mxu0 0.0
        %3503 = vmatpush2.msra.mxu0 %v3359
        %3504 = vmatprep.subr.mxu0 0.0
        %3505 = vmatpush2.msra.mxu0 %v3358
        %3506 = vmatprep.subr.mxu0 0.0
        %3507 = vmatpush2.msra.mxu0 %v3357
        %3508 = vmatprep.subr.mxu0 0.0
        %3509 = vmatpush2.msra.mxu0 %v3356
        %3510 = vmatprep.subr.mxu0 0.0
        %3511 = vmatpush2.msra.mxu0 %v3355
        %3512 = vmatprep.subr.mxu0 0.0
        %3513 = vmatpush2.msra.mxu0 %v3354
        %3514 = vmatprep.subr.mxu0 0.0
        %3515 = vmatpush2.msra.mxu0 %v3353
        %3516 = vmatprep.subr.mxu0 0.0
        %3517 = vmatpush2.msra.mxu0 %v3352
        %3518 = vmatprep.subr.mxu0 0.0
        %3519 = vmatpush2.msra.mxu0 %v3351
        %3520 = vmatprep.subr.mxu0 0.0
        %3521 = vmatpush2.msra.mxu0 %v3350
        %3522 = vmatprep.subr.mxu0 0.0
        %3523 = vmatpush2.msra.mxu0 %v3349
        %3524 = vmatprep.mubr.f32.mxu0 %v3365
        %3525 = vmatmul.mubr.f32.gmra.mxu0 %v3151
        %v3526 = vpop.f32.mrf.mxu0
        %v3527 = vadd.f32 0.0, %v3526
        %v3528 = vpop.f32.mrf.mxu0
        %3529 = vmatprep.mubr.f32.mxu0 %v3368
        %3530 = vmatmul.mubr.f32.gmra.mxu0 %v3152
        %v3531 = vpop.f32.mrf.mxu0
        %v3532 = vadd.f32 0.0, %v3531
        %v3533 = vpop.f32.mrf.mxu0
        %3534 = vmatprep.mubr.f32.mxu0 %v3371
        %3535 = vmatmul.mubr.f32.gmra.mxu0 %v3153
        %v3536 = vpop.f32.mrf.mxu0
        %v3537 = vadd.f32 0.0, %v3536
        %v3538 = vpop.f32.mrf.mxu0
        %3539 = vmatprep.mubr.f32.mxu0 %v3374
        %3540 = vmatmul.mubr.f32.gmra.mxu0 %v3154
        %v3541 = vpop.f32.mrf.mxu0
        %v3542 = vadd.f32 0.0, %v3541
        %v3543 = vpop.f32.mrf.mxu0
        %3544 = vmatprep.mubr.f32.mxu0 %v3377
        %3545 = vmatmul.mubr.f32.gmra.mxu0 %v3155
        %v3546 = vpop.f32.mrf.mxu0
        %v3547 = vadd.f32 0.0, %v3546
        %v3548 = vpop.f32.mrf.mxu0
        %3549 = vmatprep.mubr.f32.mxu0 %v3380
        %3550 = vmatmul.mubr.f32.gmra.mxu0 %v3156
        %v3551 = vpop.f32.mrf.mxu0
        %v3552 = vadd.f32 0.0, %v3551
        %v3553 = vpop.f32.mrf.mxu0
        %3554 = vmatprep.mubr.f32.mxu0 %v3383
        %3555 = vmatmul.mubr.f32.gmra.mxu0 %v3157
        %v3556 = vpop.f32.mrf.mxu0
        %v3557 = vadd.f32 0.0, %v3556
        %v3558 = vpop.f32.mrf.mxu0
        %3559 = vmatprep.mubr.f32.mxu0 %v3386
        %3560 = vmatmul.mubr.f32.gmra.mxu0 %v3158
        %v3561 = vpop.f32.mrf.mxu0
        %v3562 = vadd.f32 0.0, %v3561
        %v3563 = vpop.f32.mrf.mxu0
        %3564 = vmatprep.mubr.f32.mxu0 %v3389
        %3565 = vmatmul.mubr.f32.gmra.mxu0 %v3159
        %v3566 = vpop.f32.mrf.mxu0
        %v3567 = vadd.f32 0.0, %v3566
        %v3568 = vpop.f32.mrf.mxu0
        %3569 = vmatprep.mubr.f32.mxu0 %v3392
        %3570 = vmatmul.mubr.f32.gmra.mxu0 %v3160
        %v3571 = vpop.f32.mrf.mxu0
        %v3572 = vadd.f32 0.0, %v3571
        %v3573 = vpop.f32.mrf.mxu0
        %3574 = vmatprep.mubr.f32.mxu0 %v3395
        %3575 = vmatmul.mubr.f32.gmra.mxu0 %v3161
        %v3576 = vpop.f32.mrf.mxu0
        %v3577 = vadd.f32 0.0, %v3576
        %v3578 = vpop.f32.mrf.mxu0
        %3579 = vmatprep.mubr.f32.mxu0 %v3398
        %3580 = vmatmul.mubr.f32.gmra.mxu0 %v3162
        %v3581 = vpop.f32.mrf.mxu0
        %v3582 = vadd.f32 0.0, %v3581
        %v3583 = vpop.f32.mrf.mxu0
        %3584 = vmatprep.mubr.f32.mxu0 %v3401
        %3585 = vmatmul.mubr.f32.gmra.mxu0 %v3163
        %v3586 = vpop.f32.mrf.mxu0
        %v3587 = vadd.f32 0.0, %v3586
        %v3588 = vpop.f32.mrf.mxu0
        %3589 = vmatprep.mubr.f32.mxu0 %v3404
        %3590 = vmatmul.mubr.f32.gmra.mxu0 %v3164
        %v3591 = vpop.f32.mrf.mxu0
        %v3592 = vadd.f32 0.0, %v3591
        %v3593 = vpop.f32.mrf.mxu0
        %3594 = vmatprep.mubr.f32.mxu0 %v3407
        %3595 = vmatmul.mubr.f32.gmra.mxu0 %v3165
        %v3596 = vpop.f32.mrf.mxu0
        %v3597 = vadd.f32 0.0, %v3596
        %v3598 = vpop.f32.mrf.mxu0
        %3599 = vmatprep.mubr.f32.mxu0 %v3410
        %3600 = vmatmul.mubr.f32.gmra.mxu0 %v3166
        %v3601 = vpop.f32.mrf.mxu0
        %v3602 = vadd.f32 0.0, %v3601
        %v3603 = vpop.f32.mrf.mxu0
        %3604 = vmatprep.mubr.f32.mxu0 %v3413
        %3605 = vmatmul.mubr.f32.gmra.mxu0 %v3167
        %v3606 = vpop.f32.mrf.mxu0
        %v3607 = vadd.f32 0.0, %v3606
        %v3608 = vpop.f32.mrf.mxu0
        %3609 = vmatprep.mubr.f32.mxu0 %v3416
        %3610 = vmatmul.mubr.f32.gmra.mxu0 %v3168
        %v3611 = vpop.f32.mrf.mxu0
        %v3612 = vadd.f32 0.0, %v3611
        %v3613 = vpop.f32.mrf.mxu0
        %3614 = vmatprep.mubr.f32.mxu0 %v3419
        %3615 = vmatmul.mubr.f32.gmra.mxu0 %v3169
        %v3616 = vpop.f32.mrf.mxu0
        %v3617 = vadd.f32 0.0, %v3616
        %v3618 = vpop.f32.mrf.mxu0
        %3619 = vmatprep.mubr.f32.mxu0 %v3422
        %3620 = vmatmul.mubr.f32.gmra.mxu0 %v3170
        %v3621 = vpop.f32.mrf.mxu0
        %v3622 = vadd.f32 0.0, %v3621
        %v3623 = vpop.f32.mrf.mxu0
        %3624 = vmatprep.mubr.f32.mxu0 %v3425
        %3625 = vmatmul.mubr.f32.gmra.mxu0 %v3171
        %v3626 = vpop.f32.mrf.mxu0
        %v3627 = vadd.f32 0.0, %v3626
        %v3628 = vpop.f32.mrf.mxu0
        %3629 = vmatprep.mubr.f32.mxu0 %v3428
        %3630 = vmatmul.mubr.f32.gmra.mxu0 %v3172
        %v3631 = vpop.f32.mrf.mxu0
        %v3632 = vadd.f32 0.0, %v3631
        %v3633 = vpop.f32.mrf.mxu0
        %3634 = vmatprep.mubr.f32.mxu0 %v3431
        %3635 = vmatmul.mubr.f32.gmra.mxu0 %v3173
        %v3636 = vpop.f32.mrf.mxu0
        %v3637 = vadd.f32 0.0, %v3636
        %v3638 = vpop.f32.mrf.mxu0
        %3639 = vmatprep.mubr.f32.mxu0 %v3434
        %3640 = vmatmul.mubr.f32.gmra.mxu0 %v3174
        %v3641 = vpop.f32.mrf.mxu0
        %v3642 = vadd.f32 0.0, %v3641
        %v3643 = vpop.f32.mrf.mxu0
        %3644 = vmatprep.mubr.f32.mxu0 %v3437
        %3645 = vmatmul.mubr.f32.gmra.mxu0 %v3175
        %v3646 = vpop.f32.mrf.mxu0
        %v3647 = vadd.f32 0.0, %v3646
        %v3648 = vpop.f32.mrf.mxu0
        %3649 = vmatprep.mubr.f32.mxu0 %v3440
        %3650 = vmatmul.mubr.f32.gmra.mxu0 %v3176
        %v3651 = vpop.f32.mrf.mxu0
        %v3652 = vadd.f32 0.0, %v3651
        %v3653 = vpop.f32.mrf.mxu0
        %3654 = vmatprep.mubr.f32.mxu0 %v3443
        %3655 = vmatmul.mubr.f32.gmra.mxu0 %v3177
        %v3656 = vpop.f32.mrf.mxu0
        %v3657 = vadd.f32 0.0, %v3656
        %v3658 = vpop.f32.mrf.mxu0
        %3659 = vmatprep.mubr.f32.mxu0 %v3446
        %3660 = vmatmul.mubr.f32.gmra.mxu0 %v3178
        %v3661 = vpop.f32.mrf.mxu0
        %v3662 = vadd.f32 0.0, %v3661
        %v3663 = vpop.f32.mrf.mxu0
        %3664 = vmatprep.mubr.f32.mxu0 %v3449
        %3665 = vmatmul.mubr.f32.gmra.mxu0 %v3179
        %v3666 = vpop.f32.mrf.mxu0
        %v3667 = vadd.f32 0.0, %v3666
        %v3668 = vpop.f32.mrf.mxu0
        %3669 = vmatprep.mubr.f32.mxu0 %v3452
        %3670 = vmatmul.mubr.f32.gmra.mxu0 %v3180
        %v3671 = vpop.f32.mrf.mxu0
        %v3672 = vadd.f32 0.0, %v3671
        %v3673 = vpop.f32.mrf.mxu0
        %3674 = vmatprep.mubr.f32.mxu0 %v3455
        %3675 = vmatmul.mubr.f32.gmra.mxu0 %v3326
        %v3676 = vpop.f32.mrf.mxu0
        %v3677 = vadd.f32 0.0, %v3676
        %v3678 = vpop.f32.mrf.mxu0
        %3679 = vmatprep.mubr.f32.mxu0 %v3458
        %3680 = vmatmul.mubr.f32.gmra.mxu0 %v3327
        %v3681 = vpop.f32.mrf.mxu0
        %v3682 = vadd.f32 0.0, %v3681
        %v3683 = vpop.f32.mrf.mxu0
        %3684 = vdwg.mxu0
        %v3686 = vsel %vm3363, %v3215, 0
        %v3689 = vsel %vm3363, %v3216, 0
        %3691 = vmatprep.subr.mxu0 0.0
        %3692 = vmatpush1.msra.mxu0 %v3262
        %3693 = vmatprep.subr.mxu0 0.0
        %3694 = vmatpush1.msra.mxu0 %v3261
        %3695 = vmatprep.subr.mxu0 0.0
        %3696 = vmatpush1.msra.mxu0 %v3260
        %3697 = vmatprep.subr.mxu0 0.0
        %3698 = vmatpush1.msra.mxu0 %v3259
        %3699 = vmatprep.subr.mxu0 0.0
        %3700 = vmatpush1.msra.mxu0 %v3258
        %3701 = vmatprep.subr.mxu0 0.0
        %3702 = vmatpush1.msra.mxu0 %v3257
        %3703 = vmatprep.subr.mxu0 0.0
        %3704 = vmatpush1.msra.mxu0 %v3256
        %3705 = vmatprep.subr.mxu0 0.0
        %3706 = vmatpush1.msra.mxu0 %v3255
        %3707 = vmatprep.subr.mxu0 0.0
        %3708 = vmatpush1.msra.mxu0 %v3254
        %3709 = vmatprep.subr.mxu0 0.0
        %3710 = vmatpush1.msra.mxu0 %v3253
        %3711 = vmatprep.subr.mxu0 0.0
        %3712 = vmatpush1.msra.mxu0 %v3252
        %3713 = vmatprep.subr.mxu0 0.0
        %3714 = vmatpush1.msra.mxu0 %v3251
        %3715 = vmatprep.subr.mxu0 0.0
        %3716 = vmatpush1.msra.mxu0 %v3250
        %3717 = vmatprep.subr.mxu0 0.0
        %3718 = vmatpush1.msra.mxu0 %v3249
        %3719 = vmatprep.subr.mxu0 0.0
        %3720 = vmatpush1.msra.mxu0 %v3248
        %3721 = vmatprep.subr.mxu0 0.0
        %3722 = vmatpush1.msra.mxu0 %v3247
        %3723 = vmatprep.subr.mxu0 0.0
        %3724 = vmatpush2.msra.mxu0 0.0
        %3725 = vmatprep.subr.mxu0 0.0
        %3726 = vmatpush2.msra.mxu0 0.0
        %3727 = vmatprep.subr.mxu0 0.0
        %3728 = vmatpush2.msra.mxu0 %v3276
        %3729 = vmatprep.subr.mxu0 0.0
        %3730 = vmatpush2.msra.mxu0 %v3275
        %3731 = vmatprep.subr.mxu0 0.0
        %3732 = vmatpush2.msra.mxu0 %v3274
        %3733 = vmatprep.subr.mxu0 0.0
        %3734 = vmatpush2.msra.mxu0 %v3273
        %3735 = vmatprep.subr.mxu0 0.0
        %3736 = vmatpush2.msra.mxu0 %v3272
        %3737 = vmatprep.subr.mxu0 0.0
        %3738 = vmatpush2.msra.mxu0 %v3271
        %3739 = vmatprep.subr.mxu0 0.0
        %3740 = vmatpush2.msra.mxu0 %v3270
        %3741 = vmatprep.subr.mxu0 0.0
        %3742 = vmatpush2.msra.mxu0 %v3269
        %3743 = vmatprep.subr.mxu0 0.0
        %3744 = vmatpush2.msra.mxu0 %v3268
        %3745 = vmatprep.subr.mxu0 0.0
        %3746 = vmatpush2.msra.mxu0 %v3267
        %3747 = vmatprep.subr.mxu0 0.0
        %3748 = vmatpush2.msra.mxu0 %v3266
        %3749 = vmatprep.subr.mxu0 0.0
        %3750 = vmatpush2.msra.mxu0 %v3265
        %3751 = vmatprep.subr.mxu0 0.0
        %3752 = vmatpush2.msra.mxu0 %v3264
        %3753 = vmatprep.subr.mxu0 0.0
        %3754 = vmatpush2.msra.mxu0 %v3263
        %3755 = vmatprep.mubr.f32.mxu0 %v3686
        %3756 = vmatmul.mubr.f32.gmra.mxu0 %v3149
        %v3757 = vpop.f32.mrf.mxu0
        %v3758 = vadd.f32 %v3527, %v3757
        %v3759 = vpop.f32.mrf.mxu0
        %3760 = vmatprep.mubr.f32.mxu0 %v3689
        %3761 = vmatmul.mubr.f32.gmra.mxu0 %v3150
        %v3762 = vpop.f32.mrf.mxu0
        %v3763 = vadd.f32 %v3532, %v3762
        %v3764 = vpop.f32.mrf.mxu0
        %3765 = vmatprep.mubr.f32.mxu0 %v3365
        %3766 = vmatmul.mubr.f32.gmra.mxu0 %v3151
        %v3767 = vpop.f32.mrf.mxu0
        %v3768 = vadd.f32 %v3537, %v3767
        %v3769 = vpop.f32.mrf.mxu0
        %3770 = vmatprep.mubr.f32.mxu0 %v3368
        %3771 = vmatmul.mubr.f32.gmra.mxu0 %v3152
        %v3772 = vpop.f32.mrf.mxu0
        %v3773 = vadd.f32 %v3542, %v3772
        %v3774 = vpop.f32.mrf.mxu0
        %3775 = vmatprep.mubr.f32.mxu0 %v3371
        %3776 = vmatmul.mubr.f32.gmra.mxu0 %v3153
        %v3777 = vpop.f32.mrf.mxu0
        %v3778 = vadd.f32 %v3547, %v3777
        %v3779 = vpop.f32.mrf.mxu0
        %3780 = vmatprep.mubr.f32.mxu0 %v3374
        %3781 = vmatmul.mubr.f32.gmra.mxu0 %v3154
        %v3782 = vpop.f32.mrf.mxu0
        %v3783 = vadd.f32 %v3552, %v3782
        %v3784 = vpop.f32.mrf.mxu0
        %3785 = vmatprep.mubr.f32.mxu0 %v3377
        %3786 = vmatmul.mubr.f32.gmra.mxu0 %v3155
        %v3787 = vpop.f32.mrf.mxu0
        %v3788 = vadd.f32 %v3557, %v3787
        %v3789 = vpop.f32.mrf.mxu0
        %3790 = vmatprep.mubr.f32.mxu0 %v3380
        %3791 = vmatmul.mubr.f32.gmra.mxu0 %v3156
        %v3792 = vpop.f32.mrf.mxu0
        %v3793 = vadd.f32 %v3562, %v3792
        %v3794 = vpop.f32.mrf.mxu0
        %3795 = vmatprep.mubr.f32.mxu0 %v3383
        %3796 = vmatmul.mubr.f32.gmra.mxu0 %v3157
        %v3797 = vpop.f32.mrf.mxu0
        %v3798 = vadd.f32 %v3567, %v3797
        %v3799 = vpop.f32.mrf.mxu0
        %3800 = vmatprep.mubr.f32.mxu0 %v3386
        %3801 = vmatmul.mubr.f32.gmra.mxu0 %v3158
        %v3802 = vpop.f32.mrf.mxu0
        %v3803 = vadd.f32 %v3572, %v3802
        %v3804 = vpop.f32.mrf.mxu0
        %3805 = vmatprep.mubr.f32.mxu0 %v3389
        %3806 = vmatmul.mubr.f32.gmra.mxu0 %v3159
        %v3807 = vpop.f32.mrf.mxu0
        %v3808 = vadd.f32 %v3577, %v3807
        %v3809 = vpop.f32.mrf.mxu0
        %3810 = vmatprep.mubr.f32.mxu0 %v3392
        %3811 = vmatmul.mubr.f32.gmra.mxu0 %v3160
        %v3812 = vpop.f32.mrf.mxu0
        %v3813 = vadd.f32 %v3582, %v3812
        %v3814 = vpop.f32.mrf.mxu0
        %3815 = vmatprep.mubr.f32.mxu0 %v3395
        %3816 = vmatmul.mubr.f32.gmra.mxu0 %v3161
        %v3817 = vpop.f32.mrf.mxu0
        %v3818 = vadd.f32 %v3587, %v3817
        %v3819 = vpop.f32.mrf.mxu0
        %3820 = vmatprep.mubr.f32.mxu0 %v3398
        %3821 = vmatmul.mubr.f32.gmra.mxu0 %v3162
        %v3822 = vpop.f32.mrf.mxu0
        %v3823 = vadd.f32 %v3592, %v3822
        %v3824 = vpop.f32.mrf.mxu0
        %3825 = vmatprep.mubr.f32.mxu0 %v3401
        %3826 = vmatmul.mubr.f32.gmra.mxu0 %v3163
        %v3827 = vpop.f32.mrf.mxu0
        %v3828 = vadd.f32 %v3597, %v3827
        %v3829 = vpop.f32.mrf.mxu0
        %3830 = vmatprep.mubr.f32.mxu0 %v3404
        %3831 = vmatmul.mubr.f32.gmra.mxu0 %v3164
        %v3832 = vpop.f32.mrf.mxu0
        %v3833 = vadd.f32 %v3602, %v3832
        %v3834 = vpop.f32.mrf.mxu0
        %3835 = vmatprep.mubr.f32.mxu0 %v3407
        %3836 = vmatmul.mubr.f32.gmra.mxu0 %v3165
        %v3837 = vpop.f32.mrf.mxu0
        %v3838 = vadd.f32 %v3607, %v3837
        %v3839 = vpop.f32.mrf.mxu0
        %3840 = vmatprep.mubr.f32.mxu0 %v3410
        %3841 = vmatmul.mubr.f32.gmra.mxu0 %v3166
        %v3842 = vpop.f32.mrf.mxu0
        %v3843 = vadd.f32 %v3612, %v3842
        %v3844 = vpop.f32.mrf.mxu0
        %3845 = vmatprep.mubr.f32.mxu0 %v3413
        %3846 = vmatmul.mubr.f32.gmra.mxu0 %v3167
        %v3847 = vpop.f32.mrf.mxu0
        %v3848 = vadd.f32 %v3617, %v3847
        %v3849 = vpop.f32.mrf.mxu0
        %3850 = vmatprep.mubr.f32.mxu0 %v3416
        %3851 = vmatmul.mubr.f32.gmra.mxu0 %v3168
        %v3852 = vpop.f32.mrf.mxu0
        %v3853 = vadd.f32 %v3622, %v3852
        %v3854 = vpop.f32.mrf.mxu0
        %3855 = vmatprep.mubr.f32.mxu0 %v3419
        %3856 = vmatmul.mubr.f32.gmra.mxu0 %v3169
        %v3857 = vpop.f32.mrf.mxu0
        %v3858 = vadd.f32 %v3627, %v3857
        %v3859 = vpop.f32.mrf.mxu0
        %3860 = vmatprep.mubr.f32.mxu0 %v3422
        %3861 = vmatmul.mubr.f32.gmra.mxu0 %v3170
        %v3862 = vpop.f32.mrf.mxu0
        %v3863 = vadd.f32 %v3632, %v3862
        %v3864 = vpop.f32.mrf.mxu0
        %3865 = vmatprep.mubr.f32.mxu0 %v3425
        %3866 = vmatmul.mubr.f32.gmra.mxu0 %v3171
        %v3867 = vpop.f32.mrf.mxu0
        %v3868 = vadd.f32 %v3637, %v3867
        %v3869 = vpop.f32.mrf.mxu0
        %3870 = vmatprep.mubr.f32.mxu0 %v3428
        %3871 = vmatmul.mubr.f32.gmra.mxu0 %v3172
        %v3872 = vpop.f32.mrf.mxu0
        %v3873 = vadd.f32 %v3642, %v3872
        %v3874 = vpop.f32.mrf.mxu0
        %3875 = vmatprep.mubr.f32.mxu0 %v3431
        %3876 = vmatmul.mubr.f32.gmra.mxu0 %v3173
        %v3877 = vpop.f32.mrf.mxu0
        %v3878 = vadd.f32 %v3647, %v3877
        %v3879 = vpop.f32.mrf.mxu0
        %3880 = vmatprep.mubr.f32.mxu0 %v3434
        %3881 = vmatmul.mubr.f32.gmra.mxu0 %v3174
        %v3882 = vpop.f32.mrf.mxu0
        %v3883 = vadd.f32 %v3652, %v3882
        %v3884 = vpop.f32.mrf.mxu0
        %3885 = vmatprep.mubr.f32.mxu0 %v3437
        %3886 = vmatmul.mubr.f32.gmra.mxu0 %v3175
        %v3887 = vpop.f32.mrf.mxu0
        %v3888 = vadd.f32 %v3657, %v3887
        %v3889 = vpop.f32.mrf.mxu0
        %3890 = vmatprep.mubr.f32.mxu0 %v3440
        %3891 = vmatmul.mubr.f32.gmra.mxu0 %v3176
        %v3892 = vpop.f32.mrf.mxu0
        %v3893 = vadd.f32 %v3662, %v3892
        %v3894 = vpop.f32.mrf.mxu0
        %3895 = vmatprep.mubr.f32.mxu0 %v3443
        %3896 = vmatmul.mubr.f32.gmra.mxu0 %v3177
        %v3897 = vpop.f32.mrf.mxu0
        %v3898 = vadd.f32 %v3667, %v3897
        %v3899 = vpop.f32.mrf.mxu0
        %3900 = vmatprep.mubr.f32.mxu0 %v3446
        %3901 = vmatmul.mubr.f32.gmra.mxu0 %v3178
        %v3902 = vpop.f32.mrf.mxu0
        %v3903 = vadd.f32 %v3672, %v3902
        %v3904 = vpop.f32.mrf.mxu0
        %3905 = vmatprep.mubr.f32.mxu0 %v3449
        %3906 = vmatmul.mubr.f32.gmra.mxu0 %v3179
        %v3907 = vpop.f32.mrf.mxu0
        %v3908 = vadd.f32 %v3677, %v3907
        %v3909 = vpop.f32.mrf.mxu0
        %3910 = vmatprep.mubr.f32.mxu0 %v3452
        %3911 = vmatmul.mubr.f32.gmra.mxu0 %v3180
        %v3912 = vpop.f32.mrf.mxu0
        %v3913 = vadd.f32 %v3682, %v3912
        %v3914 = vpop.f32.mrf.mxu0
        %3915 = vdwg.mxu0
        %v3919 = vrot.slane %v2354, 1
        %v3920 = vrot.slane %v2355, 1
        %v3921 = vsel %vm1454, %v3919, %v3920
        %v3922 = vrot.slane %v2356, 1
        %v3923 = vsel %vm1454, %v3920, %v3922
        %3924 = vrot.lane.b32.xlu0 %v3921, 48
        %v3925 = vpop.permute.xlu0 %3924
        %3926 = vrot.lane.b32.xlu0 %v3923, 48
        %v3927 = vpop.permute.xlu0 %3926
        %v3930 = vrot.slane %v2354, 2
        %v3931 = vrot.slane %v2355, 2
        %v3932 = vsel %vm1599, %v3930, %v3931
        %v3933 = vrot.slane %v2356, 2
        %v3934 = vsel %vm1599, %v3931, %v3933
        %3935 = vrot.lane.b32.xlu0 %v3932, 96
        %v3936 = vpop.permute.xlu0 %3935
        %3937 = vrot.lane.b32.xlu0 %v3934, 96
        %v3938 = vpop.permute.xlu0 %3937
        %v3941 = vrot.slane %v2354, 3
        %v3942 = vrot.slane %v2355, 3
        %v3943 = vsel %vm2763, %v3941, %v3942
        %v3944 = vrot.slane %v2356, 3
        %v3945 = vsel %vm2763, %v3942, %v3944
        %3946 = vrot.lane.b32.xlu0 %v3943, 16
        %v3947 = vpop.permute.xlu0 %3946
        %3948 = vrot.lane.b32.xlu0 %v3945, 16
        %v3949 = vpop.permute.xlu0 %3948
        %v3952 = vrot.slane %v2354, 4
        %v3953 = vrot.slane %v2355, 4
        %v3954 = vsel %vm625, %v3952, %v3953
        %v3955 = vrot.slane %v2356, 4
        %v3956 = vsel %vm625, %v3953, %v3955
        %3957 = vrot.lane.b32.xlu0 %v3954, 64
        %v3958 = vpop.permute.xlu0 %3957
        %3959 = vrot.lane.b32.xlu0 %v3956, 64
        %v3960 = vpop.permute.xlu0 %3959
        %v3963 = vsel %vm2080, %v2354, %v3925
        %v3964 = vsel %vm2080, %v2355, %v3927
        %v3965 = vsel %vm3148, %v3963, %v3936
        %v3966 = vsel %vm3148, %v3964, %v3938
        %v3967 = vsel %vm3181, %v3936, %v3947
        %v3968 = vsel %vm3181, %v3938, %v3949
        %v3969 = vsel %vm3214, %v3967, %v3958
        %v3970 = vsel %vm3214, %v3968, %v3960
        %s3971 = scalar_lea.vmem %s6, 480
        %v3972 = vld [vmem:[%s3971] sm:$0xff]
        %v3973 = vld [vmem:[%s3971 + $0x8] sm:$0xff]
        %v3974 = vld [vmem:[%s3971 + $0x10] sm:$0xff]
        %v3975 = vld [vmem:[%s3971 + $0x18] sm:$0xff]
        %v3976 = vld [vmem:[%s3971 + $0x20] sm:$0xff]
        %v3977 = vld [vmem:[%s3971 + $0x28] sm:$0xff]
        %v3978 = vld [vmem:[%s3971 + $0x30] sm:$0xff]
        %v3979 = vld [vmem:[%s3971 + $0x38] sm:$0xff]
        %v3980 = vld [vmem:[%s3971 + $0x40] sm:$0xff]
        %v3981 = vld [vmem:[%s3971 + $0x48] sm:$0xff]
        %v3982 = vld [vmem:[%s3971 + $0x50] sm:$0xff]
        %v3983 = vld [vmem:[%s3971 + $0x58] sm:$0xff]
        %v3984 = vld [vmem:[%s3971 + $0x60] sm:$0xff]
        %v3985 = vld [vmem:[%s3971 + $0x68] sm:$0xff]
        %v3986 = vld [vmem:[%s3971 + $0x70] sm:$0xff]
        %v3987 = vld [vmem:[%s3971 + $0x78] sm:$0xff]
        %v3988 = vld [vmem:[%s3971 + $0x80] sm:$0xff]
        %v3989 = vld [vmem:[%s3971 + $0x88] sm:$0xff]
        %v3990 = vld [vmem:[%s3971 + $0x90] sm:$0xff]
        %v3991 = vld [vmem:[%s3971 + $0x98] sm:$0xff]
        %v3992 = vld [vmem:[%s3971 + $0xa0] sm:$0xff]
        %v3993 = vld [vmem:[%s3971 + $0xa8] sm:$0xff]
        %v3994 = vld [vmem:[%s3971 + $0xb0] sm:$0xff]
        %v3995 = vld [vmem:[%s3971 + $0xb8] sm:$0xff]
        %v3996 = vld [vmem:[%s3971 + $0xc0] sm:$0xff]
        %v3997 = vld [vmem:[%s3971 + $0xc8] sm:$0xff]
        %v3998 = vld [vmem:[%s3971 + $0xd0] sm:$0xff]
        %v3999 = vld [vmem:[%s3971 + $0xd8] sm:$0xff]
        %v4000 = vld [vmem:[%s3971 + $0xe0] sm:$0xff]
        %v4001 = vld [vmem:[%s3971 + $0xe8] sm:$0xff]
        %v4003 = vsel %vm3363, %v3969, 0
        %v4006 = vsel %vm3363, %v3970, 0
        %4008 = vmatprep.subr.mxu0 0.0
        %4009 = vmatpush1.msra.mxu0 %v3987
        %4010 = vmatprep.subr.mxu0 0.0
        %4011 = vmatpush1.msra.mxu0 %v3986
        %4012 = vmatprep.subr.mxu0 0.0
        %4013 = vmatpush1.msra.mxu0 %v3985
        %4014 = vmatprep.subr.mxu0 0.0
        %4015 = vmatpush1.msra.mxu0 %v3984
        %4016 = vmatprep.subr.mxu0 0.0
        %4017 = vmatpush1.msra.mxu0 %v3983
        %4018 = vmatprep.subr.mxu0 0.0
        %4019 = vmatpush1.msra.mxu0 %v3982
        %4020 = vmatprep.subr.mxu0 0.0
        %4021 = vmatpush1.msra.mxu0 %v3981
        %4022 = vmatprep.subr.mxu0 0.0
        %4023 = vmatpush1.msra.mxu0 %v3980
        %4024 = vmatprep.subr.mxu0 0.0
        %4025 = vmatpush1.msra.mxu0 %v3979
        %4026 = vmatprep.subr.mxu0 0.0
        %4027 = vmatpush1.msra.mxu0 %v3978
        %4028 = vmatprep.subr.mxu0 0.0
        %4029 = vmatpush1.msra.mxu0 %v3977
        %4030 = vmatprep.subr.mxu0 0.0
        %4031 = vmatpush1.msra.mxu0 %v3976
        %4032 = vmatprep.subr.mxu0 0.0
        %4033 = vmatpush1.msra.mxu0 %v3975
        %4034 = vmatprep.subr.mxu0 0.0
        %4035 = vmatpush1.msra.mxu0 %v3974
        %4036 = vmatprep.subr.mxu0 0.0
        %4037 = vmatpush1.msra.mxu0 %v3973
        %4038 = vmatprep.subr.mxu0 0.0
        %4039 = vmatpush1.msra.mxu0 %v3972
        %4040 = vmatprep.subr.mxu0 0.0
        %4041 = vmatpush2.msra.mxu0 0.0
        %4042 = vmatprep.subr.mxu0 0.0
        %4043 = vmatpush2.msra.mxu0 0.0
        %4044 = vmatprep.subr.mxu0 0.0
        %4045 = vmatpush2.msra.mxu0 %v4001
        %4046 = vmatprep.subr.mxu0 0.0
        %4047 = vmatpush2.msra.mxu0 %v4000
        %4048 = vmatprep.subr.mxu0 0.0
        %4049 = vmatpush2.msra.mxu0 %v3999
        %4050 = vmatprep.subr.mxu0 0.0
        %4051 = vmatpush2.msra.mxu0 %v3998
        %4052 = vmatprep.subr.mxu0 0.0
        %4053 = vmatpush2.msra.mxu0 %v3997
        %4054 = vmatprep.subr.mxu0 0.0
        %4055 = vmatpush2.msra.mxu0 %v3996
        %4056 = vmatprep.subr.mxu0 0.0
        %4057 = vmatpush2.msra.mxu0 %v3995
        %4058 = vmatprep.subr.mxu0 0.0
        %4059 = vmatpush2.msra.mxu0 %v3994
        %4060 = vmatprep.subr.mxu0 0.0
        %4061 = vmatpush2.msra.mxu0 %v3993
        %4062 = vmatprep.subr.mxu0 0.0
        %4063 = vmatpush2.msra.mxu0 %v3992
        %4064 = vmatprep.subr.mxu0 0.0
        %4065 = vmatpush2.msra.mxu0 %v3991
        %4066 = vmatprep.subr.mxu0 0.0
        %4067 = vmatpush2.msra.mxu0 %v3990
        %4068 = vmatprep.subr.mxu0 0.0
        %4069 = vmatpush2.msra.mxu0 %v3989
        %4070 = vmatprep.subr.mxu0 0.0
        %4071 = vmatpush2.msra.mxu0 %v3988
        %4072 = vmatprep.mubr.f32.mxu0 %v3371
        %4073 = vmatmul.mubr.f32.gmra.mxu0 %v3153
        %v4074 = vpop.f32.mrf.mxu0
        %v4075 = vadd.f32 0.0, %v4074
        %v4076 = vpop.f32.mrf.mxu0
        %4077 = vmatprep.mubr.f32.mxu0 %v3374
        %4078 = vmatmul.mubr.f32.gmra.mxu0 %v3154
        %v4079 = vpop.f32.mrf.mxu0
        %v4080 = vadd.f32 0.0, %v4079
        %v4081 = vpop.f32.mrf.mxu0
        %4082 = vmatprep.mubr.f32.mxu0 %v3377
        %4083 = vmatmul.mubr.f32.gmra.mxu0 %v3155
        %v4084 = vpop.f32.mrf.mxu0
        %v4085 = vadd.f32 0.0, %v4084
        %v4086 = vpop.f32.mrf.mxu0
        %4087 = vmatprep.mubr.f32.mxu0 %v3380
        %4088 = vmatmul.mubr.f32.gmra.mxu0 %v3156
        %v4089 = vpop.f32.mrf.mxu0
        %v4090 = vadd.f32 0.0, %v4089
        %v4091 = vpop.f32.mrf.mxu0
        %4092 = vmatprep.mubr.f32.mxu0 %v3383
        %4093 = vmatmul.mubr.f32.gmra.mxu0 %v3157
        %v4094 = vpop.f32.mrf.mxu0
        %v4095 = vadd.f32 0.0, %v4094
        %v4096 = vpop.f32.mrf.mxu0
        %4097 = vmatprep.mubr.f32.mxu0 %v3386
        %4098 = vmatmul.mubr.f32.gmra.mxu0 %v3158
        %v4099 = vpop.f32.mrf.mxu0
        %v4100 = vadd.f32 0.0, %v4099
        %v4101 = vpop.f32.mrf.mxu0
        %4102 = vmatprep.mubr.f32.mxu0 %v3389
        %4103 = vmatmul.mubr.f32.gmra.mxu0 %v3159
        %v4104 = vpop.f32.mrf.mxu0
        %v4105 = vadd.f32 0.0, %v4104
        %v4106 = vpop.f32.mrf.mxu0
        %4107 = vmatprep.mubr.f32.mxu0 %v3392
        %4108 = vmatmul.mubr.f32.gmra.mxu0 %v3160
        %v4109 = vpop.f32.mrf.mxu0
        %v4110 = vadd.f32 0.0, %v4109
        %v4111 = vpop.f32.mrf.mxu0
        %4112 = vmatprep.mubr.f32.mxu0 %v3395
        %4113 = vmatmul.mubr.f32.gmra.mxu0 %v3161
        %v4114 = vpop.f32.mrf.mxu0
        %v4115 = vadd.f32 0.0, %v4114
        %v4116 = vpop.f32.mrf.mxu0
        %4117 = vmatprep.mubr.f32.mxu0 %v3398
        %4118 = vmatmul.mubr.f32.gmra.mxu0 %v3162
        %v4119 = vpop.f32.mrf.mxu0
        %v4120 = vadd.f32 0.0, %v4119
        %v4121 = vpop.f32.mrf.mxu0
        %4122 = vmatprep.mubr.f32.mxu0 %v3401
        %4123 = vmatmul.mubr.f32.gmra.mxu0 %v3163
        %v4124 = vpop.f32.mrf.mxu0
        %v4125 = vadd.f32 0.0, %v4124
        %v4126 = vpop.f32.mrf.mxu0
        %4127 = vmatprep.mubr.f32.mxu0 %v3404
        %4128 = vmatmul.mubr.f32.gmra.mxu0 %v3164
        %v4129 = vpop.f32.mrf.mxu0
        %v4130 = vadd.f32 0.0, %v4129
        %v4131 = vpop.f32.mrf.mxu0
        %4132 = vmatprep.mubr.f32.mxu0 %v3407
        %4133 = vmatmul.mubr.f32.gmra.mxu0 %v3165
        %v4134 = vpop.f32.mrf.mxu0
        %v4135 = vadd.f32 0.0, %v4134
        %v4136 = vpop.f32.mrf.mxu0
        %4137 = vmatprep.mubr.f32.mxu0 %v3410
        %4138 = vmatmul.mubr.f32.gmra.mxu0 %v3166
        %v4139 = vpop.f32.mrf.mxu0
        %v4140 = vadd.f32 0.0, %v4139
        %v4141 = vpop.f32.mrf.mxu0
        %4142 = vmatprep.mubr.f32.mxu0 %v3413
        %4143 = vmatmul.mubr.f32.gmra.mxu0 %v3167
        %v4144 = vpop.f32.mrf.mxu0
        %v4145 = vadd.f32 0.0, %v4144
        %v4146 = vpop.f32.mrf.mxu0
        %4147 = vmatprep.mubr.f32.mxu0 %v3416
        %4148 = vmatmul.mubr.f32.gmra.mxu0 %v3168
        %v4149 = vpop.f32.mrf.mxu0
        %v4150 = vadd.f32 0.0, %v4149
        %v4151 = vpop.f32.mrf.mxu0
        %4152 = vmatprep.mubr.f32.mxu0 %v3419
        %4153 = vmatmul.mubr.f32.gmra.mxu0 %v3169
        %v4154 = vpop.f32.mrf.mxu0
        %v4155 = vadd.f32 0.0, %v4154
        %v4156 = vpop.f32.mrf.mxu0
        %4157 = vmatprep.mubr.f32.mxu0 %v3422
        %4158 = vmatmul.mubr.f32.gmra.mxu0 %v3170
        %v4159 = vpop.f32.mrf.mxu0
        %v4160 = vadd.f32 0.0, %v4159
        %v4161 = vpop.f32.mrf.mxu0
        %4162 = vmatprep.mubr.f32.mxu0 %v3425
        %4163 = vmatmul.mubr.f32.gmra.mxu0 %v3171
        %v4164 = vpop.f32.mrf.mxu0
        %v4165 = vadd.f32 0.0, %v4164
        %v4166 = vpop.f32.mrf.mxu0
        %4167 = vmatprep.mubr.f32.mxu0 %v3428
        %4168 = vmatmul.mubr.f32.gmra.mxu0 %v3172
        %v4169 = vpop.f32.mrf.mxu0
        %v4170 = vadd.f32 0.0, %v4169
        %v4171 = vpop.f32.mrf.mxu0
        %4172 = vmatprep.mubr.f32.mxu0 %v3431
        %4173 = vmatmul.mubr.f32.gmra.mxu0 %v3173
        %v4174 = vpop.f32.mrf.mxu0
        %v4175 = vadd.f32 0.0, %v4174
        %v4176 = vpop.f32.mrf.mxu0
        %4177 = vmatprep.mubr.f32.mxu0 %v3434
        %4178 = vmatmul.mubr.f32.gmra.mxu0 %v3174
        %v4179 = vpop.f32.mrf.mxu0
        %v4180 = vadd.f32 0.0, %v4179
        %v4181 = vpop.f32.mrf.mxu0
        %4182 = vmatprep.mubr.f32.mxu0 %v3437
        %4183 = vmatmul.mubr.f32.gmra.mxu0 %v3175
        %v4184 = vpop.f32.mrf.mxu0
        %v4185 = vadd.f32 0.0, %v4184
        %v4186 = vpop.f32.mrf.mxu0
        %4187 = vmatprep.mubr.f32.mxu0 %v3440
        %4188 = vmatmul.mubr.f32.gmra.mxu0 %v3176
        %v4189 = vpop.f32.mrf.mxu0
        %v4190 = vadd.f32 0.0, %v4189
        %v4191 = vpop.f32.mrf.mxu0
        %4192 = vmatprep.mubr.f32.mxu0 %v3443
        %4193 = vmatmul.mubr.f32.gmra.mxu0 %v3177
        %v4194 = vpop.f32.mrf.mxu0
        %v4195 = vadd.f32 0.0, %v4194
        %v4196 = vpop.f32.mrf.mxu0
        %4197 = vmatprep.mubr.f32.mxu0 %v3446
        %4198 = vmatmul.mubr.f32.gmra.mxu0 %v3178
        %v4199 = vpop.f32.mrf.mxu0
        %v4200 = vadd.f32 0.0, %v4199
        %v4201 = vpop.f32.mrf.mxu0
        %4202 = vmatprep.mubr.f32.mxu0 %v3449
        %4203 = vmatmul.mubr.f32.gmra.mxu0 %v3179
        %v4204 = vpop.f32.mrf.mxu0
        %v4205 = vadd.f32 0.0, %v4204
        %v4206 = vpop.f32.mrf.mxu0
        %4207 = vmatprep.mubr.f32.mxu0 %v3452
        %4208 = vmatmul.mubr.f32.gmra.mxu0 %v3180
        %v4209 = vpop.f32.mrf.mxu0
        %v4210 = vadd.f32 0.0, %v4209
        %v4211 = vpop.f32.mrf.mxu0
        %4212 = vmatprep.mubr.f32.mxu0 %v3455
        %4213 = vmatmul.mubr.f32.gmra.mxu0 %v3326
        %v4214 = vpop.f32.mrf.mxu0
        %v4215 = vadd.f32 0.0, %v4214
        %v4216 = vpop.f32.mrf.mxu0
        %4217 = vmatprep.mubr.f32.mxu0 %v3458
        %4218 = vmatmul.mubr.f32.gmra.mxu0 %v3327
        %v4219 = vpop.f32.mrf.mxu0
        %v4220 = vadd.f32 0.0, %v4219
        %v4221 = vpop.f32.mrf.mxu0
        %4222 = vmatprep.mubr.f32.mxu0 %v4003
        %4223 = vmatmul.mubr.f32.gmra.mxu0 %v3965
        %v4224 = vpop.f32.mrf.mxu0
        %v4225 = vadd.f32 0.0, %v4224
        %v4226 = vpop.f32.mrf.mxu0
        %4227 = vmatprep.mubr.f32.mxu0 %v4006
        %4228 = vmatmul.mubr.f32.gmra.mxu0 %v3966
        %v4229 = vpop.f32.mrf.mxu0
        %v4230 = vadd.f32 0.0, %v4229
        %v4231 = vpop.f32.mrf.mxu0
        %4232 = vdwg.mxu0
        %v4233 = vadd.f32 %v3758, %v4075
        %v4234 = vadd.f32 %v3763, %v4080
        %v4235 = vadd.f32 %v3768, %v4085
        %v4236 = vadd.f32 %v3773, %v4090
        %v4237 = vadd.f32 %v3778, %v4095
        %v4238 = vadd.f32 %v3783, %v4100
        %v4239 = vadd.f32 %v3788, %v4105
        %v4240 = vadd.f32 %v3793, %v4110
        %v4241 = vadd.f32 %v3798, %v4115
        %v4242 = vadd.f32 %v3803, %v4120
        %v4243 = vadd.f32 %v3808, %v4125
        %v4244 = vadd.f32 %v3813, %v4130
        %v4245 = vadd.f32 %v3818, %v4135
        %v4246 = vadd.f32 %v3823, %v4140
        %v4247 = vadd.f32 %v3828, %v4145
        %v4248 = vadd.f32 %v3833, %v4150
        %v4249 = vadd.f32 %v3838, %v4155
        %v4250 = vadd.f32 %v3843, %v4160
        %v4251 = vadd.f32 %v3848, %v4165
        %v4252 = vadd.f32 %v3853, %v4170
        %v4253 = vadd.f32 %v3858, %v4175
        %v4254 = vadd.f32 %v3863, %v4180
        %v4255 = vadd.f32 %v3868, %v4185
        %v4256 = vadd.f32 %v3873, %v4190
        %v4257 = vadd.f32 %v3878, %v4195
        %v4258 = vadd.f32 %v3883, %v4200
        %v4259 = vadd.f32 %v3888, %v4205
        %v4260 = vadd.f32 %v3893, %v4210
        %v4261 = vadd.f32 %v3898, %v4215
        %v4262 = vadd.f32 %v3903, %v4220
        %v4263 = vadd.f32 %v3908, %v4225
        %v4264 = vadd.f32 %v3913, %v4230
        %v4268 = vrot.slane %v2357, 1
        %v4269 = vrot.slane %v2358, 1
        %v4270 = vsel %vm1454, %v4268, %v4269
        %v4271 = vrot.slane %v2359, 1
        %v4272 = vsel %vm1454, %v4269, %v4271
        %4273 = vrot.lane.b32.xlu0 %v4270, 48
        %v4274 = vpop.permute.xlu0 %4273
        %4275 = vrot.lane.b32.xlu0 %v4272, 48
        %v4276 = vpop.permute.xlu0 %4275
        %v4279 = vrot.slane %v2357, 2
        %v4280 = vrot.slane %v2358, 2
        %v4281 = vsel %vm1599, %v4279, %v4280
        %v4282 = vrot.slane %v2359, 2
        %v4283 = vsel %vm1599, %v4280, %v4282
        %4284 = vrot.lane.b32.xlu0 %v4281, 96
        %v4285 = vpop.permute.xlu0 %4284
        %4286 = vrot.lane.b32.xlu0 %v4283, 96
        %v4287 = vpop.permute.xlu0 %4286
        %v4290 = vrot.slane %v2357, 3
        %v4291 = vrot.slane %v2358, 3
        %v4292 = vsel %vm2763, %v4290, %v4291
        %v4293 = vrot.slane %v2359, 3
        %v4294 = vsel %vm2763, %v4291, %v4293
        %4295 = vrot.lane.b32.xlu0 %v4292, 16
        %v4296 = vpop.permute.xlu0 %4295
        %4297 = vrot.lane.b32.xlu0 %v4294, 16
        %v4298 = vpop.permute.xlu0 %4297
        %v4301 = vrot.slane %v2357, 4
        %v4302 = vrot.slane %v2358, 4
        %v4303 = vsel %vm625, %v4301, %v4302
        %v4304 = vrot.slane %v2359, 4
        %v4305 = vsel %vm625, %v4302, %v4304
        %4306 = vrot.lane.b32.xlu0 %v4303, 64
        %v4307 = vpop.permute.xlu0 %4306
        %4308 = vrot.lane.b32.xlu0 %v4305, 64
        %v4309 = vpop.permute.xlu0 %4308
        %v4312 = vsel %vm2080, %v2357, %v4274
        %v4313 = vsel %vm2080, %v2358, %v4276
        %v4314 = vsel %vm3148, %v4312, %v4285
        %v4315 = vsel %vm3148, %v4313, %v4287
        %v4316 = vsel %vm3181, %v4285, %v4296
        %v4317 = vsel %vm3181, %v4287, %v4298
        %v4318 = vsel %vm3214, %v4316, %v4307
        %v4319 = vsel %vm3214, %v4317, %v4309
        %s4320 = scalar_lea.vmem %s6, 720
        %v4321 = vld [vmem:[%s4320] sm:$0xff]
        %v4322 = vld [vmem:[%s4320 + $0x8] sm:$0xff]
        %v4323 = vld [vmem:[%s4320 + $0x10] sm:$0xff]
        %v4324 = vld [vmem:[%s4320 + $0x18] sm:$0xff]
        %v4325 = vld [vmem:[%s4320 + $0x20] sm:$0xff]
        %v4326 = vld [vmem:[%s4320 + $0x28] sm:$0xff]
        %v4327 = vld [vmem:[%s4320 + $0x30] sm:$0xff]
        %v4328 = vld [vmem:[%s4320 + $0x38] sm:$0xff]
        %v4329 = vld [vmem:[%s4320 + $0x40] sm:$0xff]
        %v4330 = vld [vmem:[%s4320 + $0x48] sm:$0xff]
        %v4331 = vld [vmem:[%s4320 + $0x50] sm:$0xff]
        %v4332 = vld [vmem:[%s4320 + $0x58] sm:$0xff]
        %v4333 = vld [vmem:[%s4320 + $0x60] sm:$0xff]
        %v4334 = vld [vmem:[%s4320 + $0x68] sm:$0xff]
        %v4335 = vld [vmem:[%s4320 + $0x70] sm:$0xff]
        %v4336 = vld [vmem:[%s4320 + $0x78] sm:$0xff]
        %v4337 = vld [vmem:[%s4320 + $0x80] sm:$0xff]
        %v4338 = vld [vmem:[%s4320 + $0x88] sm:$0xff]
        %v4339 = vld [vmem:[%s4320 + $0x90] sm:$0xff]
        %v4340 = vld [vmem:[%s4320 + $0x98] sm:$0xff]
        %v4341 = vld [vmem:[%s4320 + $0xa0] sm:$0xff]
        %v4342 = vld [vmem:[%s4320 + $0xa8] sm:$0xff]
        %v4343 = vld [vmem:[%s4320 + $0xb0] sm:$0xff]
        %v4344 = vld [vmem:[%s4320 + $0xb8] sm:$0xff]
        %v4345 = vld [vmem:[%s4320 + $0xc0] sm:$0xff]
        %v4346 = vld [vmem:[%s4320 + $0xc8] sm:$0xff]
        %v4347 = vld [vmem:[%s4320 + $0xd0] sm:$0xff]
        %v4348 = vld [vmem:[%s4320 + $0xd8] sm:$0xff]
        %v4349 = vld [vmem:[%s4320 + $0xe0] sm:$0xff]
        %v4350 = vld [vmem:[%s4320 + $0xe8] sm:$0xff]
        %v4352 = vsel %vm3363, %v4318, 0
        %v4355 = vsel %vm3363, %v4319, 0
        %4357 = vmatprep.subr.mxu0 0.0
        %4358 = vmatpush1.msra.mxu0 %v4336
        %4359 = vmatprep.subr.mxu0 0.0
        %4360 = vmatpush1.msra.mxu0 %v4335
        %4361 = vmatprep.subr.mxu0 0.0
        %4362 = vmatpush1.msra.mxu0 %v4334
        %4363 = vmatprep.subr.mxu0 0.0
        %4364 = vmatpush1.msra.mxu0 %v4333
        %4365 = vmatprep.subr.mxu0 0.0
        %4366 = vmatpush1.msra.mxu0 %v4332
        %4367 = vmatprep.subr.mxu0 0.0
        %4368 = vmatpush1.msra.mxu0 %v4331
        %4369 = vmatprep.subr.mxu0 0.0
        %4370 = vmatpush1.msra.mxu0 %v4330
        %4371 = vmatprep.subr.mxu0 0.0
        %4372 = vmatpush1.msra.mxu0 %v4329
        %4373 = vmatprep.subr.mxu0 0.0
        %4374 = vmatpush1.msra.mxu0 %v4328
        %4375 = vmatprep.subr.mxu0 0.0
        %4376 = vmatpush1.msra.mxu0 %v4327
        %4377 = vmatprep.subr.mxu0 0.0
        %4378 = vmatpush1.msra.mxu0 %v4326
        %4379 = vmatprep.subr.mxu0 0.0
        %4380 = vmatpush1.msra.mxu0 %v4325
        %4381 = vmatprep.subr.mxu0 0.0
        %4382 = vmatpush1.msra.mxu0 %v4324
        %4383 = vmatprep.subr.mxu0 0.0
        %4384 = vmatpush1.msra.mxu0 %v4323
        %4385 = vmatprep.subr.mxu0 0.0
        %4386 = vmatpush1.msra.mxu0 %v4322
        %4387 = vmatprep.subr.mxu0 0.0
        %4388 = vmatpush1.msra.mxu0 %v4321
        %4389 = vmatprep.subr.mxu0 0.0
        %4390 = vmatpush2.msra.mxu0 0.0
        %4391 = vmatprep.subr.mxu0 0.0
        %4392 = vmatpush2.msra.mxu0 0.0
        %4393 = vmatprep.subr.mxu0 0.0
        %4394 = vmatpush2.msra.mxu0 %v4350
        %4395 = vmatprep.subr.mxu0 0.0
        %4396 = vmatpush2.msra.mxu0 %v4349
        %4397 = vmatprep.subr.mxu0 0.0
        %4398 = vmatpush2.msra.mxu0 %v4348
        %4399 = vmatprep.subr.mxu0 0.0
        %4400 = vmatpush2.msra.mxu0 %v4347
        %4401 = vmatprep.subr.mxu0 0.0
        %4402 = vmatpush2.msra.mxu0 %v4346
        %4403 = vmatprep.subr.mxu0 0.0
        %4404 = vmatpush2.msra.mxu0 %v4345
        %4405 = vmatprep.subr.mxu0 0.0
        %4406 = vmatpush2.msra.mxu0 %v4344
        %4407 = vmatprep.subr.mxu0 0.0
        %4408 = vmatpush2.msra.mxu0 %v4343
        %4409 = vmatprep.subr.mxu0 0.0
        %4410 = vmatpush2.msra.mxu0 %v4342
        %4411 = vmatprep.subr.mxu0 0.0
        %4412 = vmatpush2.msra.mxu0 %v4341
        %4413 = vmatprep.subr.mxu0 0.0
        %4414 = vmatpush2.msra.mxu0 %v4340
        %4415 = vmatprep.subr.mxu0 0.0
        %4416 = vmatpush2.msra.mxu0 %v4339
        %4417 = vmatprep.subr.mxu0 0.0
        %4418 = vmatpush2.msra.mxu0 %v4338
        %4419 = vmatprep.subr.mxu0 0.0
        %4420 = vmatpush2.msra.mxu0 %v4337
        %4421 = vmatprep.mubr.f32.mxu0 %v3377
        %4422 = vmatmul.mubr.f32.gmra.mxu0 %v3155
        %v4423 = vpop.f32.mrf.mxu0
        %v4424 = vadd.f32 0.0, %v4423
        %v4425 = vpop.f32.mrf.mxu0
        %4426 = vmatprep.mubr.f32.mxu0 %v3380
        %4427 = vmatmul.mubr.f32.gmra.mxu0 %v3156
        %v4428 = vpop.f32.mrf.mxu0
        %v4429 = vadd.f32 0.0, %v4428
        %v4430 = vpop.f32.mrf.mxu0
        %4431 = vmatprep.mubr.f32.mxu0 %v3383
        %4432 = vmatmul.mubr.f32.gmra.mxu0 %v3157
        %v4433 = vpop.f32.mrf.mxu0
        %v4434 = vadd.f32 0.0, %v4433
        %v4435 = vpop.f32.mrf.mxu0
        %4436 = vmatprep.mubr.f32.mxu0 %v3386
        %4437 = vmatmul.mubr.f32.gmra.mxu0 %v3158
        %v4438 = vpop.f32.mrf.mxu0
        %v4439 = vadd.f32 0.0, %v4438
        %v4440 = vpop.f32.mrf.mxu0
        %4441 = vmatprep.mubr.f32.mxu0 %v3389
        %4442 = vmatmul.mubr.f32.gmra.mxu0 %v3159
        %v4443 = vpop.f32.mrf.mxu0
        %v4444 = vadd.f32 0.0, %v4443
        %v4445 = vpop.f32.mrf.mxu0
        %4446 = vmatprep.mubr.f32.mxu0 %v3392
        %4447 = vmatmul.mubr.f32.gmra.mxu0 %v3160
        %v4448 = vpop.f32.mrf.mxu0
        %v4449 = vadd.f32 0.0, %v4448
        %v4450 = vpop.f32.mrf.mxu0
        %4451 = vmatprep.mubr.f32.mxu0 %v3395
        %4452 = vmatmul.mubr.f32.gmra.mxu0 %v3161
        %v4453 = vpop.f32.mrf.mxu0
        %v4454 = vadd.f32 0.0, %v4453
        %v4455 = vpop.f32.mrf.mxu0
        %4456 = vmatprep.mubr.f32.mxu0 %v3398
        %4457 = vmatmul.mubr.f32.gmra.mxu0 %v3162
        %v4458 = vpop.f32.mrf.mxu0
        %v4459 = vadd.f32 0.0, %v4458
        %v4460 = vpop.f32.mrf.mxu0
        %4461 = vmatprep.mubr.f32.mxu0 %v3401
        %4462 = vmatmul.mubr.f32.gmra.mxu0 %v3163
        %v4463 = vpop.f32.mrf.mxu0
        %v4464 = vadd.f32 0.0, %v4463
        %v4465 = vpop.f32.mrf.mxu0
        %4466 = vmatprep.mubr.f32.mxu0 %v3404
        %4467 = vmatmul.mubr.f32.gmra.mxu0 %v3164
        %v4468 = vpop.f32.mrf.mxu0
        %v4469 = vadd.f32 0.0, %v4468
        %v4470 = vpop.f32.mrf.mxu0
        %4471 = vmatprep.mubr.f32.mxu0 %v3407
        %4472 = vmatmul.mubr.f32.gmra.mxu0 %v3165
        %v4473 = vpop.f32.mrf.mxu0
        %v4474 = vadd.f32 0.0, %v4473
        %v4475 = vpop.f32.mrf.mxu0
        %4476 = vmatprep.mubr.f32.mxu0 %v3410
        %4477 = vmatmul.mubr.f32.gmra.mxu0 %v3166
        %v4478 = vpop.f32.mrf.mxu0
        %v4479 = vadd.f32 0.0, %v4478
        %v4480 = vpop.f32.mrf.mxu0
        %4481 = vmatprep.mubr.f32.mxu0 %v3413
        %4482 = vmatmul.mubr.f32.gmra.mxu0 %v3167
        %v4483 = vpop.f32.mrf.mxu0
        %v4484 = vadd.f32 0.0, %v4483
        %v4485 = vpop.f32.mrf.mxu0
        %4486 = vmatprep.mubr.f32.mxu0 %v3416
        %4487 = vmatmul.mubr.f32.gmra.mxu0 %v3168
        %v4488 = vpop.f32.mrf.mxu0
        %v4489 = vadd.f32 0.0, %v4488
        %v4490 = vpop.f32.mrf.mxu0
        %4491 = vmatprep.mubr.f32.mxu0 %v3419
        %4492 = vmatmul.mubr.f32.gmra.mxu0 %v3169
        %v4493 = vpop.f32.mrf.mxu0
        %v4494 = vadd.f32 0.0, %v4493
        %v4495 = vpop.f32.mrf.mxu0
        %4496 = vmatprep.mubr.f32.mxu0 %v3422
        %4497 = vmatmul.mubr.f32.gmra.mxu0 %v3170
        %v4498 = vpop.f32.mrf.mxu0
        %v4499 = vadd.f32 0.0, %v4498
        %v4500 = vpop.f32.mrf.mxu0
        %4501 = vmatprep.mubr.f32.mxu0 %v3425
        %4502 = vmatmul.mubr.f32.gmra.mxu0 %v3171
        %v4503 = vpop.f32.mrf.mxu0
        %v4504 = vadd.f32 0.0, %v4503
        %v4505 = vpop.f32.mrf.mxu0
        %4506 = vmatprep.mubr.f32.mxu0 %v3428
        %4507 = vmatmul.mubr.f32.gmra.mxu0 %v3172
        %v4508 = vpop.f32.mrf.mxu0
        %v4509 = vadd.f32 0.0, %v4508
        %v4510 = vpop.f32.mrf.mxu0
        %4511 = vmatprep.mubr.f32.mxu0 %v3431
        %4512 = vmatmul.mubr.f32.gmra.mxu0 %v3173
        %v4513 = vpop.f32.mrf.mxu0
        %v4514 = vadd.f32 0.0, %v4513
        %v4515 = vpop.f32.mrf.mxu0
        %4516 = vmatprep.mubr.f32.mxu0 %v3434
        %4517 = vmatmul.mubr.f32.gmra.mxu0 %v3174
        %v4518 = vpop.f32.mrf.mxu0
        %v4519 = vadd.f32 0.0, %v4518
        %v4520 = vpop.f32.mrf.mxu0
        %4521 = vmatprep.mubr.f32.mxu0 %v3437
        %4522 = vmatmul.mubr.f32.gmra.mxu0 %v3175
        %v4523 = vpop.f32.mrf.mxu0
        %v4524 = vadd.f32 0.0, %v4523
        %v4525 = vpop.f32.mrf.mxu0
        %4526 = vmatprep.mubr.f32.mxu0 %v3440
        %4527 = vmatmul.mubr.f32.gmra.mxu0 %v3176
        %v4528 = vpop.f32.mrf.mxu0
        %v4529 = vadd.f32 0.0, %v4528
        %v4530 = vpop.f32.mrf.mxu0
        %4531 = vmatprep.mubr.f32.mxu0 %v3443
        %4532 = vmatmul.mubr.f32.gmra.mxu0 %v3177
        %v4533 = vpop.f32.mrf.mxu0
        %v4534 = vadd.f32 0.0, %v4533
        %v4535 = vpop.f32.mrf.mxu0
        %4536 = vmatprep.mubr.f32.mxu0 %v3446
        %4537 = vmatmul.mubr.f32.gmra.mxu0 %v3178
        %v4538 = vpop.f32.mrf.mxu0
        %v4539 = vadd.f32 0.0, %v4538
        %v4540 = vpop.f32.mrf.mxu0
        %4541 = vmatprep.mubr.f32.mxu0 %v3449
        %4542 = vmatmul.mubr.f32.gmra.mxu0 %v3179
        %v4543 = vpop.f32.mrf.mxu0
        %v4544 = vadd.f32 0.0, %v4543
        %v4545 = vpop.f32.mrf.mxu0
        %4546 = vmatprep.mubr.f32.mxu0 %v3452
        %4547 = vmatmul.mubr.f32.gmra.mxu0 %v3180
        %v4548 = vpop.f32.mrf.mxu0
        %v4549 = vadd.f32 0.0, %v4548
        %v4550 = vpop.f32.mrf.mxu0
        %4551 = vmatprep.mubr.f32.mxu0 %v3455
        %4552 = vmatmul.mubr.f32.gmra.mxu0 %v3326
        %v4553 = vpop.f32.mrf.mxu0
        %v4554 = vadd.f32 0.0, %v4553
        %v4555 = vpop.f32.mrf.mxu0
        %4556 = vmatprep.mubr.f32.mxu0 %v3458
        %4557 = vmatmul.mubr.f32.gmra.mxu0 %v3327
        %v4558 = vpop.f32.mrf.mxu0
        %v4559 = vadd.f32 0.0, %v4558
        %v4560 = vpop.f32.mrf.mxu0
        %4561 = vmatprep.mubr.f32.mxu0 %v4003
        %4562 = vmatmul.mubr.f32.gmra.mxu0 %v3965
        %v4563 = vpop.f32.mrf.mxu0
        %v4564 = vadd.f32 0.0, %v4563
        %v4565 = vpop.f32.mrf.mxu0
        %4566 = vmatprep.mubr.f32.mxu0 %v4006
        %4567 = vmatmul.mubr.f32.gmra.mxu0 %v3966
        %v4568 = vpop.f32.mrf.mxu0
        %v4569 = vadd.f32 0.0, %v4568
        %v4570 = vpop.f32.mrf.mxu0
        %4571 = vmatprep.mubr.f32.mxu0 %v4352
        %4572 = vmatmul.mubr.f32.gmra.mxu0 %v4314
        %v4573 = vpop.f32.mrf.mxu0
        %v4574 = vadd.f32 0.0, %v4573
        %v4575 = vpop.f32.mrf.mxu0
        %4576 = vmatprep.mubr.f32.mxu0 %v4355
        %4577 = vmatmul.mubr.f32.gmra.mxu0 %v4315
        %v4578 = vpop.f32.mrf.mxu0
        %v4579 = vadd.f32 0.0, %v4578
        %v4580 = vpop.f32.mrf.mxu0
        %4581 = vdwg.mxu0
        %v4582 = vadd.f32 %v4233, %v4424
        %v4583 = vadd.f32 %v4234, %v4429
        %v4584 = vadd.f32 %v4235, %v4434
        %v4585 = vadd.f32 %v4236, %v4439
        %v4586 = vadd.f32 %v4237, %v4444
        %v4587 = vadd.f32 %v4238, %v4449
        %v4588 = vadd.f32 %v4239, %v4454
        %v4589 = vadd.f32 %v4240, %v4459
        %v4590 = vadd.f32 %v4241, %v4464
        %v4591 = vadd.f32 %v4242, %v4469
        %v4592 = vadd.f32 %v4243, %v4474
        %v4593 = vadd.f32 %v4244, %v4479
        %v4594 = vadd.f32 %v4245, %v4484
        %v4595 = vadd.f32 %v4246, %v4489
        %v4596 = vadd.f32 %v4247, %v4494
        %v4597 = vadd.f32 %v4248, %v4499
        %v4598 = vadd.f32 %v4249, %v4504
        %v4599 = vadd.f32 %v4250, %v4509
        %v4600 = vadd.f32 %v4251, %v4514
        %v4601 = vadd.f32 %v4252, %v4519
        %v4602 = vadd.f32 %v4253, %v4524
        %v4603 = vadd.f32 %v4254, %v4529
        %v4604 = vadd.f32 %v4255, %v4534
        %v4605 = vadd.f32 %v4256, %v4539
        %v4606 = vadd.f32 %v4257, %v4544
        %v4607 = vadd.f32 %v4258, %v4549
        %v4608 = vadd.f32 %v4259, %v4554
        %v4609 = vadd.f32 %v4260, %v4559
        %v4610 = vadd.f32 %v4261, %v4564
        %v4611 = vadd.f32 %v4262, %v4569
        %v4612 = vadd.f32 %v4263, %v4574
        %v4613 = vadd.f32 %v4264, %v4579
        %v4617 = vrot.slane %v2360, 1
        %v4618 = vrot.slane %v2361, 1
        %v4619 = vsel %vm1454, %v4617, %v4618
        %v4620 = vrot.slane %v2362, 1
        %v4621 = vsel %vm1454, %v4618, %v4620
        %4622 = vrot.lane.b32.xlu0 %v4619, 48
        %v4623 = vpop.permute.xlu0 %4622
        %4624 = vrot.lane.b32.xlu0 %v4621, 48
        %v4625 = vpop.permute.xlu0 %4624
        %v4628 = vrot.slane %v2360, 2
        %v4629 = vrot.slane %v2361, 2
        %v4630 = vsel %vm1599, %v4628, %v4629
        %v4631 = vrot.slane %v2362, 2
        %v4632 = vsel %vm1599, %v4629, %v4631
        %4633 = vrot.lane.b32.xlu0 %v4630, 96
        %v4634 = vpop.permute.xlu0 %4633
        %4635 = vrot.lane.b32.xlu0 %v4632, 96
        %v4636 = vpop.permute.xlu0 %4635
        %v4639 = vrot.slane %v2360, 3
        %v4640 = vrot.slane %v2361, 3
        %v4641 = vsel %vm2763, %v4639, %v4640
        %v4642 = vrot.slane %v2362, 3
        %v4643 = vsel %vm2763, %v4640, %v4642
        %4644 = vrot.lane.b32.xlu0 %v4641, 16
        %v4645 = vpop.permute.xlu0 %4644
        %4646 = vrot.lane.b32.xlu0 %v4643, 16
        %v4647 = vpop.permute.xlu0 %4646
        %v4650 = vrot.slane %v2360, 4
        %v4651 = vrot.slane %v2361, 4
        %v4652 = vsel %vm625, %v4650, %v4651
        %v4653 = vrot.slane %v2362, 4
        %v4654 = vsel %vm625, %v4651, %v4653
        %4655 = vrot.lane.b32.xlu0 %v4652, 64
        %v4656 = vpop.permute.xlu0 %4655
        %4657 = vrot.lane.b32.xlu0 %v4654, 64
        %v4658 = vpop.permute.xlu0 %4657
        %v4661 = vsel %vm2080, %v2360, %v4623
        %v4662 = vsel %vm2080, %v2361, %v4625
        %v4663 = vsel %vm3148, %v4661, %v4634
        %v4664 = vsel %vm3148, %v4662, %v4636
        %v4665 = vsel %vm3181, %v4634, %v4645
        %v4666 = vsel %vm3181, %v4636, %v4647
        %v4667 = vsel %vm3214, %v4665, %v4656
        %v4668 = vsel %vm3214, %v4666, %v4658
        %s4669 = scalar_lea.vmem %s6, 960
        %v4670 = vld [vmem:[%s4669] sm:$0xff]
        %v4671 = vld [vmem:[%s4669 + $0x8] sm:$0xff]
        %v4672 = vld [vmem:[%s4669 + $0x10] sm:$0xff]
        %v4673 = vld [vmem:[%s4669 + $0x18] sm:$0xff]
        %v4674 = vld [vmem:[%s4669 + $0x20] sm:$0xff]
        %v4675 = vld [vmem:[%s4669 + $0x28] sm:$0xff]
        %v4676 = vld [vmem:[%s4669 + $0x30] sm:$0xff]
        %v4677 = vld [vmem:[%s4669 + $0x38] sm:$0xff]
        %v4678 = vld [vmem:[%s4669 + $0x40] sm:$0xff]
        %v4679 = vld [vmem:[%s4669 + $0x48] sm:$0xff]
        %v4680 = vld [vmem:[%s4669 + $0x50] sm:$0xff]
        %v4681 = vld [vmem:[%s4669 + $0x58] sm:$0xff]
        %v4682 = vld [vmem:[%s4669 + $0x60] sm:$0xff]
        %v4683 = vld [vmem:[%s4669 + $0x68] sm:$0xff]
        %v4684 = vld [vmem:[%s4669 + $0x70] sm:$0xff]
        %v4685 = vld [vmem:[%s4669 + $0x78] sm:$0xff]
        %v4686 = vld [vmem:[%s4669 + $0x80] sm:$0xff]
        %v4687 = vld [vmem:[%s4669 + $0x88] sm:$0xff]
        %v4688 = vld [vmem:[%s4669 + $0x90] sm:$0xff]
        %v4689 = vld [vmem:[%s4669 + $0x98] sm:$0xff]
        %v4690 = vld [vmem:[%s4669 + $0xa0] sm:$0xff]
        %v4691 = vld [vmem:[%s4669 + $0xa8] sm:$0xff]
        %v4692 = vld [vmem:[%s4669 + $0xb0] sm:$0xff]
        %v4693 = vld [vmem:[%s4669 + $0xb8] sm:$0xff]
        %v4694 = vld [vmem:[%s4669 + $0xc0] sm:$0xff]
        %v4695 = vld [vmem:[%s4669 + $0xc8] sm:$0xff]
        %v4696 = vld [vmem:[%s4669 + $0xd0] sm:$0xff]
        %v4697 = vld [vmem:[%s4669 + $0xd8] sm:$0xff]
        %v4698 = vld [vmem:[%s4669 + $0xe0] sm:$0xff]
        %v4699 = vld [vmem:[%s4669 + $0xe8] sm:$0xff]
        %v4701 = vsel %vm3363, %v4667, 0
        %v4704 = vsel %vm3363, %v4668, 0
        %4706 = vmatprep.subr.mxu0 0.0
        %4707 = vmatpush1.msra.mxu0 %v4685
        %4708 = vmatprep.subr.mxu0 0.0
        %4709 = vmatpush1.msra.mxu0 %v4684
        %4710 = vmatprep.subr.mxu0 0.0
        %4711 = vmatpush1.msra.mxu0 %v4683
        %4712 = vmatprep.subr.mxu0 0.0
        %4713 = vmatpush1.msra.mxu0 %v4682
        %4714 = vmatprep.subr.mxu0 0.0
        %4715 = vmatpush1.msra.mxu0 %v4681
        %4716 = vmatprep.subr.mxu0 0.0
        %4717 = vmatpush1.msra.mxu0 %v4680
        %4718 = vmatprep.subr.mxu0 0.0
        %4719 = vmatpush1.msra.mxu0 %v4679
        %4720 = vmatprep.subr.mxu0 0.0
        %4721 = vmatpush1.msra.mxu0 %v4678
        %4722 = vmatprep.subr.mxu0 0.0
        %4723 = vmatpush1.msra.mxu0 %v4677
        %4724 = vmatprep.subr.mxu0 0.0
        %4725 = vmatpush1.msra.mxu0 %v4676
        %4726 = vmatprep.subr.mxu0 0.0
        %4727 = vmatpush1.msra.mxu0 %v4675
        %4728 = vmatprep.subr.mxu0 0.0
        %4729 = vmatpush1.msra.mxu0 %v4674
        %4730 = vmatprep.subr.mxu0 0.0
        %4731 = vmatpush1.msra.mxu0 %v4673
        %4732 = vmatprep.subr.mxu0 0.0
        %4733 = vmatpush1.msra.mxu0 %v4672
        %4734 = vmatprep.subr.mxu0 0.0
        %4735 = vmatpush1.msra.mxu0 %v4671
        %4736 = vmatprep.subr.mxu0 0.0
        %4737 = vmatpush1.msra.mxu0 %v4670
        %4738 = vmatprep.subr.mxu0 0.0
        %4739 = vmatpush2.msra.mxu0 0.0
        %4740 = vmatprep.subr.mxu0 0.0
        %4741 = vmatpush2.msra.mxu0 0.0
        %4742 = vmatprep.subr.mxu0 0.0
        %4743 = vmatpush2.msra.mxu0 %v4699
        %4744 = vmatprep.subr.mxu0 0.0
        %4745 = vmatpush2.msra.mxu0 %v4698
        %4746 = vmatprep.subr.mxu0 0.0
        %4747 = vmatpush2.msra.mxu0 %v4697
        %4748 = vmatprep.subr.mxu0 0.0
        %4749 = vmatpush2.msra.mxu0 %v4696
        %4750 = vmatprep.subr.mxu0 0.0
        %4751 = vmatpush2.msra.mxu0 %v4695
        %4752 = vmatprep.subr.mxu0 0.0
        %4753 = vmatpush2.msra.mxu0 %v4694
        %4754 = vmatprep.subr.mxu0 0.0
        %4755 = vmatpush2.msra.mxu0 %v4693
        %4756 = vmatprep.subr.mxu0 0.0
        %4757 = vmatpush2.msra.mxu0 %v4692
        %4758 = vmatprep.subr.mxu0 0.0
        %4759 = vmatpush2.msra.mxu0 %v4691
        %4760 = vmatprep.subr.mxu0 0.0
        %4761 = vmatpush2.msra.mxu0 %v4690
        %4762 = vmatprep.subr.mxu0 0.0
        %4763 = vmatpush2.msra.mxu0 %v4689
        %4764 = vmatprep.subr.mxu0 0.0
        %4765 = vmatpush2.msra.mxu0 %v4688
        %4766 = vmatprep.subr.mxu0 0.0
        %4767 = vmatpush2.msra.mxu0 %v4687
        %4768 = vmatprep.subr.mxu0 0.0
        %4769 = vmatpush2.msra.mxu0 %v4686
        %4770 = vmatprep.mubr.f32.mxu0 %v3383
        %4771 = vmatmul.mubr.f32.gmra.mxu0 %v3157
        %v4772 = vpop.f32.mrf.mxu0
        %v4773 = vadd.f32 0.0, %v4772
        %v4774 = vpop.f32.mrf.mxu0
        %4775 = vmatprep.mubr.f32.mxu0 %v3386
        %4776 = vmatmul.mubr.f32.gmra.mxu0 %v3158
        %v4777 = vpop.f32.mrf.mxu0
        %v4778 = vadd.f32 0.0, %v4777
        %v4779 = vpop.f32.mrf.mxu0
        %4780 = vmatprep.mubr.f32.mxu0 %v3389
        %4781 = vmatmul.mubr.f32.gmra.mxu0 %v3159
        %v4782 = vpop.f32.mrf.mxu0
        %v4783 = vadd.f32 0.0, %v4782
        %v4784 = vpop.f32.mrf.mxu0
        %4785 = vmatprep.mubr.f32.mxu0 %v3392
        %4786 = vmatmul.mubr.f32.gmra.mxu0 %v3160
        %v4787 = vpop.f32.mrf.mxu0
        %v4788 = vadd.f32 0.0, %v4787
        %v4789 = vpop.f32.mrf.mxu0
        %4790 = vmatprep.mubr.f32.mxu0 %v3395
        %4791 = vmatmul.mubr.f32.gmra.mxu0 %v3161
        %v4792 = vpop.f32.mrf.mxu0
        %v4793 = vadd.f32 0.0, %v4792
        %v4794 = vpop.f32.mrf.mxu0
        %4795 = vmatprep.mubr.f32.mxu0 %v3398
        %4796 = vmatmul.mubr.f32.gmra.mxu0 %v3162
        %v4797 = vpop.f32.mrf.mxu0
        %v4798 = vadd.f32 0.0, %v4797
        %v4799 = vpop.f32.mrf.mxu0
        %4800 = vmatprep.mubr.f32.mxu0 %v3401
        %4801 = vmatmul.mubr.f32.gmra.mxu0 %v3163
        %v4802 = vpop.f32.mrf.mxu0
        %v4803 = vadd.f32 0.0, %v4802
        %v4804 = vpop.f32.mrf.mxu0
        %4805 = vmatprep.mubr.f32.mxu0 %v3404
        %4806 = vmatmul.mubr.f32.gmra.mxu0 %v3164
        %v4807 = vpop.f32.mrf.mxu0
        %v4808 = vadd.f32 0.0, %v4807
        %v4809 = vpop.f32.mrf.mxu0
        %4810 = vmatprep.mubr.f32.mxu0 %v3407
        %4811 = vmatmul.mubr.f32.gmra.mxu0 %v3165
        %v4812 = vpop.f32.mrf.mxu0
        %v4813 = vadd.f32 0.0, %v4812
        %v4814 = vpop.f32.mrf.mxu0
        %4815 = vmatprep.mubr.f32.mxu0 %v3410
        %4816 = vmatmul.mubr.f32.gmra.mxu0 %v3166
        %v4817 = vpop.f32.mrf.mxu0
        %v4818 = vadd.f32 0.0, %v4817
        %v4819 = vpop.f32.mrf.mxu0
        %4820 = vmatprep.mubr.f32.mxu0 %v3413
        %4821 = vmatmul.mubr.f32.gmra.mxu0 %v3167
        %v4822 = vpop.f32.mrf.mxu0
        %v4823 = vadd.f32 0.0, %v4822
        %v4824 = vpop.f32.mrf.mxu0
        %4825 = vmatprep.mubr.f32.mxu0 %v3416
        %4826 = vmatmul.mubr.f32.gmra.mxu0 %v3168
        %v4827 = vpop.f32.mrf.mxu0
        %v4828 = vadd.f32 0.0, %v4827
        %v4829 = vpop.f32.mrf.mxu0
        %4830 = vmatprep.mubr.f32.mxu0 %v3419
        %4831 = vmatmul.mubr.f32.gmra.mxu0 %v3169
        %v4832 = vpop.f32.mrf.mxu0
        %v4833 = vadd.f32 0.0, %v4832
        %v4834 = vpop.f32.mrf.mxu0
        %4835 = vmatprep.mubr.f32.mxu0 %v3422
        %4836 = vmatmul.mubr.f32.gmra.mxu0 %v3170
        %v4837 = vpop.f32.mrf.mxu0
        %v4838 = vadd.f32 0.0, %v4837
        %v4839 = vpop.f32.mrf.mxu0
        %4840 = vmatprep.mubr.f32.mxu0 %v3425
        %4841 = vmatmul.mubr.f32.gmra.mxu0 %v3171
        %v4842 = vpop.f32.mrf.mxu0
        %v4843 = vadd.f32 0.0, %v4842
        %v4844 = vpop.f32.mrf.mxu0
        %4845 = vmatprep.mubr.f32.mxu0 %v3428
        %4846 = vmatmul.mubr.f32.gmra.mxu0 %v3172
        %v4847 = vpop.f32.mrf.mxu0
        %v4848 = vadd.f32 0.0, %v4847
        %v4849 = vpop.f32.mrf.mxu0
        %4850 = vmatprep.mubr.f32.mxu0 %v3431
        %4851 = vmatmul.mubr.f32.gmra.mxu0 %v3173
        %v4852 = vpop.f32.mrf.mxu0
        %v4853 = vadd.f32 0.0, %v4852
        %v4854 = vpop.f32.mrf.mxu0
        %4855 = vmatprep.mubr.f32.mxu0 %v3434
        %4856 = vmatmul.mubr.f32.gmra.mxu0 %v3174
        %v4857 = vpop.f32.mrf.mxu0
        %v4858 = vadd.f32 0.0, %v4857
        %v4859 = vpop.f32.mrf.mxu0
        %4860 = vmatprep.mubr.f32.mxu0 %v3437
        %4861 = vmatmul.mubr.f32.gmra.mxu0 %v3175
        %v4862 = vpop.f32.mrf.mxu0
        %v4863 = vadd.f32 0.0, %v4862
        %v4864 = vpop.f32.mrf.mxu0
        %4865 = vmatprep.mubr.f32.mxu0 %v3440
        %4866 = vmatmul.mubr.f32.gmra.mxu0 %v3176
        %v4867 = vpop.f32.mrf.mxu0
        %v4868 = vadd.f32 0.0, %v4867
        %v4869 = vpop.f32.mrf.mxu0
        %4870 = vmatprep.mubr.f32.mxu0 %v3443
        %4871 = vmatmul.mubr.f32.gmra.mxu0 %v3177
        %v4872 = vpop.f32.mrf.mxu0
        %v4873 = vadd.f32 0.0, %v4872
        %v4874 = vpop.f32.mrf.mxu0
        %4875 = vmatprep.mubr.f32.mxu0 %v3446
        %4876 = vmatmul.mubr.f32.gmra.mxu0 %v3178
        %v4877 = vpop.f32.mrf.mxu0
        %v4878 = vadd.f32 0.0, %v4877
        %v4879 = vpop.f32.mrf.mxu0
        %4880 = vmatprep.mubr.f32.mxu0 %v3449
        %4881 = vmatmul.mubr.f32.gmra.mxu0 %v3179
        %v4882 = vpop.f32.mrf.mxu0
        %v4883 = vadd.f32 0.0, %v4882
        %v4884 = vpop.f32.mrf.mxu0
        %4885 = vmatprep.mubr.f32.mxu0 %v3452
        %4886 = vmatmul.mubr.f32.gmra.mxu0 %v3180
        %v4887 = vpop.f32.mrf.mxu0
        %v4888 = vadd.f32 0.0, %v4887
        %v4889 = vpop.f32.mrf.mxu0
        %4890 = vmatprep.mubr.f32.mxu0 %v3455
        %4891 = vmatmul.mubr.f32.gmra.mxu0 %v3326
        %v4892 = vpop.f32.mrf.mxu0
        %v4893 = vadd.f32 0.0, %v4892
        %v4894 = vpop.f32.mrf.mxu0
        %4895 = vmatprep.mubr.f32.mxu0 %v3458
        %4896 = vmatmul.mubr.f32.gmra.mxu0 %v3327
        %v4897 = vpop.f32.mrf.mxu0
        %v4898 = vadd.f32 0.0, %v4897
        %v4899 = vpop.f32.mrf.mxu0
        %4900 = vmatprep.mubr.f32.mxu0 %v4003
        %4901 = vmatmul.mubr.f32.gmra.mxu0 %v3965
        %v4902 = vpop.f32.mrf.mxu0
        %v4903 = vadd.f32 0.0, %v4902
        %v4904 = vpop.f32.mrf.mxu0
        %4905 = vmatprep.mubr.f32.mxu0 %v4006
        %4906 = vmatmul.mubr.f32.gmra.mxu0 %v3966
        %v4907 = vpop.f32.mrf.mxu0
        %v4908 = vadd.f32 0.0, %v4907
        %v4909 = vpop.f32.mrf.mxu0
        %4910 = vmatprep.mubr.f32.mxu0 %v4352
        %4911 = vmatmul.mubr.f32.gmra.mxu0 %v4314
        %v4912 = vpop.f32.mrf.mxu0
        %v4913 = vadd.f32 0.0, %v4912
        %v4914 = vpop.f32.mrf.mxu0
        %4915 = vmatprep.mubr.f32.mxu0 %v4355
        %4916 = vmatmul.mubr.f32.gmra.mxu0 %v4315
        %v4917 = vpop.f32.mrf.mxu0
        %v4918 = vadd.f32 0.0, %v4917
        %v4919 = vpop.f32.mrf.mxu0
        %4920 = vmatprep.mubr.f32.mxu0 %v4701
        %4921 = vmatmul.mubr.f32.gmra.mxu0 %v4663
        %v4922 = vpop.f32.mrf.mxu0
        %v4923 = vadd.f32 0.0, %v4922
        %v4924 = vpop.f32.mrf.mxu0
        %4925 = vmatprep.mubr.f32.mxu0 %v4704
        %4926 = vmatmul.mubr.f32.gmra.mxu0 %v4664
        %v4927 = vpop.f32.mrf.mxu0
        %v4928 = vadd.f32 0.0, %v4927
        %v4929 = vpop.f32.mrf.mxu0
        %4930 = vdwg.mxu0
        %v4931 = vadd.f32 %v4582, %v4773
        %v4932 = vadd.f32 %v4583, %v4778
        %v4933 = vadd.f32 %v4584, %v4783
        %v4934 = vadd.f32 %v4585, %v4788
        %v4935 = vadd.f32 %v4586, %v4793
        %v4936 = vadd.f32 %v4587, %v4798
        %v4937 = vadd.f32 %v4588, %v4803
        %v4938 = vadd.f32 %v4589, %v4808
        %v4939 = vadd.f32 %v4590, %v4813
        %v4940 = vadd.f32 %v4591, %v4818
        %v4941 = vadd.f32 %v4592, %v4823
        %v4942 = vadd.f32 %v4593, %v4828
        %v4943 = vadd.f32 %v4594, %v4833
        %v4944 = vadd.f32 %v4595, %v4838
        %v4945 = vadd.f32 %v4596, %v4843
        %v4946 = vadd.f32 %v4597, %v4848
        %v4947 = vadd.f32 %v4598, %v4853
        %v4948 = vadd.f32 %v4599, %v4858
        %v4949 = vadd.f32 %v4600, %v4863
        %v4950 = vadd.f32 %v4601, %v4868
        %v4951 = vadd.f32 %v4602, %v4873
        %v4952 = vadd.f32 %v4603, %v4878
        %v4953 = vadd.f32 %v4604, %v4883
        %v4954 = vadd.f32 %v4605, %v4888
        %v4955 = vadd.f32 %v4606, %v4893
        %v4956 = vadd.f32 %v4607, %v4898
        %v4957 = vadd.f32 %v4608, %v4903
        %v4958 = vadd.f32 %v4609, %v4908
        %v4959 = vadd.f32 %v4610, %v4913
        %v4960 = vadd.f32 %v4611, %v4918
        %v4961 = vadd.f32 %v4612, %v4923
        %v4962 = vadd.f32 %v4613, %v4928
        %v4963 = vld [vmem:[%s7] sm:$0x1]
        %v4965 = vlaneseq
        %v4966 = vshrl.u32 %v4965, 7
        %v4967 = vsub.s32 0, %v4966
        %v4968 = vrot.slane %v4963, %v4967
        %v4970 = vmul.f32 %v4931, %v4968
        %v4971 = vmul.f32 %v4932, %v4968
        %v4972 = vmul.f32 %v4933, %v4968
        %v4973 = vmul.f32 %v4934, %v4968
        %v4974 = vmul.f32 %v4935, %v4968
        %v4975 = vmul.f32 %v4936, %v4968
        %v4976 = vmul.f32 %v4937, %v4968
        %v4977 = vmul.f32 %v4938, %v4968
        %v4978 = vmul.f32 %v4939, %v4968
        %v4979 = vmul.f32 %v4940, %v4968
        %v4980 = vmul.f32 %v4941, %v4968
        %v4981 = vmul.f32 %v4942, %v4968
        %v4982 = vmul.f32 %v4943, %v4968
        %v4983 = vmul.f32 %v4944, %v4968
        %v4984 = vmul.f32 %v4945, %v4968
        %v4985 = vmul.f32 %v4946, %v4968
        %v4986 = vmul.f32 %v4947, %v4968
        %v4987 = vmul.f32 %v4948, %v4968
        %v4988 = vmul.f32 %v4949, %v4968
        %v4989 = vmul.f32 %v4950, %v4968
        %v4990 = vmul.f32 %v4951, %v4968
        %v4991 = vmul.f32 %v4952, %v4968
        %v4992 = vmul.f32 %v4953, %v4968
        %v4993 = vmul.f32 %v4954, %v4968
        %v4994 = vmul.f32 %v4955, %v4968
        %v4995 = vmul.f32 %v4956, %v4968
        %v4996 = vmul.f32 %v4957, %v4968
        %v4997 = vmul.f32 %v4958, %v4968
        %v4998 = vmul.f32 %v4959, %v4968
        %v4999 = vmul.f32 %v4960, %v4968
        %v5000 = vmul.f32 %v4961, %v4968
        %v5001 = vmul.f32 %v4962, %v4968
        %v5002 = vld [vmem:[%s8] sm:$0x1]
        %v5004 = vlaneseq
        %v5005 = vshrl.u32 %v5004, 7
        %v5006 = vsub.s32 0, %v5005
        %v5007 = vrot.slane %v5002, %v5006
        %v5009 = vadd.f32 %v4970, %v5007
        %v5010 = vadd.f32 %v4971, %v5007
        %v5011 = vadd.f32 %v4972, %v5007
        %v5012 = vadd.f32 %v4973, %v5007
        %v5013 = vadd.f32 %v4974, %v5007
        %v5014 = vadd.f32 %v4975, %v5007
        %v5015 = vadd.f32 %v4976, %v5007
        %v5016 = vadd.f32 %v4977, %v5007
        %v5017 = vadd.f32 %v4978, %v5007
        %v5018 = vadd.f32 %v4979, %v5007
        %v5019 = vadd.f32 %v4980, %v5007
        %v5020 = vadd.f32 %v4981, %v5007
        %v5021 = vadd.f32 %v4982, %v5007
        %v5022 = vadd.f32 %v4983, %v5007
        %v5023 = vadd.f32 %v4984, %v5007
        %v5024 = vadd.f32 %v4985, %v5007
        %v5025 = vadd.f32 %v4986, %v5007
        %v5026 = vadd.f32 %v4987, %v5007
        %v5027 = vadd.f32 %v4988, %v5007
        %v5028 = vadd.f32 %v4989, %v5007
        %v5029 = vadd.f32 %v4990, %v5007
        %v5030 = vadd.f32 %v4991, %v5007
        %v5031 = vadd.f32 %v4992, %v5007
        %v5032 = vadd.f32 %v4993, %v5007
        %v5033 = vadd.f32 %v4994, %v5007
        %v5034 = vadd.f32 %v4995, %v5007
        %v5035 = vadd.f32 %v4996, %v5007
        %v5036 = vadd.f32 %v4997, %v5007
        %v5037 = vadd.f32 %v4998, %v5007
        %v5038 = vadd.f32 %v4999, %v5007
        %v5039 = vadd.f32 %v5000, %v5007
        %v5040 = vadd.f32 %v5001, %v5007
        %v5041 = vmax.f32 %v5009, 0.0
        %v5042 = vmax.f32 %v5010, 0.0
        %v5043 = vmax.f32 %v5011, 0.0
        %v5044 = vmax.f32 %v5012, 0.0
        %v5045 = vmax.f32 %v5013, 0.0
        %v5046 = vmax.f32 %v5014, 0.0
        %v5047 = vmax.f32 %v5015, 0.0
        %v5048 = vmax.f32 %v5016, 0.0
        %v5049 = vmax.f32 %v5017, 0.0
        %v5050 = vmax.f32 %v5018, 0.0
        %v5051 = vmax.f32 %v5019, 0.0
        %v5052 = vmax.f32 %v5020, 0.0
        %v5053 = vmax.f32 %v5021, 0.0
        %v5054 = vmax.f32 %v5022, 0.0
        %v5055 = vmax.f32 %v5023, 0.0
        %v5056 = vmax.f32 %v5024, 0.0
        %v5057 = vmax.f32 %v5025, 0.0
        %v5058 = vmax.f32 %v5026, 0.0
        %v5059 = vmax.f32 %v5027, 0.0
        %v5060 = vmax.f32 %v5028, 0.0
        %v5061 = vmax.f32 %v5029, 0.0
        %v5062 = vmax.f32 %v5030, 0.0
        %v5063 = vmax.f32 %v5031, 0.0
        %v5064 = vmax.f32 %v5032, 0.0
        %v5065 = vmax.f32 %v5033, 0.0
        %v5066 = vmax.f32 %v5034, 0.0
        %v5067 = vmax.f32 %v5035, 0.0
        %v5068 = vmax.f32 %v5036, 0.0
        %v5069 = vmax.f32 %v5037, 0.0
        %v5070 = vmax.f32 %v5038, 0.0
        %v5071 = vmax.f32 %v5039, 0.0
        %v5072 = vmax.f32 %v5040, 0.0
        %5073 = vst.msk [vmem:[#allocation4] sm:$0xff] %vm3214, 0.0
        %5074 = vst.msk [vmem:[#allocation4 + $0x8] sm:$0xff] %vm3214, 0.0
        %vm5075 = vcmask 517120
        %5076 = vst.msk [vmem:[#allocation4 + $0x10] sm:$0x3] %vm5075, 0.0
        %5077 = vst.msk [vmem:[#allocation4 + $0x18] sm:$0xff] %vm3214, 0.0
        %5078 = vst.msk [vmem:[#allocation4 + $0x20] sm:$0xff] %vm3214, 0.0
        %5079 = vst.msk [vmem:[#allocation4 + $0x28] sm:$0x3] %vm5075, 0.0
        %5080 = vst.msk [vmem:[#allocation4 + $0x30] sm:$0xff] %vm3214, 0.0
        %5081 = vst.msk [vmem:[#allocation4 + $0x38] sm:$0xff] %vm3214, 0.0
        %5082 = vst.msk [vmem:[#allocation4 + $0x40] sm:$0x3] %vm5075, 0.0
        %5083 = vst.msk [vmem:[#allocation4 + $0x48] sm:$0xff] %vm3214, 0.0
        %5084 = vst.msk [vmem:[#allocation4 + $0x50] sm:$0xff] %vm3214, 0.0
        %5085 = vst.msk [vmem:[#allocation4 + $0x58] sm:$0x3] %vm5075, 0.0
        %5086 = vst.msk [vmem:[#allocation4 + $0x60] sm:$0xff] %vm3214, 0.0
        %5087 = vst.msk [vmem:[#allocation4 + $0x68] sm:$0xff] %vm3214, 0.0
        %5088 = vst.msk [vmem:[#allocation4 + $0x70] sm:$0x3] %vm5075, 0.0
        %5089 = vst.msk [vmem:[#allocation4 + $0x78] sm:$0xff] %vm3214, 0.0
        %5090 = vst.msk [vmem:[#allocation4 + $0x80] sm:$0xff] %vm3214, 0.0
        %5091 = vst.msk [vmem:[#allocation4 + $0x88] sm:$0x3] %vm5075, 0.0
        %5092 = vst.msk [vmem:[#allocation4 + $0x90] sm:$0xff] %vm3214, 0.0
        %5093 = vst.msk [vmem:[#allocation4 + $0x98] sm:$0xff] %vm3214, 0.0
        %5094 = vst.msk [vmem:[#allocation4 + $0xa0] sm:$0x3] %vm5075, 0.0
        %5095 = vst.msk [vmem:[#allocation4 + $0xa8] sm:$0xff] %vm3214, 0.0
        %5096 = vst.msk [vmem:[#allocation4 + $0xb0] sm:$0xff] %vm3214, 0.0
        %5097 = vst.msk [vmem:[#allocation4 + $0xb8] sm:$0x3] %vm5075, 0.0
        %5098 = vst.msk [vmem:[#allocation4 + $0xc0] sm:$0xff] %vm3214, 0.0
        %5099 = vst.msk [vmem:[#allocation4 + $0xc8] sm:$0xff] %vm3214, 0.0
        %5100 = vst.msk [vmem:[#allocation4 + $0xd0] sm:$0x3] %vm5075, 0.0
        %5101 = vst.msk [vmem:[#allocation4 + $0xd8] sm:$0xff] %vm3214, 0.0
        %5102 = vst.msk [vmem:[#allocation4 + $0xe0] sm:$0xff] %vm3214, 0.0
        %5103 = vst.msk [vmem:[#allocation4 + $0xe8] sm:$0x3] %vm5075, 0.0
        %5104 = vst.msk [vmem:[#allocation4 + $0xf0] sm:$0xff] %vm3214, 0.0
        %5105 = vst.msk [vmem:[#allocation4 + $0xf8] sm:$0xff] %vm3214, 0.0
        %5106 = vst.msk [vmem:[#allocation4 + $0x100] sm:$0x3] %vm5075, 0.0
        %5107 = vst.msk [vmem:[#allocation4 + $0x108] sm:$0xff] %vm3214, 0.0
        %5108 = vst.msk [vmem:[#allocation4 + $0x110] sm:$0xff] %vm3214, 0.0
        %5109 = vst.msk [vmem:[#allocation4 + $0x118] sm:$0x3] %vm5075, 0.0
        %5110 = vst.msk [vmem:[#allocation4 + $0x120] sm:$0xff] %vm3214, 0.0
        %5111 = vst.msk [vmem:[#allocation4 + $0x128] sm:$0xff] %vm3214, 0.0
        %5112 = vst.msk [vmem:[#allocation4 + $0x130] sm:$0x3] %vm5075, 0.0
        %5113 = vst.msk [vmem:[#allocation4 + $0x138] sm:$0xff] %vm3214, 0.0
        %5114 = vst.msk [vmem:[#allocation4 + $0x140] sm:$0xff] %vm3214, 0.0
        %5115 = vst.msk [vmem:[#allocation4 + $0x148] sm:$0x3] %vm5075, 0.0
        %5116 = vst.msk [vmem:[#allocation4 + $0x150] sm:$0xff] %vm3214, 0.0
        %5117 = vst.msk [vmem:[#allocation4 + $0x158] sm:$0xff] %vm3214, 0.0
        %5118 = vst.msk [vmem:[#allocation4 + $0x160] sm:$0x3] %vm5075, 0.0
        %5119 = vst.msk [vmem:[#allocation4 + $0x168] sm:$0xff] %vm3214, 0.0
        %5120 = vst.msk [vmem:[#allocation4 + $0x170] sm:$0xff] %vm3214, 0.0
        %5121 = vst.msk [vmem:[#allocation4 + $0x178] sm:$0x3] %vm5075, 0.0
        %5122 = vst.msk [vmem:[#allocation4 + $0x180] sm:$0xff] %vm3214, 0.0
        %5123 = vst.msk [vmem:[#allocation4 + $0x188] sm:$0xff] %vm3214, 0.0
        %5124 = vst.msk [vmem:[#allocation4 + $0x190] sm:$0x3] %vm5075, 0.0
        %5125 = vst.msk [vmem:[#allocation4 + $0x198] sm:$0xff] %vm3214, 0.0
        %5126 = vst.msk [vmem:[#allocation4 + $0x1a0] sm:$0xff] %vm3214, 0.0
        %5127 = vst.msk [vmem:[#allocation4 + $0x1a8] sm:$0x3] %vm5075, 0.0
        %5160 = vrot.lane.b32.xlu0 %v1039, 16
        %v5161 = vpop.permute.xlu0 %5160
        %5162 = vrot.lane.b32.xlu0 %v1040, 16
        %v5163 = vpop.permute.xlu0 %5162
        %5164 = vrot.lane.b32.xlu0 %v1041, 16
        %v5165 = vpop.permute.xlu0 %5164
        %5166 = vrot.lane.b32.xlu0 %v1042, 16
        %v5167 = vpop.permute.xlu0 %5166
        %5168 = vrot.lane.b32.xlu0 %v1043, 16
        %v5169 = vpop.permute.xlu0 %5168
        %5170 = vrot.lane.b32.xlu0 %v1044, 16
        %v5171 = vpop.permute.xlu0 %5170
        %5172 = vrot.lane.b32.xlu0 %v1045, 16
        %v5173 = vpop.permute.xlu0 %5172
        %5174 = vrot.lane.b32.xlu0 %v1046, 16
        %v5175 = vpop.permute.xlu0 %5174
        %5176 = vrot.lane.b32.xlu0 %v1047, 16
        %v5177 = vpop.permute.xlu0 %5176
        %5178 = vrot.lane.b32.xlu0 %v1048, 16
        %v5179 = vpop.permute.xlu0 %5178
        %5180 = vrot.lane.b32.xlu0 %v1049, 16
        %v5181 = vpop.permute.xlu0 %5180
        %5182 = vrot.lane.b32.xlu0 %v1050, 16
        %v5183 = vpop.permute.xlu0 %5182
        %5184 = vrot.lane.b32.xlu0 %v1051, 16
        %v5185 = vpop.permute.xlu0 %5184
        %5186 = vrot.lane.b32.xlu0 %v1052, 16
        %v5187 = vpop.permute.xlu0 %5186
        %5188 = vrot.lane.b32.xlu0 %v1053, 16
        %v5189 = vpop.permute.xlu0 %5188
        %5190 = vrot.lane.b32.xlu0 %v1054, 16
        %v5191 = vpop.permute.xlu0 %5190
        %5192 = vrot.lane.b32.xlu0 %v1055, 16
        %v5193 = vpop.permute.xlu0 %5192
        %5194 = vrot.lane.b32.xlu0 %v1056, 16
        %v5195 = vpop.permute.xlu0 %5194
        %5196 = vrot.lane.b32.xlu0 %v1057, 16
        %v5197 = vpop.permute.xlu0 %5196
        %5198 = vrot.lane.b32.xlu0 %v1058, 16
        %v5199 = vpop.permute.xlu0 %5198
        %5200 = vrot.lane.b32.xlu0 %v1059, 16
        %v5201 = vpop.permute.xlu0 %5200
        %5202 = vrot.lane.b32.xlu0 %v1060, 16
        %v5203 = vpop.permute.xlu0 %5202
        %5204 = vrot.lane.b32.xlu0 %v1061, 16
        %v5205 = vpop.permute.xlu0 %5204
        %5206 = vrot.lane.b32.xlu0 %v1062, 16
        %v5207 = vpop.permute.xlu0 %5206
        %5208 = vrot.lane.b32.xlu0 %v1063, 16
        %v5209 = vpop.permute.xlu0 %5208
        %5210 = vrot.lane.b32.xlu0 %v1064, 16
        %v5211 = vpop.permute.xlu0 %5210
        %5212 = vrot.lane.b32.xlu0 %v1065, 16
        %v5213 = vpop.permute.xlu0 %5212
        %5214 = vrot.lane.b32.xlu0 %v1066, 16
        %v5215 = vpop.permute.xlu0 %5214
        %5216 = vrot.lane.b32.xlu0 %v1067, 16
        %v5217 = vpop.permute.xlu0 %5216
        %5218 = vrot.lane.b32.xlu0 %v1068, 16
        %v5219 = vpop.permute.xlu0 %5218
        %5220 = vrot.lane.b32.xlu0 %v1069, 16
        %v5221 = vpop.permute.xlu0 %5220
        %5222 = vrot.lane.b32.xlu0 %v1070, 16
        %v5223 = vpop.permute.xlu0 %5222
        %5224 = vrot.lane.b32.xlu0 %v1071, 16
        %v5225 = vpop.permute.xlu0 %5224
        %5226 = vrot.lane.b32.xlu0 %v1072, 16
        %v5227 = vpop.permute.xlu0 %5226
        %5228 = vrot.lane.b32.xlu0 %v1073, 16
        %v5229 = vpop.permute.xlu0 %5228
        %5230 = vrot.lane.b32.xlu0 %v1074, 16
        %v5231 = vpop.permute.xlu0 %5230
        %5232 = vrot.lane.b32.xlu0 %v1075, 16
        %v5233 = vpop.permute.xlu0 %5232
        %5234 = vrot.lane.b32.xlu0 %v1076, 16
        %v5235 = vpop.permute.xlu0 %5234
        %5236 = vrot.lane.b32.xlu0 %v1077, 16
        %v5237 = vpop.permute.xlu0 %5236
        %5238 = vrot.lane.b32.xlu0 %v1078, 16
        %v5239 = vpop.permute.xlu0 %5238
        %5240 = vrot.lane.b32.xlu0 %v1079, 16
        %v5241 = vpop.permute.xlu0 %5240
        %5242 = vrot.lane.b32.xlu0 %v1080, 16
        %v5243 = vpop.permute.xlu0 %5242
        %5244 = vrot.lane.b32.xlu0 %v1081, 16
        %v5245 = vpop.permute.xlu0 %5244
        %5246 = vrot.lane.b32.xlu0 %v1082, 16
        %v5247 = vpop.permute.xlu0 %5246
        %5248 = vrot.lane.b32.xlu0 %v1083, 16
        %v5249 = vpop.permute.xlu0 %5248
        %5250 = vrot.lane.b32.xlu0 %v1084, 16
        %v5251 = vpop.permute.xlu0 %5250
        %5252 = vrot.lane.b32.xlu0 %v1085, 16
        %v5253 = vpop.permute.xlu0 %5252
        %5254 = vrot.lane.b32.xlu0 %v1086, 16
        %v5255 = vpop.permute.xlu0 %5254
        %5256 = vrot.lane.b32.xlu0 %v1087, 16
        %v5257 = vpop.permute.xlu0 %5256
        %5258 = vrot.lane.b32.xlu0 %v1088, 16
        %v5259 = vpop.permute.xlu0 %5258
        %5260 = vrot.lane.b32.xlu0 %v1089, 16
        %v5261 = vpop.permute.xlu0 %5260
        %5262 = vrot.lane.b32.xlu0 %v1090, 16
        %v5263 = vpop.permute.xlu0 %5262
        %5264 = vrot.lane.b32.xlu0 %v1091, 16
        %v5265 = vpop.permute.xlu0 %5264
        %5266 = vrot.lane.b32.xlu0 %v1092, 16
        %v5267 = vpop.permute.xlu0 %5266
        %5268 = vrot.lane.b32.xlu0 %v1093, 16
        %v5269 = vpop.permute.xlu0 %5268
        %5270 = vrot.lane.b32.xlu0 %v1094, 16
        %v5271 = vpop.permute.xlu0 %5270
        %5272 = vrot.lane.b32.xlu0 %v1095, 16
        %v5273 = vpop.permute.xlu0 %5272
        %5274 = vrot.lane.b32.xlu0 %v1096, 16
        %v5275 = vpop.permute.xlu0 %5274
        %5276 = vrot.lane.b32.xlu0 %v1097, 16
        %v5277 = vpop.permute.xlu0 %5276
        %5278 = vrot.lane.b32.xlu0 %v1098, 16
        %v5279 = vpop.permute.xlu0 %5278
        %5280 = vrot.lane.b32.xlu0 %v1099, 16
        %v5281 = vpop.permute.xlu0 %5280
        %5282 = vrot.lane.b32.xlu0 %v1100, 16
        %v5283 = vpop.permute.xlu0 %5282
        %5284 = vrot.lane.b32.xlu0 %v1101, 16
        %v5285 = vpop.permute.xlu0 %5284
        %5286 = vrot.lane.b32.xlu0 %v1102, 16
        %v5287 = vpop.permute.xlu0 %5286
        %v5288 = vsel %vm3181, %v5161, %v5163
        %v5289 = vsel %vm3181, %v5165, %v5167
        %v5290 = vsel %vm3181, %v5169, %v5171
        %v5291 = vsel %vm3181, %v5173, %v5175
        %v5292 = vsel %vm3181, %v5177, %v5179
        %v5293 = vsel %vm3181, %v5181, %v5183
        %v5294 = vsel %vm3181, %v5185, %v5187
        %v5295 = vsel %vm3181, %v5189, %v5191
        %v5296 = vsel %vm3181, %v5193, %v5195
        %v5297 = vsel %vm3181, %v5197, %v5199
        %v5298 = vsel %vm3181, %v5201, %v5203
        %v5299 = vsel %vm3181, %v5205, %v5207
        %v5300 = vsel %vm3181, %v5209, %v5211
        %v5301 = vsel %vm3181, %v5213, %v5215
        %v5302 = vsel %vm3181, %v5217, %v5219
        %v5303 = vsel %vm3181, %v5221, %v5223
        %v5304 = vsel %vm3181, %v5225, %v5227
        %v5305 = vsel %vm3181, %v5229, %v5231
        %v5306 = vsel %vm3181, %v5233, %v5235
        %v5307 = vsel %vm3181, %v5237, %v5239
        %v5308 = vsel %vm3181, %v5241, %v5243
        %v5309 = vsel %vm3181, %v5245, %v5247
        %v5310 = vsel %vm3181, %v5249, %v5251
        %v5311 = vsel %vm3181, %v5253, %v5255
        %v5312 = vsel %vm3181, %v5257, %v5259
        %v5313 = vsel %vm3181, %v5261, %v5263
        %v5314 = vsel %vm3181, %v5265, %v5267
        %v5315 = vsel %vm3181, %v5269, %v5271
        %v5316 = vsel %vm3181, %v5273, %v5275
        %v5317 = vsel %vm3181, %v5277, %v5279
        %v5318 = vsel %vm3181, %v5281, %v5283
        %v5319 = vsel %vm3181, %v5285, %v5287
        %s5352 = scalar_lea.vmem [#allocation4], 24
        %5353 = vst.msk [vmem:[%s5352 + $0x1] sm:$0xff] %vm3214, %v5288
        %5354 = vst.msk [vmem:[%s5352 + $0x9] sm:$0xff] %vm3214, %v5289
        %5355 = vst.msk [vmem:[%s5352 + $0x19] sm:$0xff] %vm3214, %v5290
        %5356 = vst.msk [vmem:[%s5352 + $0x21] sm:$0xff] %vm3214, %v5291
        %5357 = vst.msk [vmem:[%s5352 + $0x31] sm:$0xff] %vm3214, %v5292
        %5358 = vst.msk [vmem:[%s5352 + $0x39] sm:$0xff] %vm3214, %v5293
        %5359 = vst.msk [vmem:[%s5352 + $0x49] sm:$0xff] %vm3214, %v5294
        %5360 = vst.msk [vmem:[%s5352 + $0x51] sm:$0xff] %vm3214, %v5295
        %5361 = vst.msk [vmem:[%s5352 + $0x61] sm:$0xff] %vm3214, %v5296
        %5362 = vst.msk [vmem:[%s5352 + $0x69] sm:$0xff] %vm3214, %v5297
        %5363 = vst.msk [vmem:[%s5352 + $0x79] sm:$0xff] %vm3214, %v5298
        %5364 = vst.msk [vmem:[%s5352 + $0x81] sm:$0xff] %vm3214, %v5299
        %5365 = vst.msk [vmem:[%s5352 + $0x91] sm:$0xff] %vm3214, %v5300
        %5366 = vst.msk [vmem:[%s5352 + $0x99] sm:$0xff] %vm3214, %v5301
        %5367 = vst.msk [vmem:[%s5352 + $0xa9] sm:$0xff] %vm3214, %v5302
        %5368 = vst.msk [vmem:[%s5352 + $0xb1] sm:$0xff] %vm3214, %v5303
        %5369 = vst.msk [vmem:[%s5352 + $0xc1] sm:$0xff] %vm3214, %v5304
        %5370 = vst.msk [vmem:[%s5352 + $0xc9] sm:$0xff] %vm3214, %v5305
        %5371 = vst.msk [vmem:[%s5352 + $0xd9] sm:$0xff] %vm3214, %v5306
        %5372 = vst.msk [vmem:[%s5352 + $0xe1] sm:$0xff] %vm3214, %v5307
        %5373 = vst.msk [vmem:[%s5352 + $0xf1] sm:$0xff] %vm3214, %v5308
        %5374 = vst.msk [vmem:[%s5352 + $0xf9] sm:$0xff] %vm3214, %v5309
        %5375 = vst.msk [vmem:[%s5352 + $0x109] sm:$0xff] %vm3214, %v5310
        %5376 = vst.msk [vmem:[%s5352 + $0x111] sm:$0xff] %vm3214, %v5311
        %5377 = vst.msk [vmem:[%s5352 + $0x121] sm:$0xff] %vm3214, %v5312
        %5378 = vst.msk [vmem:[%s5352 + $0x129] sm:$0xff] %vm3214, %v5313
        %5379 = vst.msk [vmem:[%s5352 + $0x139] sm:$0xff] %vm3214, %v5314
        %5380 = vst.msk [vmem:[%s5352 + $0x141] sm:$0xff] %vm3214, %v5315
        %5381 = vst.msk [vmem:[%s5352 + $0x151] sm:$0xff] %vm3214, %v5316
        %5382 = vst.msk [vmem:[%s5352 + $0x159] sm:$0xff] %vm3214, %v5317
        %5383 = vst.msk [vmem:[%s5352 + $0x169] sm:$0xff] %vm3214, %v5318
        %5384 = vst.msk [vmem:[%s5352 + $0x171] sm:$0xff] %vm3214, %v5319
        %v5385 = vld [vmem:[#allocation4] sm:$0xff]
        %v5386 = vld [vmem:[#allocation4 + $0x8] sm:$0xff]
        %v5387 = vld [vmem:[#allocation4 + $0x10] sm:$0x3]
        %v5388 = vld [vmem:[#allocation4 + $0x18] sm:$0xff]
        %v5389 = vld [vmem:[#allocation4 + $0x20] sm:$0xff]
        %v5390 = vld [vmem:[#allocation4 + $0x28] sm:$0x3]
        %v5391 = vld [vmem:[#allocation4 + $0x30] sm:$0xff]
        %v5392 = vld [vmem:[#allocation4 + $0x38] sm:$0xff]
        %v5393 = vld [vmem:[#allocation4 + $0x40] sm:$0x3]
        %v5394 = vld [vmem:[#allocation4 + $0x48] sm:$0xff]
        %v5395 = vld [vmem:[#allocation4 + $0x50] sm:$0xff]
        %v5396 = vld [vmem:[#allocation4 + $0x58] sm:$0x3]
        %v5397 = vld [vmem:[#allocation4 + $0x60] sm:$0xff]
        %v5398 = vld [vmem:[#allocation4 + $0x68] sm:$0xff]
        %v5399 = vld [vmem:[#allocation4 + $0x70] sm:$0x3]
        %v5400 = vld [vmem:[#allocation4 + $0x78] sm:$0xff]
        %v5401 = vld [vmem:[#allocation4 + $0x80] sm:$0xff]
        %v5402 = vld [vmem:[#allocation4 + $0x88] sm:$0x3]
        %v5403 = vld [vmem:[#allocation4 + $0x90] sm:$0xff]
        %v5404 = vld [vmem:[#allocation4 + $0x98] sm:$0xff]
        %v5405 = vld [vmem:[#allocation4 + $0xa0] sm:$0x3]
        %v5406 = vld [vmem:[#allocation4 + $0xa8] sm:$0xff]
        %v5407 = vld [vmem:[#allocation4 + $0xb0] sm:$0xff]
        %v5408 = vld [vmem:[#allocation4 + $0xb8] sm:$0x3]
        %v5409 = vld [vmem:[#allocation4 + $0xc0] sm:$0xff]
        %v5410 = vld [vmem:[#allocation4 + $0xc8] sm:$0xff]
        %v5411 = vld [vmem:[#allocation4 + $0xd0] sm:$0x3]
        %v5412 = vld [vmem:[#allocation4 + $0xd8] sm:$0xff]
        %v5413 = vld [vmem:[#allocation4 + $0xe0] sm:$0xff]
        %v5414 = vld [vmem:[#allocation4 + $0xe8] sm:$0x3]
        %v5415 = vld [vmem:[#allocation4 + $0xf0] sm:$0xff]
        %v5416 = vld [vmem:[#allocation4 + $0xf8] sm:$0xff]
        %v5417 = vld [vmem:[#allocation4 + $0x100] sm:$0x3]
        %v5418 = vld [vmem:[#allocation4 + $0x108] sm:$0xff]
        %v5419 = vld [vmem:[#allocation4 + $0x110] sm:$0xff]
        %v5420 = vld [vmem:[#allocation4 + $0x118] sm:$0x3]
        %v5421 = vld [vmem:[#allocation4 + $0x120] sm:$0xff]
        %v5422 = vld [vmem:[#allocation4 + $0x128] sm:$0xff]
        %v5423 = vld [vmem:[#allocation4 + $0x130] sm:$0x3]
        %v5424 = vld [vmem:[#allocation4 + $0x138] sm:$0xff]
        %v5425 = vld [vmem:[#allocation4 + $0x140] sm:$0xff]
        %v5426 = vld [vmem:[#allocation4 + $0x148] sm:$0x3]
        %v5427 = vld [vmem:[#allocation4 + $0x150] sm:$0xff]
        %v5428 = vld [vmem:[#allocation4 + $0x158] sm:$0xff]
        %v5429 = vld [vmem:[#allocation4 + $0x160] sm:$0x3]
        %v5430 = vld [vmem:[#allocation4 + $0x168] sm:$0xff]
        %v5431 = vld [vmem:[#allocation4 + $0x170] sm:$0xff]
        %v5432 = vld [vmem:[#allocation4 + $0x178] sm:$0x3]
        %v5433 = vld [vmem:[#allocation4 + $0x180] sm:$0xff]
        %v5434 = vld [vmem:[#allocation4 + $0x188] sm:$0xff]
        %v5435 = vld [vmem:[#allocation4 + $0x190] sm:$0x3]
        %v5436 = vld [vmem:[#allocation4 + $0x198] sm:$0xff]
        %v5437 = vld [vmem:[#allocation4 + $0x1a0] sm:$0xff]
        %v5438 = vld [vmem:[#allocation4 + $0x1a8] sm:$0x3]
        %v5487 = vrot.slane %v5385, 1
        %v5488 = vrot.slane %v5386, 1
        %v5489 = vsel %vm1454, %v5487, %v5488
        %v5490 = vrot.slane %v5387, 1
        %v5491 = vsel %vm1454, %v5488, %v5490
        %v5492 = vrot.slane %v5388, 1
        %v5493 = vrot.slane %v5389, 1
        %v5494 = vsel %vm1454, %v5492, %v5493
        %v5495 = vrot.slane %v5390, 1
        %v5496 = vsel %vm1454, %v5493, %v5495
        %v5497 = vrot.slane %v5391, 1
        %v5498 = vrot.slane %v5392, 1
        %v5499 = vsel %vm1454, %v5497, %v5498
        %v5500 = vrot.slane %v5393, 1
        %v5501 = vsel %vm1454, %v5498, %v5500
        %v5502 = vrot.slane %v5394, 1
        %v5503 = vrot.slane %v5395, 1
        %v5504 = vsel %vm1454, %v5502, %v5503
        %v5505 = vrot.slane %v5396, 1
        %v5506 = vsel %vm1454, %v5503, %v5505
        %v5507 = vrot.slane %v5397, 1
        %v5508 = vrot.slane %v5398, 1
        %v5509 = vsel %vm1454, %v5507, %v5508
        %v5510 = vrot.slane %v5399, 1
        %v5511 = vsel %vm1454, %v5508, %v5510
        %v5512 = vrot.slane %v5400, 1
        %v5513 = vrot.slane %v5401, 1
        %v5514 = vsel %vm1454, %v5512, %v5513
        %v5515 = vrot.slane %v5402, 1
        %v5516 = vsel %vm1454, %v5513, %v5515
        %v5517 = vrot.slane %v5403, 1
        %v5518 = vrot.slane %v5404, 1
        %v5519 = vsel %vm1454, %v5517, %v5518
        %v5520 = vrot.slane %v5405, 1
        %v5521 = vsel %vm1454, %v5518, %v5520
        %v5522 = vrot.slane %v5406, 1
        %v5523 = vrot.slane %v5407, 1
        %v5524 = vsel %vm1454, %v5522, %v5523
        %v5525 = vrot.slane %v5408, 1
        %v5526 = vsel %vm1454, %v5523, %v5525
        %v5527 = vrot.slane %v5409, 1
        %v5528 = vrot.slane %v5410, 1
        %v5529 = vsel %vm1454, %v5527, %v5528
        %v5530 = vrot.slane %v5411, 1
        %v5531 = vsel %vm1454, %v5528, %v5530
        %v5532 = vrot.slane %v5412, 1
        %v5533 = vrot.slane %v5413, 1
        %v5534 = vsel %vm1454, %v5532, %v5533
        %v5535 = vrot.slane %v5414, 1
        %v5536 = vsel %vm1454, %v5533, %v5535
        %v5537 = vrot.slane %v5415, 1
        %v5538 = vrot.slane %v5416, 1
        %v5539 = vsel %vm1454, %v5537, %v5538
        %v5540 = vrot.slane %v5417, 1
        %v5541 = vsel %vm1454, %v5538, %v5540
        %v5542 = vrot.slane %v5418, 1
        %v5543 = vrot.slane %v5419, 1
        %v5544 = vsel %vm1454, %v5542, %v5543
        %v5545 = vrot.slane %v5420, 1
        %v5546 = vsel %vm1454, %v5543, %v5545
        %v5547 = vrot.slane %v5421, 1
        %v5548 = vrot.slane %v5422, 1
        %v5549 = vsel %vm1454, %v5547, %v5548
        %v5550 = vrot.slane %v5423, 1
        %v5551 = vsel %vm1454, %v5548, %v5550
        %v5552 = vrot.slane %v5424, 1
        %v5553 = vrot.slane %v5425, 1
        %v5554 = vsel %vm1454, %v5552, %v5553
        %v5555 = vrot.slane %v5426, 1
        %v5556 = vsel %vm1454, %v5553, %v5555
        %v5557 = vrot.slane %v5427, 1
        %v5558 = vrot.slane %v5428, 1
        %v5559 = vsel %vm1454, %v5557, %v5558
        %v5560 = vrot.slane %v5429, 1
        %v5561 = vsel %vm1454, %v5558, %v5560
        %v5562 = vrot.slane %v5430, 1
        %v5563 = vrot.slane %v5431, 1
        %v5564 = vsel %vm1454, %v5562, %v5563
        %v5565 = vrot.slane %v5432, 1
        %v5566 = vsel %vm1454, %v5563, %v5565
        %5567 = vrot.lane.b32.xlu0 %v5489, 64
        %v5568 = vpop.permute.xlu0 %5567
        %5569 = vrot.lane.b32.xlu0 %v5491, 64
        %v5570 = vpop.permute.xlu0 %5569
        %5571 = vrot.lane.b32.xlu0 %v5494, 64
        %v5572 = vpop.permute.xlu0 %5571
        %5573 = vrot.lane.b32.xlu0 %v5496, 64
        %v5574 = vpop.permute.xlu0 %5573
        %5575 = vrot.lane.b32.xlu0 %v5499, 64
        %v5576 = vpop.permute.xlu0 %5575
        %5577 = vrot.lane.b32.xlu0 %v5501, 64
        %v5578 = vpop.permute.xlu0 %5577
        %5579 = vrot.lane.b32.xlu0 %v5504, 64
        %v5580 = vpop.permute.xlu0 %5579
        %5581 = vrot.lane.b32.xlu0 %v5506, 64
        %v5582 = vpop.permute.xlu0 %5581
        %5583 = vrot.lane.b32.xlu0 %v5509, 64
        %v5584 = vpop.permute.xlu0 %5583
        %5585 = vrot.lane.b32.xlu0 %v5511, 64
        %v5586 = vpop.permute.xlu0 %5585
        %5587 = vrot.lane.b32.xlu0 %v5514, 64
        %v5588 = vpop.permute.xlu0 %5587
        %5589 = vrot.lane.b32.xlu0 %v5516, 64
        %v5590 = vpop.permute.xlu0 %5589
        %5591 = vrot.lane.b32.xlu0 %v5519, 64
        %v5592 = vpop.permute.xlu0 %5591
        %5593 = vrot.lane.b32.xlu0 %v5521, 64
        %v5594 = vpop.permute.xlu0 %5593
        %5595 = vrot.lane.b32.xlu0 %v5524, 64
        %v5596 = vpop.permute.xlu0 %5595
        %5597 = vrot.lane.b32.xlu0 %v5526, 64
        %v5598 = vpop.permute.xlu0 %5597
        %5599 = vrot.lane.b32.xlu0 %v5529, 64
        %v5600 = vpop.permute.xlu0 %5599
        %5601 = vrot.lane.b32.xlu0 %v5531, 64
        %v5602 = vpop.permute.xlu0 %5601
        %5603 = vrot.lane.b32.xlu0 %v5534, 64
        %v5604 = vpop.permute.xlu0 %5603
        %5605 = vrot.lane.b32.xlu0 %v5536, 64
        %v5606 = vpop.permute.xlu0 %5605
        %5607 = vrot.lane.b32.xlu0 %v5539, 64
        %v5608 = vpop.permute.xlu0 %5607
        %5609 = vrot.lane.b32.xlu0 %v5541, 64
        %v5610 = vpop.permute.xlu0 %5609
        %5611 = vrot.lane.b32.xlu0 %v5544, 64
        %v5612 = vpop.permute.xlu0 %5611
        %5613 = vrot.lane.b32.xlu0 %v5546, 64
        %v5614 = vpop.permute.xlu0 %5613
        %5615 = vrot.lane.b32.xlu0 %v5549, 64
        %v5616 = vpop.permute.xlu0 %5615
        %5617 = vrot.lane.b32.xlu0 %v5551, 64
        %v5618 = vpop.permute.xlu0 %5617
        %5619 = vrot.lane.b32.xlu0 %v5554, 64
        %v5620 = vpop.permute.xlu0 %5619
        %5621 = vrot.lane.b32.xlu0 %v5556, 64
        %v5622 = vpop.permute.xlu0 %5621
        %5623 = vrot.lane.b32.xlu0 %v5559, 64
        %v5624 = vpop.permute.xlu0 %5623
        %5625 = vrot.lane.b32.xlu0 %v5561, 64
        %v5626 = vpop.permute.xlu0 %5625
        %5627 = vrot.lane.b32.xlu0 %v5564, 64
        %v5628 = vpop.permute.xlu0 %5627
        %5629 = vrot.lane.b32.xlu0 %v5566, 64
        %v5630 = vpop.permute.xlu0 %5629
        %v5663 = vrot.slane %v5385, 2
        %v5664 = vrot.slane %v5386, 2
        %v5665 = vsel %vm1599, %v5663, %v5664
        %v5666 = vrot.slane %v5387, 2
        %v5667 = vsel %vm1599, %v5664, %v5666
        %v5668 = vrot.slane %v5388, 2
        %v5669 = vrot.slane %v5389, 2
        %v5670 = vsel %vm1599, %v5668, %v5669
        %v5671 = vrot.slane %v5390, 2
        %v5672 = vsel %vm1599, %v5669, %v5671
        %v5673 = vrot.slane %v5391, 2
        %v5674 = vrot.slane %v5392, 2
        %v5675 = vsel %vm1599, %v5673, %v5674
        %v5676 = vrot.slane %v5393, 2
        %v5677 = vsel %vm1599, %v5674, %v5676
        %v5678 = vrot.slane %v5394, 2
        %v5679 = vrot.slane %v5395, 2
        %v5680 = vsel %vm1599, %v5678, %v5679
        %v5681 = vrot.slane %v5396, 2
        %v5682 = vsel %vm1599, %v5679, %v5681
        %v5683 = vrot.slane %v5397, 2
        %v5684 = vrot.slane %v5398, 2
        %v5685 = vsel %vm1599, %v5683, %v5684
        %v5686 = vrot.slane %v5399, 2
        %v5687 = vsel %vm1599, %v5684, %v5686
        %v5688 = vrot.slane %v5400, 2
        %v5689 = vrot.slane %v5401, 2
        %v5690 = vsel %vm1599, %v5688, %v5689
        %v5691 = vrot.slane %v5402, 2
        %v5692 = vsel %vm1599, %v5689, %v5691
        %v5693 = vrot.slane %v5403, 2
        %v5694 = vrot.slane %v5404, 2
        %v5695 = vsel %vm1599, %v5693, %v5694
        %v5696 = vrot.slane %v5405, 2
        %v5697 = vsel %vm1599, %v5694, %v5696
        %v5698 = vrot.slane %v5406, 2
        %v5699 = vrot.slane %v5407, 2
        %v5700 = vsel %vm1599, %v5698, %v5699
        %v5701 = vrot.slane %v5408, 2
        %v5702 = vsel %vm1599, %v5699, %v5701
        %v5703 = vrot.slane %v5409, 2
        %v5704 = vrot.slane %v5410, 2
        %v5705 = vsel %vm1599, %v5703, %v5704
        %v5706 = vrot.slane %v5411, 2
        %v5707 = vsel %vm1599, %v5704, %v5706
        %v5708 = vrot.slane %v5412, 2
        %v5709 = vrot.slane %v5413, 2
        %v5710 = vsel %vm1599, %v5708, %v5709
        %v5711 = vrot.slane %v5414, 2
        %v5712 = vsel %vm1599, %v5709, %v5711
        %v5713 = vrot.slane %v5415, 2
        %v5714 = vrot.slane %v5416, 2
        %v5715 = vsel %vm1599, %v5713, %v5714
        %v5716 = vrot.slane %v5417, 2
        %v5717 = vsel %vm1599, %v5714, %v5716
        %v5718 = vrot.slane %v5418, 2
        %v5719 = vrot.slane %v5419, 2
        %v5720 = vsel %vm1599, %v5718, %v5719
        %v5721 = vrot.slane %v5420, 2
        %v5722 = vsel %vm1599, %v5719, %v5721
        %v5723 = vrot.slane %v5421, 2
        %v5724 = vrot.slane %v5422, 2
        %v5725 = vsel %vm1599, %v5723, %v5724
        %v5726 = vrot.slane %v5423, 2
        %v5727 = vsel %vm1599, %v5724, %v5726
        %v5728 = vrot.slane %v5424, 2
        %v5729 = vrot.slane %v5425, 2
        %v5730 = vsel %vm1599, %v5728, %v5729
        %v5731 = vrot.slane %v5426, 2
        %v5732 = vsel %vm1599, %v5729, %v5731
        %v5733 = vrot.slane %v5427, 2
        %v5734 = vrot.slane %v5428, 2
        %v5735 = vsel %vm1599, %v5733, %v5734
        %v5736 = vrot.slane %v5429, 2
        %v5737 = vsel %vm1599, %v5734, %v5736
        %v5738 = vrot.slane %v5430, 2
        %v5739 = vrot.slane %v5431, 2
        %v5740 = vsel %vm1599, %v5738, %v5739
        %v5741 = vrot.slane %v5432, 2
        %v5742 = vsel %vm1599, %v5739, %v5741
        %v5743 = vsel %vm3214, %v5385, %v5568
        %v5744 = vsel %vm3214, %v5386, %v5570
        %v5745 = vsel %vm3214, %v5388, %v5572
        %v5746 = vsel %vm3214, %v5389, %v5574
        %v5747 = vsel %vm3214, %v5391, %v5576
        %v5748 = vsel %vm3214, %v5392, %v5578
        %v5749 = vsel %vm3214, %v5394, %v5580
        %v5750 = vsel %vm3214, %v5395, %v5582
        %v5751 = vsel %vm3214, %v5397, %v5584
        %v5752 = vsel %vm3214, %v5398, %v5586
        %v5753 = vsel %vm3214, %v5400, %v5588
        %v5754 = vsel %vm3214, %v5401, %v5590
        %v5755 = vsel %vm3214, %v5403, %v5592
        %v5756 = vsel %vm3214, %v5404, %v5594
        %v5757 = vsel %vm3214, %v5406, %v5596
        %v5758 = vsel %vm3214, %v5407, %v5598
        %v5759 = vsel %vm3214, %v5409, %v5600
        %v5760 = vsel %vm3214, %v5410, %v5602
        %v5761 = vsel %vm3214, %v5412, %v5604
        %v5762 = vsel %vm3214, %v5413, %v5606
        %v5763 = vsel %vm3214, %v5415, %v5608
        %v5764 = vsel %vm3214, %v5416, %v5610
        %v5765 = vsel %vm3214, %v5418, %v5612
        %v5766 = vsel %vm3214, %v5419, %v5614
        %v5767 = vsel %vm3214, %v5421, %v5616
        %v5768 = vsel %vm3214, %v5422, %v5618
        %v5769 = vsel %vm3214, %v5424, %v5620
        %v5770 = vsel %vm3214, %v5425, %v5622
        %v5771 = vsel %vm3214, %v5427, %v5624
        %v5772 = vsel %vm3214, %v5428, %v5626
        %v5773 = vsel %vm3214, %v5430, %v5628
        %v5774 = vsel %vm3214, %v5431, %v5630
        %v5775 = vld [vmem:[%s9] sm:$0xff]
        %v5776 = vld [vmem:[%s9 + $0x8] sm:$0xff]
        %v5777 = vld [vmem:[%s9 + $0x10] sm:$0xff]
        %v5778 = vld [vmem:[%s9 + $0x18] sm:$0xff]
        %v5779 = vld [vmem:[%s9 + $0x20] sm:$0xff]
        %v5780 = vld [vmem:[%s9 + $0x28] sm:$0xff]
        %v5781 = vld [vmem:[%s9 + $0x30] sm:$0xff]
        %v5782 = vld [vmem:[%s9 + $0x38] sm:$0xff]
        %v5783 = vld [vmem:[%s9 + $0x40] sm:$0xff]
        %v5784 = vld [vmem:[%s9 + $0x48] sm:$0xff]
        %v5785 = vld [vmem:[%s9 + $0x50] sm:$0xff]
        %v5786 = vld [vmem:[%s9 + $0x58] sm:$0xff]
        %v5787 = vld [vmem:[%s9 + $0x60] sm:$0xff]
        %v5788 = vld [vmem:[%s9 + $0x68] sm:$0xff]
        %v5789 = vld [vmem:[%s9 + $0x70] sm:$0xff]
        %v5790 = vld [vmem:[%s9 + $0x78] sm:$0xff]
        %v5791 = vld [vmem:[%s9 + $0x80] sm:$0xff]
        %v5792 = vld [vmem:[%s9 + $0x88] sm:$0xff]
        %v5793 = vld [vmem:[%s9 + $0x90] sm:$0xff]
        %v5794 = vld [vmem:[%s9 + $0x98] sm:$0xff]
        %v5795 = vld [vmem:[%s9 + $0xa0] sm:$0xff]
        %v5796 = vld [vmem:[%s9 + $0xa8] sm:$0xff]
        %v5797 = vld [vmem:[%s9 + $0xb0] sm:$0xff]
        %v5798 = vld [vmem:[%s9 + $0xb8] sm:$0xff]
        %v5802 = vrot.slane %v5433, 1
        %v5803 = vrot.slane %v5434, 1
        %v5804 = vsel %vm1454, %v5802, %v5803
        %v5805 = vrot.slane %v5435, 1
        %v5806 = vsel %vm1454, %v5803, %v5805
        %5807 = vrot.lane.b32.xlu0 %v5804, 64
        %v5808 = vpop.permute.xlu0 %5807
        %5809 = vrot.lane.b32.xlu0 %v5806, 64
        %v5810 = vpop.permute.xlu0 %5809
        %v5813 = vrot.slane %v5433, 2
        %v5814 = vrot.slane %v5434, 2
        %v5815 = vsel %vm1599, %v5813, %v5814
        %v5816 = vrot.slane %v5435, 2
        %v5817 = vsel %vm1599, %v5814, %v5816
        %v5818 = vsel %vm3214, %v5433, %v5808
        %v5819 = vsel %vm3214, %v5434, %v5810
        %s5820 = scalar_lea.vmem %s9, 192
        %v5821 = vld [vmem:[%s5820] sm:$0xff]
        %v5822 = vld [vmem:[%s5820 + $0x8] sm:$0xff]
        %v5823 = vld [vmem:[%s5820 + $0x10] sm:$0xff]
        %v5824 = vld [vmem:[%s5820 + $0x18] sm:$0xff]
        %v5825 = vld [vmem:[%s5820 + $0x20] sm:$0xff]
        %v5826 = vld [vmem:[%s5820 + $0x28] sm:$0xff]
        %v5827 = vld [vmem:[%s5820 + $0x30] sm:$0xff]
        %v5828 = vld [vmem:[%s5820 + $0x38] sm:$0xff]
        %v5829 = vld [vmem:[%s5820 + $0x40] sm:$0xff]
        %v5830 = vld [vmem:[%s5820 + $0x48] sm:$0xff]
        %v5831 = vld [vmem:[%s5820 + $0x50] sm:$0xff]
        %v5832 = vld [vmem:[%s5820 + $0x58] sm:$0xff]
        %v5833 = vld [vmem:[%s5820 + $0x60] sm:$0xff]
        %v5834 = vld [vmem:[%s5820 + $0x68] sm:$0xff]
        %v5835 = vld [vmem:[%s5820 + $0x70] sm:$0xff]
        %v5836 = vld [vmem:[%s5820 + $0x78] sm:$0xff]
        %v5837 = vld [vmem:[%s5820 + $0x80] sm:$0xff]
        %v5838 = vld [vmem:[%s5820 + $0x88] sm:$0xff]
        %v5839 = vld [vmem:[%s5820 + $0x90] sm:$0xff]
        %v5840 = vld [vmem:[%s5820 + $0x98] sm:$0xff]
        %v5841 = vld [vmem:[%s5820 + $0xa0] sm:$0xff]
        %v5842 = vld [vmem:[%s5820 + $0xa8] sm:$0xff]
        %v5843 = vld [vmem:[%s5820 + $0xb0] sm:$0xff]
        %v5844 = vld [vmem:[%s5820 + $0xb8] sm:$0xff]
        %v5845 = vsel %vm3214, %v5670, 0
        %v5847 = vsel %vm3214, %v5672, 0
        %v5849 = vsel %vm3214, %v5675, 0
        %v5851 = vsel %vm3214, %v5677, 0
        %v5853 = vsel %vm3214, %v5680, 0
        %v5855 = vsel %vm3214, %v5682, 0
        %v5857 = vsel %vm3214, %v5685, 0
        %v5859 = vsel %vm3214, %v5687, 0
        %v5861 = vsel %vm3214, %v5690, 0
        %v5863 = vsel %vm3214, %v5692, 0
        %v5865 = vsel %vm3214, %v5695, 0
        %v5867 = vsel %vm3214, %v5697, 0
        %v5869 = vsel %vm3214, %v5700, 0
        %v5871 = vsel %vm3214, %v5702, 0
        %v5873 = vsel %vm3214, %v5705, 0
        %v5875 = vsel %vm3214, %v5707, 0
        %v5877 = vsel %vm3214, %v5710, 0
        %v5879 = vsel %vm3214, %v5712, 0
        %v5881 = vsel %vm3214, %v5715, 0
        %v5883 = vsel %vm3214, %v5717, 0
        %v5885 = vsel %vm3214, %v5720, 0
        %v5887 = vsel %vm3214, %v5722, 0
        %v5889 = vsel %vm3214, %v5725, 0
        %v5891 = vsel %vm3214, %v5727, 0
        %v5893 = vsel %vm3214, %v5730, 0
        %v5895 = vsel %vm3214, %v5732, 0
        %v5897 = vsel %vm3214, %v5735, 0
        %v5899 = vsel %vm3214, %v5737, 0
        %v5901 = vsel %vm3214, %v5740, 0
        %v5903 = vsel %vm3214, %v5742, 0
        %v5905 = vsel %vm3214, %v5815, 0
        %v5907 = vsel %vm3214, %v5817, 0
        %5909 = vmatprep.subr.mxu0 0.0
        %5910 = vmatpush1.msra.mxu0 %v5836
        %5911 = vmatprep.subr.mxu0 0.0
        %5912 = vmatpush1.msra.mxu0 %v5835
        %5913 = vmatprep.subr.mxu0 0.0
        %5914 = vmatpush1.msra.mxu0 %v5834
        %5915 = vmatprep.subr.mxu0 0.0
        %5916 = vmatpush1.msra.mxu0 %v5833
        %5917 = vmatprep.subr.mxu0 0.0
        %5918 = vmatpush1.msra.mxu0 %v5832
        %5919 = vmatprep.subr.mxu0 0.0
        %5920 = vmatpush1.msra.mxu0 %v5831
        %5921 = vmatprep.subr.mxu0 0.0
        %5922 = vmatpush1.msra.mxu0 %v5830
        %5923 = vmatprep.subr.mxu0 0.0
        %5924 = vmatpush1.msra.mxu0 %v5829
        %5925 = vmatprep.subr.mxu0 0.0
        %5926 = vmatpush1.msra.mxu0 %v5828
        %5927 = vmatprep.subr.mxu0 0.0
        %5928 = vmatpush1.msra.mxu0 %v5827
        %5929 = vmatprep.subr.mxu0 0.0
        %5930 = vmatpush1.msra.mxu0 %v5826
        %5931 = vmatprep.subr.mxu0 0.0
        %5932 = vmatpush1.msra.mxu0 %v5825
        %5933 = vmatprep.subr.mxu0 0.0
        %5934 = vmatpush1.msra.mxu0 %v5824
        %5935 = vmatprep.subr.mxu0 0.0
        %5936 = vmatpush1.msra.mxu0 %v5823
        %5937 = vmatprep.subr.mxu0 0.0
        %5938 = vmatpush1.msra.mxu0 %v5822
        %5939 = vmatprep.subr.mxu0 0.0
        %5940 = vmatpush1.msra.mxu0 %v5821
        %5941 = vmatprep.subr.mxu0 0.0
        %5942 = vmatpush2.msra.mxu0 0.0
        %5943 = vmatprep.subr.mxu0 0.0
        %5944 = vmatpush2.msra.mxu0 0.0
        %5945 = vmatprep.subr.mxu0 0.0
        %5946 = vmatpush2.msra.mxu0 0.0
        %5947 = vmatprep.subr.mxu0 0.0
        %5948 = vmatpush2.msra.mxu0 0.0
        %5949 = vmatprep.subr.mxu0 0.0
        %5950 = vmatpush2.msra.mxu0 0.0
        %5951 = vmatprep.subr.mxu0 0.0
        %5952 = vmatpush2.msra.mxu0 0.0
        %5953 = vmatprep.subr.mxu0 0.0
        %5954 = vmatpush2.msra.mxu0 0.0
        %5955 = vmatprep.subr.mxu0 0.0
        %5956 = vmatpush2.msra.mxu0 0.0
        %5957 = vmatprep.subr.mxu0 0.0
        %5958 = vmatpush2.msra.mxu0 %v5844
        %5959 = vmatprep.subr.mxu0 0.0
        %5960 = vmatpush2.msra.mxu0 %v5843
        %5961 = vmatprep.subr.mxu0 0.0
        %5962 = vmatpush2.msra.mxu0 %v5842
        %5963 = vmatprep.subr.mxu0 0.0
        %5964 = vmatpush2.msra.mxu0 %v5841
        %5965 = vmatprep.subr.mxu0 0.0
        %5966 = vmatpush2.msra.mxu0 %v5840
        %5967 = vmatprep.subr.mxu0 0.0
        %5968 = vmatpush2.msra.mxu0 %v5839
        %5969 = vmatprep.subr.mxu0 0.0
        %5970 = vmatpush2.msra.mxu0 %v5838
        %5971 = vmatprep.subr.mxu0 0.0
        %5972 = vmatpush2.msra.mxu0 %v5837
        %5973 = vmatprep.mubr.f32.mxu0 %v5845
        %5974 = vmatmul.mubr.f32.gmra.mxu0 %v5745
        %v5975 = vpop.f32.mrf.mxu0
        %v5976 = vadd.f32 0.0, %v5975
        %v5977 = vpop.f32.mrf.mxu0
        %5978 = vmatprep.mubr.f32.mxu0 %v5847
        %5979 = vmatmul.mubr.f32.gmra.mxu0 %v5746
        %v5980 = vpop.f32.mrf.mxu0
        %v5981 = vadd.f32 0.0, %v5980
        %v5982 = vpop.f32.mrf.mxu0
        %5983 = vmatprep.mubr.f32.mxu0 %v5849
        %5984 = vmatmul.mubr.f32.gmra.mxu0 %v5747
        %v5985 = vpop.f32.mrf.mxu0
        %v5986 = vadd.f32 0.0, %v5985
        %v5987 = vpop.f32.mrf.mxu0
        %5988 = vmatprep.mubr.f32.mxu0 %v5851
        %5989 = vmatmul.mubr.f32.gmra.mxu0 %v5748
        %v5990 = vpop.f32.mrf.mxu0
        %v5991 = vadd.f32 0.0, %v5990
        %v5992 = vpop.f32.mrf.mxu0
        %5993 = vmatprep.mubr.f32.mxu0 %v5853
        %5994 = vmatmul.mubr.f32.gmra.mxu0 %v5749
        %v5995 = vpop.f32.mrf.mxu0
        %v5996 = vadd.f32 0.0, %v5995
        %v5997 = vpop.f32.mrf.mxu0
        %5998 = vmatprep.mubr.f32.mxu0 %v5855
        %5999 = vmatmul.mubr.f32.gmra.mxu0 %v5750
        %v6000 = vpop.f32.mrf.mxu0
        %v6001 = vadd.f32 0.0, %v6000
        %v6002 = vpop.f32.mrf.mxu0
        %6003 = vmatprep.mubr.f32.mxu0 %v5857
        %6004 = vmatmul.mubr.f32.gmra.mxu0 %v5751
        %v6005 = vpop.f32.mrf.mxu0
        %v6006 = vadd.f32 0.0, %v6005
        %v6007 = vpop.f32.mrf.mxu0
        %6008 = vmatprep.mubr.f32.mxu0 %v5859
        %6009 = vmatmul.mubr.f32.gmra.mxu0 %v5752
        %v6010 = vpop.f32.mrf.mxu0
        %v6011 = vadd.f32 0.0, %v6010
        %v6012 = vpop.f32.mrf.mxu0
        %6013 = vmatprep.mubr.f32.mxu0 %v5861
        %6014 = vmatmul.mubr.f32.gmra.mxu0 %v5753
        %v6015 = vpop.f32.mrf.mxu0
        %v6016 = vadd.f32 0.0, %v6015
        %v6017 = vpop.f32.mrf.mxu0
        %6018 = vmatprep.mubr.f32.mxu0 %v5863
        %6019 = vmatmul.mubr.f32.gmra.mxu0 %v5754
        %v6020 = vpop.f32.mrf.mxu0
        %v6021 = vadd.f32 0.0, %v6020
        %v6022 = vpop.f32.mrf.mxu0
        %6023 = vmatprep.mubr.f32.mxu0 %v5865
        %6024 = vmatmul.mubr.f32.gmra.mxu0 %v5755
        %v6025 = vpop.f32.mrf.mxu0
        %v6026 = vadd.f32 0.0, %v6025
        %v6027 = vpop.f32.mrf.mxu0
        %6028 = vmatprep.mubr.f32.mxu0 %v5867
        %6029 = vmatmul.mubr.f32.gmra.mxu0 %v5756
        %v6030 = vpop.f32.mrf.mxu0
        %v6031 = vadd.f32 0.0, %v6030
        %v6032 = vpop.f32.mrf.mxu0
        %6033 = vmatprep.mubr.f32.mxu0 %v5869
        %6034 = vmatmul.mubr.f32.gmra.mxu0 %v5757
        %v6035 = vpop.f32.mrf.mxu0
        %v6036 = vadd.f32 0.0, %v6035
        %v6037 = vpop.f32.mrf.mxu0
        %6038 = vmatprep.mubr.f32.mxu0 %v5871
        %6039 = vmatmul.mubr.f32.gmra.mxu0 %v5758
        %v6040 = vpop.f32.mrf.mxu0
        %v6041 = vadd.f32 0.0, %v6040
        %v6042 = vpop.f32.mrf.mxu0
        %6043 = vmatprep.mubr.f32.mxu0 %v5873
        %6044 = vmatmul.mubr.f32.gmra.mxu0 %v5759
        %v6045 = vpop.f32.mrf.mxu0
        %v6046 = vadd.f32 0.0, %v6045
        %v6047 = vpop.f32.mrf.mxu0
        %6048 = vmatprep.mubr.f32.mxu0 %v5875
        %6049 = vmatmul.mubr.f32.gmra.mxu0 %v5760
        %v6050 = vpop.f32.mrf.mxu0
        %v6051 = vadd.f32 0.0, %v6050
        %v6052 = vpop.f32.mrf.mxu0
        %6053 = vmatprep.mubr.f32.mxu0 %v5877
        %6054 = vmatmul.mubr.f32.gmra.mxu0 %v5761
        %v6055 = vpop.f32.mrf.mxu0
        %v6056 = vadd.f32 0.0, %v6055
        %v6057 = vpop.f32.mrf.mxu0
        %6058 = vmatprep.mubr.f32.mxu0 %v5879
        %6059 = vmatmul.mubr.f32.gmra.mxu0 %v5762
        %v6060 = vpop.f32.mrf.mxu0
        %v6061 = vadd.f32 0.0, %v6060
        %v6062 = vpop.f32.mrf.mxu0
        %6063 = vmatprep.mubr.f32.mxu0 %v5881
        %6064 = vmatmul.mubr.f32.gmra.mxu0 %v5763
        %v6065 = vpop.f32.mrf.mxu0
        %v6066 = vadd.f32 0.0, %v6065
        %v6067 = vpop.f32.mrf.mxu0
        %6068 = vmatprep.mubr.f32.mxu0 %v5883
        %6069 = vmatmul.mubr.f32.gmra.mxu0 %v5764
        %v6070 = vpop.f32.mrf.mxu0
        %v6071 = vadd.f32 0.0, %v6070
        %v6072 = vpop.f32.mrf.mxu0
        %6073 = vmatprep.mubr.f32.mxu0 %v5885
        %6074 = vmatmul.mubr.f32.gmra.mxu0 %v5765
        %v6075 = vpop.f32.mrf.mxu0
        %v6076 = vadd.f32 0.0, %v6075
        %v6077 = vpop.f32.mrf.mxu0
        %6078 = vmatprep.mubr.f32.mxu0 %v5887
        %6079 = vmatmul.mubr.f32.gmra.mxu0 %v5766
        %v6080 = vpop.f32.mrf.mxu0
        %v6081 = vadd.f32 0.0, %v6080
        %v6082 = vpop.f32.mrf.mxu0
        %6083 = vmatprep.mubr.f32.mxu0 %v5889
        %6084 = vmatmul.mubr.f32.gmra.mxu0 %v5767
        %v6085 = vpop.f32.mrf.mxu0
        %v6086 = vadd.f32 0.0, %v6085
        %v6087 = vpop.f32.mrf.mxu0
        %6088 = vmatprep.mubr.f32.mxu0 %v5891
        %6089 = vmatmul.mubr.f32.gmra.mxu0 %v5768
        %v6090 = vpop.f32.mrf.mxu0
        %v6091 = vadd.f32 0.0, %v6090
        %v6092 = vpop.f32.mrf.mxu0
        %6093 = vmatprep.mubr.f32.mxu0 %v5893
        %6094 = vmatmul.mubr.f32.gmra.mxu0 %v5769
        %v6095 = vpop.f32.mrf.mxu0
        %v6096 = vadd.f32 0.0, %v6095
        %v6097 = vpop.f32.mrf.mxu0
        %6098 = vmatprep.mubr.f32.mxu0 %v5895
        %6099 = vmatmul.mubr.f32.gmra.mxu0 %v5770
        %v6100 = vpop.f32.mrf.mxu0
        %v6101 = vadd.f32 0.0, %v6100
        %v6102 = vpop.f32.mrf.mxu0
        %6103 = vmatprep.mubr.f32.mxu0 %v5897
        %6104 = vmatmul.mubr.f32.gmra.mxu0 %v5771
        %v6105 = vpop.f32.mrf.mxu0
        %v6106 = vadd.f32 0.0, %v6105
        %v6107 = vpop.f32.mrf.mxu0
        %6108 = vmatprep.mubr.f32.mxu0 %v5899
        %6109 = vmatmul.mubr.f32.gmra.mxu0 %v5772
        %v6110 = vpop.f32.mrf.mxu0
        %v6111 = vadd.f32 0.0, %v6110
        %v6112 = vpop.f32.mrf.mxu0
        %6113 = vmatprep.mubr.f32.mxu0 %v5901
        %6114 = vmatmul.mubr.f32.gmra.mxu0 %v5773
        %v6115 = vpop.f32.mrf.mxu0
        %v6116 = vadd.f32 0.0, %v6115
        %v6117 = vpop.f32.mrf.mxu0
        %6118 = vmatprep.mubr.f32.mxu0 %v5903
        %6119 = vmatmul.mubr.f32.gmra.mxu0 %v5774
        %v6120 = vpop.f32.mrf.mxu0
        %v6121 = vadd.f32 0.0, %v6120
        %v6122 = vpop.f32.mrf.mxu0
        %6123 = vmatprep.mubr.f32.mxu0 %v5905
        %6124 = vmatmul.mubr.f32.gmra.mxu0 %v5818
        %v6125 = vpop.f32.mrf.mxu0
        %v6126 = vadd.f32 0.0, %v6125
        %v6127 = vpop.f32.mrf.mxu0
        %6128 = vmatprep.mubr.f32.mxu0 %v5907
        %6129 = vmatmul.mubr.f32.gmra.mxu0 %v5819
        %v6130 = vpop.f32.mrf.mxu0
        %v6131 = vadd.f32 0.0, %v6130
        %v6132 = vpop.f32.mrf.mxu0
        %6133 = vdwg.mxu0
        %v6134 = vsel %vm3214, %v5665, 0
        %v6136 = vsel %vm3214, %v5667, 0
        %6138 = vmatprep.subr.mxu0 0.0
        %6139 = vmatpush1.msra.mxu0 %v5790
        %6140 = vmatprep.subr.mxu0 0.0
        %6141 = vmatpush1.msra.mxu0 %v5789
        %6142 = vmatprep.subr.mxu0 0.0
        %6143 = vmatpush1.msra.mxu0 %v5788
        %6144 = vmatprep.subr.mxu0 0.0
        %6145 = vmatpush1.msra.mxu0 %v5787
        %6146 = vmatprep.subr.mxu0 0.0
        %6147 = vmatpush1.msra.mxu0 %v5786
        %6148 = vmatprep.subr.mxu0 0.0
        %6149 = vmatpush1.msra.mxu0 %v5785
        %6150 = vmatprep.subr.mxu0 0.0
        %6151 = vmatpush1.msra.mxu0 %v5784
        %6152 = vmatprep.subr.mxu0 0.0
        %6153 = vmatpush1.msra.mxu0 %v5783
        %6154 = vmatprep.subr.mxu0 0.0
        %6155 = vmatpush1.msra.mxu0 %v5782
        %6156 = vmatprep.subr.mxu0 0.0
        %6157 = vmatpush1.msra.mxu0 %v5781
        %6158 = vmatprep.subr.mxu0 0.0
        %6159 = vmatpush1.msra.mxu0 %v5780
        %6160 = vmatprep.subr.mxu0 0.0
        %6161 = vmatpush1.msra.mxu0 %v5779
        %6162 = vmatprep.subr.mxu0 0.0
        %6163 = vmatpush1.msra.mxu0 %v5778
        %6164 = vmatprep.subr.mxu0 0.0
        %6165 = vmatpush1.msra.mxu0 %v5777
        %6166 = vmatprep.subr.mxu0 0.0
        %6167 = vmatpush1.msra.mxu0 %v5776
        %6168 = vmatprep.subr.mxu0 0.0
        %6169 = vmatpush1.msra.mxu0 %v5775
        %6170 = vmatprep.subr.mxu0 0.0
        %6171 = vmatpush2.msra.mxu0 0.0
        %6172 = vmatprep.subr.mxu0 0.0
        %6173 = vmatpush2.msra.mxu0 0.0
        %6174 = vmatprep.subr.mxu0 0.0
        %6175 = vmatpush2.msra.mxu0 0.0
        %6176 = vmatprep.subr.mxu0 0.0
        %6177 = vmatpush2.msra.mxu0 0.0
        %6178 = vmatprep.subr.mxu0 0.0
        %6179 = vmatpush2.msra.mxu0 0.0
        %6180 = vmatprep.subr.mxu0 0.0
        %6181 = vmatpush2.msra.mxu0 0.0
        %6182 = vmatprep.subr.mxu0 0.0
        %6183 = vmatpush2.msra.mxu0 0.0
        %6184 = vmatprep.subr.mxu0 0.0
        %6185 = vmatpush2.msra.mxu0 0.0
        %6186 = vmatprep.subr.mxu0 0.0
        %6187 = vmatpush2.msra.mxu0 %v5798
        %6188 = vmatprep.subr.mxu0 0.0
        %6189 = vmatpush2.msra.mxu0 %v5797
        %6190 = vmatprep.subr.mxu0 0.0
        %6191 = vmatpush2.msra.mxu0 %v5796
        %6192 = vmatprep.subr.mxu0 0.0
        %6193 = vmatpush2.msra.mxu0 %v5795
        %6194 = vmatprep.subr.mxu0 0.0
        %6195 = vmatpush2.msra.mxu0 %v5794
        %6196 = vmatprep.subr.mxu0 0.0
        %6197 = vmatpush2.msra.mxu0 %v5793
        %6198 = vmatprep.subr.mxu0 0.0
        %6199 = vmatpush2.msra.mxu0 %v5792
        %6200 = vmatprep.subr.mxu0 0.0
        %6201 = vmatpush2.msra.mxu0 %v5791
        %6202 = vmatprep.mubr.f32.mxu0 %v6134
        %6203 = vmatmul.mubr.f32.gmra.mxu0 %v5743
        %v6204 = vpop.f32.mrf.mxu0
        %v6205 = vadd.f32 %v5976, %v6204
        %v6206 = vpop.f32.mrf.mxu0
        %6207 = vmatprep.mubr.f32.mxu0 %v6136
        %6208 = vmatmul.mubr.f32.gmra.mxu0 %v5744
        %v6209 = vpop.f32.mrf.mxu0
        %v6210 = vadd.f32 %v5981, %v6209
        %v6211 = vpop.f32.mrf.mxu0
        %6212 = vmatprep.mubr.f32.mxu0 %v5845
        %6213 = vmatmul.mubr.f32.gmra.mxu0 %v5745
        %v6214 = vpop.f32.mrf.mxu0
        %v6215 = vadd.f32 %v5986, %v6214
        %v6216 = vpop.f32.mrf.mxu0
        %6217 = vmatprep.mubr.f32.mxu0 %v5847
        %6218 = vmatmul.mubr.f32.gmra.mxu0 %v5746
        %v6219 = vpop.f32.mrf.mxu0
        %v6220 = vadd.f32 %v5991, %v6219
        %v6221 = vpop.f32.mrf.mxu0
        %6222 = vmatprep.mubr.f32.mxu0 %v5849
        %6223 = vmatmul.mubr.f32.gmra.mxu0 %v5747
        %v6224 = vpop.f32.mrf.mxu0
        %v6225 = vadd.f32 %v5996, %v6224
        %v6226 = vpop.f32.mrf.mxu0
        %6227 = vmatprep.mubr.f32.mxu0 %v5851
        %6228 = vmatmul.mubr.f32.gmra.mxu0 %v5748
        %v6229 = vpop.f32.mrf.mxu0
        %v6230 = vadd.f32 %v6001, %v6229
        %v6231 = vpop.f32.mrf.mxu0
        %6232 = vmatprep.mubr.f32.mxu0 %v5853
        %6233 = vmatmul.mubr.f32.gmra.mxu0 %v5749
        %v6234 = vpop.f32.mrf.mxu0
        %v6235 = vadd.f32 %v6006, %v6234
        %v6236 = vpop.f32.mrf.mxu0
        %6237 = vmatprep.mubr.f32.mxu0 %v5855
        %6238 = vmatmul.mubr.f32.gmra.mxu0 %v5750
        %v6239 = vpop.f32.mrf.mxu0
        %v6240 = vadd.f32 %v6011, %v6239
        %v6241 = vpop.f32.mrf.mxu0
        %6242 = vmatprep.mubr.f32.mxu0 %v5857
        %6243 = vmatmul.mubr.f32.gmra.mxu0 %v5751
        %v6244 = vpop.f32.mrf.mxu0
        %v6245 = vadd.f32 %v6016, %v6244
        %v6246 = vpop.f32.mrf.mxu0
        %6247 = vmatprep.mubr.f32.mxu0 %v5859
        %6248 = vmatmul.mubr.f32.gmra.mxu0 %v5752
        %v6249 = vpop.f32.mrf.mxu0
        %v6250 = vadd.f32 %v6021, %v6249
        %v6251 = vpop.f32.mrf.mxu0
        %6252 = vmatprep.mubr.f32.mxu0 %v5861
        %6253 = vmatmul.mubr.f32.gmra.mxu0 %v5753
        %v6254 = vpop.f32.mrf.mxu0
        %v6255 = vadd.f32 %v6026, %v6254
        %v6256 = vpop.f32.mrf.mxu0
        %6257 = vmatprep.mubr.f32.mxu0 %v5863
        %6258 = vmatmul.mubr.f32.gmra.mxu0 %v5754
        %v6259 = vpop.f32.mrf.mxu0
        %v6260 = vadd.f32 %v6031, %v6259
        %v6261 = vpop.f32.mrf.mxu0
        %6262 = vmatprep.mubr.f32.mxu0 %v5865
        %6263 = vmatmul.mubr.f32.gmra.mxu0 %v5755
        %v6264 = vpop.f32.mrf.mxu0
        %v6265 = vadd.f32 %v6036, %v6264
        %v6266 = vpop.f32.mrf.mxu0
        %6267 = vmatprep.mubr.f32.mxu0 %v5867
        %6268 = vmatmul.mubr.f32.gmra.mxu0 %v5756
        %v6269 = vpop.f32.mrf.mxu0
        %v6270 = vadd.f32 %v6041, %v6269
        %v6271 = vpop.f32.mrf.mxu0
        %6272 = vmatprep.mubr.f32.mxu0 %v5869
        %6273 = vmatmul.mubr.f32.gmra.mxu0 %v5757
        %v6274 = vpop.f32.mrf.mxu0
        %v6275 = vadd.f32 %v6046, %v6274
        %v6276 = vpop.f32.mrf.mxu0
        %6277 = vmatprep.mubr.f32.mxu0 %v5871
        %6278 = vmatmul.mubr.f32.gmra.mxu0 %v5758
        %v6279 = vpop.f32.mrf.mxu0
        %v6280 = vadd.f32 %v6051, %v6279
        %v6281 = vpop.f32.mrf.mxu0
        %6282 = vmatprep.mubr.f32.mxu0 %v5873
        %6283 = vmatmul.mubr.f32.gmra.mxu0 %v5759
        %v6284 = vpop.f32.mrf.mxu0
        %v6285 = vadd.f32 %v6056, %v6284
        %v6286 = vpop.f32.mrf.mxu0
        %6287 = vmatprep.mubr.f32.mxu0 %v5875
        %6288 = vmatmul.mubr.f32.gmra.mxu0 %v5760
        %v6289 = vpop.f32.mrf.mxu0
        %v6290 = vadd.f32 %v6061, %v6289
        %v6291 = vpop.f32.mrf.mxu0
        %6292 = vmatprep.mubr.f32.mxu0 %v5877
        %6293 = vmatmul.mubr.f32.gmra.mxu0 %v5761
        %v6294 = vpop.f32.mrf.mxu0
        %v6295 = vadd.f32 %v6066, %v6294
        %v6296 = vpop.f32.mrf.mxu0
        %6297 = vmatprep.mubr.f32.mxu0 %v5879
        %6298 = vmatmul.mubr.f32.gmra.mxu0 %v5762
        %v6299 = vpop.f32.mrf.mxu0
        %v6300 = vadd.f32 %v6071, %v6299
        %v6301 = vpop.f32.mrf.mxu0
        %6302 = vmatprep.mubr.f32.mxu0 %v5881
        %6303 = vmatmul.mubr.f32.gmra.mxu0 %v5763
        %v6304 = vpop.f32.mrf.mxu0
        %v6305 = vadd.f32 %v6076, %v6304
        %v6306 = vpop.f32.mrf.mxu0
        %6307 = vmatprep.mubr.f32.mxu0 %v5883
        %6308 = vmatmul.mubr.f32.gmra.mxu0 %v5764
        %v6309 = vpop.f32.mrf.mxu0
        %v6310 = vadd.f32 %v6081, %v6309
        %v6311 = vpop.f32.mrf.mxu0
        %6312 = vmatprep.mubr.f32.mxu0 %v5885
        %6313 = vmatmul.mubr.f32.gmra.mxu0 %v5765
        %v6314 = vpop.f32.mrf.mxu0
        %v6315 = vadd.f32 %v6086, %v6314
        %v6316 = vpop.f32.mrf.mxu0
        %6317 = vmatprep.mubr.f32.mxu0 %v5887
        %6318 = vmatmul.mubr.f32.gmra.mxu0 %v5766
        %v6319 = vpop.f32.mrf.mxu0
        %v6320 = vadd.f32 %v6091, %v6319
        %v6321 = vpop.f32.mrf.mxu0
        %6322 = vmatprep.mubr.f32.mxu0 %v5889
        %6323 = vmatmul.mubr.f32.gmra.mxu0 %v5767
        %v6324 = vpop.f32.mrf.mxu0
        %v6325 = vadd.f32 %v6096, %v6324
        %v6326 = vpop.f32.mrf.mxu0
        %6327 = vmatprep.mubr.f32.mxu0 %v5891
        %6328 = vmatmul.mubr.f32.gmra.mxu0 %v5768
        %v6329 = vpop.f32.mrf.mxu0
        %v6330 = vadd.f32 %v6101, %v6329
        %v6331 = vpop.f32.mrf.mxu0
        %6332 = vmatprep.mubr.f32.mxu0 %v5893
        %6333 = vmatmul.mubr.f32.gmra.mxu0 %v5769
        %v6334 = vpop.f32.mrf.mxu0
        %v6335 = vadd.f32 %v6106, %v6334
        %v6336 = vpop.f32.mrf.mxu0
        %6337 = vmatprep.mubr.f32.mxu0 %v5895
        %6338 = vmatmul.mubr.f32.gmra.mxu0 %v5770
        %v6339 = vpop.f32.mrf.mxu0
        %v6340 = vadd.f32 %v6111, %v6339
        %v6341 = vpop.f32.mrf.mxu0
        %6342 = vmatprep.mubr.f32.mxu0 %v5897
        %6343 = vmatmul.mubr.f32.gmra.mxu0 %v5771
        %v6344 = vpop.f32.mrf.mxu0
        %v6345 = vadd.f32 %v6116, %v6344
        %v6346 = vpop.f32.mrf.mxu0
        %6347 = vmatprep.mubr.f32.mxu0 %v5899
        %6348 = vmatmul.mubr.f32.gmra.mxu0 %v5772
        %v6349 = vpop.f32.mrf.mxu0
        %v6350 = vadd.f32 %v6121, %v6349
        %v6351 = vpop.f32.mrf.mxu0
        %6352 = vmatprep.mubr.f32.mxu0 %v5901
        %6353 = vmatmul.mubr.f32.gmra.mxu0 %v5773
        %v6354 = vpop.f32.mrf.mxu0
        %v6355 = vadd.f32 %v6126, %v6354
        %v6356 = vpop.f32.mrf.mxu0
        %6357 = vmatprep.mubr.f32.mxu0 %v5903
        %6358 = vmatmul.mubr.f32.gmra.mxu0 %v5774
        %v6359 = vpop.f32.mrf.mxu0
        %v6360 = vadd.f32 %v6131, %v6359
        %v6361 = vpop.f32.mrf.mxu0
        %6362 = vdwg.mxu0
        %v6366 = vrot.slane %v5436, 1
        %v6367 = vrot.slane %v5437, 1
        %v6368 = vsel %vm1454, %v6366, %v6367
        %v6369 = vrot.slane %v5438, 1
        %v6370 = vsel %vm1454, %v6367, %v6369
        %6371 = vrot.lane.b32.xlu0 %v6368, 64
        %v6372 = vpop.permute.xlu0 %6371
        %6373 = vrot.lane.b32.xlu0 %v6370, 64
        %v6374 = vpop.permute.xlu0 %6373
        %v6377 = vrot.slane %v5436, 2
        %v6378 = vrot.slane %v5437, 2
        %v6379 = vsel %vm1599, %v6377, %v6378
        %v6380 = vrot.slane %v5438, 2
        %v6381 = vsel %vm1599, %v6378, %v6380
        %v6382 = vsel %vm3214, %v5436, %v6372
        %v6383 = vsel %vm3214, %v5437, %v6374
        %s6384 = scalar_lea.vmem %s9, 384
        %v6385 = vld [vmem:[%s6384] sm:$0xff]
        %v6386 = vld [vmem:[%s6384 + $0x8] sm:$0xff]
        %v6387 = vld [vmem:[%s6384 + $0x10] sm:$0xff]
        %v6388 = vld [vmem:[%s6384 + $0x18] sm:$0xff]
        %v6389 = vld [vmem:[%s6384 + $0x20] sm:$0xff]
        %v6390 = vld [vmem:[%s6384 + $0x28] sm:$0xff]
        %v6391 = vld [vmem:[%s6384 + $0x30] sm:$0xff]
        %v6392 = vld [vmem:[%s6384 + $0x38] sm:$0xff]
        %v6393 = vld [vmem:[%s6384 + $0x40] sm:$0xff]
        %v6394 = vld [vmem:[%s6384 + $0x48] sm:$0xff]
        %v6395 = vld [vmem:[%s6384 + $0x50] sm:$0xff]
        %v6396 = vld [vmem:[%s6384 + $0x58] sm:$0xff]
        %v6397 = vld [vmem:[%s6384 + $0x60] sm:$0xff]
        %v6398 = vld [vmem:[%s6384 + $0x68] sm:$0xff]
        %v6399 = vld [vmem:[%s6384 + $0x70] sm:$0xff]
        %v6400 = vld [vmem:[%s6384 + $0x78] sm:$0xff]
        %v6401 = vld [vmem:[%s6384 + $0x80] sm:$0xff]
        %v6402 = vld [vmem:[%s6384 + $0x88] sm:$0xff]
        %v6403 = vld [vmem:[%s6384 + $0x90] sm:$0xff]
        %v6404 = vld [vmem:[%s6384 + $0x98] sm:$0xff]
        %v6405 = vld [vmem:[%s6384 + $0xa0] sm:$0xff]
        %v6406 = vld [vmem:[%s6384 + $0xa8] sm:$0xff]
        %v6407 = vld [vmem:[%s6384 + $0xb0] sm:$0xff]
        %v6408 = vld [vmem:[%s6384 + $0xb8] sm:$0xff]
        %v6409 = vsel %vm3214, %v6379, 0
        %v6411 = vsel %vm3214, %v6381, 0
        %6413 = vmatprep.subr.mxu0 0.0
        %6414 = vmatpush1.msra.mxu0 %v6400
        %6415 = vmatprep.subr.mxu0 0.0
        %6416 = vmatpush1.msra.mxu0 %v6399
        %6417 = vmatprep.subr.mxu0 0.0
        %6418 = vmatpush1.msra.mxu0 %v6398
        %6419 = vmatprep.subr.mxu0 0.0
        %6420 = vmatpush1.msra.mxu0 %v6397
        %6421 = vmatprep.subr.mxu0 0.0
        %6422 = vmatpush1.msra.mxu0 %v6396
        %6423 = vmatprep.subr.mxu0 0.0
        %6424 = vmatpush1.msra.mxu0 %v6395
        %6425 = vmatprep.subr.mxu0 0.0
        %6426 = vmatpush1.msra.mxu0 %v6394
        %6427 = vmatprep.subr.mxu0 0.0
        %6428 = vmatpush1.msra.mxu0 %v6393
        %6429 = vmatprep.subr.mxu0 0.0
        %6430 = vmatpush1.msra.mxu0 %v6392
        %6431 = vmatprep.subr.mxu0 0.0
        %6432 = vmatpush1.msra.mxu0 %v6391
        %6433 = vmatprep.subr.mxu0 0.0
        %6434 = vmatpush1.msra.mxu0 %v6390
        %6435 = vmatprep.subr.mxu0 0.0
        %6436 = vmatpush1.msra.mxu0 %v6389
        %6437 = vmatprep.subr.mxu0 0.0
        %6438 = vmatpush1.msra.mxu0 %v6388
        %6439 = vmatprep.subr.mxu0 0.0
        %6440 = vmatpush1.msra.mxu0 %v6387
        %6441 = vmatprep.subr.mxu0 0.0
        %6442 = vmatpush1.msra.mxu0 %v6386
        %6443 = vmatprep.subr.mxu0 0.0
        %6444 = vmatpush1.msra.mxu0 %v6385
        %6445 = vmatprep.subr.mxu0 0.0
        %6446 = vmatpush2.msra.mxu0 0.0
        %6447 = vmatprep.subr.mxu0 0.0
        %6448 = vmatpush2.msra.mxu0 0.0
        %6449 = vmatprep.subr.mxu0 0.0
        %6450 = vmatpush2.msra.mxu0 0.0
        %6451 = vmatprep.subr.mxu0 0.0
        %6452 = vmatpush2.msra.mxu0 0.0
        %6453 = vmatprep.subr.mxu0 0.0
        %6454 = vmatpush2.msra.mxu0 0.0
        %6455 = vmatprep.subr.mxu0 0.0
        %6456 = vmatpush2.msra.mxu0 0.0
        %6457 = vmatprep.subr.mxu0 0.0
        %6458 = vmatpush2.msra.mxu0 0.0
        %6459 = vmatprep.subr.mxu0 0.0
        %6460 = vmatpush2.msra.mxu0 0.0
        %6461 = vmatprep.subr.mxu0 0.0
        %6462 = vmatpush2.msra.mxu0 %v6408
        %6463 = vmatprep.subr.mxu0 0.0
        %6464 = vmatpush2.msra.mxu0 %v6407
        %6465 = vmatprep.subr.mxu0 0.0
        %6466 = vmatpush2.msra.mxu0 %v6406
        %6467 = vmatprep.subr.mxu0 0.0
        %6468 = vmatpush2.msra.mxu0 %v6405
        %6469 = vmatprep.subr.mxu0 0.0
        %6470 = vmatpush2.msra.mxu0 %v6404
        %6471 = vmatprep.subr.mxu0 0.0
        %6472 = vmatpush2.msra.mxu0 %v6403
        %6473 = vmatprep.subr.mxu0 0.0
        %6474 = vmatpush2.msra.mxu0 %v6402
        %6475 = vmatprep.subr.mxu0 0.0
        %6476 = vmatpush2.msra.mxu0 %v6401
        %6477 = vmatprep.mubr.f32.mxu0 %v5849
        %6478 = vmatmul.mubr.f32.gmra.mxu0 %v5747
        %v6479 = vpop.f32.mrf.mxu0
        %v6480 = vadd.f32 0.0, %v6479
        %v6481 = vpop.f32.mrf.mxu0
        %6482 = vmatprep.mubr.f32.mxu0 %v5851
        %6483 = vmatmul.mubr.f32.gmra.mxu0 %v5748
        %v6484 = vpop.f32.mrf.mxu0
        %v6485 = vadd.f32 0.0, %v6484
        %v6486 = vpop.f32.mrf.mxu0
        %6487 = vmatprep.mubr.f32.mxu0 %v5853
        %6488 = vmatmul.mubr.f32.gmra.mxu0 %v5749
        %v6489 = vpop.f32.mrf.mxu0
        %v6490 = vadd.f32 0.0, %v6489
        %v6491 = vpop.f32.mrf.mxu0
        %6492 = vmatprep.mubr.f32.mxu0 %v5855
        %6493 = vmatmul.mubr.f32.gmra.mxu0 %v5750
        %v6494 = vpop.f32.mrf.mxu0
        %v6495 = vadd.f32 0.0, %v6494
        %v6496 = vpop.f32.mrf.mxu0
        %6497 = vmatprep.mubr.f32.mxu0 %v5857
        %6498 = vmatmul.mubr.f32.gmra.mxu0 %v5751
        %v6499 = vpop.f32.mrf.mxu0
        %v6500 = vadd.f32 0.0, %v6499
        %v6501 = vpop.f32.mrf.mxu0
        %6502 = vmatprep.mubr.f32.mxu0 %v5859
        %6503 = vmatmul.mubr.f32.gmra.mxu0 %v5752
        %v6504 = vpop.f32.mrf.mxu0
        %v6505 = vadd.f32 0.0, %v6504
        %v6506 = vpop.f32.mrf.mxu0
        %6507 = vmatprep.mubr.f32.mxu0 %v5861
        %6508 = vmatmul.mubr.f32.gmra.mxu0 %v5753
        %v6509 = vpop.f32.mrf.mxu0
        %v6510 = vadd.f32 0.0, %v6509
        %v6511 = vpop.f32.mrf.mxu0
        %6512 = vmatprep.mubr.f32.mxu0 %v5863
        %6513 = vmatmul.mubr.f32.gmra.mxu0 %v5754
        %v6514 = vpop.f32.mrf.mxu0
        %v6515 = vadd.f32 0.0, %v6514
        %v6516 = vpop.f32.mrf.mxu0
        %6517 = vmatprep.mubr.f32.mxu0 %v5865
        %6518 = vmatmul.mubr.f32.gmra.mxu0 %v5755
        %v6519 = vpop.f32.mrf.mxu0
        %v6520 = vadd.f32 0.0, %v6519
        %v6521 = vpop.f32.mrf.mxu0
        %6522 = vmatprep.mubr.f32.mxu0 %v5867
        %6523 = vmatmul.mubr.f32.gmra.mxu0 %v5756
        %v6524 = vpop.f32.mrf.mxu0
        %v6525 = vadd.f32 0.0, %v6524
        %v6526 = vpop.f32.mrf.mxu0
        %6527 = vmatprep.mubr.f32.mxu0 %v5869
        %6528 = vmatmul.mubr.f32.gmra.mxu0 %v5757
        %v6529 = vpop.f32.mrf.mxu0
        %v6530 = vadd.f32 0.0, %v6529
        %v6531 = vpop.f32.mrf.mxu0
        %6532 = vmatprep.mubr.f32.mxu0 %v5871
        %6533 = vmatmul.mubr.f32.gmra.mxu0 %v5758
        %v6534 = vpop.f32.mrf.mxu0
        %v6535 = vadd.f32 0.0, %v6534
        %v6536 = vpop.f32.mrf.mxu0
        %6537 = vmatprep.mubr.f32.mxu0 %v5873
        %6538 = vmatmul.mubr.f32.gmra.mxu0 %v5759
        %v6539 = vpop.f32.mrf.mxu0
        %v6540 = vadd.f32 0.0, %v6539
        %v6541 = vpop.f32.mrf.mxu0
        %6542 = vmatprep.mubr.f32.mxu0 %v5875
        %6543 = vmatmul.mubr.f32.gmra.mxu0 %v5760
        %v6544 = vpop.f32.mrf.mxu0
        %v6545 = vadd.f32 0.0, %v6544
        %v6546 = vpop.f32.mrf.mxu0
        %6547 = vmatprep.mubr.f32.mxu0 %v5877
        %6548 = vmatmul.mubr.f32.gmra.mxu0 %v5761
        %v6549 = vpop.f32.mrf.mxu0
        %v6550 = vadd.f32 0.0, %v6549
        %v6551 = vpop.f32.mrf.mxu0
        %6552 = vmatprep.mubr.f32.mxu0 %v5879
        %6553 = vmatmul.mubr.f32.gmra.mxu0 %v5762
        %v6554 = vpop.f32.mrf.mxu0
        %v6555 = vadd.f32 0.0, %v6554
        %v6556 = vpop.f32.mrf.mxu0
        %6557 = vmatprep.mubr.f32.mxu0 %v5881
        %6558 = vmatmul.mubr.f32.gmra.mxu0 %v5763
        %v6559 = vpop.f32.mrf.mxu0
        %v6560 = vadd.f32 0.0, %v6559
        %v6561 = vpop.f32.mrf.mxu0
        %6562 = vmatprep.mubr.f32.mxu0 %v5883
        %6563 = vmatmul.mubr.f32.gmra.mxu0 %v5764
        %v6564 = vpop.f32.mrf.mxu0
        %v6565 = vadd.f32 0.0, %v6564
        %v6566 = vpop.f32.mrf.mxu0
        %6567 = vmatprep.mubr.f32.mxu0 %v5885
        %6568 = vmatmul.mubr.f32.gmra.mxu0 %v5765
        %v6569 = vpop.f32.mrf.mxu0
        %v6570 = vadd.f32 0.0, %v6569
        %v6571 = vpop.f32.mrf.mxu0
        %6572 = vmatprep.mubr.f32.mxu0 %v5887
        %6573 = vmatmul.mubr.f32.gmra.mxu0 %v5766
        %v6574 = vpop.f32.mrf.mxu0
        %v6575 = vadd.f32 0.0, %v6574
        %v6576 = vpop.f32.mrf.mxu0
        %6577 = vmatprep.mubr.f32.mxu0 %v5889
        %6578 = vmatmul.mubr.f32.gmra.mxu0 %v5767
        %v6579 = vpop.f32.mrf.mxu0
        %v6580 = vadd.f32 0.0, %v6579
        %v6581 = vpop.f32.mrf.mxu0
        %6582 = vmatprep.mubr.f32.mxu0 %v5891
        %6583 = vmatmul.mubr.f32.gmra.mxu0 %v5768
        %v6584 = vpop.f32.mrf.mxu0
        %v6585 = vadd.f32 0.0, %v6584
        %v6586 = vpop.f32.mrf.mxu0
        %6587 = vmatprep.mubr.f32.mxu0 %v5893
        %6588 = vmatmul.mubr.f32.gmra.mxu0 %v5769
        %v6589 = vpop.f32.mrf.mxu0
        %v6590 = vadd.f32 0.0, %v6589
        %v6591 = vpop.f32.mrf.mxu0
        %6592 = vmatprep.mubr.f32.mxu0 %v5895
        %6593 = vmatmul.mubr.f32.gmra.mxu0 %v5770
        %v6594 = vpop.f32.mrf.mxu0
        %v6595 = vadd.f32 0.0, %v6594
        %v6596 = vpop.f32.mrf.mxu0
        %6597 = vmatprep.mubr.f32.mxu0 %v5897
        %6598 = vmatmul.mubr.f32.gmra.mxu0 %v5771
        %v6599 = vpop.f32.mrf.mxu0
        %v6600 = vadd.f32 0.0, %v6599
        %v6601 = vpop.f32.mrf.mxu0
        %6602 = vmatprep.mubr.f32.mxu0 %v5899
        %6603 = vmatmul.mubr.f32.gmra.mxu0 %v5772
        %v6604 = vpop.f32.mrf.mxu0
        %v6605 = vadd.f32 0.0, %v6604
        %v6606 = vpop.f32.mrf.mxu0
        %6607 = vmatprep.mubr.f32.mxu0 %v5901
        %6608 = vmatmul.mubr.f32.gmra.mxu0 %v5773
        %v6609 = vpop.f32.mrf.mxu0
        %v6610 = vadd.f32 0.0, %v6609
        %v6611 = vpop.f32.mrf.mxu0
        %6612 = vmatprep.mubr.f32.mxu0 %v5903
        %6613 = vmatmul.mubr.f32.gmra.mxu0 %v5774
        %v6614 = vpop.f32.mrf.mxu0
        %v6615 = vadd.f32 0.0, %v6614
        %v6616 = vpop.f32.mrf.mxu0
        %6617 = vmatprep.mubr.f32.mxu0 %v5905
        %6618 = vmatmul.mubr.f32.gmra.mxu0 %v5818
        %v6619 = vpop.f32.mrf.mxu0
        %v6620 = vadd.f32 0.0, %v6619
        %v6621 = vpop.f32.mrf.mxu0
        %6622 = vmatprep.mubr.f32.mxu0 %v5907
        %6623 = vmatmul.mubr.f32.gmra.mxu0 %v5819
        %v6624 = vpop.f32.mrf.mxu0
        %v6625 = vadd.f32 0.0, %v6624
        %v6626 = vpop.f32.mrf.mxu0
        %6627 = vmatprep.mubr.f32.mxu0 %v6409
        %6628 = vmatmul.mubr.f32.gmra.mxu0 %v6382
        %v6629 = vpop.f32.mrf.mxu0
        %v6630 = vadd.f32 0.0, %v6629
        %v6631 = vpop.f32.mrf.mxu0
        %6632 = vmatprep.mubr.f32.mxu0 %v6411
        %6633 = vmatmul.mubr.f32.gmra.mxu0 %v6383
        %v6634 = vpop.f32.mrf.mxu0
        %v6635 = vadd.f32 0.0, %v6634
        %v6636 = vpop.f32.mrf.mxu0
        %6637 = vdwg.mxu0
        %v6638 = vadd.f32 %v6205, %v6480
        %v6639 = vadd.f32 %v6210, %v6485
        %v6640 = vadd.f32 %v6215, %v6490
        %v6641 = vadd.f32 %v6220, %v6495
        %v6642 = vadd.f32 %v6225, %v6500
        %v6643 = vadd.f32 %v6230, %v6505
        %v6644 = vadd.f32 %v6235, %v6510
        %v6645 = vadd.f32 %v6240, %v6515
        %v6646 = vadd.f32 %v6245, %v6520
        %v6647 = vadd.f32 %v6250, %v6525
        %v6648 = vadd.f32 %v6255, %v6530
        %v6649 = vadd.f32 %v6260, %v6535
        %v6650 = vadd.f32 %v6265, %v6540
        %v6651 = vadd.f32 %v6270, %v6545
        %v6652 = vadd.f32 %v6275, %v6550
        %v6653 = vadd.f32 %v6280, %v6555
        %v6654 = vadd.f32 %v6285, %v6560
        %v6655 = vadd.f32 %v6290, %v6565
        %v6656 = vadd.f32 %v6295, %v6570
        %v6657 = vadd.f32 %v6300, %v6575
        %v6658 = vadd.f32 %v6305, %v6580
        %v6659 = vadd.f32 %v6310, %v6585
        %v6660 = vadd.f32 %v6315, %v6590
        %v6661 = vadd.f32 %v6320, %v6595
        %v6662 = vadd.f32 %v6325, %v6600
        %v6663 = vadd.f32 %v6330, %v6605
        %v6664 = vadd.f32 %v6335, %v6610
        %v6665 = vadd.f32 %v6340, %v6615
        %v6666 = vadd.f32 %v6345, %v6620
        %v6667 = vadd.f32 %v6350, %v6625
        %v6668 = vadd.f32 %v6355, %v6630
        %v6669 = vadd.f32 %v6360, %v6635
        %v6670 = vld [vmem:[%s10] sm:$0x1]
        %v6672 = vlaneseq
        %v6673 = vshrl.u32 %v6672, 7
        %v6674 = vsub.s32 0, %v6673
        %v6675 = vrot.slane %v6670, %v6674
        %v6677 = vmul.f32 %v6638, %v6675
        %v6678 = vmul.f32 %v6639, %v6675
        %v6679 = vmul.f32 %v6640, %v6675
        %v6680 = vmul.f32 %v6641, %v6675
        %v6681 = vmul.f32 %v6642, %v6675
        %v6682 = vmul.f32 %v6643, %v6675
        %v6683 = vmul.f32 %v6644, %v6675
        %v6684 = vmul.f32 %v6645, %v6675
        %v6685 = vmul.f32 %v6646, %v6675
        %v6686 = vmul.f32 %v6647, %v6675
        %v6687 = vmul.f32 %v6648, %v6675
        %v6688 = vmul.f32 %v6649, %v6675
        %v6689 = vmul.f32 %v6650, %v6675
        %v6690 = vmul.f32 %v6651, %v6675
        %v6691 = vmul.f32 %v6652, %v6675
        %v6692 = vmul.f32 %v6653, %v6675
        %v6693 = vmul.f32 %v6654, %v6675
        %v6694 = vmul.f32 %v6655, %v6675
        %v6695 = vmul.f32 %v6656, %v6675
        %v6696 = vmul.f32 %v6657, %v6675
        %v6697 = vmul.f32 %v6658, %v6675
        %v6698 = vmul.f32 %v6659, %v6675
        %v6699 = vmul.f32 %v6660, %v6675
        %v6700 = vmul.f32 %v6661, %v6675
        %v6701 = vmul.f32 %v6662, %v6675
        %v6702 = vmul.f32 %v6663, %v6675
        %v6703 = vmul.f32 %v6664, %v6675
        %v6704 = vmul.f32 %v6665, %v6675
        %v6705 = vmul.f32 %v6666, %v6675
        %v6706 = vmul.f32 %v6667, %v6675
        %v6707 = vmul.f32 %v6668, %v6675
        %v6708 = vmul.f32 %v6669, %v6675
        %v6709 = vld [vmem:[%s11] sm:$0x1]
        %v6711 = vlaneseq
        %v6712 = vshrl.u32 %v6711, 7
        %v6713 = vsub.s32 0, %v6712
        %v6714 = vrot.slane %v6709, %v6713
        %v6716 = vadd.f32 %v6677, %v6714
        %v6717 = vadd.f32 %v6678, %v6714
        %v6718 = vadd.f32 %v6679, %v6714
        %v6719 = vadd.f32 %v6680, %v6714
        %v6720 = vadd.f32 %v6681, %v6714
        %v6721 = vadd.f32 %v6682, %v6714
        %v6722 = vadd.f32 %v6683, %v6714
        %v6723 = vadd.f32 %v6684, %v6714
        %v6724 = vadd.f32 %v6685, %v6714
        %v6725 = vadd.f32 %v6686, %v6714
        %v6726 = vadd.f32 %v6687, %v6714
        %v6727 = vadd.f32 %v6688, %v6714
        %v6728 = vadd.f32 %v6689, %v6714
        %v6729 = vadd.f32 %v6690, %v6714
        %v6730 = vadd.f32 %v6691, %v6714
        %v6731 = vadd.f32 %v6692, %v6714
        %v6732 = vadd.f32 %v6693, %v6714
        %v6733 = vadd.f32 %v6694, %v6714
        %v6734 = vadd.f32 %v6695, %v6714
        %v6735 = vadd.f32 %v6696, %v6714
        %v6736 = vadd.f32 %v6697, %v6714
        %v6737 = vadd.f32 %v6698, %v6714
        %v6738 = vadd.f32 %v6699, %v6714
        %v6739 = vadd.f32 %v6700, %v6714
        %v6740 = vadd.f32 %v6701, %v6714
        %v6741 = vadd.f32 %v6702, %v6714
        %v6742 = vadd.f32 %v6703, %v6714
        %v6743 = vadd.f32 %v6704, %v6714
        %v6744 = vadd.f32 %v6705, %v6714
        %v6745 = vadd.f32 %v6706, %v6714
        %v6746 = vadd.f32 %v6707, %v6714
        %v6747 = vadd.f32 %v6708, %v6714
        %v6748 = vmax.f32 %v6716, 0.0
        %v6749 = vmax.f32 %v6717, 0.0
        %v6750 = vmax.f32 %v6718, 0.0
        %v6751 = vmax.f32 %v6719, 0.0
        %v6752 = vmax.f32 %v6720, 0.0
        %v6753 = vmax.f32 %v6721, 0.0
        %v6754 = vmax.f32 %v6722, 0.0
        %v6755 = vmax.f32 %v6723, 0.0
        %v6756 = vmax.f32 %v6724, 0.0
        %v6757 = vmax.f32 %v6725, 0.0
        %v6758 = vmax.f32 %v6726, 0.0
        %v6759 = vmax.f32 %v6727, 0.0
        %v6760 = vmax.f32 %v6728, 0.0
        %v6761 = vmax.f32 %v6729, 0.0
        %v6762 = vmax.f32 %v6730, 0.0
        %v6763 = vmax.f32 %v6731, 0.0
        %v6764 = vmax.f32 %v6732, 0.0
        %v6765 = vmax.f32 %v6733, 0.0
        %v6766 = vmax.f32 %v6734, 0.0
        %v6767 = vmax.f32 %v6735, 0.0
        %v6768 = vmax.f32 %v6736, 0.0
        %v6769 = vmax.f32 %v6737, 0.0
        %v6770 = vmax.f32 %v6738, 0.0
        %v6771 = vmax.f32 %v6739, 0.0
        %v6772 = vmax.f32 %v6740, 0.0
        %v6773 = vmax.f32 %v6741, 0.0
        %v6774 = vmax.f32 %v6742, 0.0
        %v6775 = vmax.f32 %v6743, 0.0
        %v6776 = vmax.f32 %v6744, 0.0
        %v6777 = vmax.f32 %v6745, 0.0
        %v6778 = vmax.f32 %v6746, 0.0
        %v6779 = vmax.f32 %v6747, 0.0
        %6780 = vst.msk [vmem:[#allocation5] sm:$0xff] %vm3148, 0.0
        %6781 = vst.msk [vmem:[#allocation5 + $0x8] sm:$0xff] %vm3148, 0.0
        %vm6782 = vcmask 779264
        %6783 = vst.msk [vmem:[#allocation5 + $0x10] sm:$0x3] %vm6782, 0.0
        %6784 = vst.msk [vmem:[#allocation5 + $0x18] sm:$0xff] %vm3148, 0.0
        %6785 = vst.msk [vmem:[#allocation5 + $0x20] sm:$0xff] %vm3148, 0.0
        %6786 = vst.msk [vmem:[#allocation5 + $0x28] sm:$0x3] %vm6782, 0.0
        %6787 = vst.msk [vmem:[#allocation5 + $0x30] sm:$0xff] %vm3148, 0.0
        %6788 = vst.msk [vmem:[#allocation5 + $0x38] sm:$0xff] %vm3148, 0.0
        %6789 = vst.msk [vmem:[#allocation5 + $0x40] sm:$0x3] %vm6782, 0.0
        %6790 = vst.msk [vmem:[#allocation5 + $0x48] sm:$0xff] %vm3148, 0.0
        %6791 = vst.msk [vmem:[#allocation5 + $0x50] sm:$0xff] %vm3148, 0.0
        %6792 = vst.msk [vmem:[#allocation5 + $0x58] sm:$0x3] %vm6782, 0.0
        %6793 = vst.msk [vmem:[#allocation5 + $0x60] sm:$0xff] %vm3148, 0.0
        %6794 = vst.msk [vmem:[#allocation5 + $0x68] sm:$0xff] %vm3148, 0.0
        %6795 = vst.msk [vmem:[#allocation5 + $0x70] sm:$0x3] %vm6782, 0.0
        %6796 = vst.msk [vmem:[#allocation5 + $0x78] sm:$0xff] %vm3148, 0.0
        %6797 = vst.msk [vmem:[#allocation5 + $0x80] sm:$0xff] %vm3148, 0.0
        %6798 = vst.msk [vmem:[#allocation5 + $0x88] sm:$0x3] %vm6782, 0.0
        %6799 = vst.msk [vmem:[#allocation5 + $0x90] sm:$0xff] %vm3148, 0.0
        %6800 = vst.msk [vmem:[#allocation5 + $0x98] sm:$0xff] %vm3148, 0.0
        %6801 = vst.msk [vmem:[#allocation5 + $0xa0] sm:$0x3] %vm6782, 0.0
        %6802 = vst.msk [vmem:[#allocation5 + $0xa8] sm:$0xff] %vm3148, 0.0
        %6803 = vst.msk [vmem:[#allocation5 + $0xb0] sm:$0xff] %vm3148, 0.0
        %6804 = vst.msk [vmem:[#allocation5 + $0xb8] sm:$0x3] %vm6782, 0.0
        %6805 = vst.msk [vmem:[#allocation5 + $0xc0] sm:$0xff] %vm3148, 0.0
        %6806 = vst.msk [vmem:[#allocation5 + $0xc8] sm:$0xff] %vm3148, 0.0
        %6807 = vst.msk [vmem:[#allocation5 + $0xd0] sm:$0x3] %vm6782, 0.0
        %6808 = vst.msk [vmem:[#allocation5 + $0xd8] sm:$0xff] %vm3148, 0.0
        %6809 = vst.msk [vmem:[#allocation5 + $0xe0] sm:$0xff] %vm3148, 0.0
        %6810 = vst.msk [vmem:[#allocation5 + $0xe8] sm:$0x3] %vm6782, 0.0
        %6811 = vst.msk [vmem:[#allocation5 + $0xf0] sm:$0xff] %vm3148, 0.0
        %6812 = vst.msk [vmem:[#allocation5 + $0xf8] sm:$0xff] %vm3148, 0.0
        %6813 = vst.msk [vmem:[#allocation5 + $0x100] sm:$0x3] %vm6782, 0.0
        %6814 = vst.msk [vmem:[#allocation5 + $0x108] sm:$0xff] %vm3148, 0.0
        %6815 = vst.msk [vmem:[#allocation5 + $0x110] sm:$0xff] %vm3148, 0.0
        %6816 = vst.msk [vmem:[#allocation5 + $0x118] sm:$0x3] %vm6782, 0.0
        %6817 = vst.msk [vmem:[#allocation5 + $0x120] sm:$0xff] %vm3148, 0.0
        %6818 = vst.msk [vmem:[#allocation5 + $0x128] sm:$0xff] %vm3148, 0.0
        %6819 = vst.msk [vmem:[#allocation5 + $0x130] sm:$0x3] %vm6782, 0.0
        %6820 = vst.msk [vmem:[#allocation5 + $0x138] sm:$0xff] %vm3148, 0.0
        %6821 = vst.msk [vmem:[#allocation5 + $0x140] sm:$0xff] %vm3148, 0.0
        %6822 = vst.msk [vmem:[#allocation5 + $0x148] sm:$0x3] %vm6782, 0.0
        %6823 = vst.msk [vmem:[#allocation5 + $0x150] sm:$0xff] %vm3148, 0.0
        %6824 = vst.msk [vmem:[#allocation5 + $0x158] sm:$0xff] %vm3148, 0.0
        %6825 = vst.msk [vmem:[#allocation5 + $0x160] sm:$0x3] %vm6782, 0.0
        %6826 = vst.msk [vmem:[#allocation5 + $0x168] sm:$0xff] %vm3148, 0.0
        %6827 = vst.msk [vmem:[#allocation5 + $0x170] sm:$0xff] %vm3148, 0.0
        %6828 = vst.msk [vmem:[#allocation5 + $0x178] sm:$0x3] %vm6782, 0.0
        %6829 = vst.msk [vmem:[#allocation5 + $0x180] sm:$0xff] %vm3148, 0.0
        %6830 = vst.msk [vmem:[#allocation5 + $0x188] sm:$0xff] %vm3148, 0.0
        %6831 = vst.msk [vmem:[#allocation5 + $0x190] sm:$0x3] %vm6782, 0.0
        %6832 = vst.msk [vmem:[#allocation5 + $0x198] sm:$0xff] %vm3148, 0.0
        %6833 = vst.msk [vmem:[#allocation5 + $0x1a0] sm:$0xff] %vm3148, 0.0
        %6834 = vst.msk [vmem:[#allocation5 + $0x1a8] sm:$0x3] %vm6782, 0.0
        %s6835 = scalar_lea.vmem [#allocation5], 24
        %6836 = vst.msk [vmem:[%s6835 + $0x1] sm:$0xff] %vm3148, %v6748
        %6837 = vst.msk [vmem:[%s6835 + $0x9] sm:$0xff] %vm3148, %v6749
        %6838 = vst.msk [vmem:[%s6835 + $0x19] sm:$0xff] %vm3148, %v6750
        %6839 = vst.msk [vmem:[%s6835 + $0x21] sm:$0xff] %vm3148, %v6751
        %6840 = vst.msk [vmem:[%s6835 + $0x31] sm:$0xff] %vm3148, %v6752
        %6841 = vst.msk [vmem:[%s6835 + $0x39] sm:$0xff] %vm3148, %v6753
        %6842 = vst.msk [vmem:[%s6835 + $0x49] sm:$0xff] %vm3148, %v6754
        %6843 = vst.msk [vmem:[%s6835 + $0x51] sm:$0xff] %vm3148, %v6755
        %6844 = vst.msk [vmem:[%s6835 + $0x61] sm:$0xff] %vm3148, %v6756
        %6845 = vst.msk [vmem:[%s6835 + $0x69] sm:$0xff] %vm3148, %v6757
        %6846 = vst.msk [vmem:[%s6835 + $0x79] sm:$0xff] %vm3148, %v6758
        %6847 = vst.msk [vmem:[%s6835 + $0x81] sm:$0xff] %vm3148, %v6759
        %6848 = vst.msk [vmem:[%s6835 + $0x91] sm:$0xff] %vm3148, %v6760
        %6849 = vst.msk [vmem:[%s6835 + $0x99] sm:$0xff] %vm3148, %v6761
        %6850 = vst.msk [vmem:[%s6835 + $0xa9] sm:$0xff] %vm3148, %v6762
        %6851 = vst.msk [vmem:[%s6835 + $0xb1] sm:$0xff] %vm3148, %v6763
        %6852 = vst.msk [vmem:[%s6835 + $0xc1] sm:$0xff] %vm3148, %v6764
        %6853 = vst.msk [vmem:[%s6835 + $0xc9] sm:$0xff] %vm3148, %v6765
        %6854 = vst.msk [vmem:[%s6835 + $0xd9] sm:$0xff] %vm3148, %v6766
        %6855 = vst.msk [vmem:[%s6835 + $0xe1] sm:$0xff] %vm3148, %v6767
        %6856 = vst.msk [vmem:[%s6835 + $0xf1] sm:$0xff] %vm3148, %v6768
        %6857 = vst.msk [vmem:[%s6835 + $0xf9] sm:$0xff] %vm3148, %v6769
        %6858 = vst.msk [vmem:[%s6835 + $0x109] sm:$0xff] %vm3148, %v6770
        %6859 = vst.msk [vmem:[%s6835 + $0x111] sm:$0xff] %vm3148, %v6771
        %6860 = vst.msk [vmem:[%s6835 + $0x121] sm:$0xff] %vm3148, %v6772
        %6861 = vst.msk [vmem:[%s6835 + $0x129] sm:$0xff] %vm3148, %v6773
        %6862 = vst.msk [vmem:[%s6835 + $0x139] sm:$0xff] %vm3148, %v6774
        %6863 = vst.msk [vmem:[%s6835 + $0x141] sm:$0xff] %vm3148, %v6775
        %6864 = vst.msk [vmem:[%s6835 + $0x151] sm:$0xff] %vm3148, %v6776
        %6865 = vst.msk [vmem:[%s6835 + $0x159] sm:$0xff] %vm3148, %v6777
        %6866 = vst.msk [vmem:[%s6835 + $0x169] sm:$0xff] %vm3148, %v6778
        %6867 = vst.msk [vmem:[%s6835 + $0x171] sm:$0xff] %vm3148, %v6779
        %v6868 = vld [vmem:[#allocation5] sm:$0xff]
        %v6869 = vld [vmem:[#allocation5 + $0x8] sm:$0xff]
        %v6870 = vld [vmem:[#allocation5 + $0x10] sm:$0x3]
        %v6871 = vld [vmem:[#allocation5 + $0x18] sm:$0xff]
        %v6872 = vld [vmem:[#allocation5 + $0x20] sm:$0xff]
        %v6873 = vld [vmem:[#allocation5 + $0x28] sm:$0x3]
        %v6874 = vld [vmem:[#allocation5 + $0x30] sm:$0xff]
        %v6875 = vld [vmem:[#allocation5 + $0x38] sm:$0xff]
        %v6876 = vld [vmem:[#allocation5 + $0x40] sm:$0x3]
        %v6877 = vld [vmem:[#allocation5 + $0x48] sm:$0xff]
        %v6878 = vld [vmem:[#allocation5 + $0x50] sm:$0xff]
        %v6879 = vld [vmem:[#allocation5 + $0x58] sm:$0x3]
        %v6880 = vld [vmem:[#allocation5 + $0x60] sm:$0xff]
        %v6881 = vld [vmem:[#allocation5 + $0x68] sm:$0xff]
        %v6882 = vld [vmem:[#allocation5 + $0x70] sm:$0x3]
        %v6883 = vld [vmem:[#allocation5 + $0x78] sm:$0xff]
        %v6884 = vld [vmem:[#allocation5 + $0x80] sm:$0xff]
        %v6885 = vld [vmem:[#allocation5 + $0x88] sm:$0x3]
        %v6886 = vld [vmem:[#allocation5 + $0x90] sm:$0xff]
        %v6887 = vld [vmem:[#allocation5 + $0x98] sm:$0xff]
        %v6888 = vld [vmem:[#allocation5 + $0xa0] sm:$0x3]
        %v6889 = vld [vmem:[#allocation5 + $0xa8] sm:$0xff]
        %v6890 = vld [vmem:[#allocation5 + $0xb0] sm:$0xff]
        %v6891 = vld [vmem:[#allocation5 + $0xb8] sm:$0x3]
        %v6892 = vld [vmem:[#allocation5 + $0xc0] sm:$0xff]
        %v6893 = vld [vmem:[#allocation5 + $0xc8] sm:$0xff]
        %v6894 = vld [vmem:[#allocation5 + $0xd0] sm:$0x3]
        %v6895 = vld [vmem:[#allocation5 + $0xd8] sm:$0xff]
        %v6896 = vld [vmem:[#allocation5 + $0xe0] sm:$0xff]
        %v6897 = vld [vmem:[#allocation5 + $0xe8] sm:$0x3]
        %v6898 = vld [vmem:[#allocation5 + $0xf0] sm:$0xff]
        %v6899 = vld [vmem:[#allocation5 + $0xf8] sm:$0xff]
        %v6900 = vld [vmem:[#allocation5 + $0x100] sm:$0x3]
        %v6901 = vld [vmem:[#allocation5 + $0x108] sm:$0xff]
        %v6902 = vld [vmem:[#allocation5 + $0x110] sm:$0xff]
        %v6903 = vld [vmem:[#allocation5 + $0x118] sm:$0x3]
        %v6904 = vld [vmem:[#allocation5 + $0x120] sm:$0xff]
        %v6905 = vld [vmem:[#allocation5 + $0x128] sm:$0xff]
        %v6906 = vld [vmem:[#allocation5 + $0x130] sm:$0x3]
        %v6907 = vld [vmem:[#allocation5 + $0x138] sm:$0xff]
        %v6908 = vld [vmem:[#allocation5 + $0x140] sm:$0xff]
        %v6909 = vld [vmem:[#allocation5 + $0x148] sm:$0x3]
        %v6910 = vld [vmem:[#allocation5 + $0x150] sm:$0xff]
        %v6911 = vld [vmem:[#allocation5 + $0x158] sm:$0xff]
        %v6912 = vld [vmem:[#allocation5 + $0x160] sm:$0x3]
        %v6913 = vld [vmem:[#allocation5 + $0x168] sm:$0xff]
        %v6914 = vld [vmem:[#allocation5 + $0x170] sm:$0xff]
        %v6915 = vld [vmem:[#allocation5 + $0x178] sm:$0x3]
        %v6916 = vld [vmem:[#allocation5 + $0x180] sm:$0xff]
        %v6917 = vld [vmem:[#allocation5 + $0x188] sm:$0xff]
        %v6918 = vld [vmem:[#allocation5 + $0x190] sm:$0x3]
        %v6919 = vld [vmem:[#allocation5 + $0x198] sm:$0xff]
        %v6920 = vld [vmem:[#allocation5 + $0x1a0] sm:$0xff]
        %v6921 = vld [vmem:[#allocation5 + $0x1a8] sm:$0x3]
        %v6970 = vrot.slane %v6868, 1
        %v6971 = vrot.slane %v6869, 1
        %v6972 = vsel %vm1454, %v6970, %v6971
        %v6973 = vrot.slane %v6870, 1
        %v6974 = vsel %vm1454, %v6971, %v6973
        %v6975 = vrot.slane %v6871, 1
        %v6976 = vrot.slane %v6872, 1
        %v6977 = vsel %vm1454, %v6975, %v6976
        %v6978 = vrot.slane %v6873, 1
        %v6979 = vsel %vm1454, %v6976, %v6978
        %v6980 = vrot.slane %v6874, 1
        %v6981 = vrot.slane %v6875, 1
        %v6982 = vsel %vm1454, %v6980, %v6981
        %v6983 = vrot.slane %v6876, 1
        %v6984 = vsel %vm1454, %v6981, %v6983
        %v6985 = vrot.slane %v6877, 1
        %v6986 = vrot.slane %v6878, 1
        %v6987 = vsel %vm1454, %v6985, %v6986
        %v6988 = vrot.slane %v6879, 1
        %v6989 = vsel %vm1454, %v6986, %v6988
        %v6990 = vrot.slane %v6880, 1
        %v6991 = vrot.slane %v6881, 1
        %v6992 = vsel %vm1454, %v6990, %v6991
        %v6993 = vrot.slane %v6882, 1
        %v6994 = vsel %vm1454, %v6991, %v6993
        %v6995 = vrot.slane %v6883, 1
        %v6996 = vrot.slane %v6884, 1
        %v6997 = vsel %vm1454, %v6995, %v6996
        %v6998 = vrot.slane %v6885, 1
        %v6999 = vsel %vm1454, %v6996, %v6998
        %v7000 = vrot.slane %v6886, 1
        %v7001 = vrot.slane %v6887, 1
        %v7002 = vsel %vm1454, %v7000, %v7001
        %v7003 = vrot.slane %v6888, 1
        %v7004 = vsel %vm1454, %v7001, %v7003
        %v7005 = vrot.slane %v6889, 1
        %v7006 = vrot.slane %v6890, 1
        %v7007 = vsel %vm1454, %v7005, %v7006
        %v7008 = vrot.slane %v6891, 1
        %v7009 = vsel %vm1454, %v7006, %v7008
        %v7010 = vrot.slane %v6892, 1
        %v7011 = vrot.slane %v6893, 1
        %v7012 = vsel %vm1454, %v7010, %v7011
        %v7013 = vrot.slane %v6894, 1
        %v7014 = vsel %vm1454, %v7011, %v7013
        %v7015 = vrot.slane %v6895, 1
        %v7016 = vrot.slane %v6896, 1
        %v7017 = vsel %vm1454, %v7015, %v7016
        %v7018 = vrot.slane %v6897, 1
        %v7019 = vsel %vm1454, %v7016, %v7018
        %v7020 = vrot.slane %v6898, 1
        %v7021 = vrot.slane %v6899, 1
        %v7022 = vsel %vm1454, %v7020, %v7021
        %v7023 = vrot.slane %v6900, 1
        %v7024 = vsel %vm1454, %v7021, %v7023
        %v7025 = vrot.slane %v6901, 1
        %v7026 = vrot.slane %v6902, 1
        %v7027 = vsel %vm1454, %v7025, %v7026
        %v7028 = vrot.slane %v6903, 1
        %v7029 = vsel %vm1454, %v7026, %v7028
        %v7030 = vrot.slane %v6904, 1
        %v7031 = vrot.slane %v6905, 1
        %v7032 = vsel %vm1454, %v7030, %v7031
        %v7033 = vrot.slane %v6906, 1
        %v7034 = vsel %vm1454, %v7031, %v7033
        %v7035 = vrot.slane %v6907, 1
        %v7036 = vrot.slane %v6908, 1
        %v7037 = vsel %vm1454, %v7035, %v7036
        %v7038 = vrot.slane %v6909, 1
        %v7039 = vsel %vm1454, %v7036, %v7038
        %v7040 = vrot.slane %v6910, 1
        %v7041 = vrot.slane %v6911, 1
        %v7042 = vsel %vm1454, %v7040, %v7041
        %v7043 = vrot.slane %v6912, 1
        %v7044 = vsel %vm1454, %v7041, %v7043
        %v7045 = vrot.slane %v6913, 1
        %v7046 = vrot.slane %v6914, 1
        %v7047 = vsel %vm1454, %v7045, %v7046
        %v7048 = vrot.slane %v6915, 1
        %v7049 = vsel %vm1454, %v7046, %v7048
        %7050 = vrot.lane.b32.xlu0 %v6972, 96
        %v7051 = vpop.permute.xlu0 %7050
        %7052 = vrot.lane.b32.xlu0 %v6974, 96
        %v7053 = vpop.permute.xlu0 %7052
        %7054 = vrot.lane.b32.xlu0 %v6977, 96
        %v7055 = vpop.permute.xlu0 %7054
        %7056 = vrot.lane.b32.xlu0 %v6979, 96
        %v7057 = vpop.permute.xlu0 %7056
        %7058 = vrot.lane.b32.xlu0 %v6982, 96
        %v7059 = vpop.permute.xlu0 %7058
        %7060 = vrot.lane.b32.xlu0 %v6984, 96
        %v7061 = vpop.permute.xlu0 %7060
        %7062 = vrot.lane.b32.xlu0 %v6987, 96
        %v7063 = vpop.permute.xlu0 %7062
        %7064 = vrot.lane.b32.xlu0 %v6989, 96
        %v7065 = vpop.permute.xlu0 %7064
        %7066 = vrot.lane.b32.xlu0 %v6992, 96
        %v7067 = vpop.permute.xlu0 %7066
        %7068 = vrot.lane.b32.xlu0 %v6994, 96
        %v7069 = vpop.permute.xlu0 %7068
        %7070 = vrot.lane.b32.xlu0 %v6997, 96
        %v7071 = vpop.permute.xlu0 %7070
        %7072 = vrot.lane.b32.xlu0 %v6999, 96
        %v7073 = vpop.permute.xlu0 %7072
        %7074 = vrot.lane.b32.xlu0 %v7002, 96
        %v7075 = vpop.permute.xlu0 %7074
        %7076 = vrot.lane.b32.xlu0 %v7004, 96
        %v7077 = vpop.permute.xlu0 %7076
        %7078 = vrot.lane.b32.xlu0 %v7007, 96
        %v7079 = vpop.permute.xlu0 %7078
        %7080 = vrot.lane.b32.xlu0 %v7009, 96
        %v7081 = vpop.permute.xlu0 %7080
        %7082 = vrot.lane.b32.xlu0 %v7012, 96
        %v7083 = vpop.permute.xlu0 %7082
        %7084 = vrot.lane.b32.xlu0 %v7014, 96
        %v7085 = vpop.permute.xlu0 %7084
        %7086 = vrot.lane.b32.xlu0 %v7017, 96
        %v7087 = vpop.permute.xlu0 %7086
        %7088 = vrot.lane.b32.xlu0 %v7019, 96
        %v7089 = vpop.permute.xlu0 %7088
        %7090 = vrot.lane.b32.xlu0 %v7022, 96
        %v7091 = vpop.permute.xlu0 %7090
        %7092 = vrot.lane.b32.xlu0 %v7024, 96
        %v7093 = vpop.permute.xlu0 %7092
        %7094 = vrot.lane.b32.xlu0 %v7027, 96
        %v7095 = vpop.permute.xlu0 %7094
        %7096 = vrot.lane.b32.xlu0 %v7029, 96
        %v7097 = vpop.permute.xlu0 %7096
        %7098 = vrot.lane.b32.xlu0 %v7032, 96
        %v7099 = vpop.permute.xlu0 %7098
        %7100 = vrot.lane.b32.xlu0 %v7034, 96
        %v7101 = vpop.permute.xlu0 %7100
        %7102 = vrot.lane.b32.xlu0 %v7037, 96
        %v7103 = vpop.permute.xlu0 %7102
        %7104 = vrot.lane.b32.xlu0 %v7039, 96
        %v7105 = vpop.permute.xlu0 %7104
        %7106 = vrot.lane.b32.xlu0 %v7042, 96
        %v7107 = vpop.permute.xlu0 %7106
        %7108 = vrot.lane.b32.xlu0 %v7044, 96
        %v7109 = vpop.permute.xlu0 %7108
        %7110 = vrot.lane.b32.xlu0 %v7047, 96
        %v7111 = vpop.permute.xlu0 %7110
        %7112 = vrot.lane.b32.xlu0 %v7049, 96
        %v7113 = vpop.permute.xlu0 %7112
        %v7146 = vrot.slane %v6868, 2
        %v7147 = vrot.slane %v6869, 2
        %v7148 = vsel %vm1599, %v7146, %v7147
        %v7149 = vrot.slane %v6870, 2
        %v7150 = vsel %vm1599, %v7147, %v7149
        %v7151 = vrot.slane %v6871, 2
        %v7152 = vrot.slane %v6872, 2
        %v7153 = vsel %vm1599, %v7151, %v7152
        %v7154 = vrot.slane %v6873, 2
        %v7155 = vsel %vm1599, %v7152, %v7154
        %v7156 = vrot.slane %v6874, 2
        %v7157 = vrot.slane %v6875, 2
        %v7158 = vsel %vm1599, %v7156, %v7157
        %v7159 = vrot.slane %v6876, 2
        %v7160 = vsel %vm1599, %v7157, %v7159
        %v7161 = vrot.slane %v6877, 2
        %v7162 = vrot.slane %v6878, 2
        %v7163 = vsel %vm1599, %v7161, %v7162
        %v7164 = vrot.slane %v6879, 2
        %v7165 = vsel %vm1599, %v7162, %v7164
        %v7166 = vrot.slane %v6880, 2
        %v7167 = vrot.slane %v6881, 2
        %v7168 = vsel %vm1599, %v7166, %v7167
        %v7169 = vrot.slane %v6882, 2
        %v7170 = vsel %vm1599, %v7167, %v7169
        %v7171 = vrot.slane %v6883, 2
        %v7172 = vrot.slane %v6884, 2
        %v7173 = vsel %vm1599, %v7171, %v7172
        %v7174 = vrot.slane %v6885, 2
        %v7175 = vsel %vm1599, %v7172, %v7174
        %v7176 = vrot.slane %v6886, 2
        %v7177 = vrot.slane %v6887, 2
        %v7178 = vsel %vm1599, %v7176, %v7177
        %v7179 = vrot.slane %v6888, 2
        %v7180 = vsel %vm1599, %v7177, %v7179
        %v7181 = vrot.slane %v6889, 2
        %v7182 = vrot.slane %v6890, 2
        %v7183 = vsel %vm1599, %v7181, %v7182
        %v7184 = vrot.slane %v6891, 2
        %v7185 = vsel %vm1599, %v7182, %v7184
        %v7186 = vrot.slane %v6892, 2
        %v7187 = vrot.slane %v6893, 2
        %v7188 = vsel %vm1599, %v7186, %v7187
        %v7189 = vrot.slane %v6894, 2
        %v7190 = vsel %vm1599, %v7187, %v7189
        %v7191 = vrot.slane %v6895, 2
        %v7192 = vrot.slane %v6896, 2
        %v7193 = vsel %vm1599, %v7191, %v7192
        %v7194 = vrot.slane %v6897, 2
        %v7195 = vsel %vm1599, %v7192, %v7194
        %v7196 = vrot.slane %v6898, 2
        %v7197 = vrot.slane %v6899, 2
        %v7198 = vsel %vm1599, %v7196, %v7197
        %v7199 = vrot.slane %v6900, 2
        %v7200 = vsel %vm1599, %v7197, %v7199
        %v7201 = vrot.slane %v6901, 2
        %v7202 = vrot.slane %v6902, 2
        %v7203 = vsel %vm1599, %v7201, %v7202
        %v7204 = vrot.slane %v6903, 2
        %v7205 = vsel %vm1599, %v7202, %v7204
        %v7206 = vrot.slane %v6904, 2
        %v7207 = vrot.slane %v6905, 2
        %v7208 = vsel %vm1599, %v7206, %v7207
        %v7209 = vrot.slane %v6906, 2
        %v7210 = vsel %vm1599, %v7207, %v7209
        %v7211 = vrot.slane %v6907, 2
        %v7212 = vrot.slane %v6908, 2
        %v7213 = vsel %vm1599, %v7211, %v7212
        %v7214 = vrot.slane %v6909, 2
        %v7215 = vsel %vm1599, %v7212, %v7214
        %v7216 = vrot.slane %v6910, 2
        %v7217 = vrot.slane %v6911, 2
        %v7218 = vsel %vm1599, %v7216, %v7217
        %v7219 = vrot.slane %v6912, 2
        %v7220 = vsel %vm1599, %v7217, %v7219
        %v7221 = vrot.slane %v6913, 2
        %v7222 = vrot.slane %v6914, 2
        %v7223 = vsel %vm1599, %v7221, %v7222
        %v7224 = vrot.slane %v6915, 2
        %v7225 = vsel %vm1599, %v7222, %v7224
        %7226 = vrot.lane.b32.xlu0 %v7148, 64
        %v7227 = vpop.permute.xlu0 %7226
        %7228 = vrot.lane.b32.xlu0 %v7150, 64
        %v7229 = vpop.permute.xlu0 %7228
        %7230 = vrot.lane.b32.xlu0 %v7153, 64
        %v7231 = vpop.permute.xlu0 %7230
        %7232 = vrot.lane.b32.xlu0 %v7155, 64
        %v7233 = vpop.permute.xlu0 %7232
        %7234 = vrot.lane.b32.xlu0 %v7158, 64
        %v7235 = vpop.permute.xlu0 %7234
        %7236 = vrot.lane.b32.xlu0 %v7160, 64
        %v7237 = vpop.permute.xlu0 %7236
        %7238 = vrot.lane.b32.xlu0 %v7163, 64
        %v7239 = vpop.permute.xlu0 %7238
        %7240 = vrot.lane.b32.xlu0 %v7165, 64
        %v7241 = vpop.permute.xlu0 %7240
        %7242 = vrot.lane.b32.xlu0 %v7168, 64
        %v7243 = vpop.permute.xlu0 %7242
        %7244 = vrot.lane.b32.xlu0 %v7170, 64
        %v7245 = vpop.permute.xlu0 %7244
        %7246 = vrot.lane.b32.xlu0 %v7173, 64
        %v7247 = vpop.permute.xlu0 %7246
        %7248 = vrot.lane.b32.xlu0 %v7175, 64
        %v7249 = vpop.permute.xlu0 %7248
        %7250 = vrot.lane.b32.xlu0 %v7178, 64
        %v7251 = vpop.permute.xlu0 %7250
        %7252 = vrot.lane.b32.xlu0 %v7180, 64
        %v7253 = vpop.permute.xlu0 %7252
        %7254 = vrot.lane.b32.xlu0 %v7183, 64
        %v7255 = vpop.permute.xlu0 %7254
        %7256 = vrot.lane.b32.xlu0 %v7185, 64
        %v7257 = vpop.permute.xlu0 %7256
        %7258 = vrot.lane.b32.xlu0 %v7188, 64
        %v7259 = vpop.permute.xlu0 %7258
        %7260 = vrot.lane.b32.xlu0 %v7190, 64
        %v7261 = vpop.permute.xlu0 %7260
        %7262 = vrot.lane.b32.xlu0 %v7193, 64
        %v7263 = vpop.permute.xlu0 %7262
        %7264 = vrot.lane.b32.xlu0 %v7195, 64
        %v7265 = vpop.permute.xlu0 %7264
        %7266 = vrot.lane.b32.xlu0 %v7198, 64
        %v7267 = vpop.permute.xlu0 %7266
        %7268 = vrot.lane.b32.xlu0 %v7200, 64
        %v7269 = vpop.permute.xlu0 %7268
        %7270 = vrot.lane.b32.xlu0 %v7203, 64
        %v7271 = vpop.permute.xlu0 %7270
        %7272 = vrot.lane.b32.xlu0 %v7205, 64
        %v7273 = vpop.permute.xlu0 %7272
        %7274 = vrot.lane.b32.xlu0 %v7208, 64
        %v7275 = vpop.permute.xlu0 %7274
        %7276 = vrot.lane.b32.xlu0 %v7210, 64
        %v7277 = vpop.permute.xlu0 %7276
        %7278 = vrot.lane.b32.xlu0 %v7213, 64
        %v7279 = vpop.permute.xlu0 %7278
        %7280 = vrot.lane.b32.xlu0 %v7215, 64
        %v7281 = vpop.permute.xlu0 %7280
        %7282 = vrot.lane.b32.xlu0 %v7218, 64
        %v7283 = vpop.permute.xlu0 %7282
        %7284 = vrot.lane.b32.xlu0 %v7220, 64
        %v7285 = vpop.permute.xlu0 %7284
        %7286 = vrot.lane.b32.xlu0 %v7223, 64
        %v7287 = vpop.permute.xlu0 %7286
        %7288 = vrot.lane.b32.xlu0 %v7225, 64
        %v7289 = vpop.permute.xlu0 %7288
        %v7322 = vsel %vm3148, %v6868, %v7051
        %v7323 = vsel %vm3148, %v6869, %v7053
        %v7324 = vsel %vm3148, %v6871, %v7055
        %v7325 = vsel %vm3148, %v6872, %v7057
        %v7326 = vsel %vm3148, %v6874, %v7059
        %v7327 = vsel %vm3148, %v6875, %v7061
        %v7328 = vsel %vm3148, %v6877, %v7063
        %v7329 = vsel %vm3148, %v6878, %v7065
        %v7330 = vsel %vm3148, %v6880, %v7067
        %v7331 = vsel %vm3148, %v6881, %v7069
        %v7332 = vsel %vm3148, %v6883, %v7071
        %v7333 = vsel %vm3148, %v6884, %v7073
        %v7334 = vsel %vm3148, %v6886, %v7075
        %v7335 = vsel %vm3148, %v6887, %v7077
        %v7336 = vsel %vm3148, %v6889, %v7079
        %v7337 = vsel %vm3148, %v6890, %v7081
        %v7338 = vsel %vm3148, %v6892, %v7083
        %v7339 = vsel %vm3148, %v6893, %v7085
        %v7340 = vsel %vm3148, %v6895, %v7087
        %v7341 = vsel %vm3148, %v6896, %v7089
        %v7342 = vsel %vm3148, %v6898, %v7091
        %v7343 = vsel %vm3148, %v6899, %v7093
        %v7344 = vsel %vm3148, %v6901, %v7095
        %v7345 = vsel %vm3148, %v6902, %v7097
        %v7346 = vsel %vm3148, %v6904, %v7099
        %v7347 = vsel %vm3148, %v6905, %v7101
        %v7348 = vsel %vm3148, %v6907, %v7103
        %v7349 = vsel %vm3148, %v6908, %v7105
        %v7350 = vsel %vm3148, %v6910, %v7107
        %v7351 = vsel %vm3148, %v6911, %v7109
        %v7352 = vsel %vm3148, %v6913, %v7111
        %v7353 = vsel %vm3148, %v6914, %v7113
        %v7354 = vsel %vm3214, %v7051, %v7227
        %v7355 = vsel %vm3214, %v7053, %v7229
        %v7356 = vsel %vm3214, %v7055, %v7231
        %v7357 = vsel %vm3214, %v7057, %v7233
        %v7358 = vsel %vm3214, %v7059, %v7235
        %v7359 = vsel %vm3214, %v7061, %v7237
        %v7360 = vsel %vm3214, %v7063, %v7239
        %v7361 = vsel %vm3214, %v7065, %v7241
        %v7362 = vsel %vm3214, %v7067, %v7243
        %v7363 = vsel %vm3214, %v7069, %v7245
        %v7364 = vsel %vm3214, %v7071, %v7247
        %v7365 = vsel %vm3214, %v7073, %v7249
        %v7366 = vsel %vm3214, %v7075, %v7251
        %v7367 = vsel %vm3214, %v7077, %v7253
        %v7368 = vsel %vm3214, %v7079, %v7255
        %v7369 = vsel %vm3214, %v7081, %v7257
        %v7370 = vsel %vm3214, %v7083, %v7259
        %v7371 = vsel %vm3214, %v7085, %v7261
        %v7372 = vsel %vm3214, %v7087, %v7263
        %v7373 = vsel %vm3214, %v7089, %v7265
        %v7374 = vsel %vm3214, %v7091, %v7267
        %v7375 = vsel %vm3214, %v7093, %v7269
        %v7376 = vsel %vm3214, %v7095, %v7271
        %v7377 = vsel %vm3214, %v7097, %v7273
        %v7378 = vsel %vm3214, %v7099, %v7275
        %v7379 = vsel %vm3214, %v7101, %v7277
        %v7380 = vsel %vm3214, %v7103, %v7279
        %v7381 = vsel %vm3214, %v7105, %v7281
        %v7382 = vsel %vm3214, %v7107, %v7283
        %v7383 = vsel %vm3214, %v7109, %v7285
        %v7384 = vsel %vm3214, %v7111, %v7287
        %v7385 = vsel %vm3214, %v7113, %v7289
        %v7386 = vld [vmem:[%s12] sm:$0xff]
        %v7387 = vld [vmem:[%s12 + $0x8] sm:$0xff]
        %v7388 = vld [vmem:[%s12 + $0x10] sm:$0xff]
        %v7389 = vld [vmem:[%s12 + $0x18] sm:$0xff]
        %v7390 = vld [vmem:[%s12 + $0x20] sm:$0xff]
        %v7391 = vld [vmem:[%s12 + $0x28] sm:$0xff]
        %v7392 = vld [vmem:[%s12 + $0x30] sm:$0xff]
        %v7393 = vld [vmem:[%s12 + $0x38] sm:$0xff]
        %v7394 = vld [vmem:[%s12 + $0x40] sm:$0xff]
        %v7395 = vld [vmem:[%s12 + $0x48] sm:$0xff]
        %v7396 = vld [vmem:[%s12 + $0x50] sm:$0xff]
        %v7397 = vld [vmem:[%s12 + $0x58] sm:$0xff]
        %v7398 = vld [vmem:[%s12 + $0x60] sm:$0xff]
        %v7399 = vld [vmem:[%s12 + $0x68] sm:$0xff]
        %v7400 = vld [vmem:[%s12 + $0x70] sm:$0xff]
        %v7401 = vld [vmem:[%s12 + $0x78] sm:$0xff]
        %v7402 = vld [vmem:[%s12 + $0x80] sm:$0xff]
        %v7403 = vld [vmem:[%s12 + $0x88] sm:$0xff]
        %v7404 = vld [vmem:[%s12 + $0x90] sm:$0xff]
        %v7405 = vld [vmem:[%s12 + $0x98] sm:$0xff]
        %v7406 = vld [vmem:[%s12 + $0xa0] sm:$0xff]
        %v7407 = vld [vmem:[%s12 + $0xa8] sm:$0xff]
        %v7408 = vld [vmem:[%s12 + $0xb0] sm:$0xff]
        %v7409 = vld [vmem:[%s12 + $0xb8] sm:$0xff]
        %v7410 = vld [vmem:[%s12 + $0xc0] sm:$0xff]
        %v7411 = vld [vmem:[%s12 + $0xc8] sm:$0xff]
        %v7412 = vld [vmem:[%s12 + $0xd0] sm:$0xff]
        %v7413 = vld [vmem:[%s12 + $0xd8] sm:$0xff]
        %v7414 = vld [vmem:[%s12 + $0xe0] sm:$0xff]
        %v7415 = vld [vmem:[%s12 + $0xe8] sm:$0xff]
        %v7416 = vld [vmem:[%s12 + $0xf0] sm:$0xff]
        %v7417 = vld [vmem:[%s12 + $0xf8] sm:$0xff]
        %v7418 = vld [vmem:[%s12 + $0x100] sm:$0xff]
        %v7419 = vld [vmem:[%s12 + $0x108] sm:$0xff]
        %v7420 = vld [vmem:[%s12 + $0x110] sm:$0xff]
        %v7421 = vld [vmem:[%s12 + $0x118] sm:$0xff]
        %v7425 = vrot.slane %v6916, 1
        %v7426 = vrot.slane %v6917, 1
        %v7427 = vsel %vm1454, %v7425, %v7426
        %v7428 = vrot.slane %v6918, 1
        %v7429 = vsel %vm1454, %v7426, %v7428
        %7430 = vrot.lane.b32.xlu0 %v7427, 96
        %v7431 = vpop.permute.xlu0 %7430
        %7432 = vrot.lane.b32.xlu0 %v7429, 96
        %v7433 = vpop.permute.xlu0 %7432
        %v7436 = vrot.slane %v6916, 2
        %v7437 = vrot.slane %v6917, 2
        %v7438 = vsel %vm1599, %v7436, %v7437
        %v7439 = vrot.slane %v6918, 2
        %v7440 = vsel %vm1599, %v7437, %v7439
        %7441 = vrot.lane.b32.xlu0 %v7438, 64
        %v7442 = vpop.permute.xlu0 %7441
        %7443 = vrot.lane.b32.xlu0 %v7440, 64
        %v7444 = vpop.permute.xlu0 %7443
        %v7447 = vsel %vm3148, %v6916, %v7431
        %v7448 = vsel %vm3148, %v6917, %v7433
        %v7449 = vsel %vm3214, %v7431, %v7442
        %v7450 = vsel %vm3214, %v7433, %v7444
        %s7451 = scalar_lea.vmem %s12, 288
        %v7452 = vld [vmem:[%s7451] sm:$0xff]
        %v7453 = vld [vmem:[%s7451 + $0x8] sm:$0xff]
        %v7454 = vld [vmem:[%s7451 + $0x10] sm:$0xff]
        %v7455 = vld [vmem:[%s7451 + $0x18] sm:$0xff]
        %v7456 = vld [vmem:[%s7451 + $0x20] sm:$0xff]
        %v7457 = vld [vmem:[%s7451 + $0x28] sm:$0xff]
        %v7458 = vld [vmem:[%s7451 + $0x30] sm:$0xff]
        %v7459 = vld [vmem:[%s7451 + $0x38] sm:$0xff]
        %v7460 = vld [vmem:[%s7451 + $0x40] sm:$0xff]
        %v7461 = vld [vmem:[%s7451 + $0x48] sm:$0xff]
        %v7462 = vld [vmem:[%s7451 + $0x50] sm:$0xff]
        %v7463 = vld [vmem:[%s7451 + $0x58] sm:$0xff]
        %v7464 = vld [vmem:[%s7451 + $0x60] sm:$0xff]
        %v7465 = vld [vmem:[%s7451 + $0x68] sm:$0xff]
        %v7466 = vld [vmem:[%s7451 + $0x70] sm:$0xff]
        %v7467 = vld [vmem:[%s7451 + $0x78] sm:$0xff]
        %v7468 = vld [vmem:[%s7451 + $0x80] sm:$0xff]
        %v7469 = vld [vmem:[%s7451 + $0x88] sm:$0xff]
        %v7470 = vld [vmem:[%s7451 + $0x90] sm:$0xff]
        %v7471 = vld [vmem:[%s7451 + $0x98] sm:$0xff]
        %v7472 = vld [vmem:[%s7451 + $0xa0] sm:$0xff]
        %v7473 = vld [vmem:[%s7451 + $0xa8] sm:$0xff]
        %v7474 = vld [vmem:[%s7451 + $0xb0] sm:$0xff]
        %v7475 = vld [vmem:[%s7451 + $0xb8] sm:$0xff]
        %v7476 = vld [vmem:[%s7451 + $0xc0] sm:$0xff]
        %v7477 = vld [vmem:[%s7451 + $0xc8] sm:$0xff]
        %v7478 = vld [vmem:[%s7451 + $0xd0] sm:$0xff]
        %v7479 = vld [vmem:[%s7451 + $0xd8] sm:$0xff]
        %v7480 = vld [vmem:[%s7451 + $0xe0] sm:$0xff]
        %v7481 = vld [vmem:[%s7451 + $0xe8] sm:$0xff]
        %v7482 = vld [vmem:[%s7451 + $0xf0] sm:$0xff]
        %v7483 = vld [vmem:[%s7451 + $0xf8] sm:$0xff]
        %v7484 = vld [vmem:[%s7451 + $0x100] sm:$0xff]
        %v7485 = vld [vmem:[%s7451 + $0x108] sm:$0xff]
        %v7486 = vld [vmem:[%s7451 + $0x110] sm:$0xff]
        %v7487 = vld [vmem:[%s7451 + $0x118] sm:$0xff]
        %vm7488 = vcmask 261120
        %v7489 = vsel %vm7488, %v7231, 0
        %v7491 = vsel %vm7488, %v7233, 0
        %v7493 = vsel %vm7488, %v7235, 0
        %v7495 = vsel %vm7488, %v7237, 0
        %v7497 = vsel %vm7488, %v7239, 0
        %v7499 = vsel %vm7488, %v7241, 0
        %v7501 = vsel %vm7488, %v7243, 0
        %v7503 = vsel %vm7488, %v7245, 0
        %v7505 = vsel %vm7488, %v7247, 0
        %v7507 = vsel %vm7488, %v7249, 0
        %v7509 = vsel %vm7488, %v7251, 0
        %v7511 = vsel %vm7488, %v7253, 0
        %v7513 = vsel %vm7488, %v7255, 0
        %v7515 = vsel %vm7488, %v7257, 0
        %v7517 = vsel %vm7488, %v7259, 0
        %v7519 = vsel %vm7488, %v7261, 0
        %v7521 = vsel %vm7488, %v7263, 0
        %v7523 = vsel %vm7488, %v7265, 0
        %v7525 = vsel %vm7488, %v7267, 0
        %v7527 = vsel %vm7488, %v7269, 0
        %v7529 = vsel %vm7488, %v7271, 0
        %v7531 = vsel %vm7488, %v7273, 0
        %v7533 = vsel %vm7488, %v7275, 0
        %v7535 = vsel %vm7488, %v7277, 0
        %v7537 = vsel %vm7488, %v7279, 0
        %v7539 = vsel %vm7488, %v7281, 0
        %v7541 = vsel %vm7488, %v7283, 0
        %v7543 = vsel %vm7488, %v7285, 0
        %v7545 = vsel %vm7488, %v7287, 0
        %v7547 = vsel %vm7488, %v7289, 0
        %v7549 = vsel %vm7488, %v7442, 0
        %v7551 = vsel %vm7488, %v7444, 0
        %7553 = vmatprep.subr.mxu0 0.0
        %7554 = vmatpush1.msra.mxu0 %v7467
        %7555 = vmatprep.subr.mxu0 0.0
        %7556 = vmatpush1.msra.mxu0 %v7466
        %7557 = vmatprep.subr.mxu0 0.0
        %7558 = vmatpush1.msra.mxu0 %v7465
        %7559 = vmatprep.subr.mxu0 0.0
        %7560 = vmatpush1.msra.mxu0 %v7464
        %7561 = vmatprep.subr.mxu0 0.0
        %7562 = vmatpush1.msra.mxu0 %v7463
        %7563 = vmatprep.subr.mxu0 0.0
        %7564 = vmatpush1.msra.mxu0 %v7462
        %7565 = vmatprep.subr.mxu0 0.0
        %7566 = vmatpush1.msra.mxu0 %v7461
        %7567 = vmatprep.subr.mxu0 0.0
        %7568 = vmatpush1.msra.mxu0 %v7460
        %7569 = vmatprep.subr.mxu0 0.0
        %7570 = vmatpush1.msra.mxu0 %v7459
        %7571 = vmatprep.subr.mxu0 0.0
        %7572 = vmatpush1.msra.mxu0 %v7458
        %7573 = vmatprep.subr.mxu0 0.0
        %7574 = vmatpush1.msra.mxu0 %v7457
        %7575 = vmatprep.subr.mxu0 0.0
        %7576 = vmatpush1.msra.mxu0 %v7456
        %7577 = vmatprep.subr.mxu0 0.0
        %7578 = vmatpush1.msra.mxu0 %v7455
        %7579 = vmatprep.subr.mxu0 0.0
        %7580 = vmatpush1.msra.mxu0 %v7454
        %7581 = vmatprep.subr.mxu0 0.0
        %7582 = vmatpush1.msra.mxu0 %v7453
        %7583 = vmatprep.subr.mxu0 0.0
        %7584 = vmatpush1.msra.mxu0 %v7452
        %7585 = vmatprep.subr.mxu0 0.0
        %7586 = vmatpush2.msra.mxu0 %v7483
        %7587 = vmatprep.subr.mxu0 0.0
        %7588 = vmatpush2.msra.mxu0 %v7482
        %7589 = vmatprep.subr.mxu0 0.0
        %7590 = vmatpush2.msra.mxu0 %v7481
        %7591 = vmatprep.subr.mxu0 0.0
        %7592 = vmatpush2.msra.mxu0 %v7480
        %7593 = vmatprep.subr.mxu0 0.0
        %7594 = vmatpush2.msra.mxu0 %v7479
        %7595 = vmatprep.subr.mxu0 0.0
        %7596 = vmatpush2.msra.mxu0 %v7478
        %7597 = vmatprep.subr.mxu0 0.0
        %7598 = vmatpush2.msra.mxu0 %v7477
        %7599 = vmatprep.subr.mxu0 0.0
        %7600 = vmatpush2.msra.mxu0 %v7476
        %7601 = vmatprep.subr.mxu0 0.0
        %7602 = vmatpush2.msra.mxu0 %v7475
        %7603 = vmatprep.subr.mxu0 0.0
        %7604 = vmatpush2.msra.mxu0 %v7474
        %7605 = vmatprep.subr.mxu0 0.0
        %7606 = vmatpush2.msra.mxu0 %v7473
        %7607 = vmatprep.subr.mxu0 0.0
        %7608 = vmatpush2.msra.mxu0 %v7472
        %7609 = vmatprep.subr.mxu0 0.0
        %7610 = vmatpush2.msra.mxu0 %v7471
        %7611 = vmatprep.subr.mxu0 0.0
        %7612 = vmatpush2.msra.mxu0 %v7470
        %7613 = vmatprep.subr.mxu0 0.0
        %7614 = vmatpush2.msra.mxu0 %v7469
        %7615 = vmatprep.subr.mxu0 0.0
        %7616 = vmatpush2.msra.mxu0 %v7468
        %7617 = vmatprep.mubr.f32.mxu0 %v7356
        %7618 = vmatmul.mubr.f32.gmra.mxu0 %v7324
        %v7619 = vpop.f32.mrf.mxu0
        %v7620 = vadd.f32 0.0, %v7619
        %v7621 = vpop.f32.mrf.mxu0
        %7622 = vmatprep.mubr.f32.mxu0 %v7357
        %7623 = vmatmul.mubr.f32.gmra.mxu0 %v7325
        %v7624 = vpop.f32.mrf.mxu0
        %v7625 = vadd.f32 0.0, %v7624
        %v7626 = vpop.f32.mrf.mxu0
        %7627 = vmatprep.mubr.f32.mxu0 %v7358
        %7628 = vmatmul.mubr.f32.gmra.mxu0 %v7326
        %v7629 = vpop.f32.mrf.mxu0
        %v7630 = vadd.f32 0.0, %v7629
        %v7631 = vpop.f32.mrf.mxu0
        %7632 = vmatprep.mubr.f32.mxu0 %v7359
        %7633 = vmatmul.mubr.f32.gmra.mxu0 %v7327
        %v7634 = vpop.f32.mrf.mxu0
        %v7635 = vadd.f32 0.0, %v7634
        %v7636 = vpop.f32.mrf.mxu0
        %7637 = vmatprep.mubr.f32.mxu0 %v7360
        %7638 = vmatmul.mubr.f32.gmra.mxu0 %v7328
        %v7639 = vpop.f32.mrf.mxu0
        %v7640 = vadd.f32 0.0, %v7639
        %v7641 = vpop.f32.mrf.mxu0
        %7642 = vmatprep.mubr.f32.mxu0 %v7361
        %7643 = vmatmul.mubr.f32.gmra.mxu0 %v7329
        %v7644 = vpop.f32.mrf.mxu0
        %v7645 = vadd.f32 0.0, %v7644
        %v7646 = vpop.f32.mrf.mxu0
        %7647 = vmatprep.mubr.f32.mxu0 %v7362
        %7648 = vmatmul.mubr.f32.gmra.mxu0 %v7330
        %v7649 = vpop.f32.mrf.mxu0
        %v7650 = vadd.f32 0.0, %v7649
        %v7651 = vpop.f32.mrf.mxu0
        %7652 = vmatprep.mubr.f32.mxu0 %v7363
        %7653 = vmatmul.mubr.f32.gmra.mxu0 %v7331
        %v7654 = vpop.f32.mrf.mxu0
        %v7655 = vadd.f32 0.0, %v7654
        %v7656 = vpop.f32.mrf.mxu0
        %7657 = vmatprep.mubr.f32.mxu0 %v7364
        %7658 = vmatmul.mubr.f32.gmra.mxu0 %v7332
        %v7659 = vpop.f32.mrf.mxu0
        %v7660 = vadd.f32 0.0, %v7659
        %v7661 = vpop.f32.mrf.mxu0
        %7662 = vmatprep.mubr.f32.mxu0 %v7365
        %7663 = vmatmul.mubr.f32.gmra.mxu0 %v7333
        %v7664 = vpop.f32.mrf.mxu0
        %v7665 = vadd.f32 0.0, %v7664
        %v7666 = vpop.f32.mrf.mxu0
        %7667 = vmatprep.mubr.f32.mxu0 %v7366
        %7668 = vmatmul.mubr.f32.gmra.mxu0 %v7334
        %v7669 = vpop.f32.mrf.mxu0
        %v7670 = vadd.f32 0.0, %v7669
        %v7671 = vpop.f32.mrf.mxu0
        %7672 = vmatprep.mubr.f32.mxu0 %v7367
        %7673 = vmatmul.mubr.f32.gmra.mxu0 %v7335
        %v7674 = vpop.f32.mrf.mxu0
        %v7675 = vadd.f32 0.0, %v7674
        %v7676 = vpop.f32.mrf.mxu0
        %7677 = vmatprep.mubr.f32.mxu0 %v7368
        %7678 = vmatmul.mubr.f32.gmra.mxu0 %v7336
        %v7679 = vpop.f32.mrf.mxu0
        %v7680 = vadd.f32 0.0, %v7679
        %v7681 = vpop.f32.mrf.mxu0
        %7682 = vmatprep.mubr.f32.mxu0 %v7369
        %7683 = vmatmul.mubr.f32.gmra.mxu0 %v7337
        %v7684 = vpop.f32.mrf.mxu0
        %v7685 = vadd.f32 0.0, %v7684
        %v7686 = vpop.f32.mrf.mxu0
        %7687 = vmatprep.mubr.f32.mxu0 %v7370
        %7688 = vmatmul.mubr.f32.gmra.mxu0 %v7338
        %v7689 = vpop.f32.mrf.mxu0
        %v7690 = vadd.f32 0.0, %v7689
        %v7691 = vpop.f32.mrf.mxu0
        %7692 = vmatprep.mubr.f32.mxu0 %v7371
        %7693 = vmatmul.mubr.f32.gmra.mxu0 %v7339
        %v7694 = vpop.f32.mrf.mxu0
        %v7695 = vadd.f32 0.0, %v7694
        %v7696 = vpop.f32.mrf.mxu0
        %7697 = vmatprep.mubr.f32.mxu0 %v7372
        %7698 = vmatmul.mubr.f32.gmra.mxu0 %v7340
        %v7699 = vpop.f32.mrf.mxu0
        %v7700 = vadd.f32 0.0, %v7699
        %v7701 = vpop.f32.mrf.mxu0
        %7702 = vmatprep.mubr.f32.mxu0 %v7373
        %7703 = vmatmul.mubr.f32.gmra.mxu0 %v7341
        %v7704 = vpop.f32.mrf.mxu0
        %v7705 = vadd.f32 0.0, %v7704
        %v7706 = vpop.f32.mrf.mxu0
        %7707 = vmatprep.mubr.f32.mxu0 %v7374
        %7708 = vmatmul.mubr.f32.gmra.mxu0 %v7342
        %v7709 = vpop.f32.mrf.mxu0
        %v7710 = vadd.f32 0.0, %v7709
        %v7711 = vpop.f32.mrf.mxu0
        %7712 = vmatprep.mubr.f32.mxu0 %v7375
        %7713 = vmatmul.mubr.f32.gmra.mxu0 %v7343
        %v7714 = vpop.f32.mrf.mxu0
        %v7715 = vadd.f32 0.0, %v7714
        %v7716 = vpop.f32.mrf.mxu0
        %7717 = vmatprep.mubr.f32.mxu0 %v7376
        %7718 = vmatmul.mubr.f32.gmra.mxu0 %v7344
        %v7719 = vpop.f32.mrf.mxu0
        %v7720 = vadd.f32 0.0, %v7719
        %v7721 = vpop.f32.mrf.mxu0
        %7722 = vmatprep.mubr.f32.mxu0 %v7377
        %7723 = vmatmul.mubr.f32.gmra.mxu0 %v7345
        %v7724 = vpop.f32.mrf.mxu0
        %v7725 = vadd.f32 0.0, %v7724
        %v7726 = vpop.f32.mrf.mxu0
        %7727 = vmatprep.mubr.f32.mxu0 %v7378
        %7728 = vmatmul.mubr.f32.gmra.mxu0 %v7346
        %v7729 = vpop.f32.mrf.mxu0
        %v7730 = vadd.f32 0.0, %v7729
        %v7731 = vpop.f32.mrf.mxu0
        %7732 = vmatprep.mubr.f32.mxu0 %v7379
        %7733 = vmatmul.mubr.f32.gmra.mxu0 %v7347
        %v7734 = vpop.f32.mrf.mxu0
        %v7735 = vadd.f32 0.0, %v7734
        %v7736 = vpop.f32.mrf.mxu0
        %7737 = vmatprep.mubr.f32.mxu0 %v7380
        %7738 = vmatmul.mubr.f32.gmra.mxu0 %v7348
        %v7739 = vpop.f32.mrf.mxu0
        %v7740 = vadd.f32 0.0, %v7739
        %v7741 = vpop.f32.mrf.mxu0
        %7742 = vmatprep.mubr.f32.mxu0 %v7381
        %7743 = vmatmul.mubr.f32.gmra.mxu0 %v7349
        %v7744 = vpop.f32.mrf.mxu0
        %v7745 = vadd.f32 0.0, %v7744
        %v7746 = vpop.f32.mrf.mxu0
        %7747 = vmatprep.mubr.f32.mxu0 %v7382
        %7748 = vmatmul.mubr.f32.gmra.mxu0 %v7350
        %v7749 = vpop.f32.mrf.mxu0
        %v7750 = vadd.f32 0.0, %v7749
        %v7751 = vpop.f32.mrf.mxu0
        %7752 = vmatprep.mubr.f32.mxu0 %v7383
        %7753 = vmatmul.mubr.f32.gmra.mxu0 %v7351
        %v7754 = vpop.f32.mrf.mxu0
        %v7755 = vadd.f32 0.0, %v7754
        %v7756 = vpop.f32.mrf.mxu0
        %7757 = vmatprep.mubr.f32.mxu0 %v7384
        %7758 = vmatmul.mubr.f32.gmra.mxu0 %v7352
        %v7759 = vpop.f32.mrf.mxu0
        %v7760 = vadd.f32 0.0, %v7759
        %v7761 = vpop.f32.mrf.mxu0
        %7762 = vmatprep.mubr.f32.mxu0 %v7385
        %7763 = vmatmul.mubr.f32.gmra.mxu0 %v7353
        %v7764 = vpop.f32.mrf.mxu0
        %v7765 = vadd.f32 0.0, %v7764
        %v7766 = vpop.f32.mrf.mxu0
        %7767 = vmatprep.mubr.f32.mxu0 %v7449
        %7768 = vmatmul.mubr.f32.gmra.mxu0 %v7447
        %v7769 = vpop.f32.mrf.mxu0
        %v7770 = vadd.f32 0.0, %v7769
        %v7771 = vpop.f32.mrf.mxu0
        %7772 = vmatprep.mubr.f32.mxu0 %v7450
        %7773 = vmatmul.mubr.f32.gmra.mxu0 %v7448
        %v7774 = vpop.f32.mrf.mxu0
        %v7775 = vadd.f32 0.0, %v7774
        %v7776 = vpop.f32.mrf.mxu0
        %7777 = vdwg.mxu0
        %7778 = vmatprep.subr.mxu0 0.0
        %7779 = vmatpush1.msra.mxu0 0.0
        %7780 = vmatprep.subr.mxu0 0.0
        %7781 = vmatpush1.msra.mxu0 0.0
        %7782 = vmatprep.subr.mxu0 0.0
        %7783 = vmatpush1.msra.mxu0 0.0
        %7784 = vmatprep.subr.mxu0 0.0
        %7785 = vmatpush1.msra.mxu0 0.0
        %7786 = vmatprep.subr.mxu0 0.0
        %7787 = vmatpush1.msra.mxu0 0.0
        %7788 = vmatprep.subr.mxu0 0.0
        %7789 = vmatpush1.msra.mxu0 0.0
        %7790 = vmatprep.subr.mxu0 0.0
        %7791 = vmatpush1.msra.mxu0 0.0
        %7792 = vmatprep.subr.mxu0 0.0
        %7793 = vmatpush1.msra.mxu0 0.0
        %7794 = vmatprep.subr.mxu0 0.0
        %7795 = vmatpush1.msra.mxu0 0.0
        %7796 = vmatprep.subr.mxu0 0.0
        %7797 = vmatpush1.msra.mxu0 0.0
        %7798 = vmatprep.subr.mxu0 0.0
        %7799 = vmatpush1.msra.mxu0 0.0
        %7800 = vmatprep.subr.mxu0 0.0
        %7801 = vmatpush1.msra.mxu0 0.0
        %7802 = vmatprep.subr.mxu0 0.0
        %7803 = vmatpush1.msra.mxu0 %v7487
        %7804 = vmatprep.subr.mxu0 0.0
        %7805 = vmatpush1.msra.mxu0 %v7486
        %7806 = vmatprep.subr.mxu0 0.0
        %7807 = vmatpush1.msra.mxu0 %v7485
        %7808 = vmatprep.subr.mxu0 0.0
        %7809 = vmatpush1.msra.mxu0 %v7484
        %7810 = vmatprep.subr.mxu0 0.0
        %7811 = vmatpush2.msra.mxu0 0.0
        %7812 = vmatprep.subr.mxu0 0.0
        %7813 = vmatpush2.msra.mxu0 0.0
        %7814 = vmatprep.subr.mxu0 0.0
        %7815 = vmatpush2.msra.mxu0 0.0
        %7816 = vmatprep.subr.mxu0 0.0
        %7817 = vmatpush2.msra.mxu0 0.0
        %7818 = vmatprep.subr.mxu0 0.0
        %7819 = vmatpush2.msra.mxu0 0.0
        %7820 = vmatprep.subr.mxu0 0.0
        %7821 = vmatpush2.msra.mxu0 0.0
        %7822 = vmatprep.subr.mxu0 0.0
        %7823 = vmatpush2.msra.mxu0 0.0
        %7824 = vmatprep.subr.mxu0 0.0
        %7825 = vmatpush2.msra.mxu0 0.0
        %7826 = vmatprep.subr.mxu0 0.0
        %7827 = vmatpush2.msra.mxu0 0.0
        %7828 = vmatprep.subr.mxu0 0.0
        %7829 = vmatpush2.msra.mxu0 0.0
        %7830 = vmatprep.subr.mxu0 0.0
        %7831 = vmatpush2.msra.mxu0 0.0
        %7832 = vmatprep.subr.mxu0 0.0
        %7833 = vmatpush2.msra.mxu0 0.0
        %7834 = vmatprep.subr.mxu0 0.0
        %7835 = vmatpush2.msra.mxu0 0.0
        %7836 = vmatprep.subr.mxu0 0.0
        %7837 = vmatpush2.msra.mxu0 0.0
        %7838 = vmatprep.subr.mxu0 0.0
        %7839 = vmatpush2.msra.mxu0 0.0
        %7840 = vmatprep.subr.mxu0 0.0
        %7841 = vmatpush2.msra.mxu0 0.0
        %7842 = vmatprep.mubr.f32.mxu0 0.0
        %7843 = vmatmul.mubr.f32.gmra.mxu0 %v7489
        %v7844 = vpop.f32.mrf.mxu0
        %v7845 = vadd.f32 %v7620, %v7844
        %v7846 = vpop.f32.mrf.mxu0
        %7847 = vmatprep.mubr.f32.mxu0 0.0
        %7848 = vmatmul.mubr.f32.gmra.mxu0 %v7491
        %v7849 = vpop.f32.mrf.mxu0
        %v7850 = vadd.f32 %v7625, %v7849
        %v7851 = vpop.f32.mrf.mxu0
        %7852 = vmatprep.mubr.f32.mxu0 0.0
        %7853 = vmatmul.mubr.f32.gmra.mxu0 %v7493
        %v7854 = vpop.f32.mrf.mxu0
        %v7855 = vadd.f32 %v7630, %v7854
        %v7856 = vpop.f32.mrf.mxu0
        %7857 = vmatprep.mubr.f32.mxu0 0.0
        %7858 = vmatmul.mubr.f32.gmra.mxu0 %v7495
        %v7859 = vpop.f32.mrf.mxu0
        %v7860 = vadd.f32 %v7635, %v7859
        %v7861 = vpop.f32.mrf.mxu0
        %7862 = vmatprep.mubr.f32.mxu0 0.0
        %7863 = vmatmul.mubr.f32.gmra.mxu0 %v7497
        %v7864 = vpop.f32.mrf.mxu0
        %v7865 = vadd.f32 %v7640, %v7864
        %v7866 = vpop.f32.mrf.mxu0
        %7867 = vmatprep.mubr.f32.mxu0 0.0
        %7868 = vmatmul.mubr.f32.gmra.mxu0 %v7499
        %v7869 = vpop.f32.mrf.mxu0
        %v7870 = vadd.f32 %v7645, %v7869
        %v7871 = vpop.f32.mrf.mxu0
        %7872 = vmatprep.mubr.f32.mxu0 0.0
        %7873 = vmatmul.mubr.f32.gmra.mxu0 %v7501
        %v7874 = vpop.f32.mrf.mxu0
        %v7875 = vadd.f32 %v7650, %v7874
        %v7876 = vpop.f32.mrf.mxu0
        %7877 = vmatprep.mubr.f32.mxu0 0.0
        %7878 = vmatmul.mubr.f32.gmra.mxu0 %v7503
        %v7879 = vpop.f32.mrf.mxu0
        %v7880 = vadd.f32 %v7655, %v7879
        %v7881 = vpop.f32.mrf.mxu0
        %7882 = vmatprep.mubr.f32.mxu0 0.0
        %7883 = vmatmul.mubr.f32.gmra.mxu0 %v7505
        %v7884 = vpop.f32.mrf.mxu0
        %v7885 = vadd.f32 %v7660, %v7884
        %v7886 = vpop.f32.mrf.mxu0
        %7887 = vmatprep.mubr.f32.mxu0 0.0
        %7888 = vmatmul.mubr.f32.gmra.mxu0 %v7507
        %v7889 = vpop.f32.mrf.mxu0
        %v7890 = vadd.f32 %v7665, %v7889
        %v7891 = vpop.f32.mrf.mxu0
        %7892 = vmatprep.mubr.f32.mxu0 0.0
        %7893 = vmatmul.mubr.f32.gmra.mxu0 %v7509
        %v7894 = vpop.f32.mrf.mxu0
        %v7895 = vadd.f32 %v7670, %v7894
        %v7896 = vpop.f32.mrf.mxu0
        %7897 = vmatprep.mubr.f32.mxu0 0.0
        %7898 = vmatmul.mubr.f32.gmra.mxu0 %v7511
        %v7899 = vpop.f32.mrf.mxu0
        %v7900 = vadd.f32 %v7675, %v7899
        %v7901 = vpop.f32.mrf.mxu0
        %7902 = vmatprep.mubr.f32.mxu0 0.0
        %7903 = vmatmul.mubr.f32.gmra.mxu0 %v7513
        %v7904 = vpop.f32.mrf.mxu0
        %v7905 = vadd.f32 %v7680, %v7904
        %v7906 = vpop.f32.mrf.mxu0
        %7907 = vmatprep.mubr.f32.mxu0 0.0
        %7908 = vmatmul.mubr.f32.gmra.mxu0 %v7515
        %v7909 = vpop.f32.mrf.mxu0
        %v7910 = vadd.f32 %v7685, %v7909
        %v7911 = vpop.f32.mrf.mxu0
        %7912 = vmatprep.mubr.f32.mxu0 0.0
        %7913 = vmatmul.mubr.f32.gmra.mxu0 %v7517
        %v7914 = vpop.f32.mrf.mxu0
        %v7915 = vadd.f32 %v7690, %v7914
        %v7916 = vpop.f32.mrf.mxu0
        %7917 = vmatprep.mubr.f32.mxu0 0.0
        %7918 = vmatmul.mubr.f32.gmra.mxu0 %v7519
        %v7919 = vpop.f32.mrf.mxu0
        %v7920 = vadd.f32 %v7695, %v7919
        %v7921 = vpop.f32.mrf.mxu0
        %7922 = vmatprep.mubr.f32.mxu0 0.0
        %7923 = vmatmul.mubr.f32.gmra.mxu0 %v7521
        %v7924 = vpop.f32.mrf.mxu0
        %v7925 = vadd.f32 %v7700, %v7924
        %v7926 = vpop.f32.mrf.mxu0
        %7927 = vmatprep.mubr.f32.mxu0 0.0
        %7928 = vmatmul.mubr.f32.gmra.mxu0 %v7523
        %v7929 = vpop.f32.mrf.mxu0
        %v7930 = vadd.f32 %v7705, %v7929
        %v7931 = vpop.f32.mrf.mxu0
        %7932 = vmatprep.mubr.f32.mxu0 0.0
        %7933 = vmatmul.mubr.f32.gmra.mxu0 %v7525
        %v7934 = vpop.f32.mrf.mxu0
        %v7935 = vadd.f32 %v7710, %v7934
        %v7936 = vpop.f32.mrf.mxu0
        %7937 = vmatprep.mubr.f32.mxu0 0.0
        %7938 = vmatmul.mubr.f32.gmra.mxu0 %v7527
        %v7939 = vpop.f32.mrf.mxu0
        %v7940 = vadd.f32 %v7715, %v7939
        %v7941 = vpop.f32.mrf.mxu0
        %7942 = vmatprep.mubr.f32.mxu0 0.0
        %7943 = vmatmul.mubr.f32.gmra.mxu0 %v7529
        %v7944 = vpop.f32.mrf.mxu0
        %v7945 = vadd.f32 %v7720, %v7944
        %v7946 = vpop.f32.mrf.mxu0
        %7947 = vmatprep.mubr.f32.mxu0 0.0
        %7948 = vmatmul.mubr.f32.gmra.mxu0 %v7531
        %v7949 = vpop.f32.mrf.mxu0
        %v7950 = vadd.f32 %v7725, %v7949
        %v7951 = vpop.f32.mrf.mxu0
        %7952 = vmatprep.mubr.f32.mxu0 0.0
        %7953 = vmatmul.mubr.f32.gmra.mxu0 %v7533
        %v7954 = vpop.f32.mrf.mxu0
        %v7955 = vadd.f32 %v7730, %v7954
        %v7956 = vpop.f32.mrf.mxu0
        %7957 = vmatprep.mubr.f32.mxu0 0.0
        %7958 = vmatmul.mubr.f32.gmra.mxu0 %v7535
        %v7959 = vpop.f32.mrf.mxu0
        %v7960 = vadd.f32 %v7735, %v7959
        %v7961 = vpop.f32.mrf.mxu0
        %7962 = vmatprep.mubr.f32.mxu0 0.0
        %7963 = vmatmul.mubr.f32.gmra.mxu0 %v7537
        %v7964 = vpop.f32.mrf.mxu0
        %v7965 = vadd.f32 %v7740, %v7964
        %v7966 = vpop.f32.mrf.mxu0
        %7967 = vmatprep.mubr.f32.mxu0 0.0
        %7968 = vmatmul.mubr.f32.gmra.mxu0 %v7539
        %v7969 = vpop.f32.mrf.mxu0
        %v7970 = vadd.f32 %v7745, %v7969
        %v7971 = vpop.f32.mrf.mxu0
        %7972 = vmatprep.mubr.f32.mxu0 0.0
        %7973 = vmatmul.mubr.f32.gmra.mxu0 %v7541
        %v7974 = vpop.f32.mrf.mxu0
        %v7975 = vadd.f32 %v7750, %v7974
        %v7976 = vpop.f32.mrf.mxu0
        %7977 = vmatprep.mubr.f32.mxu0 0.0
        %7978 = vmatmul.mubr.f32.gmra.mxu0 %v7543
        %v7979 = vpop.f32.mrf.mxu0
        %v7980 = vadd.f32 %v7755, %v7979
        %v7981 = vpop.f32.mrf.mxu0
        %7982 = vmatprep.mubr.f32.mxu0 0.0
        %7983 = vmatmul.mubr.f32.gmra.mxu0 %v7545
        %v7984 = vpop.f32.mrf.mxu0
        %v7985 = vadd.f32 %v7760, %v7984
        %v7986 = vpop.f32.mrf.mxu0
        %7987 = vmatprep.mubr.f32.mxu0 0.0
        %7988 = vmatmul.mubr.f32.gmra.mxu0 %v7547
        %v7989 = vpop.f32.mrf.mxu0
        %v7990 = vadd.f32 %v7765, %v7989
        %v7991 = vpop.f32.mrf.mxu0
        %7992 = vmatprep.mubr.f32.mxu0 0.0
        %7993 = vmatmul.mubr.f32.gmra.mxu0 %v7549
        %v7994 = vpop.f32.mrf.mxu0
        %v7995 = vadd.f32 %v7770, %v7994
        %v7996 = vpop.f32.mrf.mxu0
        %7997 = vmatprep.mubr.f32.mxu0 0.0
        %7998 = vmatmul.mubr.f32.gmra.mxu0 %v7551
        %v7999 = vpop.f32.mrf.mxu0
        %v8000 = vadd.f32 %v7775, %v7999
        %v8001 = vpop.f32.mrf.mxu0
        %8002 = vdwg.mxu0
        %v8003 = vsel %vm7488, %v7227, 0
        %v8005 = vsel %vm7488, %v7229, 0
        %8007 = vmatprep.subr.mxu0 0.0
        %8008 = vmatpush1.msra.mxu0 %v7401
        %8009 = vmatprep.subr.mxu0 0.0
        %8010 = vmatpush1.msra.mxu0 %v7400
        %8011 = vmatprep.subr.mxu0 0.0
        %8012 = vmatpush1.msra.mxu0 %v7399
        %8013 = vmatprep.subr.mxu0 0.0
        %8014 = vmatpush1.msra.mxu0 %v7398
        %8015 = vmatprep.subr.mxu0 0.0
        %8016 = vmatpush1.msra.mxu0 %v7397
        %8017 = vmatprep.subr.mxu0 0.0
        %8018 = vmatpush1.msra.mxu0 %v7396
        %8019 = vmatprep.subr.mxu0 0.0
        %8020 = vmatpush1.msra.mxu0 %v7395
        %8021 = vmatprep.subr.mxu0 0.0
        %8022 = vmatpush1.msra.mxu0 %v7394
        %8023 = vmatprep.subr.mxu0 0.0
        %8024 = vmatpush1.msra.mxu0 %v7393
        %8025 = vmatprep.subr.mxu0 0.0
        %8026 = vmatpush1.msra.mxu0 %v7392
        %8027 = vmatprep.subr.mxu0 0.0
        %8028 = vmatpush1.msra.mxu0 %v7391
        %8029 = vmatprep.subr.mxu0 0.0
        %8030 = vmatpush1.msra.mxu0 %v7390
        %8031 = vmatprep.subr.mxu0 0.0
        %8032 = vmatpush1.msra.mxu0 %v7389
        %8033 = vmatprep.subr.mxu0 0.0
        %8034 = vmatpush1.msra.mxu0 %v7388
        %8035 = vmatprep.subr.mxu0 0.0
        %8036 = vmatpush1.msra.mxu0 %v7387
        %8037 = vmatprep.subr.mxu0 0.0
        %8038 = vmatpush1.msra.mxu0 %v7386
        %8039 = vmatprep.subr.mxu0 0.0
        %8040 = vmatpush2.msra.mxu0 %v7417
        %8041 = vmatprep.subr.mxu0 0.0
        %8042 = vmatpush2.msra.mxu0 %v7416
        %8043 = vmatprep.subr.mxu0 0.0
        %8044 = vmatpush2.msra.mxu0 %v7415
        %8045 = vmatprep.subr.mxu0 0.0
        %8046 = vmatpush2.msra.mxu0 %v7414
        %8047 = vmatprep.subr.mxu0 0.0
        %8048 = vmatpush2.msra.mxu0 %v7413
        %8049 = vmatprep.subr.mxu0 0.0
        %8050 = vmatpush2.msra.mxu0 %v7412
        %8051 = vmatprep.subr.mxu0 0.0
        %8052 = vmatpush2.msra.mxu0 %v7411
        %8053 = vmatprep.subr.mxu0 0.0
        %8054 = vmatpush2.msra.mxu0 %v7410
        %8055 = vmatprep.subr.mxu0 0.0
        %8056 = vmatpush2.msra.mxu0 %v7409
        %8057 = vmatprep.subr.mxu0 0.0
        %8058 = vmatpush2.msra.mxu0 %v7408
        %8059 = vmatprep.subr.mxu0 0.0
        %8060 = vmatpush2.msra.mxu0 %v7407
        %8061 = vmatprep.subr.mxu0 0.0
        %8062 = vmatpush2.msra.mxu0 %v7406
        %8063 = vmatprep.subr.mxu0 0.0
        %8064 = vmatpush2.msra.mxu0 %v7405
        %8065 = vmatprep.subr.mxu0 0.0
        %8066 = vmatpush2.msra.mxu0 %v7404
        %8067 = vmatprep.subr.mxu0 0.0
        %8068 = vmatpush2.msra.mxu0 %v7403
        %8069 = vmatprep.subr.mxu0 0.0
        %8070 = vmatpush2.msra.mxu0 %v7402
        %8071 = vmatprep.mubr.f32.mxu0 %v7354
        %8072 = vmatmul.mubr.f32.gmra.mxu0 %v7322
        %v8073 = vpop.f32.mrf.mxu0
        %v8074 = vadd.f32 %v7845, %v8073
        %v8075 = vpop.f32.mrf.mxu0
        %8076 = vmatprep.mubr.f32.mxu0 %v7355
        %8077 = vmatmul.mubr.f32.gmra.mxu0 %v7323
        %v8078 = vpop.f32.mrf.mxu0
        %v8079 = vadd.f32 %v7850, %v8078
        %v8080 = vpop.f32.mrf.mxu0
        %8081 = vmatprep.mubr.f32.mxu0 %v7356
        %8082 = vmatmul.mubr.f32.gmra.mxu0 %v7324
        %v8083 = vpop.f32.mrf.mxu0
        %v8084 = vadd.f32 %v7855, %v8083
        %v8085 = vpop.f32.mrf.mxu0
        %8086 = vmatprep.mubr.f32.mxu0 %v7357
        %8087 = vmatmul.mubr.f32.gmra.mxu0 %v7325
        %v8088 = vpop.f32.mrf.mxu0
        %v8089 = vadd.f32 %v7860, %v8088
        %v8090 = vpop.f32.mrf.mxu0
        %8091 = vmatprep.mubr.f32.mxu0 %v7358
        %8092 = vmatmul.mubr.f32.gmra.mxu0 %v7326
        %v8093 = vpop.f32.mrf.mxu0
        %v8094 = vadd.f32 %v7865, %v8093
        %v8095 = vpop.f32.mrf.mxu0
        %8096 = vmatprep.mubr.f32.mxu0 %v7359
        %8097 = vmatmul.mubr.f32.gmra.mxu0 %v7327
        %v8098 = vpop.f32.mrf.mxu0
        %v8099 = vadd.f32 %v7870, %v8098
        %v8100 = vpop.f32.mrf.mxu0
        %8101 = vmatprep.mubr.f32.mxu0 %v7360
        %8102 = vmatmul.mubr.f32.gmra.mxu0 %v7328
        %v8103 = vpop.f32.mrf.mxu0
        %v8104 = vadd.f32 %v7875, %v8103
        %v8105 = vpop.f32.mrf.mxu0
        %8106 = vmatprep.mubr.f32.mxu0 %v7361
        %8107 = vmatmul.mubr.f32.gmra.mxu0 %v7329
        %v8108 = vpop.f32.mrf.mxu0
        %v8109 = vadd.f32 %v7880, %v8108
        %v8110 = vpop.f32.mrf.mxu0
        %8111 = vmatprep.mubr.f32.mxu0 %v7362
        %8112 = vmatmul.mubr.f32.gmra.mxu0 %v7330
        %v8113 = vpop.f32.mrf.mxu0
        %v8114 = vadd.f32 %v7885, %v8113
        %v8115 = vpop.f32.mrf.mxu0
        %8116 = vmatprep.mubr.f32.mxu0 %v7363
        %8117 = vmatmul.mubr.f32.gmra.mxu0 %v7331
        %v8118 = vpop.f32.mrf.mxu0
        %v8119 = vadd.f32 %v7890, %v8118
        %v8120 = vpop.f32.mrf.mxu0
        %8121 = vmatprep.mubr.f32.mxu0 %v7364
        %8122 = vmatmul.mubr.f32.gmra.mxu0 %v7332
        %v8123 = vpop.f32.mrf.mxu0
        %v8124 = vadd.f32 %v7895, %v8123
        %v8125 = vpop.f32.mrf.mxu0
        %8126 = vmatprep.mubr.f32.mxu0 %v7365
        %8127 = vmatmul.mubr.f32.gmra.mxu0 %v7333
        %v8128 = vpop.f32.mrf.mxu0
        %v8129 = vadd.f32 %v7900, %v8128
        %v8130 = vpop.f32.mrf.mxu0
        %8131 = vmatprep.mubr.f32.mxu0 %v7366
        %8132 = vmatmul.mubr.f32.gmra.mxu0 %v7334
        %v8133 = vpop.f32.mrf.mxu0
        %v8134 = vadd.f32 %v7905, %v8133
        %v8135 = vpop.f32.mrf.mxu0
        %8136 = vmatprep.mubr.f32.mxu0 %v7367
        %8137 = vmatmul.mubr.f32.gmra.mxu0 %v7335
        %v8138 = vpop.f32.mrf.mxu0
        %v8139 = vadd.f32 %v7910, %v8138
        %v8140 = vpop.f32.mrf.mxu0
        %8141 = vmatprep.mubr.f32.mxu0 %v7368
        %8142 = vmatmul.mubr.f32.gmra.mxu0 %v7336
        %v8143 = vpop.f32.mrf.mxu0
        %v8144 = vadd.f32 %v7915, %v8143
        %v8145 = vpop.f32.mrf.mxu0
        %8146 = vmatprep.mubr.f32.mxu0 %v7369
        %8147 = vmatmul.mubr.f32.gmra.mxu0 %v7337
        %v8148 = vpop.f32.mrf.mxu0
        %v8149 = vadd.f32 %v7920, %v8148
        %v8150 = vpop.f32.mrf.mxu0
        %8151 = vmatprep.mubr.f32.mxu0 %v7370
        %8152 = vmatmul.mubr.f32.gmra.mxu0 %v7338
        %v8153 = vpop.f32.mrf.mxu0
        %v8154 = vadd.f32 %v7925, %v8153
        %v8155 = vpop.f32.mrf.mxu0
        %8156 = vmatprep.mubr.f32.mxu0 %v7371
        %8157 = vmatmul.mubr.f32.gmra.mxu0 %v7339
        %v8158 = vpop.f32.mrf.mxu0
        %v8159 = vadd.f32 %v7930, %v8158
        %v8160 = vpop.f32.mrf.mxu0
        %8161 = vmatprep.mubr.f32.mxu0 %v7372
        %8162 = vmatmul.mubr.f32.gmra.mxu0 %v7340
        %v8163 = vpop.f32.mrf.mxu0
        %v8164 = vadd.f32 %v7935, %v8163
        %v8165 = vpop.f32.mrf.mxu0
        %8166 = vmatprep.mubr.f32.mxu0 %v7373
        %8167 = vmatmul.mubr.f32.gmra.mxu0 %v7341
        %v8168 = vpop.f32.mrf.mxu0
        %v8169 = vadd.f32 %v7940, %v8168
        %v8170 = vpop.f32.mrf.mxu0
        %8171 = vmatprep.mubr.f32.mxu0 %v7374
        %8172 = vmatmul.mubr.f32.gmra.mxu0 %v7342
        %v8173 = vpop.f32.mrf.mxu0
        %v8174 = vadd.f32 %v7945, %v8173
        %v8175 = vpop.f32.mrf.mxu0
        %8176 = vmatprep.mubr.f32.mxu0 %v7375
        %8177 = vmatmul.mubr.f32.gmra.mxu0 %v7343
        %v8178 = vpop.f32.mrf.mxu0
        %v8179 = vadd.f32 %v7950, %v8178
        %v8180 = vpop.f32.mrf.mxu0
        %8181 = vmatprep.mubr.f32.mxu0 %v7376
        %8182 = vmatmul.mubr.f32.gmra.mxu0 %v7344
        %v8183 = vpop.f32.mrf.mxu0
        %v8184 = vadd.f32 %v7955, %v8183
        %v8185 = vpop.f32.mrf.mxu0
        %8186 = vmatprep.mubr.f32.mxu0 %v7377
        %8187 = vmatmul.mubr.f32.gmra.mxu0 %v7345
        %v8188 = vpop.f32.mrf.mxu0
        %v8189 = vadd.f32 %v7960, %v8188
        %v8190 = vpop.f32.mrf.mxu0
        %8191 = vmatprep.mubr.f32.mxu0 %v7378
        %8192 = vmatmul.mubr.f32.gmra.mxu0 %v7346
        %v8193 = vpop.f32.mrf.mxu0
        %v8194 = vadd.f32 %v7965, %v8193
        %v8195 = vpop.f32.mrf.mxu0
        %8196 = vmatprep.mubr.f32.mxu0 %v7379
        %8197 = vmatmul.mubr.f32.gmra.mxu0 %v7347
        %v8198 = vpop.f32.mrf.mxu0
        %v8199 = vadd.f32 %v7970, %v8198
        %v8200 = vpop.f32.mrf.mxu0
        %8201 = vmatprep.mubr.f32.mxu0 %v7380
        %8202 = vmatmul.mubr.f32.gmra.mxu0 %v7348
        %v8203 = vpop.f32.mrf.mxu0
        %v8204 = vadd.f32 %v7975, %v8203
        %v8205 = vpop.f32.mrf.mxu0
        %8206 = vmatprep.mubr.f32.mxu0 %v7381
        %8207 = vmatmul.mubr.f32.gmra.mxu0 %v7349
        %v8208 = vpop.f32.mrf.mxu0
        %v8209 = vadd.f32 %v7980, %v8208
        %v8210 = vpop.f32.mrf.mxu0
        %8211 = vmatprep.mubr.f32.mxu0 %v7382
        %8212 = vmatmul.mubr.f32.gmra.mxu0 %v7350
        %v8213 = vpop.f32.mrf.mxu0
        %v8214 = vadd.f32 %v7985, %v8213
        %v8215 = vpop.f32.mrf.mxu0
        %8216 = vmatprep.mubr.f32.mxu0 %v7383
        %8217 = vmatmul.mubr.f32.gmra.mxu0 %v7351
        %v8218 = vpop.f32.mrf.mxu0
        %v8219 = vadd.f32 %v7990, %v8218
        %v8220 = vpop.f32.mrf.mxu0
        %8221 = vmatprep.mubr.f32.mxu0 %v7384
        %8222 = vmatmul.mubr.f32.gmra.mxu0 %v7352
        %v8223 = vpop.f32.mrf.mxu0
        %v8224 = vadd.f32 %v7995, %v8223
        %v8225 = vpop.f32.mrf.mxu0
        %8226 = vmatprep.mubr.f32.mxu0 %v7385
        %8227 = vmatmul.mubr.f32.gmra.mxu0 %v7353
        %v8228 = vpop.f32.mrf.mxu0
        %v8229 = vadd.f32 %v8000, %v8228
        %v8230 = vpop.f32.mrf.mxu0
        %8231 = vdwg.mxu0
        %8232 = vmatprep.subr.mxu0 0.0
        %8233 = vmatpush1.msra.mxu0 0.0
        %8234 = vmatprep.subr.mxu0 0.0
        %8235 = vmatpush1.msra.mxu0 0.0
        %8236 = vmatprep.subr.mxu0 0.0
        %8237 = vmatpush1.msra.mxu0 0.0
        %8238 = vmatprep.subr.mxu0 0.0
        %8239 = vmatpush1.msra.mxu0 0.0
        %8240 = vmatprep.subr.mxu0 0.0
        %8241 = vmatpush1.msra.mxu0 0.0
        %8242 = vmatprep.subr.mxu0 0.0
        %8243 = vmatpush1.msra.mxu0 0.0
        %8244 = vmatprep.subr.mxu0 0.0
        %8245 = vmatpush1.msra.mxu0 0.0
        %8246 = vmatprep.subr.mxu0 0.0
        %8247 = vmatpush1.msra.mxu0 0.0
        %8248 = vmatprep.subr.mxu0 0.0
        %8249 = vmatpush1.msra.mxu0 0.0
        %8250 = vmatprep.subr.mxu0 0.0
        %8251 = vmatpush1.msra.mxu0 0.0
        %8252 = vmatprep.subr.mxu0 0.0
        %8253 = vmatpush1.msra.mxu0 0.0
        %8254 = vmatprep.subr.mxu0 0.0
        %8255 = vmatpush1.msra.mxu0 0.0
        %8256 = vmatprep.subr.mxu0 0.0
        %8257 = vmatpush1.msra.mxu0 %v7421
        %8258 = vmatprep.subr.mxu0 0.0
        %8259 = vmatpush1.msra.mxu0 %v7420
        %8260 = vmatprep.subr.mxu0 0.0
        %8261 = vmatpush1.msra.mxu0 %v7419
        %8262 = vmatprep.subr.mxu0 0.0
        %8263 = vmatpush1.msra.mxu0 %v7418
        %8264 = vmatprep.subr.mxu0 0.0
        %8265 = vmatpush2.msra.mxu0 0.0
        %8266 = vmatprep.subr.mxu0 0.0
        %8267 = vmatpush2.msra.mxu0 0.0
        %8268 = vmatprep.subr.mxu0 0.0
        %8269 = vmatpush2.msra.mxu0 0.0
        %8270 = vmatprep.subr.mxu0 0.0
        %8271 = vmatpush2.msra.mxu0 0.0
        %8272 = vmatprep.subr.mxu0 0.0
        %8273 = vmatpush2.msra.mxu0 0.0
        %8274 = vmatprep.subr.mxu0 0.0
        %8275 = vmatpush2.msra.mxu0 0.0
        %8276 = vmatprep.subr.mxu0 0.0
        %8277 = vmatpush2.msra.mxu0 0.0
        %8278 = vmatprep.subr.mxu0 0.0
        %8279 = vmatpush2.msra.mxu0 0.0
        %8280 = vmatprep.subr.mxu0 0.0
        %8281 = vmatpush2.msra.mxu0 0.0
        %8282 = vmatprep.subr.mxu0 0.0
        %8283 = vmatpush2.msra.mxu0 0.0
        %8284 = vmatprep.subr.mxu0 0.0
        %8285 = vmatpush2.msra.mxu0 0.0
        %8286 = vmatprep.subr.mxu0 0.0
        %8287 = vmatpush2.msra.mxu0 0.0
        %8288 = vmatprep.subr.mxu0 0.0
        %8289 = vmatpush2.msra.mxu0 0.0
        %8290 = vmatprep.subr.mxu0 0.0
        %8291 = vmatpush2.msra.mxu0 0.0
        %8292 = vmatprep.subr.mxu0 0.0
        %8293 = vmatpush2.msra.mxu0 0.0
        %8294 = vmatprep.subr.mxu0 0.0
        %8295 = vmatpush2.msra.mxu0 0.0
        %8296 = vmatprep.mubr.f32.mxu0 0.0
        %8297 = vmatmul.mubr.f32.gmra.mxu0 %v8003
        %v8298 = vpop.f32.mrf.mxu0
        %v8299 = vadd.f32 %v8074, %v8298
        %v8300 = vpop.f32.mrf.mxu0
        %8301 = vmatprep.mubr.f32.mxu0 0.0
        %8302 = vmatmul.mubr.f32.gmra.mxu0 %v8005
        %v8303 = vpop.f32.mrf.mxu0
        %v8304 = vadd.f32 %v8079, %v8303
        %v8305 = vpop.f32.mrf.mxu0
        %8306 = vmatprep.mubr.f32.mxu0 0.0
        %8307 = vmatmul.mubr.f32.gmra.mxu0 %v7489
        %v8308 = vpop.f32.mrf.mxu0
        %v8309 = vadd.f32 %v8084, %v8308
        %v8310 = vpop.f32.mrf.mxu0
        %8311 = vmatprep.mubr.f32.mxu0 0.0
        %8312 = vmatmul.mubr.f32.gmra.mxu0 %v7491
        %v8313 = vpop.f32.mrf.mxu0
        %v8314 = vadd.f32 %v8089, %v8313
        %v8315 = vpop.f32.mrf.mxu0
        %8316 = vmatprep.mubr.f32.mxu0 0.0
        %8317 = vmatmul.mubr.f32.gmra.mxu0 %v7493
        %v8318 = vpop.f32.mrf.mxu0
        %v8319 = vadd.f32 %v8094, %v8318
        %v8320 = vpop.f32.mrf.mxu0
        %8321 = vmatprep.mubr.f32.mxu0 0.0
        %8322 = vmatmul.mubr.f32.gmra.mxu0 %v7495
        %v8323 = vpop.f32.mrf.mxu0
        %v8324 = vadd.f32 %v8099, %v8323
        %v8325 = vpop.f32.mrf.mxu0
        %8326 = vmatprep.mubr.f32.mxu0 0.0
        %8327 = vmatmul.mubr.f32.gmra.mxu0 %v7497
        %v8328 = vpop.f32.mrf.mxu0
        %v8329 = vadd.f32 %v8104, %v8328
        %v8330 = vpop.f32.mrf.mxu0
        %8331 = vmatprep.mubr.f32.mxu0 0.0
        %8332 = vmatmul.mubr.f32.gmra.mxu0 %v7499
        %v8333 = vpop.f32.mrf.mxu0
        %v8334 = vadd.f32 %v8109, %v8333
        %v8335 = vpop.f32.mrf.mxu0
        %8336 = vmatprep.mubr.f32.mxu0 0.0
        %8337 = vmatmul.mubr.f32.gmra.mxu0 %v7501
        %v8338 = vpop.f32.mrf.mxu0
        %v8339 = vadd.f32 %v8114, %v8338
        %v8340 = vpop.f32.mrf.mxu0
        %8341 = vmatprep.mubr.f32.mxu0 0.0
        %8342 = vmatmul.mubr.f32.gmra.mxu0 %v7503
        %v8343 = vpop.f32.mrf.mxu0
        %v8344 = vadd.f32 %v8119, %v8343
        %v8345 = vpop.f32.mrf.mxu0
        %8346 = vmatprep.mubr.f32.mxu0 0.0
        %8347 = vmatmul.mubr.f32.gmra.mxu0 %v7505
        %v8348 = vpop.f32.mrf.mxu0
        %v8349 = vadd.f32 %v8124, %v8348
        %v8350 = vpop.f32.mrf.mxu0
        %8351 = vmatprep.mubr.f32.mxu0 0.0
        %8352 = vmatmul.mubr.f32.gmra.mxu0 %v7507
        %v8353 = vpop.f32.mrf.mxu0
        %v8354 = vadd.f32 %v8129, %v8353
        %v8355 = vpop.f32.mrf.mxu0
        %8356 = vmatprep.mubr.f32.mxu0 0.0
        %8357 = vmatmul.mubr.f32.gmra.mxu0 %v7509
        %v8358 = vpop.f32.mrf.mxu0
        %v8359 = vadd.f32 %v8134, %v8358
        %v8360 = vpop.f32.mrf.mxu0
        %8361 = vmatprep.mubr.f32.mxu0 0.0
        %8362 = vmatmul.mubr.f32.gmra.mxu0 %v7511
        %v8363 = vpop.f32.mrf.mxu0
        %v8364 = vadd.f32 %v8139, %v8363
        %v8365 = vpop.f32.mrf.mxu0
        %8366 = vmatprep.mubr.f32.mxu0 0.0
        %8367 = vmatmul.mubr.f32.gmra.mxu0 %v7513
        %v8368 = vpop.f32.mrf.mxu0
        %v8369 = vadd.f32 %v8144, %v8368
        %v8370 = vpop.f32.mrf.mxu0
        %8371 = vmatprep.mubr.f32.mxu0 0.0
        %8372 = vmatmul.mubr.f32.gmra.mxu0 %v7515
        %v8373 = vpop.f32.mrf.mxu0
        %v8374 = vadd.f32 %v8149, %v8373
        %v8375 = vpop.f32.mrf.mxu0
        %8376 = vmatprep.mubr.f32.mxu0 0.0
        %8377 = vmatmul.mubr.f32.gmra.mxu0 %v7517
        %v8378 = vpop.f32.mrf.mxu0
        %v8379 = vadd.f32 %v8154, %v8378
        %v8380 = vpop.f32.mrf.mxu0
        %8381 = vmatprep.mubr.f32.mxu0 0.0
        %8382 = vmatmul.mubr.f32.gmra.mxu0 %v7519
        %v8383 = vpop.f32.mrf.mxu0
        %v8384 = vadd.f32 %v8159, %v8383
        %v8385 = vpop.f32.mrf.mxu0
        %8386 = vmatprep.mubr.f32.mxu0 0.0
        %8387 = vmatmul.mubr.f32.gmra.mxu0 %v7521
        %v8388 = vpop.f32.mrf.mxu0
        %v8389 = vadd.f32 %v8164, %v8388
        %v8390 = vpop.f32.mrf.mxu0
        %8391 = vmatprep.mubr.f32.mxu0 0.0
        %8392 = vmatmul.mubr.f32.gmra.mxu0 %v7523
        %v8393 = vpop.f32.mrf.mxu0
        %v8394 = vadd.f32 %v8169, %v8393
        %v8395 = vpop.f32.mrf.mxu0
        %8396 = vmatprep.mubr.f32.mxu0 0.0
        %8397 = vmatmul.mubr.f32.gmra.mxu0 %v7525
        %v8398 = vpop.f32.mrf.mxu0
        %v8399 = vadd.f32 %v8174, %v8398
        %v8400 = vpop.f32.mrf.mxu0
        %8401 = vmatprep.mubr.f32.mxu0 0.0
        %8402 = vmatmul.mubr.f32.gmra.mxu0 %v7527
        %v8403 = vpop.f32.mrf.mxu0
        %v8404 = vadd.f32 %v8179, %v8403
        %v8405 = vpop.f32.mrf.mxu0
        %8406 = vmatprep.mubr.f32.mxu0 0.0
        %8407 = vmatmul.mubr.f32.gmra.mxu0 %v7529
        %v8408 = vpop.f32.mrf.mxu0
        %v8409 = vadd.f32 %v8184, %v8408
        %v8410 = vpop.f32.mrf.mxu0
        %8411 = vmatprep.mubr.f32.mxu0 0.0
        %8412 = vmatmul.mubr.f32.gmra.mxu0 %v7531
        %v8413 = vpop.f32.mrf.mxu0
        %v8414 = vadd.f32 %v8189, %v8413
        %v8415 = vpop.f32.mrf.mxu0
        %8416 = vmatprep.mubr.f32.mxu0 0.0
        %8417 = vmatmul.mubr.f32.gmra.mxu0 %v7533
        %v8418 = vpop.f32.mrf.mxu0
        %v8419 = vadd.f32 %v8194, %v8418
        %v8420 = vpop.f32.mrf.mxu0
        %8421 = vmatprep.mubr.f32.mxu0 0.0
        %8422 = vmatmul.mubr.f32.gmra.mxu0 %v7535
        %v8423 = vpop.f32.mrf.mxu0
        %v8424 = vadd.f32 %v8199, %v8423
        %v8425 = vpop.f32.mrf.mxu0
        %8426 = vmatprep.mubr.f32.mxu0 0.0
        %8427 = vmatmul.mubr.f32.gmra.mxu0 %v7537
        %v8428 = vpop.f32.mrf.mxu0
        %v8429 = vadd.f32 %v8204, %v8428
        %v8430 = vpop.f32.mrf.mxu0
        %8431 = vmatprep.mubr.f32.mxu0 0.0
        %8432 = vmatmul.mubr.f32.gmra.mxu0 %v7539
        %v8433 = vpop.f32.mrf.mxu0
        %v8434 = vadd.f32 %v8209, %v8433
        %v8435 = vpop.f32.mrf.mxu0
        %8436 = vmatprep.mubr.f32.mxu0 0.0
        %8437 = vmatmul.mubr.f32.gmra.mxu0 %v7541
        %v8438 = vpop.f32.mrf.mxu0
        %v8439 = vadd.f32 %v8214, %v8438
        %v8440 = vpop.f32.mrf.mxu0
        %8441 = vmatprep.mubr.f32.mxu0 0.0
        %8442 = vmatmul.mubr.f32.gmra.mxu0 %v7543
        %v8443 = vpop.f32.mrf.mxu0
        %v8444 = vadd.f32 %v8219, %v8443
        %v8445 = vpop.f32.mrf.mxu0
        %8446 = vmatprep.mubr.f32.mxu0 0.0
        %8447 = vmatmul.mubr.f32.gmra.mxu0 %v7545
        %v8448 = vpop.f32.mrf.mxu0
        %v8449 = vadd.f32 %v8224, %v8448
        %v8450 = vpop.f32.mrf.mxu0
        %8451 = vmatprep.mubr.f32.mxu0 0.0
        %8452 = vmatmul.mubr.f32.gmra.mxu0 %v7547
        %v8453 = vpop.f32.mrf.mxu0
        %v8454 = vadd.f32 %v8229, %v8453
        %v8455 = vpop.f32.mrf.mxu0
        %8456 = vdwg.mxu0
        %v8460 = vrot.slane %v6919, 1
        %v8461 = vrot.slane %v6920, 1
        %v8462 = vsel %vm1454, %v8460, %v8461
        %v8463 = vrot.slane %v6921, 1
        %v8464 = vsel %vm1454, %v8461, %v8463
        %8465 = vrot.lane.b32.xlu0 %v8462, 96
        %v8466 = vpop.permute.xlu0 %8465
        %8467 = vrot.lane.b32.xlu0 %v8464, 96
        %v8468 = vpop.permute.xlu0 %8467
        %v8471 = vrot.slane %v6919, 2
        %v8472 = vrot.slane %v6920, 2
        %v8473 = vsel %vm1599, %v8471, %v8472
        %v8474 = vrot.slane %v6921, 2
        %v8475 = vsel %vm1599, %v8472, %v8474
        %8476 = vrot.lane.b32.xlu0 %v8473, 64
        %v8477 = vpop.permute.xlu0 %8476
        %8478 = vrot.lane.b32.xlu0 %v8475, 64
        %v8479 = vpop.permute.xlu0 %8478
        %v8482 = vsel %vm3148, %v6919, %v8466
        %v8483 = vsel %vm3148, %v6920, %v8468
        %v8484 = vsel %vm3214, %v8466, %v8477
        %v8485 = vsel %vm3214, %v8468, %v8479
        %s8486 = scalar_lea.vmem %s12, 576
        %v8487 = vld [vmem:[%s8486] sm:$0xff]
        %v8488 = vld [vmem:[%s8486 + $0x8] sm:$0xff]
        %v8489 = vld [vmem:[%s8486 + $0x10] sm:$0xff]
        %v8490 = vld [vmem:[%s8486 + $0x18] sm:$0xff]
        %v8491 = vld [vmem:[%s8486 + $0x20] sm:$0xff]
        %v8492 = vld [vmem:[%s8486 + $0x28] sm:$0xff]
        %v8493 = vld [vmem:[%s8486 + $0x30] sm:$0xff]
        %v8494 = vld [vmem:[%s8486 + $0x38] sm:$0xff]
        %v8495 = vld [vmem:[%s8486 + $0x40] sm:$0xff]
        %v8496 = vld [vmem:[%s8486 + $0x48] sm:$0xff]
        %v8497 = vld [vmem:[%s8486 + $0x50] sm:$0xff]
        %v8498 = vld [vmem:[%s8486 + $0x58] sm:$0xff]
        %v8499 = vld [vmem:[%s8486 + $0x60] sm:$0xff]
        %v8500 = vld [vmem:[%s8486 + $0x68] sm:$0xff]
        %v8501 = vld [vmem:[%s8486 + $0x70] sm:$0xff]
        %v8502 = vld [vmem:[%s8486 + $0x78] sm:$0xff]
        %v8503 = vld [vmem:[%s8486 + $0x80] sm:$0xff]
        %v8504 = vld [vmem:[%s8486 + $0x88] sm:$0xff]
        %v8505 = vld [vmem:[%s8486 + $0x90] sm:$0xff]
        %v8506 = vld [vmem:[%s8486 + $0x98] sm:$0xff]
        %v8507 = vld [vmem:[%s8486 + $0xa0] sm:$0xff]
        %v8508 = vld [vmem:[%s8486 + $0xa8] sm:$0xff]
        %v8509 = vld [vmem:[%s8486 + $0xb0] sm:$0xff]
        %v8510 = vld [vmem:[%s8486 + $0xb8] sm:$0xff]
        %v8511 = vld [vmem:[%s8486 + $0xc0] sm:$0xff]
        %v8512 = vld [vmem:[%s8486 + $0xc8] sm:$0xff]
        %v8513 = vld [vmem:[%s8486 + $0xd0] sm:$0xff]
        %v8514 = vld [vmem:[%s8486 + $0xd8] sm:$0xff]
        %v8515 = vld [vmem:[%s8486 + $0xe0] sm:$0xff]
        %v8516 = vld [vmem:[%s8486 + $0xe8] sm:$0xff]
        %v8517 = vld [vmem:[%s8486 + $0xf0] sm:$0xff]
        %v8518 = vld [vmem:[%s8486 + $0xf8] sm:$0xff]
        %v8519 = vld [vmem:[%s8486 + $0x100] sm:$0xff]
        %v8520 = vld [vmem:[%s8486 + $0x108] sm:$0xff]
        %v8521 = vld [vmem:[%s8486 + $0x110] sm:$0xff]
        %v8522 = vld [vmem:[%s8486 + $0x118] sm:$0xff]
        %v8523 = vsel %vm7488, %v8477, 0
        %v8525 = vsel %vm7488, %v8479, 0
        %8527 = vmatprep.subr.mxu0 0.0
        %8528 = vmatpush1.msra.mxu0 %v8502
        %8529 = vmatprep.subr.mxu0 0.0
        %8530 = vmatpush1.msra.mxu0 %v8501
        %8531 = vmatprep.subr.mxu0 0.0
        %8532 = vmatpush1.msra.mxu0 %v8500
        %8533 = vmatprep.subr.mxu0 0.0
        %8534 = vmatpush1.msra.mxu0 %v8499
        %8535 = vmatprep.subr.mxu0 0.0
        %8536 = vmatpush1.msra.mxu0 %v8498
        %8537 = vmatprep.subr.mxu0 0.0
        %8538 = vmatpush1.msra.mxu0 %v8497
        %8539 = vmatprep.subr.mxu0 0.0
        %8540 = vmatpush1.msra.mxu0 %v8496
        %8541 = vmatprep.subr.mxu0 0.0
        %8542 = vmatpush1.msra.mxu0 %v8495
        %8543 = vmatprep.subr.mxu0 0.0
        %8544 = vmatpush1.msra.mxu0 %v8494
        %8545 = vmatprep.subr.mxu0 0.0
        %8546 = vmatpush1.msra.mxu0 %v8493
        %8547 = vmatprep.subr.mxu0 0.0
        %8548 = vmatpush1.msra.mxu0 %v8492
        %8549 = vmatprep.subr.mxu0 0.0
        %8550 = vmatpush1.msra.mxu0 %v8491
        %8551 = vmatprep.subr.mxu0 0.0
        %8552 = vmatpush1.msra.mxu0 %v8490
        %8553 = vmatprep.subr.mxu0 0.0
        %8554 = vmatpush1.msra.mxu0 %v8489
        %8555 = vmatprep.subr.mxu0 0.0
        %8556 = vmatpush1.msra.mxu0 %v8488
        %8557 = vmatprep.subr.mxu0 0.0
        %8558 = vmatpush1.msra.mxu0 %v8487
        %8559 = vmatprep.subr.mxu0 0.0
        %8560 = vmatpush2.msra.mxu0 %v8518
        %8561 = vmatprep.subr.mxu0 0.0
        %8562 = vmatpush2.msra.mxu0 %v8517
        %8563 = vmatprep.subr.mxu0 0.0
        %8564 = vmatpush2.msra.mxu0 %v8516
        %8565 = vmatprep.subr.mxu0 0.0
        %8566 = vmatpush2.msra.mxu0 %v8515
        %8567 = vmatprep.subr.mxu0 0.0
        %8568 = vmatpush2.msra.mxu0 %v8514
        %8569 = vmatprep.subr.mxu0 0.0
        %8570 = vmatpush2.msra.mxu0 %v8513
        %8571 = vmatprep.subr.mxu0 0.0
        %8572 = vmatpush2.msra.mxu0 %v8512
        %8573 = vmatprep.subr.mxu0 0.0
        %8574 = vmatpush2.msra.mxu0 %v8511
        %8575 = vmatprep.subr.mxu0 0.0
        %8576 = vmatpush2.msra.mxu0 %v8510
        %8577 = vmatprep.subr.mxu0 0.0
        %8578 = vmatpush2.msra.mxu0 %v8509
        %8579 = vmatprep.subr.mxu0 0.0
        %8580 = vmatpush2.msra.mxu0 %v8508
        %8581 = vmatprep.subr.mxu0 0.0
        %8582 = vmatpush2.msra.mxu0 %v8507
        %8583 = vmatprep.subr.mxu0 0.0
        %8584 = vmatpush2.msra.mxu0 %v8506
        %8585 = vmatprep.subr.mxu0 0.0
        %8586 = vmatpush2.msra.mxu0 %v8505
        %8587 = vmatprep.subr.mxu0 0.0
        %8588 = vmatpush2.msra.mxu0 %v8504
        %8589 = vmatprep.subr.mxu0 0.0
        %8590 = vmatpush2.msra.mxu0 %v8503
        %8591 = vmatprep.mubr.f32.mxu0 %v7358
        %8592 = vmatmul.mubr.f32.gmra.mxu0 %v7326
        %v8593 = vpop.f32.mrf.mxu0
        %v8594 = vadd.f32 0.0, %v8593
        %v8595 = vpop.f32.mrf.mxu0
        %8596 = vmatprep.mubr.f32.mxu0 %v7359
        %8597 = vmatmul.mubr.f32.gmra.mxu0 %v7327
        %v8598 = vpop.f32.mrf.mxu0
        %v8599 = vadd.f32 0.0, %v8598
        %v8600 = vpop.f32.mrf.mxu0
        %8601 = vmatprep.mubr.f32.mxu0 %v7360
        %8602 = vmatmul.mubr.f32.gmra.mxu0 %v7328
        %v8603 = vpop.f32.mrf.mxu0
        %v8604 = vadd.f32 0.0, %v8603
        %v8605 = vpop.f32.mrf.mxu0
        %8606 = vmatprep.mubr.f32.mxu0 %v7361
        %8607 = vmatmul.mubr.f32.gmra.mxu0 %v7329
        %v8608 = vpop.f32.mrf.mxu0
        %v8609 = vadd.f32 0.0, %v8608
        %v8610 = vpop.f32.mrf.mxu0
        %8611 = vmatprep.mubr.f32.mxu0 %v7362
        %8612 = vmatmul.mubr.f32.gmra.mxu0 %v7330
        %v8613 = vpop.f32.mrf.mxu0
        %v8614 = vadd.f32 0.0, %v8613
        %v8615 = vpop.f32.mrf.mxu0
        %8616 = vmatprep.mubr.f32.mxu0 %v7363
        %8617 = vmatmul.mubr.f32.gmra.mxu0 %v7331
        %v8618 = vpop.f32.mrf.mxu0
        %v8619 = vadd.f32 0.0, %v8618
        %v8620 = vpop.f32.mrf.mxu0
        %8621 = vmatprep.mubr.f32.mxu0 %v7364
        %8622 = vmatmul.mubr.f32.gmra.mxu0 %v7332
        %v8623 = vpop.f32.mrf.mxu0
        %v8624 = vadd.f32 0.0, %v8623
        %v8625 = vpop.f32.mrf.mxu0
        %8626 = vmatprep.mubr.f32.mxu0 %v7365
        %8627 = vmatmul.mubr.f32.gmra.mxu0 %v7333
        %v8628 = vpop.f32.mrf.mxu0
        %v8629 = vadd.f32 0.0, %v8628
        %v8630 = vpop.f32.mrf.mxu0
        %8631 = vmatprep.mubr.f32.mxu0 %v7366
        %8632 = vmatmul.mubr.f32.gmra.mxu0 %v7334
        %v8633 = vpop.f32.mrf.mxu0
        %v8634 = vadd.f32 0.0, %v8633
        %v8635 = vpop.f32.mrf.mxu0
        %8636 = vmatprep.mubr.f32.mxu0 %v7367
        %8637 = vmatmul.mubr.f32.gmra.mxu0 %v7335
        %v8638 = vpop.f32.mrf.mxu0
        %v8639 = vadd.f32 0.0, %v8638
        %v8640 = vpop.f32.mrf.mxu0
        %8641 = vmatprep.mubr.f32.mxu0 %v7368
        %8642 = vmatmul.mubr.f32.gmra.mxu0 %v7336
        %v8643 = vpop.f32.mrf.mxu0
        %v8644 = vadd.f32 0.0, %v8643
        %v8645 = vpop.f32.mrf.mxu0
        %8646 = vmatprep.mubr.f32.mxu0 %v7369
        %8647 = vmatmul.mubr.f32.gmra.mxu0 %v7337
        %v8648 = vpop.f32.mrf.mxu0
        %v8649 = vadd.f32 0.0, %v8648
        %v8650 = vpop.f32.mrf.mxu0
        %8651 = vmatprep.mubr.f32.mxu0 %v7370
        %8652 = vmatmul.mubr.f32.gmra.mxu0 %v7338
        %v8653 = vpop.f32.mrf.mxu0
        %v8654 = vadd.f32 0.0, %v8653
        %v8655 = vpop.f32.mrf.mxu0
        %8656 = vmatprep.mubr.f32.mxu0 %v7371
        %8657 = vmatmul.mubr.f32.gmra.mxu0 %v7339
        %v8658 = vpop.f32.mrf.mxu0
        %v8659 = vadd.f32 0.0, %v8658
        %v8660 = vpop.f32.mrf.mxu0
        %8661 = vmatprep.mubr.f32.mxu0 %v7372
        %8662 = vmatmul.mubr.f32.gmra.mxu0 %v7340
        %v8663 = vpop.f32.mrf.mxu0
        %v8664 = vadd.f32 0.0, %v8663
        %v8665 = vpop.f32.mrf.mxu0
        %8666 = vmatprep.mubr.f32.mxu0 %v7373
        %8667 = vmatmul.mubr.f32.gmra.mxu0 %v7341
        %v8668 = vpop.f32.mrf.mxu0
        %v8669 = vadd.f32 0.0, %v8668
        %v8670 = vpop.f32.mrf.mxu0
        %8671 = vmatprep.mubr.f32.mxu0 %v7374
        %8672 = vmatmul.mubr.f32.gmra.mxu0 %v7342
        %v8673 = vpop.f32.mrf.mxu0
        %v8674 = vadd.f32 0.0, %v8673
        %v8675 = vpop.f32.mrf.mxu0
        %8676 = vmatprep.mubr.f32.mxu0 %v7375
        %8677 = vmatmul.mubr.f32.gmra.mxu0 %v7343
        %v8678 = vpop.f32.mrf.mxu0
        %v8679 = vadd.f32 0.0, %v8678
        %v8680 = vpop.f32.mrf.mxu0
        %8681 = vmatprep.mubr.f32.mxu0 %v7376
        %8682 = vmatmul.mubr.f32.gmra.mxu0 %v7344
        %v8683 = vpop.f32.mrf.mxu0
        %v8684 = vadd.f32 0.0, %v8683
        %v8685 = vpop.f32.mrf.mxu0
        %8686 = vmatprep.mubr.f32.mxu0 %v7377
        %8687 = vmatmul.mubr.f32.gmra.mxu0 %v7345
        %v8688 = vpop.f32.mrf.mxu0
        %v8689 = vadd.f32 0.0, %v8688
        %v8690 = vpop.f32.mrf.mxu0
        %8691 = vmatprep.mubr.f32.mxu0 %v7378
        %8692 = vmatmul.mubr.f32.gmra.mxu0 %v7346
        %v8693 = vpop.f32.mrf.mxu0
        %v8694 = vadd.f32 0.0, %v8693
        %v8695 = vpop.f32.mrf.mxu0
        %8696 = vmatprep.mubr.f32.mxu0 %v7379
        %8697 = vmatmul.mubr.f32.gmra.mxu0 %v7347
        %v8698 = vpop.f32.mrf.mxu0
        %v8699 = vadd.f32 0.0, %v8698
        %v8700 = vpop.f32.mrf.mxu0
        %8701 = vmatprep.mubr.f32.mxu0 %v7380
        %8702 = vmatmul.mubr.f32.gmra.mxu0 %v7348
        %v8703 = vpop.f32.mrf.mxu0
        %v8704 = vadd.f32 0.0, %v8703
        %v8705 = vpop.f32.mrf.mxu0
        %8706 = vmatprep.mubr.f32.mxu0 %v7381
        %8707 = vmatmul.mubr.f32.gmra.mxu0 %v7349
        %v8708 = vpop.f32.mrf.mxu0
        %v8709 = vadd.f32 0.0, %v8708
        %v8710 = vpop.f32.mrf.mxu0
        %8711 = vmatprep.mubr.f32.mxu0 %v7382
        %8712 = vmatmul.mubr.f32.gmra.mxu0 %v7350
        %v8713 = vpop.f32.mrf.mxu0
        %v8714 = vadd.f32 0.0, %v8713
        %v8715 = vpop.f32.mrf.mxu0
        %8716 = vmatprep.mubr.f32.mxu0 %v7383
        %8717 = vmatmul.mubr.f32.gmra.mxu0 %v7351
        %v8718 = vpop.f32.mrf.mxu0
        %v8719 = vadd.f32 0.0, %v8718
        %v8720 = vpop.f32.mrf.mxu0
        %8721 = vmatprep.mubr.f32.mxu0 %v7384
        %8722 = vmatmul.mubr.f32.gmra.mxu0 %v7352
        %v8723 = vpop.f32.mrf.mxu0
        %v8724 = vadd.f32 0.0, %v8723
        %v8725 = vpop.f32.mrf.mxu0
        %8726 = vmatprep.mubr.f32.mxu0 %v7385
        %8727 = vmatmul.mubr.f32.gmra.mxu0 %v7353
        %v8728 = vpop.f32.mrf.mxu0
        %v8729 = vadd.f32 0.0, %v8728
        %v8730 = vpop.f32.mrf.mxu0
        %8731 = vmatprep.mubr.f32.mxu0 %v7449
        %8732 = vmatmul.mubr.f32.gmra.mxu0 %v7447
        %v8733 = vpop.f32.mrf.mxu0
        %v8734 = vadd.f32 0.0, %v8733
        %v8735 = vpop.f32.mrf.mxu0
        %8736 = vmatprep.mubr.f32.mxu0 %v7450
        %8737 = vmatmul.mubr.f32.gmra.mxu0 %v7448
        %v8738 = vpop.f32.mrf.mxu0
        %v8739 = vadd.f32 0.0, %v8738
        %v8740 = vpop.f32.mrf.mxu0
        %8741 = vmatprep.mubr.f32.mxu0 %v8484
        %8742 = vmatmul.mubr.f32.gmra.mxu0 %v8482
        %v8743 = vpop.f32.mrf.mxu0
        %v8744 = vadd.f32 0.0, %v8743
        %v8745 = vpop.f32.mrf.mxu0
        %8746 = vmatprep.mubr.f32.mxu0 %v8485
        %8747 = vmatmul.mubr.f32.gmra.mxu0 %v8483
        %v8748 = vpop.f32.mrf.mxu0
        %v8749 = vadd.f32 0.0, %v8748
        %v8750 = vpop.f32.mrf.mxu0
        %8751 = vdwg.mxu0
        %8752 = vmatprep.subr.mxu0 0.0
        %8753 = vmatpush1.msra.mxu0 0.0
        %8754 = vmatprep.subr.mxu0 0.0
        %8755 = vmatpush1.msra.mxu0 0.0
        %8756 = vmatprep.subr.mxu0 0.0
        %8757 = vmatpush1.msra.mxu0 0.0
        %8758 = vmatprep.subr.mxu0 0.0
        %8759 = vmatpush1.msra.mxu0 0.0
        %8760 = vmatprep.subr.mxu0 0.0
        %8761 = vmatpush1.msra.mxu0 0.0
        %8762 = vmatprep.subr.mxu0 0.0
        %8763 = vmatpush1.msra.mxu0 0.0
        %8764 = vmatprep.subr.mxu0 0.0
        %8765 = vmatpush1.msra.mxu0 0.0
        %8766 = vmatprep.subr.mxu0 0.0
        %8767 = vmatpush1.msra.mxu0 0.0
        %8768 = vmatprep.subr.mxu0 0.0
        %8769 = vmatpush1.msra.mxu0 0.0
        %8770 = vmatprep.subr.mxu0 0.0
        %8771 = vmatpush1.msra.mxu0 0.0
        %8772 = vmatprep.subr.mxu0 0.0
        %8773 = vmatpush1.msra.mxu0 0.0
        %8774 = vmatprep.subr.mxu0 0.0
        %8775 = vmatpush1.msra.mxu0 0.0
        %8776 = vmatprep.subr.mxu0 0.0
        %8777 = vmatpush1.msra.mxu0 %v8522
        %8778 = vmatprep.subr.mxu0 0.0
        %8779 = vmatpush1.msra.mxu0 %v8521
        %8780 = vmatprep.subr.mxu0 0.0
        %8781 = vmatpush1.msra.mxu0 %v8520
        %8782 = vmatprep.subr.mxu0 0.0
        %8783 = vmatpush1.msra.mxu0 %v8519
        %8784 = vmatprep.subr.mxu0 0.0
        %8785 = vmatpush2.msra.mxu0 0.0
        %8786 = vmatprep.subr.mxu0 0.0
        %8787 = vmatpush2.msra.mxu0 0.0
        %8788 = vmatprep.subr.mxu0 0.0
        %8789 = vmatpush2.msra.mxu0 0.0
        %8790 = vmatprep.subr.mxu0 0.0
        %8791 = vmatpush2.msra.mxu0 0.0
        %8792 = vmatprep.subr.mxu0 0.0
        %8793 = vmatpush2.msra.mxu0 0.0
        %8794 = vmatprep.subr.mxu0 0.0
        %8795 = vmatpush2.msra.mxu0 0.0
        %8796 = vmatprep.subr.mxu0 0.0
        %8797 = vmatpush2.msra.mxu0 0.0
        %8798 = vmatprep.subr.mxu0 0.0
        %8799 = vmatpush2.msra.mxu0 0.0
        %8800 = vmatprep.subr.mxu0 0.0
        %8801 = vmatpush2.msra.mxu0 0.0
        %8802 = vmatprep.subr.mxu0 0.0
        %8803 = vmatpush2.msra.mxu0 0.0
        %8804 = vmatprep.subr.mxu0 0.0
        %8805 = vmatpush2.msra.mxu0 0.0
        %8806 = vmatprep.subr.mxu0 0.0
        %8807 = vmatpush2.msra.mxu0 0.0
        %8808 = vmatprep.subr.mxu0 0.0
        %8809 = vmatpush2.msra.mxu0 0.0
        %8810 = vmatprep.subr.mxu0 0.0
        %8811 = vmatpush2.msra.mxu0 0.0
        %8812 = vmatprep.subr.mxu0 0.0
        %8813 = vmatpush2.msra.mxu0 0.0
        %8814 = vmatprep.subr.mxu0 0.0
        %8815 = vmatpush2.msra.mxu0 0.0
        %8816 = vmatprep.mubr.f32.mxu0 0.0
        %8817 = vmatmul.mubr.f32.gmra.mxu0 %v7493
        %v8818 = vpop.f32.mrf.mxu0
        %v8819 = vadd.f32 %v8594, %v8818
        %v8820 = vpop.f32.mrf.mxu0
        %8821 = vmatprep.mubr.f32.mxu0 0.0
        %8822 = vmatmul.mubr.f32.gmra.mxu0 %v7495
        %v8823 = vpop.f32.mrf.mxu0
        %v8824 = vadd.f32 %v8599, %v8823
        %v8825 = vpop.f32.mrf.mxu0
        %8826 = vmatprep.mubr.f32.mxu0 0.0
        %8827 = vmatmul.mubr.f32.gmra.mxu0 %v7497
        %v8828 = vpop.f32.mrf.mxu0
        %v8829 = vadd.f32 %v8604, %v8828
        %v8830 = vpop.f32.mrf.mxu0
        %8831 = vmatprep.mubr.f32.mxu0 0.0
        %8832 = vmatmul.mubr.f32.gmra.mxu0 %v7499
        %v8833 = vpop.f32.mrf.mxu0
        %v8834 = vadd.f32 %v8609, %v8833
        %v8835 = vpop.f32.mrf.mxu0
        %8836 = vmatprep.mubr.f32.mxu0 0.0
        %8837 = vmatmul.mubr.f32.gmra.mxu0 %v7501
        %v8838 = vpop.f32.mrf.mxu0
        %v8839 = vadd.f32 %v8614, %v8838
        %v8840 = vpop.f32.mrf.mxu0
        %8841 = vmatprep.mubr.f32.mxu0 0.0
        %8842 = vmatmul.mubr.f32.gmra.mxu0 %v7503
        %v8843 = vpop.f32.mrf.mxu0
        %v8844 = vadd.f32 %v8619, %v8843
        %v8845 = vpop.f32.mrf.mxu0
        %8846 = vmatprep.mubr.f32.mxu0 0.0
        %8847 = vmatmul.mubr.f32.gmra.mxu0 %v7505
        %v8848 = vpop.f32.mrf.mxu0
        %v8849 = vadd.f32 %v8624, %v8848
        %v8850 = vpop.f32.mrf.mxu0
        %8851 = vmatprep.mubr.f32.mxu0 0.0
        %8852 = vmatmul.mubr.f32.gmra.mxu0 %v7507
        %v8853 = vpop.f32.mrf.mxu0
        %v8854 = vadd.f32 %v8629, %v8853
        %v8855 = vpop.f32.mrf.mxu0
        %8856 = vmatprep.mubr.f32.mxu0 0.0
        %8857 = vmatmul.mubr.f32.gmra.mxu0 %v7509
        %v8858 = vpop.f32.mrf.mxu0
        %v8859 = vadd.f32 %v8634, %v8858
        %v8860 = vpop.f32.mrf.mxu0
        %8861 = vmatprep.mubr.f32.mxu0 0.0
        %8862 = vmatmul.mubr.f32.gmra.mxu0 %v7511
        %v8863 = vpop.f32.mrf.mxu0
        %v8864 = vadd.f32 %v8639, %v8863
        %v8865 = vpop.f32.mrf.mxu0
        %8866 = vmatprep.mubr.f32.mxu0 0.0
        %8867 = vmatmul.mubr.f32.gmra.mxu0 %v7513
        %v8868 = vpop.f32.mrf.mxu0
        %v8869 = vadd.f32 %v8644, %v8868
        %v8870 = vpop.f32.mrf.mxu0
        %8871 = vmatprep.mubr.f32.mxu0 0.0
        %8872 = vmatmul.mubr.f32.gmra.mxu0 %v7515
        %v8873 = vpop.f32.mrf.mxu0
        %v8874 = vadd.f32 %v8649, %v8873
        %v8875 = vpop.f32.mrf.mxu0
        %8876 = vmatprep.mubr.f32.mxu0 0.0
        %8877 = vmatmul.mubr.f32.gmra.mxu0 %v7517
        %v8878 = vpop.f32.mrf.mxu0
        %v8879 = vadd.f32 %v8654, %v8878
        %v8880 = vpop.f32.mrf.mxu0
        %8881 = vmatprep.mubr.f32.mxu0 0.0
        %8882 = vmatmul.mubr.f32.gmra.mxu0 %v7519
        %v8883 = vpop.f32.mrf.mxu0
        %v8884 = vadd.f32 %v8659, %v8883
        %v8885 = vpop.f32.mrf.mxu0
        %8886 = vmatprep.mubr.f32.mxu0 0.0
        %8887 = vmatmul.mubr.f32.gmra.mxu0 %v7521
        %v8888 = vpop.f32.mrf.mxu0
        %v8889 = vadd.f32 %v8664, %v8888
        %v8890 = vpop.f32.mrf.mxu0
        %8891 = vmatprep.mubr.f32.mxu0 0.0
        %8892 = vmatmul.mubr.f32.gmra.mxu0 %v7523
        %v8893 = vpop.f32.mrf.mxu0
        %v8894 = vadd.f32 %v8669, %v8893
        %v8895 = vpop.f32.mrf.mxu0
        %8896 = vmatprep.mubr.f32.mxu0 0.0
        %8897 = vmatmul.mubr.f32.gmra.mxu0 %v7525
        %v8898 = vpop.f32.mrf.mxu0
        %v8899 = vadd.f32 %v8674, %v8898
        %v8900 = vpop.f32.mrf.mxu0
        %8901 = vmatprep.mubr.f32.mxu0 0.0
        %8902 = vmatmul.mubr.f32.gmra.mxu0 %v7527
        %v8903 = vpop.f32.mrf.mxu0
        %v8904 = vadd.f32 %v8679, %v8903
        %v8905 = vpop.f32.mrf.mxu0
        %8906 = vmatprep.mubr.f32.mxu0 0.0
        %8907 = vmatmul.mubr.f32.gmra.mxu0 %v7529
        %v8908 = vpop.f32.mrf.mxu0
        %v8909 = vadd.f32 %v8684, %v8908
        %v8910 = vpop.f32.mrf.mxu0
        %8911 = vmatprep.mubr.f32.mxu0 0.0
        %8912 = vmatmul.mubr.f32.gmra.mxu0 %v7531
        %v8913 = vpop.f32.mrf.mxu0
        %v8914 = vadd.f32 %v8689, %v8913
        %v8915 = vpop.f32.mrf.mxu0
        %8916 = vmatprep.mubr.f32.mxu0 0.0
        %8917 = vmatmul.mubr.f32.gmra.mxu0 %v7533
        %v8918 = vpop.f32.mrf.mxu0
        %v8919 = vadd.f32 %v8694, %v8918
        %v8920 = vpop.f32.mrf.mxu0
        %8921 = vmatprep.mubr.f32.mxu0 0.0
        %8922 = vmatmul.mubr.f32.gmra.mxu0 %v7535
        %v8923 = vpop.f32.mrf.mxu0
        %v8924 = vadd.f32 %v8699, %v8923
        %v8925 = vpop.f32.mrf.mxu0
        %8926 = vmatprep.mubr.f32.mxu0 0.0
        %8927 = vmatmul.mubr.f32.gmra.mxu0 %v7537
        %v8928 = vpop.f32.mrf.mxu0
        %v8929 = vadd.f32 %v8704, %v8928
        %v8930 = vpop.f32.mrf.mxu0
        %8931 = vmatprep.mubr.f32.mxu0 0.0
        %8932 = vmatmul.mubr.f32.gmra.mxu0 %v7539
        %v8933 = vpop.f32.mrf.mxu0
        %v8934 = vadd.f32 %v8709, %v8933
        %v8935 = vpop.f32.mrf.mxu0
        %8936 = vmatprep.mubr.f32.mxu0 0.0
        %8937 = vmatmul.mubr.f32.gmra.mxu0 %v7541
        %v8938 = vpop.f32.mrf.mxu0
        %v8939 = vadd.f32 %v8714, %v8938
        %v8940 = vpop.f32.mrf.mxu0
        %8941 = vmatprep.mubr.f32.mxu0 0.0
        %8942 = vmatmul.mubr.f32.gmra.mxu0 %v7543
        %v8943 = vpop.f32.mrf.mxu0
        %v8944 = vadd.f32 %v8719, %v8943
        %v8945 = vpop.f32.mrf.mxu0
        %8946 = vmatprep.mubr.f32.mxu0 0.0
        %8947 = vmatmul.mubr.f32.gmra.mxu0 %v7545
        %v8948 = vpop.f32.mrf.mxu0
        %v8949 = vadd.f32 %v8724, %v8948
        %v8950 = vpop.f32.mrf.mxu0
        %8951 = vmatprep.mubr.f32.mxu0 0.0
        %8952 = vmatmul.mubr.f32.gmra.mxu0 %v7547
        %v8953 = vpop.f32.mrf.mxu0
        %v8954 = vadd.f32 %v8729, %v8953
        %v8955 = vpop.f32.mrf.mxu0
        %8956 = vmatprep.mubr.f32.mxu0 0.0
        %8957 = vmatmul.mubr.f32.gmra.mxu0 %v7549
        %v8958 = vpop.f32.mrf.mxu0
        %v8959 = vadd.f32 %v8734, %v8958
        %v8960 = vpop.f32.mrf.mxu0
        %8961 = vmatprep.mubr.f32.mxu0 0.0
        %8962 = vmatmul.mubr.f32.gmra.mxu0 %v7551
        %v8963 = vpop.f32.mrf.mxu0
        %v8964 = vadd.f32 %v8739, %v8963
        %v8965 = vpop.f32.mrf.mxu0
        %8966 = vmatprep.mubr.f32.mxu0 0.0
        %8967 = vmatmul.mubr.f32.gmra.mxu0 %v8523
        %v8968 = vpop.f32.mrf.mxu0
        %v8969 = vadd.f32 %v8744, %v8968
        %v8970 = vpop.f32.mrf.mxu0
        %8971 = vmatprep.mubr.f32.mxu0 0.0
        %8972 = vmatmul.mubr.f32.gmra.mxu0 %v8525
        %v8973 = vpop.f32.mrf.mxu0
        %v8974 = vadd.f32 %v8749, %v8973
        %v8975 = vpop.f32.mrf.mxu0
        %8976 = vdwg.mxu0
        %v8977 = vadd.f32 %v8299, %v8819
        %v8978 = vadd.f32 %v8304, %v8824
        %v8979 = vadd.f32 %v8309, %v8829
        %v8980 = vadd.f32 %v8314, %v8834
        %v8981 = vadd.f32 %v8319, %v8839
        %v8982 = vadd.f32 %v8324, %v8844
        %v8983 = vadd.f32 %v8329, %v8849
        %v8984 = vadd.f32 %v8334, %v8854
        %v8985 = vadd.f32 %v8339, %v8859
        %v8986 = vadd.f32 %v8344, %v8864
        %v8987 = vadd.f32 %v8349, %v8869
        %v8988 = vadd.f32 %v8354, %v8874
        %v8989 = vadd.f32 %v8359, %v8879
        %v8990 = vadd.f32 %v8364, %v8884
        %v8991 = vadd.f32 %v8369, %v8889
        %v8992 = vadd.f32 %v8374, %v8894
        %v8993 = vadd.f32 %v8379, %v8899
        %v8994 = vadd.f32 %v8384, %v8904
        %v8995 = vadd.f32 %v8389, %v8909
        %v8996 = vadd.f32 %v8394, %v8914
        %v8997 = vadd.f32 %v8399, %v8919
        %v8998 = vadd.f32 %v8404, %v8924
        %v8999 = vadd.f32 %v8409, %v8929
        %v9000 = vadd.f32 %v8414, %v8934
        %v9001 = vadd.f32 %v8419, %v8939
        %v9002 = vadd.f32 %v8424, %v8944
        %v9003 = vadd.f32 %v8429, %v8949
        %v9004 = vadd.f32 %v8434, %v8954
        %v9005 = vadd.f32 %v8439, %v8959
        %v9006 = vadd.f32 %v8444, %v8964
        %v9007 = vadd.f32 %v8449, %v8969
        %v9008 = vadd.f32 %v8454, %v8974
        %v9009 = vld [vmem:[%s13] sm:$0x1]
        %v9011 = vlaneseq
        %v9012 = vshrl.u32 %v9011, 7
        %v9013 = vsub.s32 0, %v9012
        %v9014 = vrot.slane %v9009, %v9013
        %v9016 = vmul.f32 %v8977, %v9014
        %v9017 = vmul.f32 %v8978, %v9014
        %v9018 = vmul.f32 %v8979, %v9014
        %v9019 = vmul.f32 %v8980, %v9014
        %v9020 = vmul.f32 %v8981, %v9014
        %v9021 = vmul.f32 %v8982, %v9014
        %v9022 = vmul.f32 %v8983, %v9014
        %v9023 = vmul.f32 %v8984, %v9014
        %v9024 = vmul.f32 %v8985, %v9014
        %v9025 = vmul.f32 %v8986, %v9014
        %v9026 = vmul.f32 %v8987, %v9014
        %v9027 = vmul.f32 %v8988, %v9014
        %v9028 = vmul.f32 %v8989, %v9014
        %v9029 = vmul.f32 %v8990, %v9014
        %v9030 = vmul.f32 %v8991, %v9014
        %v9031 = vmul.f32 %v8992, %v9014
        %v9032 = vmul.f32 %v8993, %v9014
        %v9033 = vmul.f32 %v8994, %v9014
        %v9034 = vmul.f32 %v8995, %v9014
        %v9035 = vmul.f32 %v8996, %v9014
        %v9036 = vmul.f32 %v8997, %v9014
        %v9037 = vmul.f32 %v8998, %v9014
        %v9038 = vmul.f32 %v8999, %v9014
        %v9039 = vmul.f32 %v9000, %v9014
        %v9040 = vmul.f32 %v9001, %v9014
        %v9041 = vmul.f32 %v9002, %v9014
        %v9042 = vmul.f32 %v9003, %v9014
        %v9043 = vmul.f32 %v9004, %v9014
        %v9044 = vmul.f32 %v9005, %v9014
        %v9045 = vmul.f32 %v9006, %v9014
        %v9046 = vmul.f32 %v9007, %v9014
        %v9047 = vmul.f32 %v9008, %v9014
        %v9048 = vld [vmem:[%s14] sm:$0x1]
        %v9050 = vlaneseq
        %v9051 = vshrl.u32 %v9050, 7
        %v9052 = vsub.s32 0, %v9051
        %v9053 = vrot.slane %v9048, %v9052
        %v9055 = vadd.f32 %v9016, %v9053
        %v9056 = vadd.f32 %v9017, %v9053
        %v9057 = vadd.f32 %v9018, %v9053
        %v9058 = vadd.f32 %v9019, %v9053
        %v9059 = vadd.f32 %v9020, %v9053
        %v9060 = vadd.f32 %v9021, %v9053
        %v9061 = vadd.f32 %v9022, %v9053
        %v9062 = vadd.f32 %v9023, %v9053
        %v9063 = vadd.f32 %v9024, %v9053
        %v9064 = vadd.f32 %v9025, %v9053
        %v9065 = vadd.f32 %v9026, %v9053
        %v9066 = vadd.f32 %v9027, %v9053
        %v9067 = vadd.f32 %v9028, %v9053
        %v9068 = vadd.f32 %v9029, %v9053
        %v9069 = vadd.f32 %v9030, %v9053
        %v9070 = vadd.f32 %v9031, %v9053
        %v9071 = vadd.f32 %v9032, %v9053
        %v9072 = vadd.f32 %v9033, %v9053
        %v9073 = vadd.f32 %v9034, %v9053
        %v9074 = vadd.f32 %v9035, %v9053
        %v9075 = vadd.f32 %v9036, %v9053
        %v9076 = vadd.f32 %v9037, %v9053
        %v9077 = vadd.f32 %v9038, %v9053
        %v9078 = vadd.f32 %v9039, %v9053
        %v9079 = vadd.f32 %v9040, %v9053
        %v9080 = vadd.f32 %v9041, %v9053
        %v9081 = vadd.f32 %v9042, %v9053
        %v9082 = vadd.f32 %v9043, %v9053
        %v9083 = vadd.f32 %v9044, %v9053
        %v9084 = vadd.f32 %v9045, %v9053
        %v9085 = vadd.f32 %v9046, %v9053
        %v9086 = vadd.f32 %v9047, %v9053
        %v9087 = vmax.f32 %v9055, 0.0
        %v9088 = vmax.f32 %v9056, 0.0
        %v9089 = vmax.f32 %v9057, 0.0
        %v9090 = vmax.f32 %v9058, 0.0
        %v9091 = vmax.f32 %v9059, 0.0
        %v9092 = vmax.f32 %v9060, 0.0
        %v9093 = vmax.f32 %v9061, 0.0
        %v9094 = vmax.f32 %v9062, 0.0
        %v9095 = vmax.f32 %v9063, 0.0
        %v9096 = vmax.f32 %v9064, 0.0
        %v9097 = vmax.f32 %v9065, 0.0
        %v9098 = vmax.f32 %v9066, 0.0
        %v9099 = vmax.f32 %v9067, 0.0
        %v9100 = vmax.f32 %v9068, 0.0
        %v9101 = vmax.f32 %v9069, 0.0
        %v9102 = vmax.f32 %v9070, 0.0
        %v9103 = vmax.f32 %v9071, 0.0
        %v9104 = vmax.f32 %v9072, 0.0
        %v9105 = vmax.f32 %v9073, 0.0
        %v9106 = vmax.f32 %v9074, 0.0
        %v9107 = vmax.f32 %v9075, 0.0
        %v9108 = vmax.f32 %v9076, 0.0
        %v9109 = vmax.f32 %v9077, 0.0
        %v9110 = vmax.f32 %v9078, 0.0
        %v9111 = vmax.f32 %v9079, 0.0
        %v9112 = vmax.f32 %v9080, 0.0
        %v9113 = vmax.f32 %v9081, 0.0
        %v9114 = vmax.f32 %v9082, 0.0
        %v9115 = vmax.f32 %v9083, 0.0
        %v9116 = vmax.f32 %v9084, 0.0
        %v9117 = vmax.f32 %v9085, 0.0
        %v9118 = vmax.f32 %v9086, 0.0
        %9151 = vrot.lane.b32.xlu0 %v5041, 64
        %v9152 = vpop.permute.xlu0 %9151
        %9153 = vrot.lane.b32.xlu0 %v5042, 64
        %v9154 = vpop.permute.xlu0 %9153
        %9155 = vrot.lane.b32.xlu0 %v5043, 64
        %v9156 = vpop.permute.xlu0 %9155
        %9157 = vrot.lane.b32.xlu0 %v5044, 64
        %v9158 = vpop.permute.xlu0 %9157
        %9159 = vrot.lane.b32.xlu0 %v5045, 64
        %v9160 = vpop.permute.xlu0 %9159
        %9161 = vrot.lane.b32.xlu0 %v5046, 64
        %v9162 = vpop.permute.xlu0 %9161
        %9163 = vrot.lane.b32.xlu0 %v5047, 64
        %v9164 = vpop.permute.xlu0 %9163
        %9165 = vrot.lane.b32.xlu0 %v5048, 64
        %v9166 = vpop.permute.xlu0 %9165
        %9167 = vrot.lane.b32.xlu0 %v5049, 64
        %v9168 = vpop.permute.xlu0 %9167
        %9169 = vrot.lane.b32.xlu0 %v5050, 64
        %v9170 = vpop.permute.xlu0 %9169
        %9171 = vrot.lane.b32.xlu0 %v5051, 64
        %v9172 = vpop.permute.xlu0 %9171
        %9173 = vrot.lane.b32.xlu0 %v5052, 64
        %v9174 = vpop.permute.xlu0 %9173
        %9175 = vrot.lane.b32.xlu0 %v5053, 64
        %v9176 = vpop.permute.xlu0 %9175
        %9177 = vrot.lane.b32.xlu0 %v5054, 64
        %v9178 = vpop.permute.xlu0 %9177
        %9179 = vrot.lane.b32.xlu0 %v5055, 64
        %v9180 = vpop.permute.xlu0 %9179
        %9181 = vrot.lane.b32.xlu0 %v5056, 64
        %v9182 = vpop.permute.xlu0 %9181
        %9183 = vrot.lane.b32.xlu0 %v5057, 64
        %v9184 = vpop.permute.xlu0 %9183
        %9185 = vrot.lane.b32.xlu0 %v5058, 64
        %v9186 = vpop.permute.xlu0 %9185
        %9187 = vrot.lane.b32.xlu0 %v5059, 64
        %v9188 = vpop.permute.xlu0 %9187
        %9189 = vrot.lane.b32.xlu0 %v5060, 64
        %v9190 = vpop.permute.xlu0 %9189
        %9191 = vrot.lane.b32.xlu0 %v5061, 64
        %v9192 = vpop.permute.xlu0 %9191
        %9193 = vrot.lane.b32.xlu0 %v5062, 64
        %v9194 = vpop.permute.xlu0 %9193
        %9195 = vrot.lane.b32.xlu0 %v5063, 64
        %v9196 = vpop.permute.xlu0 %9195
        %9197 = vrot.lane.b32.xlu0 %v5064, 64
        %v9198 = vpop.permute.xlu0 %9197
        %9199 = vrot.lane.b32.xlu0 %v5065, 64
        %v9200 = vpop.permute.xlu0 %9199
        %9201 = vrot.lane.b32.xlu0 %v5066, 64
        %v9202 = vpop.permute.xlu0 %9201
        %9203 = vrot.lane.b32.xlu0 %v5067, 64
        %v9204 = vpop.permute.xlu0 %9203
        %9205 = vrot.lane.b32.xlu0 %v5068, 64
        %v9206 = vpop.permute.xlu0 %9205
        %9207 = vrot.lane.b32.xlu0 %v5069, 64
        %v9208 = vpop.permute.xlu0 %9207
        %9209 = vrot.lane.b32.xlu0 %v5070, 64
        %v9210 = vpop.permute.xlu0 %9209
        %9211 = vrot.lane.b32.xlu0 %v5071, 64
        %v9212 = vpop.permute.xlu0 %9211
        %9213 = vrot.lane.b32.xlu0 %v5072, 64
        %v9214 = vpop.permute.xlu0 %9213
        %9279 = vrot.lane.b32.xlu0 %v2048, 96
        %v9280 = vpop.permute.xlu0 %9279
        %9281 = vrot.lane.b32.xlu0 %v2049, 96
        %v9282 = vpop.permute.xlu0 %9281
        %9283 = vrot.lane.b32.xlu0 %v2050, 96
        %v9284 = vpop.permute.xlu0 %9283
        %9285 = vrot.lane.b32.xlu0 %v2051, 96
        %v9286 = vpop.permute.xlu0 %9285
        %9287 = vrot.lane.b32.xlu0 %v2052, 96
        %v9288 = vpop.permute.xlu0 %9287
        %9289 = vrot.lane.b32.xlu0 %v2053, 96
        %v9290 = vpop.permute.xlu0 %9289
        %9291 = vrot.lane.b32.xlu0 %v2054, 96
        %v9292 = vpop.permute.xlu0 %9291
        %9293 = vrot.lane.b32.xlu0 %v2055, 96
        %v9294 = vpop.permute.xlu0 %9293
        %9295 = vrot.lane.b32.xlu0 %v2056, 96
        %v9296 = vpop.permute.xlu0 %9295
        %9297 = vrot.lane.b32.xlu0 %v2057, 96
        %v9298 = vpop.permute.xlu0 %9297
        %9299 = vrot.lane.b32.xlu0 %v2058, 96
        %v9300 = vpop.permute.xlu0 %9299
        %9301 = vrot.lane.b32.xlu0 %v2059, 96
        %v9302 = vpop.permute.xlu0 %9301
        %9303 = vrot.lane.b32.xlu0 %v2060, 96
        %v9304 = vpop.permute.xlu0 %9303
        %9305 = vrot.lane.b32.xlu0 %v2061, 96
        %v9306 = vpop.permute.xlu0 %9305
        %9307 = vrot.lane.b32.xlu0 %v2062, 96
        %v9308 = vpop.permute.xlu0 %9307
        %9309 = vrot.lane.b32.xlu0 %v2063, 96
        %v9310 = vpop.permute.xlu0 %9309
        %9311 = vrot.lane.b32.xlu0 %v2064, 96
        %v9312 = vpop.permute.xlu0 %9311
        %9313 = vrot.lane.b32.xlu0 %v2065, 96
        %v9314 = vpop.permute.xlu0 %9313
        %9315 = vrot.lane.b32.xlu0 %v2066, 96
        %v9316 = vpop.permute.xlu0 %9315
        %9317 = vrot.lane.b32.xlu0 %v2067, 96
        %v9318 = vpop.permute.xlu0 %9317
        %9319 = vrot.lane.b32.xlu0 %v2068, 96
        %v9320 = vpop.permute.xlu0 %9319
        %9321 = vrot.lane.b32.xlu0 %v2069, 96
        %v9322 = vpop.permute.xlu0 %9321
        %9323 = vrot.lane.b32.xlu0 %v2070, 96
        %v9324 = vpop.permute.xlu0 %9323
        %9325 = vrot.lane.b32.xlu0 %v2071, 96
        %v9326 = vpop.permute.xlu0 %9325
        %9327 = vrot.lane.b32.xlu0 %v2072, 96
        %v9328 = vpop.permute.xlu0 %9327
        %9329 = vrot.lane.b32.xlu0 %v2073, 96
        %v9330 = vpop.permute.xlu0 %9329
        %9331 = vrot.lane.b32.xlu0 %v2074, 96
        %v9332 = vpop.permute.xlu0 %9331
        %9333 = vrot.lane.b32.xlu0 %v2075, 96
        %v9334 = vpop.permute.xlu0 %9333
        %9335 = vrot.lane.b32.xlu0 %v2076, 96
        %v9336 = vpop.permute.xlu0 %9335
        %9337 = vrot.lane.b32.xlu0 %v2077, 96
        %v9338 = vpop.permute.xlu0 %9337
        %9339 = vrot.lane.b32.xlu0 %v2078, 96
        %v9340 = vpop.permute.xlu0 %9339
        %9341 = vrot.lane.b32.xlu0 %v2079, 96
        %v9342 = vpop.permute.xlu0 %9341
        %v9375 = vsel %vm3214, %v1039, %v9152
        %v9376 = vsel %vm3214, %v1041, %v9154
        %v9377 = vsel %vm3214, %v1043, %v9156
        %v9378 = vsel %vm3214, %v1045, %v9158
        %v9379 = vsel %vm3214, %v1047, %v9160
        %v9380 = vsel %vm3214, %v1049, %v9162
        %v9381 = vsel %vm3214, %v1051, %v9164
        %v9382 = vsel %vm3214, %v1053, %v9166
        %v9383 = vsel %vm3214, %v1055, %v9168
        %v9384 = vsel %vm3214, %v1057, %v9170
        %v9385 = vsel %vm3214, %v1059, %v9172
        %v9386 = vsel %vm3214, %v1061, %v9174
        %v9387 = vsel %vm3214, %v1063, %v9176
        %v9388 = vsel %vm3214, %v1065, %v9178
        %v9389 = vsel %vm3214, %v1067, %v9180
        %v9390 = vsel %vm3214, %v1069, %v9182
        %v9391 = vsel %vm3214, %v1071, %v9184
        %v9392 = vsel %vm3214, %v1073, %v9186
        %v9393 = vsel %vm3214, %v1075, %v9188
        %v9394 = vsel %vm3214, %v1077, %v9190
        %v9395 = vsel %vm3214, %v1079, %v9192
        %v9396 = vsel %vm3214, %v1081, %v9194
        %v9397 = vsel %vm3214, %v1083, %v9196
        %v9398 = vsel %vm3214, %v1085, %v9198
        %v9399 = vsel %vm3214, %v1087, %v9200
        %v9400 = vsel %vm3214, %v1089, %v9202
        %v9401 = vsel %vm3214, %v1091, %v9204
        %v9402 = vsel %vm3214, %v1093, %v9206
        %v9403 = vsel %vm3214, %v1095, %v9208
        %v9404 = vsel %vm3214, %v1097, %v9210
        %v9405 = vsel %vm3214, %v1099, %v9212
        %v9406 = vsel %vm3214, %v1101, %v9214
        %v9407 = vsel %vm3148, %v9087, %v9280
        %v9408 = vsel %vm3148, %v9088, %v9282
        %v9409 = vsel %vm3148, %v9089, %v9284
        %v9410 = vsel %vm3148, %v9090, %v9286
        %v9411 = vsel %vm3148, %v9091, %v9288
        %v9412 = vsel %vm3148, %v9092, %v9290
        %v9413 = vsel %vm3148, %v9093, %v9292
        %v9414 = vsel %vm3148, %v9094, %v9294
        %v9415 = vsel %vm3148, %v9095, %v9296
        %v9416 = vsel %vm3148, %v9096, %v9298
        %v9417 = vsel %vm3148, %v9097, %v9300
        %v9418 = vsel %vm3148, %v9098, %v9302
        %v9419 = vsel %vm3148, %v9099, %v9304
        %v9420 = vsel %vm3148, %v9100, %v9306
        %v9421 = vsel %vm3148, %v9101, %v9308
        %v9422 = vsel %vm3148, %v9102, %v9310
        %v9423 = vsel %vm3148, %v9103, %v9312
        %v9424 = vsel %vm3148, %v9104, %v9314
        %v9425 = vsel %vm3148, %v9105, %v9316
        %v9426 = vsel %vm3148, %v9106, %v9318
        %v9427 = vsel %vm3148, %v9107, %v9320
        %v9428 = vsel %vm3148, %v9108, %v9322
        %v9429 = vsel %vm3148, %v9109, %v9324
        %v9430 = vsel %vm3148, %v9110, %v9326
        %v9431 = vsel %vm3148, %v9111, %v9328
        %v9432 = vsel %vm3148, %v9112, %v9330
        %v9433 = vsel %vm3148, %v9113, %v9332
        %v9434 = vsel %vm3148, %v9114, %v9334
        %v9435 = vsel %vm3148, %v9115, %v9336
        %v9436 = vsel %vm3148, %v9116, %v9338
        %v9437 = vsel %vm3148, %v9117, %v9340
        %v9438 = vsel %vm3148, %v9118, %v9342
        %9439 = vst [vmem:[%s487] sm:$0xff] %v9375
        %vm9440 = vcmask 850944
        %9441 = vst.msk [vmem:[%s487 + $0x8] sm:$0xff] %vm9440, %v9407
        %9442 = vst [vmem:[%s487 + $0x10] sm:$0xff] %v9376
        %9443 = vst.msk [vmem:[%s487 + $0x18] sm:$0xff] %vm9440, %v9408
        %9444 = vst [vmem:[%s487 + $0x20] sm:$0xff] %v9377
        %9445 = vst.msk [vmem:[%s487 + $0x28] sm:$0xff] %vm9440, %v9409
        %9446 = vst [vmem:[%s487 + $0x30] sm:$0xff] %v9378
        %9447 = vst.msk [vmem:[%s487 + $0x38] sm:$0xff] %vm9440, %v9410
        %9448 = vst [vmem:[%s487 + $0x40] sm:$0xff] %v9379
        %9449 = vst.msk [vmem:[%s487 + $0x48] sm:$0xff] %vm9440, %v9411
        %9450 = vst [vmem:[%s487 + $0x50] sm:$0xff] %v9380
        %9451 = vst.msk [vmem:[%s487 + $0x58] sm:$0xff] %vm9440, %v9412
        %9452 = vst [vmem:[%s487 + $0x60] sm:$0xff] %v9381
        %9453 = vst.msk [vmem:[%s487 + $0x68] sm:$0xff] %vm9440, %v9413
        %9454 = vst [vmem:[%s487 + $0x70] sm:$0xff] %v9382
        %9455 = vst.msk [vmem:[%s487 + $0x78] sm:$0xff] %vm9440, %v9414
        %9456 = vst [vmem:[%s487 + $0x80] sm:$0xff] %v9383
        %9457 = vst.msk [vmem:[%s487 + $0x88] sm:$0xff] %vm9440, %v9415
        %9458 = vst [vmem:[%s487 + $0x90] sm:$0xff] %v9384
        %9459 = vst.msk [vmem:[%s487 + $0x98] sm:$0xff] %vm9440, %v9416
        %9460 = vst [vmem:[%s487 + $0xa0] sm:$0xff] %v9385
        %9461 = vst.msk [vmem:[%s487 + $0xa8] sm:$0xff] %vm9440, %v9417
        %9462 = vst [vmem:[%s487 + $0xb0] sm:$0xff] %v9386
        %9463 = vst.msk [vmem:[%s487 + $0xb8] sm:$0xff] %vm9440, %v9418
        %9464 = vst [vmem:[%s487 + $0xc0] sm:$0xff] %v9387
        %9465 = vst.msk [vmem:[%s487 + $0xc8] sm:$0xff] %vm9440, %v9419
        %9466 = vst [vmem:[%s487 + $0xd0] sm:$0xff] %v9388
        %9467 = vst.msk [vmem:[%s487 + $0xd8] sm:$0xff] %vm9440, %v9420
        %9468 = vst [vmem:[%s487 + $0xe0] sm:$0xff] %v9389
        %9469 = vst.msk [vmem:[%s487 + $0xe8] sm:$0xff] %vm9440, %v9421
        %9470 = vst [vmem:[%s487 + $0xf0] sm:$0xff] %v9390
        %9471 = vst.msk [vmem:[%s487 + $0xf8] sm:$0xff] %vm9440, %v9422
        %9472 = vst [vmem:[%s487 + $0x100] sm:$0xff] %v9391
        %9473 = vst.msk [vmem:[%s487 + $0x108] sm:$0xff] %vm9440, %v9423
        %9474 = vst [vmem:[%s487 + $0x110] sm:$0xff] %v9392
        %9475 = vst.msk [vmem:[%s487 + $0x118] sm:$0xff] %vm9440, %v9424
        %9476 = vst [vmem:[%s487 + $0x120] sm:$0xff] %v9393
        %9477 = vst.msk [vmem:[%s487 + $0x128] sm:$0xff] %vm9440, %v9425
        %9478 = vst [vmem:[%s487 + $0x130] sm:$0xff] %v9394
        %9479 = vst.msk [vmem:[%s487 + $0x138] sm:$0xff] %vm9440, %v9426
        %9480 = vst [vmem:[%s487 + $0x140] sm:$0xff] %v9395
        %9481 = vst.msk [vmem:[%s487 + $0x148] sm:$0xff] %vm9440, %v9427
        %9482 = vst [vmem:[%s487 + $0x150] sm:$0xff] %v9396
        %9483 = vst.msk [vmem:[%s487 + $0x158] sm:$0xff] %vm9440, %v9428
        %9484 = vst [vmem:[%s487 + $0x160] sm:$0xff] %v9397
        %9485 = vst.msk [vmem:[%s487 + $0x168] sm:$0xff] %vm9440, %v9429
        %9486 = vst [vmem:[%s487 + $0x170] sm:$0xff] %v9398
        %9487 = vst.msk [vmem:[%s487 + $0x178] sm:$0xff] %vm9440, %v9430
        %9488 = vst [vmem:[%s487 + $0x180] sm:$0xff] %v9399
        %9489 = vst.msk [vmem:[%s487 + $0x188] sm:$0xff] %vm9440, %v9431
        %9490 = vst [vmem:[%s487 + $0x190] sm:$0xff] %v9400
        %9491 = vst.msk [vmem:[%s487 + $0x198] sm:$0xff] %vm9440, %v9432
        %9492 = vst [vmem:[%s487 + $0x1a0] sm:$0xff] %v9401
        %9493 = vst.msk [vmem:[%s487 + $0x1a8] sm:$0xff] %vm9440, %v9433
        %9494 = vst [vmem:[%s487 + $0x1b0] sm:$0xff] %v9402
        %9495 = vst.msk [vmem:[%s487 + $0x1b8] sm:$0xff] %vm9440, %v9434
        %9496 = vst [vmem:[%s487 + $0x1c0] sm:$0xff] %v9403
        %9497 = vst.msk [vmem:[%s487 + $0x1c8] sm:$0xff] %vm9440, %v9435
        %9498 = vst [vmem:[%s487 + $0x1d0] sm:$0xff] %v9404
        %9499 = vst.msk [vmem:[%s487 + $0x1d8] sm:$0xff] %vm9440, %v9436
        %9500 = vst [vmem:[%s487 + $0x1e0] sm:$0xff] %v9405
        %9501 = vst.msk [vmem:[%s487 + $0x1e8] sm:$0xff] %vm9440, %v9437
        %9502 = vst [vmem:[%s487 + $0x1f0] sm:$0xff] %v9406
        %9503 = vst.msk [vmem:[%s487 + $0x1f8] sm:$0xff] %vm9440, %v9438
        %s9504 = sand.u32 %s357, 1
        %s9505 = scalar_lea.sflag [#allocation7], %s9504
        %s9506 = sand.u32 %s357, 1
        %s9507 = smul.addr %s9506, 512
        %s9508 = scalar_lea.vmem [#allocation6], %s9507
        // Predicated region
        $region81: #{inception_a.1} parent=79 // pred_check
          %p9509 = pneg %p367
        $region82: #{inception_a.1} parent=79 // pred_check_branch
          %9511 = sbr.rel (%p9509) target = $region84
        $region83: #{inception_a.1} parent=79 // pred_region
          %s9513 = ssub.s32 8192, 8192
          %9514 = vsyncadd %s9505, %s9513
          %s9515 = smul.addr %s29, 64
          %s9516 = smul.addr %s9515, 128
          %s9517 = scalar_lea.hbm %s15, %s9516
          %s9518 = sshll.u32 %s9508, 4
          %s9519 = int_to_ptr.vmem [resolvable:$true] %s9518
          %9524 = dma.vmem_to_hbm [thread:$0]  %s9519, 8192, %s9517, %s9505, 256, 256, 16
        $region84: #{inception_a.1} parent=79 // pred_fallthru
          _
      $region80: #{inception_a.1} parent=5 // pred_fallthru
        _
      %p9525 = scmp.le.s32.totalorder 2, %s24
      // Predicated region
      $region85: #{inception_a.1} parent=5 // pred_check
        %p9526 = pneg %p9525
      $region86: #{inception_a.1} parent=5 // pred_check_branch
        %9528 = sbr.rel (%p9526) target = $region88
      $region87: #{inception_a.1} parent=5 // pred_region
        %s9529 = ssub.s32 %s24, 2
        // Predicated region
        $region89: #{inception_a.1} parent=87 // pred_check
          %p9530 = pneg %p373
        $region90: #{inception_a.1} parent=87 // pred_check_branch
          %9532 = sbr.rel (%p9530) target = $region92
        $region91: #{inception_a.1} parent=87 // pred_region
          %s9533 = sand.u32 %s358, 1
          %s9534 = scalar_lea.sflag [#allocation7], %s9533
          %s9535 = sand.u32 %s358, 1
          %s9536 = smul.addr %s9535, 512
          %s9537 = scalar_lea.vmem [#allocation6], %s9536
          %9538 = dma.done %s9534, 8192
        $region92: #{inception_a.1} parent=87 // pred_fallthru
          _
      $region88: #{inception_a.1} parent=5 // pred_fallthru
        _
    $region6: #{inception_a.1} parent=1 // loop_footer
      %s28 = sadd.s32 1, %s24
    $region7: #{inception_a.1} parent=1 // loop_footer_branch
      %23 = sbr.rel target = $region3
    $region8: #{inception_a.1} parent=1 // loop_exit
      _
    %9539 = vsyncpa [#allocation7], 1
    %s9540 = scalar_lea.sflag [#allocation7], 1
    %9541 = vsyncpa %s9540, 1

</llo_original>
